<compile_context>
chip_gen: v7x
topology: tpu7x:2x2x1
jax: 0.10.0
libtpu: 0.0.40
codegen_flags: <defaults>
</compile_context>

<pallas_src>
import jax
import jax.numpy as jnp
from jax.experimental import pallas as pl
from jax.experimental.pallas import tpu as pltpu

_VMEM_LIMIT_BYTES = 48 * 1024 * 1024  # > scoped default, < physical VMEM on v5e/v6e/v7x


def _nbytes(*arrays):
    return int(sum(a.size * a.dtype.itemsize for a in arrays))


# ---------------------------------------------------------------------------
# Shared in-kernel helpers.
# ---------------------------------------------------------------------------
def _conv3x3_taps(xpad_ref, w_ref):
    """3x3 'same' conv of the (1, H+2, W+2, C) padded block as 9 accumulated
    MXU matmuls. Returns the (H*W, Cout) f32 accumulator (bias NOT added)."""
    Hp, Wp, C = xpad_ref.shape[1], xpad_ref.shape[2], xpad_ref.shape[3]
    H, W = Hp - 2, Wp - 2
    cdt = w_ref.dtype                      # compute dtype (bf16 fast / f32 check)
    acc = None
    for kh in range(3):
        for kw in range(3):
            win = xpad_ref[0, kh:kh + H, kw:kw + W, :]          # (H, W, C) f32
            win = win.reshape(H * W, C).astype(cdt)
            part = jnp.dot(win, w_ref[3 * kh + kw],
                           preferred_element_type=jnp.float32)  # (H*W, Cout) f32
            acc = part if acc is None else acc + part
    return acc


def _se_head(pooled, w1_ref, b1_ref, w2s_ref, b2s_ref, w2b_ref, b2b_ref):
    """pooled (1, C) f32 -> (scale, bias), each (1, C) f32.
    scale = 1 + sigmoid(w) folds the `+ initial` residual into one multiply."""
    cdt = w1_ref.dtype
    h = jnp.dot(pooled.astype(cdt), w1_ref[...],
                preferred_element_type=jnp.float32) + b1_ref[...]
    h = jnp.maximum(h, 0.0).astype(cdt)
    wv = jnp.dot(h, w2s_ref[...], preferred_element_type=jnp.float32) + b2s_ref[...]
    bv = jnp.dot(h, w2b_ref[...], preferred_element_type=jnp.float32) + b2b_ref[...]
    return 1.0 + jax.nn.sigmoid(wv), bv


# ---------------------------------------------------------------------------
# Kernel 1: standalone 3x3 conv (used by blocks that have children).
# ---------------------------------------------------------------------------
def _conv3x3_kernel(xpad_ref, w_ref, b_ref, o_ref):
    acc = _conv3x3_taps(xpad_ref, w_ref) + b_ref[...]          # (H*W, C) f32
    o_ref[...] = acc[None].astype(o_ref.dtype)


# ---------------------------------------------------------------------------
# Kernel 2: SE + residual + ReLU (used by blocks that have children).
# ---------------------------------------------------------------------------
def _se_res_relu_kernel(state_ref, init_ref, w1_ref, b1_ref,
                        w2s_ref, b2s_ref, w2b_ref, b2b_ref, o_ref):
    hw = state_ref.shape[1]
    pooled = jnp.sum(state_ref[0].astype(jnp.float32),
                     axis=0, keepdims=True) * (1.0 / hw)        # (1, C)
    scale, bias = _se_head(pooled, w1_ref, b1_ref, w2s_ref, b2s_ref, w2b_ref, b2b_ref)
    init = init_ref[0].astype(jnp.float32)                      # (H*W, C)
    o_ref[...] = jnp.maximum(init * scale + bias, 0.0)[None].astype(o_ref.dtype)


# ---------------------------------------------------------------------------
# Kernel 3: fully fused leaf block (conv -> pool -> SE -> residual -> ReLU).
# The conv result is only needed through its global average pool, so it is
# computed on the MXU and pooled in-register — never written to HBM.
# ---------------------------------------------------------------------------
def _leaf_block_kernel(xpad_ref, wc_ref, bc_ref, w1_ref, b1_ref,
                       w2s_ref, b2s_ref, w2b_ref, b2b_ref, o_ref):
    Hp, Wp, C = xpad_ref.shape[1], xpad_ref.shape[2], xpad_ref.shape[3]
    H, W = Hp - 2, Wp - 2
    hw = H * W
    acc = _conv3x3_taps(xpad_ref, wc_ref)                       # (H*W, C) f32
    pooled = jnp.sum(acc, axis=0, keepdims=True) * (1.0 / hw) + bc_ref[...]
    scale, bias = _se_head(pooled, w1_ref, b1_ref, w2s_ref, b2s_ref, w2b_ref, b2b_ref)
    init = xpad_ref[0, 1:H + 1, 1:W + 1, :].reshape(hw, C).astype(jnp.float32)
    o_ref[...] = jnp.maximum(init * scale + bias, 0.0)[None].astype(o_ref.dtype)


# ---------------------------------------------------------------------------
# Wrappers (pallas_call sites).
# ---------------------------------------------------------------------------
def _se_specs(C, hidden):
    return [
        pl.BlockSpec((C, hidden), lambda n: (0, 0)),
        pl.BlockSpec((1, hidden), lambda n: (0, 0)),
        pl.BlockSpec((hidden, C), lambda n: (0, 0)),
        pl.BlockSpec((1, C), lambda n: (0, 0)),
        pl.BlockSpec((hidden, C), lambda n: (0, 0)),
        pl.BlockSpec((1, C), lambda n: (0, 0)),
    ]


def _se_operands(se, compute_dtype):
    return (se["w1"].astype(compute_dtype), se["b1"].astype(jnp.float32),
            se["w2s"].astype(compute_dtype), se["b2s"].astype(jnp.float32),
            se["w2b"].astype(compute_dtype), se["b2b"].astype(jnp.float32))


def conv3x3_same(x_nhwc, w_hwio, b, *, compute_dtype):
    N, H, W, C = x_nhwc.shape
    xpad = jnp.pad(x_nhwc, ((0, 0), (1, 1), (1, 1), (0, 0)))
    w9 = w_hwio.reshape(9, C, C).astype(compute_dtype)          # tap k = 3*kh + kw
    b2 = b.reshape(1, C).astype(jnp.float32)

    cost = pl.CostEstimate(
        flops=2 * N * H * W * 9 * C * C,
        transcendentals=0,
        bytes_accessed=_nbytes(xpad, w9, b2) + N * H * W * C * x_nhwc.dtype.itemsize,
    )
    out = pl.pallas_call(
        _conv3x3_kernel,
        out_shape=jax.ShapeDtypeStruct((N, H * W, C), x_nhwc.dtype),
        grid_spec=pltpu.PrefetchScalarGridSpec(
            num_scalar_prefetch=0,
            grid=(N,),
            in_specs=[
                pl.BlockSpec((1, H + 2, W + 2, C), lambda n: (n, 0, 0, 0)),
                pl.BlockSpec((9, C, C), lambda n: (0, 0, 0)),
                pl.BlockSpec((1, C), lambda n: (0, 0)),
            ],
            out_specs=pl.BlockSpec((1, H * W, C), lambda n: (n, 0, 0)),
        ),
        compiler_params=pltpu.CompilerParams(
            dimension_semantics=("parallel",),
            vmem_limit_bytes=_VMEM_LIMIT_BYTES,
        ),
        cost_estimate=cost,
    )(xpad, w9, b2)
    return out.reshape(N, H, W, C)


def se_residual_relu(state_nhwc, initial_nhwc, se, *, compute_dtype):
    N, H, W, C = initial_nhwc.shape
    hidden = se["w1"].shape[1]
    state_flat = state_nhwc.reshape(N, H * W, C)
    init_flat = initial_nhwc.reshape(N, H * W, C)
    se_ops = _se_operands(se, compute_dtype)

    cost = pl.CostEstimate(
        flops=N * (2 * C * hidden + 4 * hidden * C + 4 * H * W * C),
        transcendentals=N * C,
        bytes_accessed=_nbytes(state_flat, init_flat, *se_ops)
        + N * H * W * C * initial_nhwc.dtype.itemsize,
    )
    out = pl.pallas_call(
        _se_res_relu_kernel,
        out_shape=jax.ShapeDtypeStruct((N, H * W, C), initial_nhwc.dtype),
        grid_spec=pltpu.PrefetchScalarGridSpec(
            num_scalar_prefetch=0,
            grid=(N,),
            in_specs=[
                pl.BlockSpec((1, H * W, C), lambda n: (n, 0, 0)),
                pl.BlockSpec((1, H * W, C), lambda n: (n, 0, 0)),
            ] + _se_specs(C, hidden),
            out_specs=pl.BlockSpec((1, H * W, C), lambda n: (n, 0, 0)),
        ),
        compiler_params=pltpu.CompilerParams(
            dimension_semantics=("parallel",),
            vmem_limit_bytes=_VMEM_LIMIT_BYTES,
        ),
        cost_estimate=cost,
    )(state_flat, init_flat, *se_ops)
    return out.reshape(N, H, W, C)


def leaf_block(x_nhwc, params, *, compute_dtype):
    N, H, W, C = x_nhwc.shape
    se = params["se"]
    hidden = se["w1"].shape[1]
    xpad = jnp.pad(x_nhwc, ((0, 0), (1, 1), (1, 1), (0, 0)))
    w9 = params["conv_w"].reshape(9, C, C).astype(compute_dtype)
    b2 = params["conv_b"].reshape(1, C).astype(jnp.float32)
    se_ops = _se_operands(se, compute_dtype)

    cost = pl.CostEstimate(
        flops=2 * N * H * W * 9 * C * C
        + N * (2 * C * hidden + 4 * hidden * C + 3 * H * W * C),
        transcendentals=N * C,
        bytes_accessed=_nbytes(xpad, w9, b2, *se_ops)
        + N * H * W * C * x_nhwc.dtype.itemsize,
    )
    out = pl.pallas_call(
        _leaf_block_kernel,
        out_shape=jax.ShapeDtypeStruct((N, H * W, C), x_nhwc.dtype),
        grid_spec=pltpu.PrefetchScalarGridSpec(
            num_scalar_prefetch=0,
            grid=(N,),
            in_specs=[
                pl.BlockSpec((1, H + 2, W + 2, C), lambda n: (n, 0, 0, 0)),
                pl.BlockSpec((9, C, C), lambda n: (0, 0, 0)),
                pl.BlockSpec((1, C), lambda n: (0, 0)),
            ] + _se_specs(C, hidden),
            out_specs=pl.BlockSpec((1, H * W, C), lambda n: (n, 0, 0)),
        ),
        compiler_params=pltpu.CompilerParams(
            dimension_semantics=("parallel",),
            vmem_limit_bytes=_VMEM_LIMIT_BYTES,
        ),
        cost_estimate=cost,
    )(xpad, w9, b2, *se_ops)
    return out.reshape(N, H, W, C)


# ---------------------------------------------------------------------------
# Parameter construction (deterministic, mirrors the recursive PyTorch module;
# the SE 2nd FC Linear(hidden, 2C) is stored pre-split as scale/bias halves).
# ---------------------------------------------------------------------------
def init_se_params(key, channels, squeeze_rate=4):
    hidden = int(channels // squeeze_rate)
    k1, k2, k3, k4, k5, k6 = jax.random.split(key, 6)
    return dict(
        w1=jax.random.normal(k1, (channels, hidden), jnp.float32) * 0.3,
        b1=jax.random.normal(k2, (1, hidden), jnp.float32) * 0.1,
        w2s=jax.random.normal(k3, (hidden, channels), jnp.float32) * 0.3,
        b2s=jax.random.normal(k4, (1, channels), jnp.float32) * 0.1,
        w2b=jax.random.normal(k5, (hidden, channels), jnp.float32) * 0.3,
        b2b=jax.random.normal(k6, (1, channels), jnp.float32) * 0.1,
    )


def init_rec_res_block(key, channels, n_blocks):
    kc, kb, kse, kl, kr = jax.random.split(key, 5)
    params = dict(
        conv_w=jax.random.normal(kc, (3, 3, channels, channels), jnp.float32)
        * (1.0 / (3.0 * (channels ** 0.5))),
        conv_b=jax.random.normal(kb, (channels,), jnp.float32) * 0.05,
        se=init_se_params(kse, channels),
        children=[],
    )
    if n_blocks > 1:
        params["children"] = [
            init_rec_res_block(kl, channels, int(n_blocks // 2)),
            init_rec_res_block(kr, channels, int(n_blocks - n_blocks // 2)),
        ]
    return params


# ---------------------------------------------------------------------------
# Forward pass (recursive, like the PyTorch module).
# ---------------------------------------------------------------------------
def rec_res_block_forward(params, x_nhwc, compute_dtype):
    if not params["children"]:
        # Leaf block: single fused kernel, no conv-output HBM round trip.
        return leaf_block(x_nhwc, params, compute_dtype=compute_dtype)
    initial = x_nhwc
    out = conv3x3_same(x_nhwc, params["conv_w"], params["conv_b"],
                       compute_dtype=compute_dtype)
    for child in params["children"]:
        out = rec_res_block_forward(child, out, compute_dtype)
    return se_residual_relu(out, initial, params["se"], compute_dtype=compute_dtype)


def rec_res_block_nchw(params, x_nchw, compute_dtype=jnp.bfloat16):
    x = jnp.transpose(x_nchw, (0, 2, 3, 1))        # NCHW -> NHWC
    y = rec_res_block_forward(params, x, compute_dtype)
    return jnp.transpose(y, (0, 3, 1, 2))          # NHWC -> NCHW


# ---------------------------------------------------------------------------
# Pure-JAX reference for the correctness asserts.
# ---------------------------------------------------------------------------
def _ref_forward(params, x_nhwc):
    C = x_nhwc.shape[-1]
    out = jax.lax.conv_general_dilated(
        x_nhwc, params["conv_w"], (1, 1), "SAME",
        dimension_numbers=("NHWC", "HWIO", "NHWC"),
    ) + params["conv_b"].reshape(1, 1, 1, C)
    for child in params["children"]:
        out = _ref_forward(child, out)
    se = params["se"]
    pooled = jnp.mean(out, axis=(1, 2))                         # (N, C)
    h = jnp.maximum(pooled @ se["w1"] + se["b1"], 0.0)
    z = jax.nn.sigmoid(h @ se["w2s"] + se["b2s"])[:, None, None, :]
    b = (h @ se["w2b"] + se["b2b"])[:, None, None, :]
    return jnp.maximum(x_nhwc * z + b + x_nhwc, 0.0)


if __name__ == "__main__":
    key = jax.random.PRNGKey(0)
    kx, kp = jax.random.split(key)

    N, C, H, W = 2, 8, 16, 16
    n_blocks = 2   # one recursion level: Sequential(Conv, Block(1), Block(1))

    x = jax.random.normal(kx, (N, C, H, W), jnp.float32)
    params = init_rec_res_block(kp, C, n_blocks)

    fwd = jax.jit(rec_res_block_nchw, static_argnames=("compute_dtype",))

    y_ref = jnp.transpose(
        _ref_forward(params, jnp.transpose(x, (0, 2, 3, 1))), (0, 3, 1, 2))

    # f32 compute path: tight correctness check against the pure-JAX reference.
    y_f32 = jax.block_until_ready(fwd(params, x, compute_dtype=jnp.float32))
    assert y_f32.shape == x.shape and y_f32.dtype == x.dtype
    assert jnp.allclose(y_f32, y_ref, atol=1e-4, rtol=1e-4), "f32 mismatch vs reference"

    # bf16 MXU operands with f32 accumulation: the fast default path.
    y_bf16 = jax.block_until_ready(fwd(params, x, compute_dtype=jnp.bfloat16))
    assert y_bf16.shape == x.shape and y_bf16.dtype == x.dtype
    assert jnp.allclose(y_bf16, y_ref, atol=2e-2, rtol=2e-2), "bf16 mismatch vs reference"

    print("KERNEL_OK")
</pallas_src>

<mosaic_0001>
module attributes {stable_mosaic.version = 11 : i64} {
  func.func @_conv3x3_kernel(%arg0: i32, %arg1: memref<1x18x18x8xf32, #tpu.memory_space<vmem>>, %arg2: memref<9x8x8xf32, #tpu.memory_space<vmem>>, %arg3: memref<1x8xf32, #tpu.memory_space<vmem>>, %arg4: memref<1x256x8xf32, #tpu.memory_space<vmem>>) attributes {dimension_semantics = [#tpu.dimension_semantics<parallel>], iteration_bounds = array<i64: 2>, scalar_prefetch = 0 : i64, scratch_operands = 0 : i64, tpu.core_type = #tpu.core_type<tc>, window_params = [{transform_indices = @transform_0, window_bounds = array<i64: 1, 18, 18, 8>}, {pipeline_mode = #tpu.pipeline_mode<synchronous>, transform_indices = @transform_1, window_bounds = array<i64: 9, 8, 8>}, {pipeline_mode = #tpu.pipeline_mode<synchronous>, transform_indices = @transform_2, window_bounds = array<i64: 1, 8>}, {transform_indices = @transform_3, window_bounds = array<i64: 1, 256, 8>}]} {
    %c0 = arith.constant 0 : index
    %c0_0 = arith.constant 0 : index
    %c0_1 = arith.constant 0 : index
    %c0_2 = arith.constant 0 : index
    %0 = vector.load %arg1[%c0, %c0_0, %c0_1, %c0_2] : memref<1x18x18x8xf32, #tpu.memory_space<vmem>>, vector<1x16x16x8xf32>
    %1 = vector.shape_cast %0 : vector<1x16x16x8xf32> to vector<16x16x8xf32>
    %2 = vector.shape_cast %1 : vector<16x16x8xf32> to vector<256x8xf32>
    %c0_3 = arith.constant 0 : index
    %c0_4 = arith.constant 0 : index
    %c0_5 = arith.constant 0 : index
    %3 = vector.load %arg2[%c0_3, %c0_4, %c0_5] : memref<9x8x8xf32, #tpu.memory_space<vmem>>, vector<1x8x8xf32>
    %4 = vector.shape_cast %3 : vector<1x8x8xf32> to vector<8x8xf32>
    %cst = arith.constant dense<0.000000e+00> : vector<256x8xf32>
    %5 = tpu.matmul %2, %4, %cst {dimension_numbers = #tpu.dot_dimension_numbers<[1], [0], [0], [1], [0, 0, 1, 1], [], []>} : vector<256x8xf32>, vector<8x8xf32>, vector<256x8xf32> -> vector<256x8xf32>
    %c0_6 = arith.constant 0 : index
    %c0_7 = arith.constant 0 : index
    %c1 = arith.constant 1 : index
    %c0_8 = arith.constant 0 : index
    %6 = vector.load %arg1[%c0_6, %c0_7, %c1, %c0_8] : memref<1x18x18x8xf32, #tpu.memory_space<vmem>>, vector<1x16x16x8xf32>
    %7 = vector.shape_cast %6 : vector<1x16x16x8xf32> to vector<16x16x8xf32>
    %8 = vector.shape_cast %7 : vector<16x16x8xf32> to vector<256x8xf32>
    %c1_9 = arith.constant 1 : index
    %c0_10 = arith.constant 0 : index
    %c0_11 = arith.constant 0 : index
    %9 = vector.load %arg2[%c1_9, %c0_10, %c0_11] : memref<9x8x8xf32, #tpu.memory_space<vmem>>, vector<1x8x8xf32>
    %10 = vector.shape_cast %9 : vector<1x8x8xf32> to vector<8x8xf32>
    %cst_12 = arith.constant dense<0.000000e+00> : vector<256x8xf32>
    %11 = tpu.matmul %8, %10, %cst_12 {dimension_numbers = #tpu.dot_dimension_numbers<[1], [0], [0], [1], [0, 0, 1, 1], [], []>} : vector<256x8xf32>, vector<8x8xf32>, vector<256x8xf32> -> vector<256x8xf32>
    %12 = arith.addf %5, %11 : vector<256x8xf32>
    %c0_13 = arith.constant 0 : index
    %c0_14 = arith.constant 0 : index
    %c2 = arith.constant 2 : index
    %c0_15 = arith.constant 0 : index
    %13 = vector.load %arg1[%c0_13, %c0_14, %c2, %c0_15] : memref<1x18x18x8xf32, #tpu.memory_space<vmem>>, vector<1x16x16x8xf32>
    %14 = vector.shape_cast %13 : vector<1x16x16x8xf32> to vector<16x16x8xf32>
    %15 = vector.shape_cast %14 : vector<16x16x8xf32> to vector<256x8xf32>
    %c2_16 = arith.constant 2 : index
    %c0_17 = arith.constant 0 : index
    %c0_18 = arith.constant 0 : index
    %16 = vector.load %arg2[%c2_16, %c0_17, %c0_18] : memref<9x8x8xf32, #tpu.memory_space<vmem>>, vector<1x8x8xf32>
    %17 = vector.shape_cast %16 : vector<1x8x8xf32> to vector<8x8xf32>
    %cst_19 = arith.constant dense<0.000000e+00> : vector<256x8xf32>
    %18 = tpu.matmul %15, %17, %cst_19 {dimension_numbers = #tpu.dot_dimension_numbers<[1], [0], [0], [1], [0, 0, 1, 1], [], []>} : vector<256x8xf32>, vector<8x8xf32>, vector<256x8xf32> -> vector<256x8xf32>
    %19 = arith.addf %12, %18 : vector<256x8xf32>
    %c0_20 = arith.constant 0 : index
    %c1_21 = arith.constant 1 : index
    %c0_22 = arith.constant 0 : index
    %c0_23 = arith.constant 0 : index
    %20 = vector.load %arg1[%c0_20, %c1_21, %c0_22, %c0_23] : memref<1x18x18x8xf32, #tpu.memory_space<vmem>>, vector<1x16x16x8xf32>
    %21 = vector.shape_cast %20 : vector<1x16x16x8xf32> to vector<16x16x8xf32>
    %22 = vector.shape_cast %21 : vector<16x16x8xf32> to vector<256x8xf32>
    %c3 = arith.constant 3 : index
    %c0_24 = arith.constant 0 : index
    %c0_25 = arith.constant 0 : index
    %23 = vector.load %arg2[%c3, %c0_24, %c0_25] : memref<9x8x8xf32, #tpu.memory_space<vmem>>, vector<1x8x8xf32>
    %24 = vector.shape_cast %23 : vector<1x8x8xf32> to vector<8x8xf32>
    %cst_26 = arith.constant dense<0.000000e+00> : vector<256x8xf32>
    %25 = tpu.matmul %22, %24, %cst_26 {dimension_numbers = #tpu.dot_dimension_numbers<[1], [0], [0], [1], [0, 0, 1, 1], [], []>} : vector<256x8xf32>, vector<8x8xf32>, vector<256x8xf32> -> vector<256x8xf32>
    %26 = arith.addf %19, %25 : vector<256x8xf32>
    %c0_27 = arith.constant 0 : index
    %c1_28 = arith.constant 1 : index
    %c1_29 = arith.constant 1 : index
    %c0_30 = arith.constant 0 : index
    %27 = vector.load %arg1[%c0_27, %c1_28, %c1_29, %c0_30] : memref<1x18x18x8xf32, #tpu.memory_space<vmem>>, vector<1x16x16x8xf32>
    %28 = vector.shape_cast %27 : vector<1x16x16x8xf32> to vector<16x16x8xf32>
    %29 = vector.shape_cast %28 : vector<16x16x8xf32> to vector<256x8xf32>
    %c4 = arith.constant 4 : index
    %c0_31 = arith.constant 0 : index
    %c0_32 = arith.constant 0 : index
    %30 = vector.load %arg2[%c4, %c0_31, %c0_32] : memref<9x8x8xf32, #tpu.memory_space<vmem>>, vector<1x8x8xf32>
    %31 = vector.shape_cast %30 : vector<1x8x8xf32> to vector<8x8xf32>
    %cst_33 = arith.constant dense<0.000000e+00> : vector<256x8xf32>
    %32 = tpu.matmul %29, %31, %cst_33 {dimension_numbers = #tpu.dot_dimension_numbers<[1], [0], [0], [1], [0, 0, 1, 1], [], []>} : vector<256x8xf32>, vector<8x8xf32>, vector<256x8xf32> -> vector<256x8xf32>
    %33 = arith.addf %26, %32 : vector<256x8xf32>
    %c0_34 = arith.constant 0 : index
    %c1_35 = arith.constant 1 : index
    %c2_36 = arith.constant 2 : index
    %c0_37 = arith.constant 0 : index
    %34 = vector.load %arg1[%c0_34, %c1_35, %c2_36, %c0_37] : memref<1x18x18x8xf32, #tpu.memory_space<vmem>>, vector<1x16x16x8xf32>
    %35 = vector.shape_cast %34 : vector<1x16x16x8xf32> to vector<16x16x8xf32>
    %36 = vector.shape_cast %35 : vector<16x16x8xf32> to vector<256x8xf32>
    %c5 = arith.constant 5 : index
    %c0_38 = arith.constant 0 : index
    %c0_39 = arith.constant 0 : index
    %37 = vector.load %arg2[%c5, %c0_38, %c0_39] : memref<9x8x8xf32, #tpu.memory_space<vmem>>, vector<1x8x8xf32>
    %38 = vector.shape_cast %37 : vector<1x8x8xf32> to vector<8x8xf32>
    %cst_40 = arith.constant dense<0.000000e+00> : vector<256x8xf32>
    %39 = tpu.matmul %36, %38, %cst_40 {dimension_numbers = #tpu.dot_dimension_numbers<[1], [0], [0], [1], [0, 0, 1, 1], [], []>} : vector<256x8xf32>, vector<8x8xf32>, vector<256x8xf32> -> vector<256x8xf32>
    %40 = arith.addf %33, %39 : vector<256x8xf32>
    %c0_41 = arith.constant 0 : index
    %c2_42 = arith.constant 2 : index
    %c0_43 = arith.constant 0 : index
    %c0_44 = arith.constant 0 : index
    %41 = vector.load %arg1[%c0_41, %c2_42, %c0_43, %c0_44] : memref<1x18x18x8xf32, #tpu.memory_space<vmem>>, vector<1x16x16x8xf32>
    %42 = vector.shape_cast %41 : vector<1x16x16x8xf32> to vector<16x16x8xf32>
    %43 = vector.shape_cast %42 : vector<16x16x8xf32> to vector<256x8xf32>
    %c6 = arith.constant 6 : index
    %c0_45 = arith.constant 0 : index
    %c0_46 = arith.constant 0 : index
    %44 = vector.load %arg2[%c6, %c0_45, %c0_46] : memref<9x8x8xf32, #tpu.memory_space<vmem>>, vector<1x8x8xf32>
    %45 = vector.shape_cast %44 : vector<1x8x8xf32> to vector<8x8xf32>
    %cst_47 = arith.constant dense<0.000000e+00> : vector<256x8xf32>
    %46 = tpu.matmul %43, %45, %cst_47 {dimension_numbers = #tpu.dot_dimension_numbers<[1], [0], [0], [1], [0, 0, 1, 1], [], []>} : vector<256x8xf32>, vector<8x8xf32>, vector<256x8xf32> -> vector<256x8xf32>
    %47 = arith.addf %40, %46 : vector<256x8xf32>
    %c0_48 = arith.constant 0 : index
    %c2_49 = arith.constant 2 : index
    %c1_50 = arith.constant 1 : index
    %c0_51 = arith.constant 0 : index
    %48 = vector.load %arg1[%c0_48, %c2_49, %c1_50, %c0_51] : memref<1x18x18x8xf32, #tpu.memory_space<vmem>>, vector<1x16x16x8xf32>
    %49 = vector.shape_cast %48 : vector<1x16x16x8xf32> to vector<16x16x8xf32>
    %50 = vector.shape_cast %49 : vector<16x16x8xf32> to vector<256x8xf32>
    %c7 = arith.constant 7 : index
    %c0_52 = arith.constant 0 : index
    %c0_53 = arith.constant 0 : index
    %51 = vector.load %arg2[%c7, %c0_52, %c0_53] : memref<9x8x8xf32, #tpu.memory_space<vmem>>, vector<1x8x8xf32>
    %52 = vector.shape_cast %51 : vector<1x8x8xf32> to vector<8x8xf32>
    %cst_54 = arith.constant dense<0.000000e+00> : vector<256x8xf32>
    %53 = tpu.matmul %50, %52, %cst_54 {dimension_numbers = #tpu.dot_dimension_numbers<[1], [0], [0], [1], [0, 0, 1, 1], [], []>} : vector<256x8xf32>, vector<8x8xf32>, vector<256x8xf32> -> vector<256x8xf32>
    %54 = arith.addf %47, %53 : vector<256x8xf32>
    %c0_55 = arith.constant 0 : index
    %c2_56 = arith.constant 2 : index
    %c2_57 = arith.constant 2 : index
    %c0_58 = arith.constant 0 : index
    %55 = vector.load %arg1[%c0_55, %c2_56, %c2_57, %c0_58] : memref<1x18x18x8xf32, #tpu.memory_space<vmem>>, vector<1x16x16x8xf32>
    %56 = vector.shape_cast %55 : vector<1x16x16x8xf32> to vector<16x16x8xf32>
    %57 = vector.shape_cast %56 : vector<16x16x8xf32> to vector<256x8xf32>
    %c8 = arith.constant 8 : index
    %c0_59 = arith.constant 0 : index
    %c0_60 = arith.constant 0 : index
    %58 = vector.load %arg2[%c8, %c0_59, %c0_60] : memref<9x8x8xf32, #tpu.memory_space<vmem>>, vector<1x8x8xf32>
    %59 = vector.shape_cast %58 : vector<1x8x8xf32> to vector<8x8xf32>
    %cst_61 = arith.constant dense<0.000000e+00> : vector<256x8xf32>
    %60 = tpu.matmul %57, %59, %cst_61 {dimension_numbers = #tpu.dot_dimension_numbers<[1], [0], [0], [1], [0, 0, 1, 1], [], []>} : vector<256x8xf32>, vector<8x8xf32>, vector<256x8xf32> -> vector<256x8xf32>
    %61 = arith.addf %54, %60 : vector<256x8xf32>
    %c0_62 = arith.constant 0 : index
    %c0_63 = arith.constant 0 : index
    %62 = vector.load %arg3[%c0_62, %c0_63] : memref<1x8xf32, #tpu.memory_space<vmem>>, vector<1x8xf32>
    %63 = vector.broadcast %62 : vector<1x8xf32> to vector<256x8xf32>
    %64 = arith.addf %61, %63 : vector<256x8xf32>
    %65 = vector.shape_cast %64 : vector<256x8xf32> to vector<1x256x8xf32>
    %c0_64 = arith.constant 0 : index
    %c0_65 = arith.constant 0 : index
    %c0_66 = arith.constant 0 : index
    %66 = vector.load %arg4[%c0_64, %c0_65, %c0_66] : memref<1x256x8xf32, #tpu.memory_space<vmem>>, vector<1x256x8xf32>
    tpu.vector_store %arg4[%c0_64, %c0_65, %c0_66], %65 {strides = array<i32>} : memref<1x256x8xf32, #tpu.memory_space<vmem>>, vector<1x256x8xf32>,
    return
  }
  func.func @transform_0(%arg0: i32) -> (i32, i32, i32, i32) {
    %c0_i32 = arith.constant 0 : i32
    %c0_i32_0 = arith.constant 0 : i32
    %c0_i32_1 = arith.constant 0 : i32
    %c0_i32_2 = arith.constant 0 : i32
    return %arg0, %c0_i32, %c0_i32_0, %c0_i32_1 : i32, i32, i32, i32
  }
  func.func @transform_1(%arg0: i32) -> (i32, i32, i32) {
    %c0_i32 = arith.constant 0 : i32
    %c0_i32_0 = arith.constant 0 : i32
    %c0_i32_1 = arith.constant 0 : i32
    %c0_i32_2 = arith.constant 0 : i32
    return %c0_i32, %c0_i32_0, %c0_i32_1 : i32, i32, i32
  }
  func.func @transform_2(%arg0: i32) -> (i32, i32) {
    %c0_i32 = arith.constant 0 : i32
    %c0_i32_0 = arith.constant 0 : i32
    %c0_i32_1 = arith.constant 0 : i32
    return %c0_i32, %c0_i32_0 : i32, i32
  }
  func.func @transform_3(%arg0: i32) -> (i32, i32, i32) {
    %c0_i32 = arith.constant 0 : i32
    %c0_i32_0 = arith.constant 0 : i32
    %c0_i32_1 = arith.constant 0 : i32
    return %arg0, %c0_i32, %c0_i32_0 : i32, i32, i32
  }
}

module attributes {stable_mosaic.version = 11 : i64} {
  func.func @_leaf_block_kernel(%arg0: i32, %arg1: memref<1x18x18x8xf32, #tpu.memory_space<vmem>>, %arg2: memref<9x8x8xf32, #tpu.memory_space<vmem>>, %arg3: memref<1x8xf32, #tpu.memory_space<vmem>>, %arg4: memref<8x2xf32, #tpu.memory_space<vmem>>, %arg5: memref<1x2xf32, #tpu.memory_space<vmem>>, %arg6: memref<2x8xf32, #tpu.memory_space<vmem>>, %arg7: memref<1x8xf32, #tpu.memory_space<vmem>>, %arg8: memref<2x8xf32, #tpu.memory_space<vmem>>, %arg9: memref<1x8xf32, #tpu.memory_space<vmem>>, %arg10: memref<1x256x8xf32, #tpu.memory_space<vmem>>) attributes {dimension_semantics = [#tpu.dimension_semantics<parallel>], iteration_bounds = array<i64: 2>, scalar_prefetch = 0 : i64, scratch_operands = 0 : i64, tpu.core_type = #tpu.core_type<tc>, window_params = [{transform_indices = @transform_0, window_bounds = array<i64: 1, 18, 18, 8>}, {pipeline_mode = #tpu.pipeline_mode<synchronous>, transform_indices = @transform_1, window_bounds = array<i64: 9, 8, 8>}, {pipeline_mode = #tpu.pipeline_mode<synchronous>, transform_indices = @transform_2, window_bounds = array<i64: 1, 8>}, {pipeline_mode = #tpu.pipeline_mode<synchronous>, transform_indices = @transform_3, window_bounds = array<i64: 8, 2>}, {pipeline_mode = #tpu.pipeline_mode<synchronous>, transform_indices = @transform_4, window_bounds = array<i64: 1, 2>}, {pipeline_mode = #tpu.pipeline_mode<synchronous>, transform_indices = @transform_5, window_bounds = array<i64: 2, 8>}, {pipeline_mode = #tpu.pipeline_mode<synchronous>, transform_indices = @transform_6, window_bounds = array<i64: 1, 8>}, {pipeline_mode = #tpu.pipeline_mode<synchronous>, transform_indices = @transform_7, window_bounds = array<i64: 2, 8>}, {pipeline_mode = #tpu.pipeline_mode<synchronous>, transform_indices = @transform_8, window_bounds = array<i64: 1, 8>}, {transform_indices = @transform_9, window_bounds = array<i64: 1, 256, 8>}]} {
    %c0 = arith.constant 0 : index
    %c0_0 = arith.constant 0 : index
    %c0_1 = arith.constant 0 : index
    %c0_2 = arith.constant 0 : index
    %0 = vector.load %arg1[%c0, %c0_0, %c0_1, %c0_2] : memref<1x18x18x8xf32, #tpu.memory_space<vmem>>, vector<1x16x16x8xf32>
    %1 = vector.shape_cast %0 : vector<1x16x16x8xf32> to vector<16x16x8xf32>
    %2 = vector.shape_cast %1 : vector<16x16x8xf32> to vector<256x8xf32>
    %c0_3 = arith.constant 0 : index
    %c0_4 = arith.constant 0 : index
    %c0_5 = arith.constant 0 : index
    %3 = vector.load %arg2[%c0_3, %c0_4, %c0_5] : memref<9x8x8xf32, #tpu.memory_space<vmem>>, vector<1x8x8xf32>
    %4 = vector.shape_cast %3 : vector<1x8x8xf32> to vector<8x8xf32>
    %cst = arith.constant dense<0.000000e+00> : vector<256x8xf32>
    %5 = tpu.matmul %2, %4, %cst {dimension_numbers = #tpu.dot_dimension_numbers<[1], [0], [0], [1], [0, 0, 1, 1], [], []>} : vector<256x8xf32>, vector<8x8xf32>, vector<256x8xf32> -> vector<256x8xf32>
    %c0_6 = arith.constant 0 : index
    %c0_7 = arith.constant 0 : index
    %c1 = arith.constant 1 : index
    %c0_8 = arith.constant 0 : index
    %6 = vector.load %arg1[%c0_6, %c0_7, %c1, %c0_8] : memref<1x18x18x8xf32, #tpu.memory_space<vmem>>, vector<1x16x16x8xf32>
    %7 = vector.shape_cast %6 : vector<1x16x16x8xf32> to vector<16x16x8xf32>
    %8 = vector.shape_cast %7 : vector<16x16x8xf32> to vector<256x8xf32>
    %c1_9 = arith.constant 1 : index
    %c0_10 = arith.constant 0 : index
    %c0_11 = arith.constant 0 : index
    %9 = vector.load %arg2[%c1_9, %c0_10, %c0_11] : memref<9x8x8xf32, #tpu.memory_space<vmem>>, vector<1x8x8xf32>
    %10 = vector.shape_cast %9 : vector<1x8x8xf32> to vector<8x8xf32>
    %cst_12 = arith.constant dense<0.000000e+00> : vector<256x8xf32>
    %11 = tpu.matmul %8, %10, %cst_12 {dimension_numbers = #tpu.dot_dimension_numbers<[1], [0], [0], [1], [0, 0, 1, 1], [], []>} : vector<256x8xf32>, vector<8x8xf32>, vector<256x8xf32> -> vector<256x8xf32>
    %12 = arith.addf %5, %11 : vector<256x8xf32>
    %c0_13 = arith.constant 0 : index
    %c0_14 = arith.constant 0 : index
    %c2 = arith.constant 2 : index
    %c0_15 = arith.constant 0 : index
    %13 = vector.load %arg1[%c0_13, %c0_14, %c2, %c0_15] : memref<1x18x18x8xf32, #tpu.memory_space<vmem>>, vector<1x16x16x8xf32>
    %14 = vector.shape_cast %13 : vector<1x16x16x8xf32> to vector<16x16x8xf32>
    %15 = vector.shape_cast %14 : vector<16x16x8xf32> to vector<256x8xf32>
    %c2_16 = arith.constant 2 : index
    %c0_17 = arith.constant 0 : index
    %c0_18 = arith.constant 0 : index
    %16 = vector.load %arg2[%c2_16, %c0_17, %c0_18] : memref<9x8x8xf32, #tpu.memory_space<vmem>>, vector<1x8x8xf32>
    %17 = vector.shape_cast %16 : vector<1x8x8xf32> to vector<8x8xf32>
    %cst_19 = arith.constant dense<0.000000e+00> : vector<256x8xf32>
    %18 = tpu.matmul %15, %17, %cst_19 {dimension_numbers = #tpu.dot_dimension_numbers<[1], [0], [0], [1], [0, 0, 1, 1], [], []>} : vector<256x8xf32>, vector<8x8xf32>, vector<256x8xf32> -> vector<256x8xf32>
    %19 = arith.addf %12, %18 : vector<256x8xf32>
    %c0_20 = arith.constant 0 : index
    %c1_21 = arith.constant 1 : index
    %c0_22 = arith.constant 0 : index
    %c0_23 = arith.constant 0 : index
    %20 = vector.load %arg1[%c0_20, %c1_21, %c0_22, %c0_23] : memref<1x18x18x8xf32, #tpu.memory_space<vmem>>, vector<1x16x16x8xf32>
    %21 = vector.shape_cast %20 : vector<1x16x16x8xf32> to vector<16x16x8xf32>
    %22 = vector.shape_cast %21 : vector<16x16x8xf32> to vector<256x8xf32>
    %c3 = arith.constant 3 : index
    %c0_24 = arith.constant 0 : index
    %c0_25 = arith.constant 0 : index
    %23 = vector.load %arg2[%c3, %c0_24, %c0_25] : memref<9x8x8xf32, #tpu.memory_space<vmem>>, vector<1x8x8xf32>
    %24 = vector.shape_cast %23 : vector<1x8x8xf32> to vector<8x8xf32>
    %cst_26 = arith.constant dense<0.000000e+00> : vector<256x8xf32>
    %25 = tpu.matmul %22, %24, %cst_26 {dimension_numbers = #tpu.dot_dimension_numbers<[1], [0], [0], [1], [0, 0, 1, 1], [], []>} : vector<256x8xf32>, vector<8x8xf32>, vector<256x8xf32> -> vector<256x8xf32>
    %26 = arith.addf %19, %25 : vector<256x8xf32>
    %c0_27 = arith.constant 0 : index
    %c1_28 = arith.constant 1 : index
    %c1_29 = arith.constant 1 : index
    %c0_30 = arith.constant 0 : index
    %27 = vector.load %arg1[%c0_27, %c1_28, %c1_29, %c0_30] : memref<1x18x18x8xf32, #tpu.memory_space<vmem>>, vector<1x16x16x8xf32>
    %28 = vector.shape_cast %27 : vector<1x16x16x8xf32> to vector<16x16x8xf32>
    %29 = vector.shape_cast %28 : vector<16x16x8xf32> to vector<256x8xf32>
    %c4 = arith.constant 4 : index
    %c0_31 = arith.constant 0 : index
    %c0_32 = arith.constant 0 : index
    %30 = vector.load %arg2[%c4, %c0_31, %c0_32] : memref<9x8x8xf32, #tpu.memory_space<vmem>>, vector<1x8x8xf32>
    %31 = vector.shape_cast %30 : vector<1x8x8xf32> to vector<8x8xf32>
    %cst_33 = arith.constant dense<0.000000e+00> : vector<256x8xf32>
    %32 = tpu.matmul %29, %31, %cst_33 {dimension_numbers = #tpu.dot_dimension_numbers<[1], [0], [0], [1], [0, 0, 1, 1], [], []>} : vector<256x8xf32>, vector<8x8xf32>, vector<256x8xf32> -> vector<256x8xf32>
    %33 = arith.addf %26, %32 : vector<256x8xf32>
    %c0_34 = arith.constant 0 : index
    %c1_35 = arith.constant 1 : index
    %c2_36 = arith.constant 2 : index
    %c0_37 = arith.constant 0 : index
    %34 = vector.load %arg1[%c0_34, %c1_35, %c2_36, %c0_37] : memref<1x18x18x8xf32, #tpu.memory_space<vmem>>, vector<1x16x16x8xf32>
    %35 = vector.shape_cast %34 : vector<1x16x16x8xf32> to vector<16x16x8xf32>
    %36 = vector.shape_cast %35 : vector<16x16x8xf32> to vector<256x8xf32>
    %c5 = arith.constant 5 : index
    %c0_38 = arith.constant 0 : index
    %c0_39 = arith.constant 0 : index
    %37 = vector.load %arg2[%c5, %c0_38, %c0_39] : memref<9x8x8xf32, #tpu.memory_space<vmem>>, vector<1x8x8xf32>
    %38 = vector.shape_cast %37 : vector<1x8x8xf32> to vector<8x8xf32>
    %cst_40 = arith.constant dense<0.000000e+00> : vector<256x8xf32>
    %39 = tpu.matmul %36, %38, %cst_40 {dimension_numbers = #tpu.dot_dimension_numbers<[1], [0], [0], [1], [0, 0, 1, 1], [], []>} : vector<256x8xf32>, vector<8x8xf32>, vector<256x8xf32> -> vector<256x8xf32>
    %40 = arith.addf %33, %39 : vector<256x8xf32>
    %c0_41 = arith.constant 0 : index
    %c2_42 = arith.constant 2 : index
    %c0_43 = arith.constant 0 : index
    %c0_44 = arith.constant 0 : index
    %41 = vector.load %arg1[%c0_41, %c2_42, %c0_43, %c0_44] : memref<1x18x18x8xf32, #tpu.memory_space<vmem>>, vector<1x16x16x8xf32>
    %42 = vector.shape_cast %41 : vector<1x16x16x8xf32> to vector<16x16x8xf32>
    %43 = vector.shape_cast %42 : vector<16x16x8xf32> to vector<256x8xf32>
    %c6 = arith.constant 6 : index
    %c0_45 = arith.constant 0 : index
    %c0_46 = arith.constant 0 : index
    %44 = vector.load %arg2[%c6, %c0_45, %c0_46] : memref<9x8x8xf32, #tpu.memory_space<vmem>>, vector<1x8x8xf32>
    %45 = vector.shape_cast %44 : vector<1x8x8xf32> to vector<8x8xf32>
    %cst_47 = arith.constant dense<0.000000e+00> : vector<256x8xf32>
    %46 = tpu.matmul %43, %45, %cst_47 {dimension_numbers = #tpu.dot_dimension_numbers<[1], [0], [0], [1], [0, 0, 1, 1], [], []>} : vector<256x8xf32>, vector<8x8xf32>, vector<256x8xf32> -> vector<256x8xf32>
    %47 = arith.addf %40, %46 : vector<256x8xf32>
    %c0_48 = arith.constant 0 : index
    %c2_49 = arith.constant 2 : index
    %c1_50 = arith.constant 1 : index
    %c0_51 = arith.constant 0 : index
    %48 = vector.load %arg1[%c0_48, %c2_49, %c1_50, %c0_51] : memref<1x18x18x8xf32, #tpu.memory_space<vmem>>, vector<1x16x16x8xf32>
    %49 = vector.shape_cast %48 : vector<1x16x16x8xf32> to vector<16x16x8xf32>
    %50 = vector.shape_cast %49 : vector<16x16x8xf32> to vector<256x8xf32>
    %c7 = arith.constant 7 : index
    %c0_52 = arith.constant 0 : index
    %c0_53 = arith.constant 0 : index
    %51 = vector.load %arg2[%c7, %c0_52, %c0_53] : memref<9x8x8xf32, #tpu.memory_space<vmem>>, vector<1x8x8xf32>
    %52 = vector.shape_cast %51 : vector<1x8x8xf32> to vector<8x8xf32>
    %cst_54 = arith.constant dense<0.000000e+00> : vector<256x8xf32>
    %53 = tpu.matmul %50, %52, %cst_54 {dimension_numbers = #tpu.dot_dimension_numbers<[1], [0], [0], [1], [0, 0, 1, 1], [], []>} : vector<256x8xf32>, vector<8x8xf32>, vector<256x8xf32> -> vector<256x8xf32>
    %54 = arith.addf %47, %53 : vector<256x8xf32>
    %c0_55 = arith.constant 0 : index
    %c2_56 = arith.constant 2 : index
    %c2_57 = arith.constant 2 : index
    %c0_58 = arith.constant 0 : index
    %55 = vector.load %arg1[%c0_55, %c2_56, %c2_57, %c0_58] : memref<1x18x18x8xf32, #tpu.memory_space<vmem>>, vector<1x16x16x8xf32>
    %56 = vector.shape_cast %55 : vector<1x16x16x8xf32> to vector<16x16x8xf32>
    %57 = vector.shape_cast %56 : vector<16x16x8xf32> to vector<256x8xf32>
    %c8 = arith.constant 8 : index
    %c0_59 = arith.constant 0 : index
    %c0_60 = arith.constant 0 : index
    %58 = vector.load %arg2[%c8, %c0_59, %c0_60] : memref<9x8x8xf32, #tpu.memory_space<vmem>>, vector<1x8x8xf32>
    %59 = vector.shape_cast %58 : vector<1x8x8xf32> to vector<8x8xf32>
    %cst_61 = arith.constant dense<0.000000e+00> : vector<256x8xf32>
    %60 = tpu.matmul %57, %59, %cst_61 {dimension_numbers = #tpu.dot_dimension_numbers<[1], [0], [0], [1], [0, 0, 1, 1], [], []>} : vector<256x8xf32>, vector<8x8xf32>, vector<256x8xf32> -> vector<256x8xf32>
    %61 = arith.addf %54, %60 : vector<256x8xf32>
    %cst_62 = arith.constant dense<0.000000e+00> : vector<8xf32>
    %62 = vector.multi_reduction <add>, %61, %cst_62 [0] : vector<256x8xf32> to vector<8xf32>
    %63 = vector.shape_cast %62 : vector<8xf32> to vector<1x8xf32>
    %cst_63 = arith.constant 3.906250e-03 : f32
    %64 = vector.broadcast %cst_63 : f32 to vector<1x8xf32>
    %65 = arith.mulf %63, %64 : vector<1x8xf32>
    %c0_64 = arith.constant 0 : index
    %c0_65 = arith.constant 0 : index
    %66 = vector.load %arg3[%c0_64, %c0_65] : memref<1x8xf32, #tpu.memory_space<vmem>>, vector<1x8xf32>
    %67 = arith.addf %65, %66 : vector<1x8xf32>
    %c0_66 = arith.constant 0 : index
    %c0_67 = arith.constant 0 : index
    %68 = vector.load %arg4[%c0_66, %c0_67] : memref<8x2xf32, #tpu.memory_space<vmem>>, vector<8x2xf32>
    %cst_68 = arith.constant dense<0.000000e+00> : vector<1x2xf32>
    %69 = tpu.matmul %67, %68, %cst_68 {dimension_numbers = #tpu.dot_dimension_numbers<[1], [0], [0], [1], [0, 0, 1, 1], [], []>} : vector<1x8xf32>, vector<8x2xf32>, vector<1x2xf32> -> vector<1x2xf32>
    %c0_69 = arith.constant 0 : index
    %c0_70 = arith.constant 0 : index
    %70 = vector.load %arg5[%c0_69, %c0_70] : memref<1x2xf32, #tpu.memory_space<vmem>>, vector<1x2xf32>
    %71 = arith.addf %69, %70 : vector<1x2xf32>
    %cst_71 = arith.constant 0.000000e+00 : f32
    %72 = vector.broadcast %cst_71 : f32 to vector<1x2xf32>
    %73 = arith.maximumf %71, %72 : vector<1x2xf32>
    %c0_72 = arith.constant 0 : index
    %c0_73 = arith.constant 0 : index
    %74 = vector.load %arg6[%c0_72, %c0_73] : memref<2x8xf32, #tpu.memory_space<vmem>>, vector<2x8xf32>
    %cst_74 = arith.constant dense<0.000000e+00> : vector<1x8xf32>
    %75 = tpu.matmul %73, %74, %cst_74 {dimension_numbers = #tpu.dot_dimension_numbers<[1], [0], [0], [1], [0, 0, 1, 1], [], []>} : vector<1x2xf32>, vector<2x8xf32>, vector<1x8xf32> -> vector<1x8xf32>
    %c0_75 = arith.constant 0 : index
    %c0_76 = arith.constant 0 : index
    %76 = vector.load %arg7[%c0_75, %c0_76] : memref<1x8xf32, #tpu.memory_space<vmem>>, vector<1x8xf32>
    %77 = arith.addf %75, %76 : vector<1x8xf32>
    %c0_77 = arith.constant 0 : index
    %c0_78 = arith.constant 0 : index
    %78 = vector.load %arg8[%c0_77, %c0_78] : memref<2x8xf32, #tpu.memory_space<vmem>>, vector<2x8xf32>
    %cst_79 = arith.constant dense<0.000000e+00> : vector<1x8xf32>
    %79 = tpu.matmul %73, %78, %cst_79 {dimension_numbers = #tpu.dot_dimension_numbers<[1], [0], [0], [1], [0, 0, 1, 1], [], []>} : vector<1x2xf32>, vector<2x8xf32>, vector<1x8xf32> -> vector<1x8xf32>
    %c0_80 = arith.constant 0 : index
    %c0_81 = arith.constant 0 : index
    %80 = vector.load %arg9[%c0_80, %c0_81] : memref<1x8xf32, #tpu.memory_space<vmem>>, vector<1x8xf32>
    %81 = arith.addf %79, %80 : vector<1x8xf32>
    %82 = arith.negf %77 : vector<1x8xf32>
    %83 = math.exp %82 : vector<1x8xf32>
    %cst_82 = arith.constant 1.000000e+00 : f32
    %84 = vector.broadcast %cst_82 : f32 to vector<1x8xf32>
    %85 = arith.addf %84, %83 : vector<1x8xf32>
    %86 = arith.divf %84, %85 : vector<1x8xf32>
    %cst_83 = arith.constant 1.000000e+00 : f32
    %87 = vector.broadcast %cst_83 : f32 to vector<1x8xf32>
    %88 = arith.addf %87, %86 : vector<1x8xf32>
    %c0_84 = arith.constant 0 : index
    %c1_85 = arith.constant 1 : index
    %c1_86 = arith.constant 1 : index
    %c0_87 = arith.constant 0 : index
    %89 = vector.load %arg1[%c0_84, %c1_85, %c1_86, %c0_87] : memref<1x18x18x8xf32, #tpu.memory_space<vmem>>, vector<1x16x16x8xf32>
    %90 = vector.shape_cast %89 : vector<1x16x16x8xf32> to vector<16x16x8xf32>
    %91 = vector.shape_cast %90 : vector<16x16x8xf32> to vector<256x8xf32>
    %92 = vector.broadcast %88 : vector<1x8xf32> to vector<256x8xf32>
    %93 = arith.mulf %91, %92 : vector<256x8xf32>
    %94 = vector.broadcast %81 : vector<1x8xf32> to vector<256x8xf32>
    %95 = arith.addf %93, %94 : vector<256x8xf32>
    %cst_88 = arith.constant 0.000000e+00 : f32
    %96 = vector.broadcast %cst_88 : f32 to vector<256x8xf32>
    %97 = arith.maximumf %95, %96 : vector<256x8xf32>
    %98 = vector.shape_cast %97 : vector<256x8xf32> to vector<1x256x8xf32>
    %c0_89 = arith.constant 0 : index
    %c0_90 = arith.constant 0 : index
    %c0_91 = arith.constant 0 : index
    %99 = vector.load %arg10[%c0_89, %c0_90, %c0_91] : memref<1x256x8xf32, #tpu.memory_space<vmem>>, vector<1x256x8xf32>
    tpu.vector_store %arg10[%c0_89, %c0_90, %c0_91], %98 {strides = array<i32>} : memref<1x256x8xf32, #tpu.memory_space<vmem>>, vector<1x256x8xf32>,
    return
  }
  func.func @transform_0(%arg0: i32) -> (i32, i32, i32, i32) {
    %c0_i32 = arith.constant 0 : i32
    %c0_i32_0 = arith.constant 0 : i32
    %c0_i32_1 = arith.constant 0 : i32
    %c0_i32_2 = arith.constant 0 : i32
    return %arg0, %c0_i32, %c0_i32_0, %c0_i32_1 : i32, i32, i32, i32
  }
  func.func @transform_1(%arg0: i32) -> (i32, i32, i32) {
    %c0_i32 = arith.constant 0 : i32
    %c0_i32_0 = arith.constant 0 : i32
    %c0_i32_1 = arith.constant 0 : i32
    %c0_i32_2 = arith.constant 0 : i32
    return %c0_i32, %c0_i32_0, %c0_i32_1 : i32, i32, i32
  }
  func.func @transform_2(%arg0: i32) -> (i32, i32) {
    %c0_i32 = arith.constant 0 : i32
    %c0_i32_0 = arith.constant 0 : i32
    %c0_i32_1 = arith.constant 0 : i32
    return %c0_i32, %c0_i32_0 : i32, i32
  }
  func.func @transform_3(%arg0: i32) -> (i32, i32) {
    %c0_i32 = arith.constant 0 : i32
    %c0_i32_0 = arith.constant 0 : i32
    %c0_i32_1 = arith.constant 0 : i32
    return %c0_i32, %c0_i32_0 : i32, i32
  }
  func.func @transform_4(%arg0: i32) -> (i32, i32) {
    %c0_i32 = arith.constant 0 : i32
    %c0_i32_0 = arith.constant 0 : i32
    %c0_i32_1 = arith.constant 0 : i32
    return %c0_i32, %c0_i32_0 : i32, i32
  }
  func.func @transform_5(%arg0: i32) -> (i32, i32) {
    %c0_i32 = arith.constant 0 : i32
    %c0_i32_0 = arith.constant 0 : i32
    %c0_i32_1 = arith.constant 0 : i32
    return %c0_i32, %c0_i32_0 : i32, i32
  }
  func.func @transform_6(%arg0: i32) -> (i32, i32) {
    %c0_i32 = arith.constant 0 : i32
    %c0_i32_0 = arith.constant 0 : i32
    %c0_i32_1 = arith.constant 0 : i32
    return %c0_i32, %c0_i32_0 : i32, i32
  }
  func.func @transform_7(%arg0: i32) -> (i32, i32) {
    %c0_i32 = arith.constant 0 : i32
    %c0_i32_0 = arith.constant 0 : i32
    %c0_i32_1 = arith.constant 0 : i32
    return %c0_i32, %c0_i32_0 : i32, i32
  }
  func.func @transform_8(%arg0: i32) -> (i32, i32) {
    %c0_i32 = arith.constant 0 : i32
    %c0_i32_0 = arith.constant 0 : i32
    %c0_i32_1 = arith.constant 0 : i32
    return %c0_i32, %c0_i32_0 : i32, i32
  }
  func.func @transform_9(%arg0: i32) -> (i32, i32, i32) {
    %c0_i32 = arith.constant 0 : i32
    %c0_i32_0 = arith.constant 0 : i32
    %c0_i32_1 = arith.constant 0 : i32
    return %arg0, %c0_i32, %c0_i32_0 : i32, i32, i32
  }
}

module attributes {stable_mosaic.version = 11 : i64} {
  func.func @_se_res_relu_kernel(%arg0: i32, %arg1: memref<1x256x8xf32, #tpu.memory_space<vmem>>, %arg2: memref<1x256x8xf32, #tpu.memory_space<vmem>>, %arg3: memref<8x2xf32, #tpu.memory_space<vmem>>, %arg4: memref<1x2xf32, #tpu.memory_space<vmem>>, %arg5: memref<2x8xf32, #tpu.memory_space<vmem>>, %arg6: memref<1x8xf32, #tpu.memory_space<vmem>>, %arg7: memref<2x8xf32, #tpu.memory_space<vmem>>, %arg8: memref<1x8xf32, #tpu.memory_space<vmem>>, %arg9: memref<1x256x8xf32, #tpu.memory_space<vmem>>) attributes {dimension_semantics = [#tpu.dimension_semantics<parallel>], iteration_bounds = array<i64: 2>, scalar_prefetch = 0 : i64, scratch_operands = 0 : i64, tpu.core_type = #tpu.core_type<tc>, window_params = [{transform_indices = @transform_0, window_bounds = array<i64: 1, 256, 8>}, {transform_indices = @transform_1, window_bounds = array<i64: 1, 256, 8>}, {pipeline_mode = #tpu.pipeline_mode<synchronous>, transform_indices = @transform_2, window_bounds = array<i64: 8, 2>}, {pipeline_mode = #tpu.pipeline_mode<synchronous>, transform_indices = @transform_3, window_bounds = array<i64: 1, 2>}, {pipeline_mode = #tpu.pipeline_mode<synchronous>, transform_indices = @transform_4, window_bounds = array<i64: 2, 8>}, {pipeline_mode = #tpu.pipeline_mode<synchronous>, transform_indices = @transform_5, window_bounds = array<i64: 1, 8>}, {pipeline_mode = #tpu.pipeline_mode<synchronous>, transform_indices = @transform_6, window_bounds = array<i64: 2, 8>}, {pipeline_mode = #tpu.pipeline_mode<synchronous>, transform_indices = @transform_7, window_bounds = array<i64: 1, 8>}, {transform_indices = @transform_8, window_bounds = array<i64: 1, 256, 8>}]} {
    %c0 = arith.constant 0 : index
    %c0_0 = arith.constant 0 : index
    %c0_1 = arith.constant 0 : index
    %0 = vector.load %arg1[%c0, %c0_0, %c0_1] : memref<1x256x8xf32, #tpu.memory_space<vmem>>, vector<1x256x8xf32>
    %1 = vector.shape_cast %0 : vector<1x256x8xf32> to vector<256x8xf32>
    %cst = arith.constant dense<0.000000e+00> : vector<8xf32>
    %2 = vector.multi_reduction <add>, %1, %cst [0] : vector<256x8xf32> to vector<8xf32>
    %3 = vector.shape_cast %2 : vector<8xf32> to vector<1x8xf32>
    %cst_2 = arith.constant 3.906250e-03 : f32
    %4 = vector.broadcast %cst_2 : f32 to vector<1x8xf32>
    %5 = arith.mulf %3, %4 : vector<1x8xf32>
    %c0_3 = arith.constant 0 : index
    %c0_4 = arith.constant 0 : index
    %6 = vector.load %arg3[%c0_3, %c0_4] : memref<8x2xf32, #tpu.memory_space<vmem>>, vector<8x2xf32>
    %cst_5 = arith.constant dense<0.000000e+00> : vector<1x2xf32>
    %7 = tpu.matmul %5, %6, %cst_5 {dimension_numbers = #tpu.dot_dimension_numbers<[1], [0], [0], [1], [0, 0, 1, 1], [], []>} : vector<1x8xf32>, vector<8x2xf32>, vector<1x2xf32> -> vector<1x2xf32>
    %c0_6 = arith.constant 0 : index
    %c0_7 = arith.constant 0 : index
    %8 = vector.load %arg4[%c0_6, %c0_7] : memref<1x2xf32, #tpu.memory_space<vmem>>, vector<1x2xf32>
    %9 = arith.addf %7, %8 : vector<1x2xf32>
    %cst_8 = arith.constant 0.000000e+00 : f32
    %10 = vector.broadcast %cst_8 : f32 to vector<1x2xf32>
    %11 = arith.maximumf %9, %10 : vector<1x2xf32>
    %c0_9 = arith.constant 0 : index
    %c0_10 = arith.constant 0 : index
    %12 = vector.load %arg5[%c0_9, %c0_10] : memref<2x8xf32, #tpu.memory_space<vmem>>, vector<2x8xf32>
    %cst_11 = arith.constant dense<0.000000e+00> : vector<1x8xf32>
    %13 = tpu.matmul %11, %12, %cst_11 {dimension_numbers = #tpu.dot_dimension_numbers<[1], [0], [0], [1], [0, 0, 1, 1], [], []>} : vector<1x2xf32>, vector<2x8xf32>, vector<1x8xf32> -> vector<1x8xf32>
    %c0_12 = arith.constant 0 : index
    %c0_13 = arith.constant 0 : index
    %14 = vector.load %arg6[%c0_12, %c0_13] : memref<1x8xf32, #tpu.memory_space<vmem>>, vector<1x8xf32>
    %15 = arith.addf %13, %14 : vector<1x8xf32>
    %c0_14 = arith.constant 0 : index
    %c0_15 = arith.constant 0 : index
    %16 = vector.load %arg7[%c0_14, %c0_15] : memref<2x8xf32, #tpu.memory_space<vmem>>, vector<2x8xf32>
    %cst_16 = arith.constant dense<0.000000e+00> : vector<1x8xf32>
    %17 = tpu.matmul %11, %16, %cst_16 {dimension_numbers = #tpu.dot_dimension_numbers<[1], [0], [0], [1], [0, 0, 1, 1], [], []>} : vector<1x2xf32>, vector<2x8xf32>, vector<1x8xf32> -> vector<1x8xf32>
    %c0_17 = arith.constant 0 : index
    %c0_18 = arith.constant 0 : index
    %18 = vector.load %arg8[%c0_17, %c0_18] : memref<1x8xf32, #tpu.memory_space<vmem>>, vector<1x8xf32>
    %19 = arith.addf %17, %18 : vector<1x8xf32>
    %20 = arith.negf %15 : vector<1x8xf32>
    %21 = math.exp %20 : vector<1x8xf32>
    %cst_19 = arith.constant 1.000000e+00 : f32
    %22 = vector.broadcast %cst_19 : f32 to vector<1x8xf32>
    %23 = arith.addf %22, %21 : vector<1x8xf32>
    %24 = arith.divf %22, %23 : vector<1x8xf32>
    %cst_20 = arith.constant 1.000000e+00 : f32
    %25 = vector.broadcast %cst_20 : f32 to vector<1x8xf32>
    %26 = arith.addf %25, %24 : vector<1x8xf32>
    %c0_21 = arith.constant 0 : index
    %c0_22 = arith.constant 0 : index
    %c0_23 = arith.constant 0 : index
    %27 = vector.load %arg2[%c0_21, %c0_22, %c0_23] : memref<1x256x8xf32, #tpu.memory_space<vmem>>, vector<1x256x8xf32>
    %28 = vector.shape_cast %27 : vector<1x256x8xf32> to vector<256x8xf32>
    %29 = vector.broadcast %26 : vector<1x8xf32> to vector<256x8xf32>
    %30 = arith.mulf %28, %29 : vector<256x8xf32>
    %31 = vector.broadcast %19 : vector<1x8xf32> to vector<256x8xf32>
    %32 = arith.addf %30, %31 : vector<256x8xf32>
    %cst_24 = arith.constant 0.000000e+00 : f32
    %33 = vector.broadcast %cst_24 : f32 to vector<256x8xf32>
    %34 = arith.maximumf %32, %33 : vector<256x8xf32>
    %35 = vector.shape_cast %34 : vector<256x8xf32> to vector<1x256x8xf32>
    %c0_25 = arith.constant 0 : index
    %c0_26 = arith.constant 0 : index
    %c0_27 = arith.constant 0 : index
    %36 = vector.load %arg9[%c0_25, %c0_26, %c0_27] : memref<1x256x8xf32, #tpu.memory_space<vmem>>, vector<1x256x8xf32>
    tpu.vector_store %arg9[%c0_25, %c0_26, %c0_27], %35 {strides = array<i32>} : memref<1x256x8xf32, #tpu.memory_space<vmem>>, vector<1x256x8xf32>,
    return
  }
  func.func @transform_0(%arg0: i32) -> (i32, i32, i32) {
    %c0_i32 = arith.constant 0 : i32
    %c0_i32_0 = arith.constant 0 : i32
    %c0_i32_1 = arith.constant 0 : i32
    return %arg0, %c0_i32, %c0_i32_0 : i32, i32, i32
  }
  func.func @transform_1(%arg0: i32) -> (i32, i32, i32) {
    %c0_i32 = arith.constant 0 : i32
    %c0_i32_0 = arith.constant 0 : i32
    %c0_i32_1 = arith.constant 0 : i32
    return %arg0, %c0_i32, %c0_i32_0 : i32, i32, i32
  }
  func.func @transform_2(%arg0: i32) -> (i32, i32) {
    %c0_i32 = arith.constant 0 : i32
    %c0_i32_0 = arith.constant 0 : i32
    %c0_i32_1 = arith.constant 0 : i32
    return %c0_i32, %c0_i32_0 : i32, i32
  }
  func.func @transform_3(%arg0: i32) -> (i32, i32) {
    %c0_i32 = arith.constant 0 : i32
    %c0_i32_0 = arith.constant 0 : i32
    %c0_i32_1 = arith.constant 0 : i32
    return %c0_i32, %c0_i32_0 : i32, i32
  }
  func.func @transform_4(%arg0: i32) -> (i32, i32) {
    %c0_i32 = arith.constant 0 : i32
    %c0_i32_0 = arith.constant 0 : i32
    %c0_i32_1 = arith.constant 0 : i32
    return %c0_i32, %c0_i32_0 : i32, i32
  }
  func.func @transform_5(%arg0: i32) -> (i32, i32) {
    %c0_i32 = arith.constant 0 : i32
    %c0_i32_0 = arith.constant 0 : i32
    %c0_i32_1 = arith.constant 0 : i32
    return %c0_i32, %c0_i32_0 : i32, i32
  }
  func.func @transform_6(%arg0: i32) -> (i32, i32) {
    %c0_i32 = arith.constant 0 : i32
    %c0_i32_0 = arith.constant 0 : i32
    %c0_i32_1 = arith.constant 0 : i32
    return %c0_i32, %c0_i32_0 : i32, i32
  }
  func.func @transform_7(%arg0: i32) -> (i32, i32) {
    %c0_i32 = arith.constant 0 : i32
    %c0_i32_0 = arith.constant 0 : i32
    %c0_i32_1 = arith.constant 0 : i32
    return %c0_i32, %c0_i32_0 : i32, i32
  }
  func.func @transform_8(%arg0: i32) -> (i32, i32, i32) {
    %c0_i32 = arith.constant 0 : i32
    %c0_i32_0 = arith.constant 0 : i32
    %c0_i32_1 = arith.constant 0 : i32
    return %arg0, %c0_i32, %c0_i32_0 : i32, i32, i32
  }
}

</mosaic_0001>

<llo_original>
// kernel: rec_res_block_nchw.7
$region0: #{rec_res_block_nchw.7}
  #allocation0 [shape = 'u32[]', space=smem, size = 0x4, offset = 0x4, fixed_abs, tag = 'smem constant byte address 0x4 - core index']
  #allocation1 [shape = 'u32[144,128]{1,0:T(1,128)}', space=vmem, size = 0x12000, scoped, tag = 'internal scratch']
  %s0 = inlined_call_operand.vmem [shape: f32[2,256,8], index: 0, kind: input, shape index: {}]
  %s1 = inlined_call_operand.vmem [shape: f32[2,256,8], index: 1, kind: input, shape index: {}]
  %s2 = inlined_call_operand.vmem [shape: f32[8,2], index: 2, kind: input, shape index: {}]
  %s3 = inlined_call_operand.vmem [shape: f32[1,2], index: 3, kind: input, shape index: {}]
  %s4 = inlined_call_operand.vmem [shape: f32[2,8], index: 4, kind: input, shape index: {}]
  %s5 = inlined_call_operand.vmem [shape: f32[1,8], index: 5, kind: input, shape index: {}]
  %s6 = inlined_call_operand.vmem [shape: f32[2,8], index: 6, kind: input, shape index: {}]
  %s7 = inlined_call_operand.vmem [shape: f32[1,8], index: 7, kind: input, shape index: {}]
  %s8 = inlined_call_operand.vmem [shape: f32[2,256,8], index: 8, kind: output, shape index: {}]
  %s9 = sld [smem:[#allocation0]]
  $region65: #{rec_res_block_nchw.7} parent=0
    _
  %s11 = ssub.s32 1, %s9
  %s12 = scalar_select 0, %s11, %s9
  loop: start=0, step=1, limit=4
  $region2: #{rec_res_block_nchw.7} parent=0 // loop_pre_header
    _
  $region3: #{rec_res_block_nchw.7} parent=0 // loop_header
    %s14 = sphi 0, %s18
    %p15 = scmp.ge.s32.totalorder %s14, 4
    %s24 = sphi 0, %s26
    %s27 = sphi 0, %s24
    %s28 = sphi 0, %s27
    %s44 = sphi 0, %s28
    %s50 = sphi 0, %s52
    %s53 = sphi 0, %s50
    %s54 = sphi 0, %s53
    %s70 = sphi 0, %s54
    %s74 = sphi 0, %s74
    %s76 = sphi 0, %s74
    %s77 = sphi 0, %s76
    %s91 = sphi 0, %s77
    %s95 = sphi 0, %s95
    %s97 = sphi 0, %s95
    %s98 = sphi 0, %s97
    %s112 = sphi 0, %s98
    %s116 = sphi 0, %s116
    %s118 = sphi 0, %s116
    %s119 = sphi 0, %s118
    %s133 = sphi 0, %s119
    %s137 = sphi 0, %s137
    %s139 = sphi 0, %s137
    %s140 = sphi 0, %s139
    %s154 = sphi 0, %s140
    %s158 = sphi 0, %s158
    %s160 = sphi 0, %s158
    %s161 = sphi 0, %s160
    %s175 = sphi 0, %s161
    %s179 = sphi 0, %s179
    %s181 = sphi 0, %s179
    %s182 = sphi 0, %s181
    %s196 = sphi 0, %s182
    %s202 = sphi 0, %s204
    %s205 = sphi 0, %s202
    %s206 = sphi 0, %s205
    %s222 = sphi 0, %s206
  $region4: #{rec_res_block_nchw.7} parent=0 // loop_header_branch
    %17 = sbr.rel (%p15) target = $region8
  $region5: #{rec_res_block_nchw.7} parent=0 // loop_body
    %s19 = ssub.s32 %s14, 1
    %s20 = ssub.s32 %s14, 2
    %s21 = sadd.s32 %s14, 1
    %s22 = ssub.s32 %s14, %s21
    %p23 = scmp.eq.s32.totalorder %s22, 0
    %s25 = sadd.s32 %s24, 1
    %s26 = scalar_select %p23, %s24, %s25
    %p29 = pneg %p23
    %p30 = scmp.eq.s32.totalorder %s14, 1
    %p31 = por %p29, %p30
    %p32 = scmp.ne.s32.totalorder %s24, %s27
    %p33 = scmp.eq.s32.totalorder %s14, 0
    %p34 = por %p32, %p33
    %p35 = scmp.ne.s32.totalorder %s24, %s27
    %p36 = scmp.eq.s32.totalorder %s19, 1
    %p37 = por %p35, %p36
    %p38 = scmp.ne.s32.totalorder %s27, %s28
    %p39 = scmp.eq.s32.totalorder %s19, 0
    %p40 = por %p38, %p39
    %p41 = scmp.ne.s32.totalorder %s27, %s28
    %p42 = scmp.eq.s32.totalorder %s20, 1
    %p43 = por %p41, %p42
    %p45 = scmp.ne.s32.totalorder %s28, %s44
    %p46 = scmp.eq.s32.totalorder %s20, 0
    %p47 = por %p45, %p46
    %s48 = ssub.s32 %s14, %s21
    %p49 = scmp.eq.s32.totalorder %s48, 0
    %s51 = sadd.s32 %s50, 1
    %s52 = scalar_select %p49, %s50, %s51
    %p55 = pneg %p49
    %p56 = scmp.eq.s32.totalorder %s14, 1
    %p57 = por %p55, %p56
    %p58 = scmp.ne.s32.totalorder %s50, %s53
    %p59 = scmp.eq.s32.totalorder %s14, 0
    %p60 = por %p58, %p59
    %p61 = scmp.ne.s32.totalorder %s50, %s53
    %p62 = scmp.eq.s32.totalorder %s19, 1
    %p63 = por %p61, %p62
    %p64 = scmp.ne.s32.totalorder %s53, %s54
    %p65 = scmp.eq.s32.totalorder %s19, 0
    %p66 = por %p64, %p65
    %p67 = scmp.ne.s32.totalorder %s53, %s54
    %p68 = scmp.eq.s32.totalorder %s20, 1
    %p69 = por %p67, %p68
    %p71 = scmp.ne.s32.totalorder %s54, %s70
    %p72 = scmp.eq.s32.totalorder %s20, 0
    %p73 = por %p71, %p72
    %s75 = sadd.s32 %s74, 1
    %p78 = scmp.eq.s32.totalorder %s14, 1
    %p79 = scmp.ne.s32.totalorder %s74, %s76
    %p80 = scmp.eq.s32.totalorder %s14, 0
    %p81 = por %p79, %p80
    %p82 = scmp.ne.s32.totalorder %s74, %s76
    %p83 = scmp.eq.s32.totalorder %s19, 1
    %p84 = por %p82, %p83
    %p85 = scmp.ne.s32.totalorder %s76, %s77
    %p86 = scmp.eq.s32.totalorder %s19, 0
    %p87 = por %p85, %p86
    %p88 = scmp.ne.s32.totalorder %s76, %s77
    %p89 = scmp.eq.s32.totalorder %s20, 1
    %p90 = por %p88, %p89
    %p92 = scmp.ne.s32.totalorder %s77, %s91
    %p93 = scmp.eq.s32.totalorder %s20, 0
    %p94 = por %p92, %p93
    %s96 = sadd.s32 %s95, 1
    %p99 = scmp.eq.s32.totalorder %s14, 1
    %p100 = scmp.ne.s32.totalorder %s95, %s97
    %p101 = scmp.eq.s32.totalorder %s14, 0
    %p102 = por %p100, %p101
    %p103 = scmp.ne.s32.totalorder %s95, %s97
    %p104 = scmp.eq.s32.totalorder %s19, 1
    %p105 = por %p103, %p104
    %p106 = scmp.ne.s32.totalorder %s97, %s98
    %p107 = scmp.eq.s32.totalorder %s19, 0
    %p108 = por %p106, %p107
    %p109 = scmp.ne.s32.totalorder %s97, %s98
    %p110 = scmp.eq.s32.totalorder %s20, 1
    %p111 = por %p109, %p110
    %p113 = scmp.ne.s32.totalorder %s98, %s112
    %p114 = scmp.eq.s32.totalorder %s20, 0
    %p115 = por %p113, %p114
    %s117 = sadd.s32 %s116, 1
    %p120 = scmp.eq.s32.totalorder %s14, 1
    %p121 = scmp.ne.s32.totalorder %s116, %s118
    %p122 = scmp.eq.s32.totalorder %s14, 0
    %p123 = por %p121, %p122
    %p124 = scmp.ne.s32.totalorder %s116, %s118
    %p125 = scmp.eq.s32.totalorder %s19, 1
    %p126 = por %p124, %p125
    %p127 = scmp.ne.s32.totalorder %s118, %s119
    %p128 = scmp.eq.s32.totalorder %s19, 0
    %p129 = por %p127, %p128
    %p130 = scmp.ne.s32.totalorder %s118, %s119
    %p131 = scmp.eq.s32.totalorder %s20, 1
    %p132 = por %p130, %p131
    %p134 = scmp.ne.s32.totalorder %s119, %s133
    %p135 = scmp.eq.s32.totalorder %s20, 0
    %p136 = por %p134, %p135
    %s138 = sadd.s32 %s137, 1
    %p141 = scmp.eq.s32.totalorder %s14, 1
    %p142 = scmp.ne.s32.totalorder %s137, %s139
    %p143 = scmp.eq.s32.totalorder %s14, 0
    %p144 = por %p142, %p143
    %p145 = scmp.ne.s32.totalorder %s137, %s139
    %p146 = scmp.eq.s32.totalorder %s19, 1
    %p147 = por %p145, %p146
    %p148 = scmp.ne.s32.totalorder %s139, %s140
    %p149 = scmp.eq.s32.totalorder %s19, 0
    %p150 = por %p148, %p149
    %p151 = scmp.ne.s32.totalorder %s139, %s140
    %p152 = scmp.eq.s32.totalorder %s20, 1
    %p153 = por %p151, %p152
    %p155 = scmp.ne.s32.totalorder %s140, %s154
    %p156 = scmp.eq.s32.totalorder %s20, 0
    %p157 = por %p155, %p156
    %s159 = sadd.s32 %s158, 1
    %p162 = scmp.eq.s32.totalorder %s14, 1
    %p163 = scmp.ne.s32.totalorder %s158, %s160
    %p164 = scmp.eq.s32.totalorder %s14, 0
    %p165 = por %p163, %p164
    %p166 = scmp.ne.s32.totalorder %s158, %s160
    %p167 = scmp.eq.s32.totalorder %s19, 1
    %p168 = por %p166, %p167
    %p169 = scmp.ne.s32.totalorder %s160, %s161
    %p170 = scmp.eq.s32.totalorder %s19, 0
    %p171 = por %p169, %p170
    %p172 = scmp.ne.s32.totalorder %s160, %s161
    %p173 = scmp.eq.s32.totalorder %s20, 1
    %p174 = por %p172, %p173
    %p176 = scmp.ne.s32.totalorder %s161, %s175
    %p177 = scmp.eq.s32.totalorder %s20, 0
    %p178 = por %p176, %p177
    %s180 = sadd.s32 %s179, 1
    %p183 = scmp.eq.s32.totalorder %s14, 1
    %p184 = scmp.ne.s32.totalorder %s179, %s181
    %p185 = scmp.eq.s32.totalorder %s14, 0
    %p186 = por %p184, %p185
    %p187 = scmp.ne.s32.totalorder %s179, %s181
    %p188 = scmp.eq.s32.totalorder %s19, 1
    %p189 = por %p187, %p188
    %p190 = scmp.ne.s32.totalorder %s181, %s182
    %p191 = scmp.eq.s32.totalorder %s19, 0
    %p192 = por %p190, %p191
    %p193 = scmp.ne.s32.totalorder %s181, %s182
    %p194 = scmp.eq.s32.totalorder %s20, 1
    %p195 = por %p193, %p194
    %p197 = scmp.ne.s32.totalorder %s182, %s196
    %p198 = scmp.eq.s32.totalorder %s20, 0
    %p199 = por %p197, %p198
    %s200 = ssub.s32 %s14, %s21
    %p201 = scmp.eq.s32.totalorder %s200, 0
    %s203 = sadd.s32 %s202, 1
    %s204 = scalar_select %p201, %s202, %s203
    %p207 = pneg %p201
    %p208 = scmp.eq.s32.totalorder %s14, 1
    %p209 = por %p207, %p208
    %p210 = scmp.ne.s32.totalorder %s202, %s205
    %p211 = scmp.eq.s32.totalorder %s14, 0
    %p212 = por %p210, %p211
    %p213 = scmp.ne.s32.totalorder %s202, %s205
    %p214 = scmp.eq.s32.totalorder %s19, 1
    %p215 = por %p213, %p214
    %p216 = scmp.ne.s32.totalorder %s205, %s206
    %p217 = scmp.eq.s32.totalorder %s19, 0
    %p218 = por %p216, %p217
    %p219 = scmp.ne.s32.totalorder %s205, %s206
    %p220 = scmp.eq.s32.totalorder %s20, 1
    %p221 = por %p219, %p220
    %p223 = scmp.ne.s32.totalorder %s206, %s222
    %p224 = scmp.eq.s32.totalorder %s20, 0
    %p225 = por %p223, %p224
    %p226 = scmp.le.s32.totalorder 1, %s14
    %p227 = scmp.lt.s32.totalorder %s14, 3
    %p228 = pnand %p226, %p227
    %p229 = pneg %p228
    // Predicated region
    $region9: #{rec_res_block_nchw.7} parent=5 // pred_check
      _
    $region10: #{rec_res_block_nchw.7} parent=5 // pred_check_branch
      %231 = sbr.rel (%p228) target = $region12
    $region11: #{rec_res_block_nchw.7} parent=5 // pred_region
      %s232 = ssub.s32 %s14, 1
      // Predicated region
      $region13: #{rec_res_block_nchw.7} parent=11 // pred_check
        %p233 = pneg %p87
      $region14: #{rec_res_block_nchw.7} parent=11 // pred_check_branch
        %235 = sbr.rel (%p233) target = $region16
      $region15: #{rec_res_block_nchw.7} parent=11 // pred_region
        _
      $region16: #{rec_res_block_nchw.7} parent=11 // pred_fallthru
        _
      // Predicated region
      $region17: #{rec_res_block_nchw.7} parent=11 // pred_check
        %p236 = pneg %p108
      $region18: #{rec_res_block_nchw.7} parent=11 // pred_check_branch
        %238 = sbr.rel (%p236) target = $region20
      $region19: #{rec_res_block_nchw.7} parent=11 // pred_region
        _
      $region20: #{rec_res_block_nchw.7} parent=11 // pred_fallthru
        _
      // Predicated region
      $region21: #{rec_res_block_nchw.7} parent=11 // pred_check
        %p239 = pneg %p129
      $region22: #{rec_res_block_nchw.7} parent=11 // pred_check_branch
        %241 = sbr.rel (%p239) target = $region24
      $region23: #{rec_res_block_nchw.7} parent=11 // pred_region
        _
      $region24: #{rec_res_block_nchw.7} parent=11 // pred_fallthru
        _
      // Predicated region
      $region25: #{rec_res_block_nchw.7} parent=11 // pred_check
        %p242 = pneg %p150
      $region26: #{rec_res_block_nchw.7} parent=11 // pred_check_branch
        %244 = sbr.rel (%p242) target = $region28
      $region27: #{rec_res_block_nchw.7} parent=11 // pred_region
        _
      $region28: #{rec_res_block_nchw.7} parent=11 // pred_fallthru
        _
      // Predicated region
      $region29: #{rec_res_block_nchw.7} parent=11 // pred_check
        %p245 = pneg %p171
      $region30: #{rec_res_block_nchw.7} parent=11 // pred_check_branch
        %247 = sbr.rel (%p245) target = $region32
      $region31: #{rec_res_block_nchw.7} parent=11 // pred_region
        _
      $region32: #{rec_res_block_nchw.7} parent=11 // pred_fallthru
        _
      // Predicated region
      $region33: #{rec_res_block_nchw.7} parent=11 // pred_check
        %p248 = pneg %p192
      $region34: #{rec_res_block_nchw.7} parent=11 // pred_check_branch
        %250 = sbr.rel (%p248) target = $region36
      $region35: #{rec_res_block_nchw.7} parent=11 // pred_region
        _
      $region36: #{rec_res_block_nchw.7} parent=11 // pred_fallthru
        _
    $region12: #{rec_res_block_nchw.7} parent=5 // pred_fallthru
      _
    %p251 = scmp.lt.s32.totalorder %s14, 2
    // Predicated region
    $region37: #{rec_res_block_nchw.7} parent=5 // pred_check
      %p252 = pneg %p251
    $region38: #{rec_res_block_nchw.7} parent=5 // pred_check_branch
      %254 = sbr.rel (%p252) target = $region40
    $region39: #{rec_res_block_nchw.7} parent=5 // pred_region
      // Predicated region
      $region41: #{rec_res_block_nchw.7} parent=39 // pred_check
        %p255 = pneg %p34
      $region42: #{rec_res_block_nchw.7} parent=39 // pred_check_branch
        %257 = sbr.rel (%p255) target = $region44
      $region43: #{rec_res_block_nchw.7} parent=39 // pred_region
        %p258 = scmp.lt.s32.totalorder %s14, 1
        %s259 = scalar_select %p258, %s14, 1
        %s260 = smul.addr %s259, 32
        %s261 = smul.addr %s260, 8
        %s262 = scalar_lea.vmem %s0, %s261
      $region44: #{rec_res_block_nchw.7} parent=39 // pred_fallthru
        _
      // Predicated region
      $region45: #{rec_res_block_nchw.7} parent=39 // pred_check
        %p263 = pneg %p60
      $region46: #{rec_res_block_nchw.7} parent=39 // pred_check_branch
        %265 = sbr.rel (%p263) target = $region48
      $region47: #{rec_res_block_nchw.7} parent=39 // pred_region
        %p266 = scmp.lt.s32.totalorder %s14, 1
        %s267 = scalar_select %p266, %s14, 1
        %s268 = smul.addr %s267, 32
        %s269 = smul.addr %s268, 8
        %s270 = scalar_lea.vmem %s1, %s269
      $region48: #{rec_res_block_nchw.7} parent=39 // pred_fallthru
        _
    $region40: #{rec_res_block_nchw.7} parent=5 // pred_fallthru
      _
    %p271 = scmp.le.s32.totalorder 1, %s14
    %p272 = scmp.lt.s32.totalorder %s14, 3
    %p273 = pnand %p271, %p272
    %p274 = pneg %p273
    // Predicated region
    $region49: #{rec_res_block_nchw.7} parent=5 // pred_check
      _
    $region50: #{rec_res_block_nchw.7} parent=5 // pred_check_branch
      %276 = sbr.rel (%p273) target = $region52
    $region51: #{rec_res_block_nchw.7} parent=5 // pred_region
      %s277 = ssub.s32 %s14, 1
      %p278 = scmp.lt.s32.totalorder %s19, 1
      %s279 = scalar_select %p278, %s19, 1
      %s280 = smul.addr %s279, 32
      %s281 = smul.addr %s280, 8
      %s282 = scalar_lea.vmem %s0, %s281
      %p283 = pneg %p40
      %p284 = pneg %p37
      %p285 = scmp.lt.s32.totalorder %s19, 1
      %s286 = scalar_select %p285, %s19, 1
      %s287 = smul.addr %s286, 32
      %s288 = smul.addr %s287, 8
      %s289 = scalar_lea.vmem %s1, %s288
      %p290 = pneg %p66
      %p291 = pneg %p63
      %p292 = pneg %p87
      %p293 = pneg %p84
      %p294 = pneg %p108
      %p295 = pneg %p105
      %p296 = pneg %p129
      %p297 = pneg %p126
      %p298 = pneg %p150
      %p299 = pneg %p147
      %p300 = pneg %p171
      %p301 = pneg %p168
      %p302 = pneg %p192
      %p303 = pneg %p189
      %p304 = pneg %p218
      %p305 = pneg %p215
      %p306 = scmp.lt.s32.totalorder %s19, 1
      %s307 = scalar_select %p306, %s19, 1
      %s308 = smul.addr %s307, 32
      %s309 = smul.addr %s308, 8
      %s310 = scalar_lea.vmem %s8, %s309
      %p311 = scmp.lt.s32.totalorder %s19, 1
      %s312 = scalar_select %p311, %s19, 1
      %s313 = smul.addr %s312, 32
      %s314 = smul.addr %s313, 8
      %s315 = scalar_lea.vmem %s0, %s314
      %p316 = scmp.lt.s32.totalorder %s19, 1
      %s317 = scalar_select %p316, %s19, 1
      %s318 = smul.addr %s317, 32
      %s319 = smul.addr %s318, 8
      %s320 = scalar_lea.vmem %s1, %s319
      %p321 = scmp.lt.s32.totalorder %s19, 1
      %s322 = scalar_select %p321, %s19, 1
      %s323 = smul.addr %s322, 32
      %s324 = smul.addr %s323, 8
      %s325 = scalar_lea.vmem %s8, %s324
      %v326 = vld [vmem:[%s315] sm:$0xff]
      %v327 = vld [vmem:[%s315 + $0x8] sm:$0xff]
      %v328 = vld [vmem:[%s315 + $0x10] sm:$0xff]
      %v329 = vld [vmem:[%s315 + $0x18] sm:$0xff]
      %v330 = vld [vmem:[%s315 + $0x20] sm:$0xff]
      %v331 = vld [vmem:[%s315 + $0x28] sm:$0xff]
      %v332 = vld [vmem:[%s315 + $0x30] sm:$0xff]
      %v333 = vld [vmem:[%s315 + $0x38] sm:$0xff]
      %v334 = vld [vmem:[%s315 + $0x40] sm:$0xff]
      %v335 = vld [vmem:[%s315 + $0x48] sm:$0xff]
      %v336 = vld [vmem:[%s315 + $0x50] sm:$0xff]
      %v337 = vld [vmem:[%s315 + $0x58] sm:$0xff]
      %v338 = vld [vmem:[%s315 + $0x60] sm:$0xff]
      %v339 = vld [vmem:[%s315 + $0x68] sm:$0xff]
      %v340 = vld [vmem:[%s315 + $0x70] sm:$0xff]
      %v341 = vld [vmem:[%s315 + $0x78] sm:$0xff]
      %v342 = vld [vmem:[%s315 + $0x80] sm:$0xff]
      %v343 = vld [vmem:[%s315 + $0x88] sm:$0xff]
      %v344 = vld [vmem:[%s315 + $0x90] sm:$0xff]
      %v345 = vld [vmem:[%s315 + $0x98] sm:$0xff]
      %v346 = vld [vmem:[%s315 + $0xa0] sm:$0xff]
      %v347 = vld [vmem:[%s315 + $0xa8] sm:$0xff]
      %v348 = vld [vmem:[%s315 + $0xb0] sm:$0xff]
      %v349 = vld [vmem:[%s315 + $0xb8] sm:$0xff]
      %v350 = vld [vmem:[%s315 + $0xc0] sm:$0xff]
      %v351 = vld [vmem:[%s315 + $0xc8] sm:$0xff]
      %v352 = vld [vmem:[%s315 + $0xd0] sm:$0xff]
      %v353 = vld [vmem:[%s315 + $0xd8] sm:$0xff]
      %v354 = vld [vmem:[%s315 + $0xe0] sm:$0xff]
      %v355 = vld [vmem:[%s315 + $0xe8] sm:$0xff]
      %v356 = vld [vmem:[%s315 + $0xf0] sm:$0xff]
      %v357 = vld [vmem:[%s315 + $0xf8] sm:$0xff]
      %vm358 = vcmask 64512
      %v359 = vsel %vm358, %v326, 0.0
      %v360 = vsel %vm358, %v327, 0.0
      %v361 = vadd.f32 %v359, %v360
      %v362 = vsel %vm358, %v328, 0.0
      %v363 = vadd.f32 %v361, %v362
      %v364 = vsel %vm358, %v329, 0.0
      %v365 = vadd.f32 %v363, %v364
      %v366 = vsel %vm358, %v330, 0.0
      %v367 = vadd.f32 %v365, %v366
      %v368 = vsel %vm358, %v331, 0.0
      %v369 = vadd.f32 %v367, %v368
      %v370 = vsel %vm358, %v332, 0.0
      %v371 = vadd.f32 %v369, %v370
      %v372 = vsel %vm358, %v333, 0.0
      %v373 = vadd.f32 %v371, %v372
      %v374 = vsel %vm358, %v334, 0.0
      %v375 = vadd.f32 %v373, %v374
      %v376 = vsel %vm358, %v335, 0.0
      %v377 = vadd.f32 %v375, %v376
      %v378 = vsel %vm358, %v336, 0.0
      %v379 = vadd.f32 %v377, %v378
      %v380 = vsel %vm358, %v337, 0.0
      %v381 = vadd.f32 %v379, %v380
      %v382 = vsel %vm358, %v338, 0.0
      %v383 = vadd.f32 %v381, %v382
      %v384 = vsel %vm358, %v339, 0.0
      %v385 = vadd.f32 %v383, %v384
      %v386 = vsel %vm358, %v340, 0.0
      %v387 = vadd.f32 %v385, %v386
      %v388 = vsel %vm358, %v341, 0.0
      %v389 = vadd.f32 %v387, %v388
      %v390 = vsel %vm358, %v342, 0.0
      %v391 = vadd.f32 %v389, %v390
      %v392 = vsel %vm358, %v343, 0.0
      %v393 = vadd.f32 %v391, %v392
      %v394 = vsel %vm358, %v344, 0.0
      %v395 = vadd.f32 %v393, %v394
      %v396 = vsel %vm358, %v345, 0.0
      %v397 = vadd.f32 %v395, %v396
      %v398 = vsel %vm358, %v346, 0.0
      %v399 = vadd.f32 %v397, %v398
      %v400 = vsel %vm358, %v347, 0.0
      %v401 = vadd.f32 %v399, %v400
      %v402 = vsel %vm358, %v348, 0.0
      %v403 = vadd.f32 %v401, %v402
      %v404 = vsel %vm358, %v349, 0.0
      %v405 = vadd.f32 %v403, %v404
      %v406 = vsel %vm358, %v350, 0.0
      %v407 = vadd.f32 %v405, %v406
      %v408 = vsel %vm358, %v351, 0.0
      %v409 = vadd.f32 %v407, %v408
      %v410 = vsel %vm358, %v352, 0.0
      %v411 = vadd.f32 %v409, %v410
      %v412 = vsel %vm358, %v353, 0.0
      %v413 = vadd.f32 %v411, %v412
      %v414 = vsel %vm358, %v354, 0.0
      %v415 = vadd.f32 %v413, %v414
      %v416 = vsel %vm358, %v355, 0.0
      %v417 = vadd.f32 %v415, %v416
      %v418 = vsel %vm358, %v356, 0.0
      %v419 = vadd.f32 %v417, %v418
      %v420 = vsel %vm358, %v357, 0.0
      %v421 = vadd.f32 %v419, %v420
      %v422 = vrot.slane %v421, 4
      %v423 = vadd.f32 %v421, %v422
      %v424 = vrot.slane %v423, 2
      %v425 = vadd.f32 %v423, %v424
      %v426 = vrot.slane %v425, 1
      %v427 = vadd.f32 %v425, %v426
      %v428 = vmul.f32 %v427, 0.00390625
      %v429 = vld [vmem:[%s2] sm:$0xff]
      %v430 = vld [vmem:[%s3] sm:$0x1]
      %v432 = vsel %vm358, %v428, 0
      %434 = vmatprep.subr.mxu0 0.0
      %435 = vmatpush1.msra.mxu0 %v429
      %436 = vmatprep.subr.mxu0 0.0
      %437 = vmatpush1.msra.mxu0 0.0
      %438 = vmatprep.subr.mxu0 0.0
      %439 = vmatpush1.msra.mxu0 0.0
      %440 = vmatprep.subr.mxu0 0.0
      %441 = vmatpush1.msra.mxu0 0.0
      %442 = vmatprep.subr.mxu0 0.0
      %443 = vmatpush1.msra.mxu0 0.0
      %444 = vmatprep.subr.mxu0 0.0
      %445 = vmatpush1.msra.mxu0 0.0
      %446 = vmatprep.subr.mxu0 0.0
      %447 = vmatpush1.msra.mxu0 0.0
      %448 = vmatprep.subr.mxu0 0.0
      %449 = vmatpush1.msra.mxu0 0.0
      %450 = vmatprep.subr.mxu0 0.0
      %451 = vmatpush1.msra.mxu0 0.0
      %452 = vmatprep.subr.mxu0 0.0
      %453 = vmatpush1.msra.mxu0 0.0
      %454 = vmatprep.subr.mxu0 0.0
      %455 = vmatpush1.msra.mxu0 0.0
      %456 = vmatprep.subr.mxu0 0.0
      %457 = vmatpush1.msra.mxu0 0.0
      %458 = vmatprep.subr.mxu0 0.0
      %459 = vmatpush1.msra.mxu0 0.0
      %460 = vmatprep.subr.mxu0 0.0
      %461 = vmatpush1.msra.mxu0 0.0
      %462 = vmatprep.subr.mxu0 0.0
      %463 = vmatpush1.msra.mxu0 0.0
      %464 = vmatprep.subr.mxu0 0.0
      %465 = vmatpush1.msra.mxu0 0.0
      %466 = vmatprep.subr.mxu0 0.0
      %467 = vmatpush1.msra.mxu0 0.0
      %468 = vmatprep.subr.mxu0 0.0
      %469 = vmatpush1.msra.mxu0 0.0
      %470 = vmatprep.subr.mxu0 0.0
      %471 = vmatpush1.msra.mxu0 0.0
      %472 = vmatprep.subr.mxu0 0.0
      %473 = vmatpush1.msra.mxu0 0.0
      %474 = vmatprep.subr.mxu0 0.0
      %475 = vmatpush1.msra.mxu0 0.0
      %476 = vmatprep.subr.mxu0 0.0
      %477 = vmatpush1.msra.mxu0 0.0
      %478 = vmatprep.subr.mxu0 0.0
      %479 = vmatpush1.msra.mxu0 0.0
      %480 = vmatprep.subr.mxu0 0.0
      %481 = vmatpush1.msra.mxu0 0.0
      %482 = vmatprep.subr.mxu0 0.0
      %483 = vmatpush1.msra.mxu0 0.0
      %484 = vmatprep.subr.mxu0 0.0
      %485 = vmatpush1.msra.mxu0 0.0
      %486 = vmatprep.subr.mxu0 0.0
      %487 = vmatpush1.msra.mxu0 0.0
      %488 = vmatprep.subr.mxu0 0.0
      %489 = vmatpush1.msra.mxu0 0.0
      %490 = vmatprep.subr.mxu0 0.0
      %491 = vmatpush1.msra.mxu0 0.0
      %492 = vmatprep.subr.mxu0 0.0
      %493 = vmatpush1.msra.mxu0 0.0
      %494 = vmatprep.subr.mxu0 0.0
      %495 = vmatpush1.msra.mxu0 0.0
      %496 = vmatprep.subr.mxu0 0.0
      %497 = vmatpush1.msra.mxu0 0.0
      %498 = vmatprep.mubr.f32.mxu0 0.0
      %499 = vmatmul.mubr.f32.gmra.mrb[0].mxu0 %v432
      %v500 = vpop.f32.mrb[0].mxu0
      %v501 = vadd.f32 %v430, %v500
      %v502 = vpop.f32.mrb[0].mxu0
      %503 = vdwg.mxu0
      %v504 = vmax.f32 %v501, 0.0
      %v505 = vld [vmem:[%s4] sm:$0x3]
      %v506 = vld [vmem:[%s5] sm:$0x1]
      %vm507 = vcmask 15360
      %v509 = vsel %vm507, %v504, 0
      %vm511 = vcmask 1041408
      %v513 = vsel %vm511, %v505, 0
      %515 = vmatprep.subr.mxu0 0.0
      %516 = vmatpush1.msra.mxu0 %v513
      %517 = vmatprep.subr.mxu0 0.0
      %518 = vmatpush1.msra.mxu0 0.0
      %519 = vmatprep.subr.mxu0 0.0
      %520 = vmatpush1.msra.mxu0 0.0
      %521 = vmatprep.subr.mxu0 0.0
      %522 = vmatpush1.msra.mxu0 0.0
      %523 = vmatprep.subr.mxu0 0.0
      %524 = vmatpush1.msra.mxu0 0.0
      %525 = vmatprep.subr.mxu0 0.0
      %526 = vmatpush1.msra.mxu0 0.0
      %527 = vmatprep.subr.mxu0 0.0
      %528 = vmatpush1.msra.mxu0 0.0
      %529 = vmatprep.subr.mxu0 0.0
      %530 = vmatpush1.msra.mxu0 0.0
      %531 = vmatprep.subr.mxu0 0.0
      %532 = vmatpush1.msra.mxu0 0.0
      %533 = vmatprep.subr.mxu0 0.0
      %534 = vmatpush1.msra.mxu0 0.0
      %535 = vmatprep.subr.mxu0 0.0
      %536 = vmatpush1.msra.mxu0 0.0
      %537 = vmatprep.subr.mxu0 0.0
      %538 = vmatpush1.msra.mxu0 0.0
      %539 = vmatprep.subr.mxu0 0.0
      %540 = vmatpush1.msra.mxu0 0.0
      %541 = vmatprep.subr.mxu0 0.0
      %542 = vmatpush1.msra.mxu0 0.0
      %543 = vmatprep.subr.mxu0 0.0
      %544 = vmatpush1.msra.mxu0 0.0
      %545 = vmatprep.subr.mxu0 0.0
      %546 = vmatpush1.msra.mxu0 0.0
      %547 = vmatprep.subr.mxu0 0.0
      %548 = vmatpush1.msra.mxu0 0.0
      %549 = vmatprep.subr.mxu0 0.0
      %550 = vmatpush1.msra.mxu0 0.0
      %551 = vmatprep.subr.mxu0 0.0
      %552 = vmatpush1.msra.mxu0 0.0
      %553 = vmatprep.subr.mxu0 0.0
      %554 = vmatpush1.msra.mxu0 0.0
      %555 = vmatprep.subr.mxu0 0.0
      %556 = vmatpush1.msra.mxu0 0.0
      %557 = vmatprep.subr.mxu0 0.0
      %558 = vmatpush1.msra.mxu0 0.0
      %559 = vmatprep.subr.mxu0 0.0
      %560 = vmatpush1.msra.mxu0 0.0
      %561 = vmatprep.subr.mxu0 0.0
      %562 = vmatpush1.msra.mxu0 0.0
      %563 = vmatprep.subr.mxu0 0.0
      %564 = vmatpush1.msra.mxu0 0.0
      %565 = vmatprep.subr.mxu0 0.0
      %566 = vmatpush1.msra.mxu0 0.0
      %567 = vmatprep.subr.mxu0 0.0
      %568 = vmatpush1.msra.mxu0 0.0
      %569 = vmatprep.subr.mxu0 0.0
      %570 = vmatpush1.msra.mxu0 0.0
      %571 = vmatprep.subr.mxu0 0.0
      %572 = vmatpush1.msra.mxu0 0.0
      %573 = vmatprep.subr.mxu0 0.0
      %574 = vmatpush1.msra.mxu0 0.0
      %575 = vmatprep.subr.mxu0 0.0
      %576 = vmatpush1.msra.mxu0 0.0
      %577 = vmatprep.subr.mxu0 0.0
      %578 = vmatpush1.msra.mxu0 0.0
      %579 = vmatprep.mubr.f32.mxu0 0.0
      %580 = vmatmul.mubr.f32.gmra.mrb[0].mxu0 %v509
      %v581 = vpop.f32.mrb[0].mxu0
      %v582 = vadd.f32 %v506, %v581
      %v583 = vpop.f32.mrb[0].mxu0
      %584 = vdwg.mxu0
      %v585 = vld [vmem:[%s6] sm:$0x3]
      %v586 = vld [vmem:[%s7] sm:$0x1]
      %v588 = vsel %vm511, %v585, 0
      %590 = vmatprep.subr.mxu0 0.0
      %591 = vmatpush1.msra.mxu0 %v588
      %592 = vmatprep.subr.mxu0 0.0
      %593 = vmatpush1.msra.mxu0 0.0
      %594 = vmatprep.subr.mxu0 0.0
      %595 = vmatpush1.msra.mxu0 0.0
      %596 = vmatprep.subr.mxu0 0.0
      %597 = vmatpush1.msra.mxu0 0.0
      %598 = vmatprep.subr.mxu0 0.0
      %599 = vmatpush1.msra.mxu0 0.0
      %600 = vmatprep.subr.mxu0 0.0
      %601 = vmatpush1.msra.mxu0 0.0
      %602 = vmatprep.subr.mxu0 0.0
      %603 = vmatpush1.msra.mxu0 0.0
      %604 = vmatprep.subr.mxu0 0.0
      %605 = vmatpush1.msra.mxu0 0.0
      %606 = vmatprep.subr.mxu0 0.0
      %607 = vmatpush1.msra.mxu0 0.0
      %608 = vmatprep.subr.mxu0 0.0
      %609 = vmatpush1.msra.mxu0 0.0
      %610 = vmatprep.subr.mxu0 0.0
      %611 = vmatpush1.msra.mxu0 0.0
      %612 = vmatprep.subr.mxu0 0.0
      %613 = vmatpush1.msra.mxu0 0.0
      %614 = vmatprep.subr.mxu0 0.0
      %615 = vmatpush1.msra.mxu0 0.0
      %616 = vmatprep.subr.mxu0 0.0
      %617 = vmatpush1.msra.mxu0 0.0
      %618 = vmatprep.subr.mxu0 0.0
      %619 = vmatpush1.msra.mxu0 0.0
      %620 = vmatprep.subr.mxu0 0.0
      %621 = vmatpush1.msra.mxu0 0.0
      %622 = vmatprep.subr.mxu0 0.0
      %623 = vmatpush1.msra.mxu0 0.0
      %624 = vmatprep.subr.mxu0 0.0
      %625 = vmatpush1.msra.mxu0 0.0
      %626 = vmatprep.subr.mxu0 0.0
      %627 = vmatpush1.msra.mxu0 0.0
      %628 = vmatprep.subr.mxu0 0.0
      %629 = vmatpush1.msra.mxu0 0.0
      %630 = vmatprep.subr.mxu0 0.0
      %631 = vmatpush1.msra.mxu0 0.0
      %632 = vmatprep.subr.mxu0 0.0
      %633 = vmatpush1.msra.mxu0 0.0
      %634 = vmatprep.subr.mxu0 0.0
      %635 = vmatpush1.msra.mxu0 0.0
      %636 = vmatprep.subr.mxu0 0.0
      %637 = vmatpush1.msra.mxu0 0.0
      %638 = vmatprep.subr.mxu0 0.0
      %639 = vmatpush1.msra.mxu0 0.0
      %640 = vmatprep.subr.mxu0 0.0
      %641 = vmatpush1.msra.mxu0 0.0
      %642 = vmatprep.subr.mxu0 0.0
      %643 = vmatpush1.msra.mxu0 0.0
      %644 = vmatprep.subr.mxu0 0.0
      %645 = vmatpush1.msra.mxu0 0.0
      %646 = vmatprep.subr.mxu0 0.0
      %647 = vmatpush1.msra.mxu0 0.0
      %648 = vmatprep.subr.mxu0 0.0
      %649 = vmatpush1.msra.mxu0 0.0
      %650 = vmatprep.subr.mxu0 0.0
      %651 = vmatpush1.msra.mxu0 0.0
      %652 = vmatprep.subr.mxu0 0.0
      %653 = vmatpush1.msra.mxu0 0.0
      %654 = vmatprep.mubr.f32.mxu0 0.0
      %655 = vmatmul.mubr.f32.gmra.mrb[0].mxu0 %v509
      %v656 = vpop.f32.mrb[0].mxu0
      %v657 = vadd.f32 %v586, %v656
      %v658 = vpop.f32.mrb[0].mxu0
      %659 = vdwg.mxu0
      %v660 = vxor.u32 %v582, 2147483648
      %v661 = vmul.f32 %v660, 1.442695
      %v662 = vpow.pop %v661
      %v663 = vadd.f32 %v662, 1.0
      %v664 = vrcp.pop %v663
      %v665 = vmul.f32 1.0, %v664
      %v666 = vadd.f32 %v665, 1.0
      %v667 = vld [vmem:[%s320] sm:$0xff]
      %v668 = vld [vmem:[%s320 + $0x8] sm:$0xff]
      %v669 = vld [vmem:[%s320 + $0x10] sm:$0xff]
      %v670 = vld [vmem:[%s320 + $0x18] sm:$0xff]
      %v671 = vld [vmem:[%s320 + $0x20] sm:$0xff]
      %v672 = vld [vmem:[%s320 + $0x28] sm:$0xff]
      %v673 = vld [vmem:[%s320 + $0x30] sm:$0xff]
      %v674 = vld [vmem:[%s320 + $0x38] sm:$0xff]
      %v675 = vld [vmem:[%s320 + $0x40] sm:$0xff]
      %v676 = vld [vmem:[%s320 + $0x48] sm:$0xff]
      %v677 = vld [vmem:[%s320 + $0x50] sm:$0xff]
      %v678 = vld [vmem:[%s320 + $0x58] sm:$0xff]
      %v679 = vld [vmem:[%s320 + $0x60] sm:$0xff]
      %v680 = vld [vmem:[%s320 + $0x68] sm:$0xff]
      %v681 = vld [vmem:[%s320 + $0x70] sm:$0xff]
      %v682 = vld [vmem:[%s320 + $0x78] sm:$0xff]
      %v683 = vld [vmem:[%s320 + $0x80] sm:$0xff]
      %v684 = vld [vmem:[%s320 + $0x88] sm:$0xff]
      %v685 = vld [vmem:[%s320 + $0x90] sm:$0xff]
      %v686 = vld [vmem:[%s320 + $0x98] sm:$0xff]
      %v687 = vld [vmem:[%s320 + $0xa0] sm:$0xff]
      %v688 = vld [vmem:[%s320 + $0xa8] sm:$0xff]
      %v689 = vld [vmem:[%s320 + $0xb0] sm:$0xff]
      %v690 = vld [vmem:[%s320 + $0xb8] sm:$0xff]
      %v691 = vld [vmem:[%s320 + $0xc0] sm:$0xff]
      %v692 = vld [vmem:[%s320 + $0xc8] sm:$0xff]
      %v693 = vld [vmem:[%s320 + $0xd0] sm:$0xff]
      %v694 = vld [vmem:[%s320 + $0xd8] sm:$0xff]
      %v695 = vld [vmem:[%s320 + $0xe0] sm:$0xff]
      %v696 = vld [vmem:[%s320 + $0xe8] sm:$0xff]
      %v697 = vld [vmem:[%s320 + $0xf0] sm:$0xff]
      %v698 = vld [vmem:[%s320 + $0xf8] sm:$0xff]
      %v699 = vlaneseq
      %v700 = vshrl.u32 %v699, 7
      %v701 = vsub.s32 0, %v700
      %v702 = vrot.slane %v666, %v701
      %v703 = vmul.f32 %v667, %v702
      %v704 = vmul.f32 %v668, %v702
      %v705 = vmul.f32 %v669, %v702
      %v706 = vmul.f32 %v670, %v702
      %v707 = vmul.f32 %v671, %v702
      %v708 = vmul.f32 %v672, %v702
      %v709 = vmul.f32 %v673, %v702
      %v710 = vmul.f32 %v674, %v702
      %v711 = vmul.f32 %v675, %v702
      %v712 = vmul.f32 %v676, %v702
      %v713 = vmul.f32 %v677, %v702
      %v714 = vmul.f32 %v678, %v702
      %v715 = vmul.f32 %v679, %v702
      %v716 = vmul.f32 %v680, %v702
      %v717 = vmul.f32 %v681, %v702
      %v718 = vmul.f32 %v682, %v702
      %v719 = vmul.f32 %v683, %v702
      %v720 = vmul.f32 %v684, %v702
      %v721 = vmul.f32 %v685, %v702
      %v722 = vmul.f32 %v686, %v702
      %v723 = vmul.f32 %v687, %v702
      %v724 = vmul.f32 %v688, %v702
      %v725 = vmul.f32 %v689, %v702
      %v726 = vmul.f32 %v690, %v702
      %v727 = vmul.f32 %v691, %v702
      %v728 = vmul.f32 %v692, %v702
      %v729 = vmul.f32 %v693, %v702
      %v730 = vmul.f32 %v694, %v702
      %v731 = vmul.f32 %v695, %v702
      %v732 = vmul.f32 %v696, %v702
      %v733 = vmul.f32 %v697, %v702
      %v734 = vmul.f32 %v698, %v702
      %v735 = vlaneseq
      %v736 = vshrl.u32 %v735, 7
      %v737 = vsub.s32 0, %v736
      %v738 = vrot.slane %v657, %v737
      %v739 = vadd.f32 %v703, %v738
      %v740 = vadd.f32 %v704, %v738
      %v741 = vadd.f32 %v705, %v738
      %v742 = vadd.f32 %v706, %v738
      %v743 = vadd.f32 %v707, %v738
      %v744 = vadd.f32 %v708, %v738
      %v745 = vadd.f32 %v709, %v738
      %v746 = vadd.f32 %v710, %v738
      %v747 = vadd.f32 %v711, %v738
      %v748 = vadd.f32 %v712, %v738
      %v749 = vadd.f32 %v713, %v738
      %v750 = vadd.f32 %v714, %v738
      %v751 = vadd.f32 %v715, %v738
      %v752 = vadd.f32 %v716, %v738
      %v753 = vadd.f32 %v717, %v738
      %v754 = vadd.f32 %v718, %v738
      %v755 = vadd.f32 %v719, %v738
      %v756 = vadd.f32 %v720, %v738
      %v757 = vadd.f32 %v721, %v738
      %v758 = vadd.f32 %v722, %v738
      %v759 = vadd.f32 %v723, %v738
      %v760 = vadd.f32 %v724, %v738
      %v761 = vadd.f32 %v725, %v738
      %v762 = vadd.f32 %v726, %v738
      %v763 = vadd.f32 %v727, %v738
      %v764 = vadd.f32 %v728, %v738
      %v765 = vadd.f32 %v729, %v738
      %v766 = vadd.f32 %v730, %v738
      %v767 = vadd.f32 %v731, %v738
      %v768 = vadd.f32 %v732, %v738
      %v769 = vadd.f32 %v733, %v738
      %v770 = vadd.f32 %v734, %v738
      %v771 = vmax.f32 %v739, 0.0
      %v772 = vmax.f32 %v740, 0.0
      %v773 = vmax.f32 %v741, 0.0
      %v774 = vmax.f32 %v742, 0.0
      %v775 = vmax.f32 %v743, 0.0
      %v776 = vmax.f32 %v744, 0.0
      %v777 = vmax.f32 %v745, 0.0
      %v778 = vmax.f32 %v746, 0.0
      %v779 = vmax.f32 %v747, 0.0
      %v780 = vmax.f32 %v748, 0.0
      %v781 = vmax.f32 %v749, 0.0
      %v782 = vmax.f32 %v750, 0.0
      %v783 = vmax.f32 %v751, 0.0
      %v784 = vmax.f32 %v752, 0.0
      %v785 = vmax.f32 %v753, 0.0
      %v786 = vmax.f32 %v754, 0.0
      %v787 = vmax.f32 %v755, 0.0
      %v788 = vmax.f32 %v756, 0.0
      %v789 = vmax.f32 %v757, 0.0
      %v790 = vmax.f32 %v758, 0.0
      %v791 = vmax.f32 %v759, 0.0
      %v792 = vmax.f32 %v760, 0.0
      %v793 = vmax.f32 %v761, 0.0
      %v794 = vmax.f32 %v762, 0.0
      %v795 = vmax.f32 %v763, 0.0
      %v796 = vmax.f32 %v764, 0.0
      %v797 = vmax.f32 %v765, 0.0
      %v798 = vmax.f32 %v766, 0.0
      %v799 = vmax.f32 %v767, 0.0
      %v800 = vmax.f32 %v768, 0.0
      %v801 = vmax.f32 %v769, 0.0
      %v802 = vmax.f32 %v770, 0.0
      %803 = vst.msk [vmem:[%s325] sm:$0xff] %vm358, %v771
      %804 = vst.msk [vmem:[%s325 + $0x8] sm:$0xff] %vm358, %v772
      %805 = vst.msk [vmem:[%s325 + $0x10] sm:$0xff] %vm358, %v773
      %806 = vst.msk [vmem:[%s325 + $0x18] sm:$0xff] %vm358, %v774
      %807 = vst.msk [vmem:[%s325 + $0x20] sm:$0xff] %vm358, %v775
      %808 = vst.msk [vmem:[%s325 + $0x28] sm:$0xff] %vm358, %v776
      %809 = vst.msk [vmem:[%s325 + $0x30] sm:$0xff] %vm358, %v777
      %810 = vst.msk [vmem:[%s325 + $0x38] sm:$0xff] %vm358, %v778
      %811 = vst.msk [vmem:[%s325 + $0x40] sm:$0xff] %vm358, %v779
      %812 = vst.msk [vmem:[%s325 + $0x48] sm:$0xff] %vm358, %v780
      %813 = vst.msk [vmem:[%s325 + $0x50] sm:$0xff] %vm358, %v781
      %814 = vst.msk [vmem:[%s325 + $0x58] sm:$0xff] %vm358, %v782
      %815 = vst.msk [vmem:[%s325 + $0x60] sm:$0xff] %vm358, %v783
      %816 = vst.msk [vmem:[%s325 + $0x68] sm:$0xff] %vm358, %v784
      %817 = vst.msk [vmem:[%s325 + $0x70] sm:$0xff] %vm358, %v785
      %818 = vst.msk [vmem:[%s325 + $0x78] sm:$0xff] %vm358, %v786
      %819 = vst.msk [vmem:[%s325 + $0x80] sm:$0xff] %vm358, %v787
      %820 = vst.msk [vmem:[%s325 + $0x88] sm:$0xff] %vm358, %v788
      %821 = vst.msk [vmem:[%s325 + $0x90] sm:$0xff] %vm358, %v789
      %822 = vst.msk [vmem:[%s325 + $0x98] sm:$0xff] %vm358, %v790
      %823 = vst.msk [vmem:[%s325 + $0xa0] sm:$0xff] %vm358, %v791
      %824 = vst.msk [vmem:[%s325 + $0xa8] sm:$0xff] %vm358, %v792
      %825 = vst.msk [vmem:[%s325 + $0xb0] sm:$0xff] %vm358, %v793
      %826 = vst.msk [vmem:[%s325 + $0xb8] sm:$0xff] %vm358, %v794
      %827 = vst.msk [vmem:[%s325 + $0xc0] sm:$0xff] %vm358, %v795
      %828 = vst.msk [vmem:[%s325 + $0xc8] sm:$0xff] %vm358, %v796
      %829 = vst.msk [vmem:[%s325 + $0xd0] sm:$0xff] %vm358, %v797
      %830 = vst.msk [vmem:[%s325 + $0xd8] sm:$0xff] %vm358, %v798
      %831 = vst.msk [vmem:[%s325 + $0xe0] sm:$0xff] %vm358, %v799
      %832 = vst.msk [vmem:[%s325 + $0xe8] sm:$0xff] %vm358, %v800
      %833 = vst.msk [vmem:[%s325 + $0xf0] sm:$0xff] %vm358, %v801
      %834 = vst.msk [vmem:[%s325 + $0xf8] sm:$0xff] %vm358, %v802
      %p835 = scmp.lt.s32.totalorder %s19, 1
      %s836 = scalar_select %p835, %s19, 1
      %s837 = smul.addr %s836, 32
      %s838 = smul.addr %s837, 8
      %s839 = scalar_lea.vmem %s8, %s838
      // Predicated region
      $region53: #{rec_res_block_nchw.7} parent=51 // pred_check
        %p840 = pneg %p215
      $region54: #{rec_res_block_nchw.7} parent=51 // pred_check_branch
        %842 = sbr.rel (%p840) target = $region56
      $region55: #{rec_res_block_nchw.7} parent=51 // pred_region
        _
      $region56: #{rec_res_block_nchw.7} parent=51 // pred_fallthru
        _
    $region52: #{rec_res_block_nchw.7} parent=5 // pred_fallthru
      _
    %p843 = scmp.le.s32.totalorder 2, %s14
    // Predicated region
    $region57: #{rec_res_block_nchw.7} parent=5 // pred_check
      %p844 = pneg %p843
    $region58: #{rec_res_block_nchw.7} parent=5 // pred_check_branch
      %846 = sbr.rel (%p844) target = $region60
    $region59: #{rec_res_block_nchw.7} parent=5 // pred_region
      %s847 = ssub.s32 %s14, 2
      // Predicated region
      $region61: #{rec_res_block_nchw.7} parent=59 // pred_check
        %p848 = pneg %p221
      $region62: #{rec_res_block_nchw.7} parent=59 // pred_check_branch
        %850 = sbr.rel (%p848) target = $region64
      $region63: #{rec_res_block_nchw.7} parent=59 // pred_region
        %p851 = scmp.lt.s32.totalorder %s20, 1
        %s852 = scalar_select %p851, %s20, 1
        %s853 = smul.addr %s852, 32
        %s854 = smul.addr %s853, 8
        %s855 = scalar_lea.vmem %s8, %s854
      $region64: #{rec_res_block_nchw.7} parent=59 // pred_fallthru
        _
    $region60: #{rec_res_block_nchw.7} parent=5 // pred_fallthru
      _
  $region6: #{rec_res_block_nchw.7} parent=0 // loop_footer
    %s18 = sadd.s32 1, %s14
  $region7: #{rec_res_block_nchw.7} parent=0 // loop_footer_branch
    %13 = sbr.rel target = $region3
  $region8: #{rec_res_block_nchw.7} parent=0 // loop_exit
    _

// kernel: rec_res_block_nchw.4
$region0: #{rec_res_block_nchw.4}
  #allocation0 [shape = 'u32[]', space=smem, size = 0x4, offset = 0x4, fixed_abs, tag = 'smem constant byte address 0x4 - core index']
  #allocation1 [shape = 'u32[144,128]{1,0:T(1,128)}', space=vmem, size = 0x12000, scoped, tag = 'internal scratch']
  %s0 = inlined_call_operand.vmem [shape: f32[2,18,18,8], index: 0, kind: input, shape index: {}]
  %s1 = inlined_call_operand.vmem [shape: f32[9,8,8], index: 1, kind: input, shape index: {}]
  %s2 = inlined_call_operand.vmem [shape: f32[1,8], index: 2, kind: input, shape index: {}]
  %s3 = inlined_call_operand.vmem [shape: f32[2,256,8], index: 3, kind: output, shape index: {}]
  %s4 = sld [smem:[#allocation0]]
  $region45: #{rec_res_block_nchw.4} parent=0
    _
  %s6 = ssub.s32 1, %s4
  %s7 = scalar_select 0, %s6, %s4
  loop: start=0, step=1, limit=4
  $region2: #{rec_res_block_nchw.4} parent=0 // loop_pre_header
    _
  $region3: #{rec_res_block_nchw.4} parent=0 // loop_header
    %s9 = sphi 0, %s13
    %p10 = scmp.ge.s32.totalorder %s9, 4
    %s19 = sphi 0, %s21
    %s22 = sphi 0, %s19
    %s23 = sphi 0, %s22
    %s39 = sphi 0, %s23
    %s43 = sphi 0, %s43
    %s45 = sphi 0, %s43
    %s46 = sphi 0, %s45
    %s60 = sphi 0, %s46
    %s64 = sphi 0, %s64
    %s66 = sphi 0, %s64
    %s67 = sphi 0, %s66
    %s81 = sphi 0, %s67
    %s87 = sphi 0, %s89
    %s90 = sphi 0, %s87
    %s91 = sphi 0, %s90
    %s107 = sphi 0, %s91
  $region4: #{rec_res_block_nchw.4} parent=0 // loop_header_branch
    %12 = sbr.rel (%p10) target = $region8
  $region5: #{rec_res_block_nchw.4} parent=0 // loop_body
    %s14 = ssub.s32 %s9, 1
    %s15 = ssub.s32 %s9, 2
    %s16 = sadd.s32 %s9, 1
    %s17 = ssub.s32 %s9, %s16
    %p18 = scmp.eq.s32.totalorder %s17, 0
    %s20 = sadd.s32 %s19, 1
    %s21 = scalar_select %p18, %s19, %s20
    %p24 = pneg %p18
    %p25 = scmp.eq.s32.totalorder %s9, 1
    %p26 = por %p24, %p25
    %p27 = scmp.ne.s32.totalorder %s19, %s22
    %p28 = scmp.eq.s32.totalorder %s9, 0
    %p29 = por %p27, %p28
    %p30 = scmp.ne.s32.totalorder %s19, %s22
    %p31 = scmp.eq.s32.totalorder %s14, 1
    %p32 = por %p30, %p31
    %p33 = scmp.ne.s32.totalorder %s22, %s23
    %p34 = scmp.eq.s32.totalorder %s14, 0
    %p35 = por %p33, %p34
    %p36 = scmp.ne.s32.totalorder %s22, %s23
    %p37 = scmp.eq.s32.totalorder %s15, 1
    %p38 = por %p36, %p37
    %p40 = scmp.ne.s32.totalorder %s23, %s39
    %p41 = scmp.eq.s32.totalorder %s15, 0
    %p42 = por %p40, %p41
    %s44 = sadd.s32 %s43, 1
    %p47 = scmp.eq.s32.totalorder %s9, 1
    %p48 = scmp.ne.s32.totalorder %s43, %s45
    %p49 = scmp.eq.s32.totalorder %s9, 0
    %p50 = por %p48, %p49
    %p51 = scmp.ne.s32.totalorder %s43, %s45
    %p52 = scmp.eq.s32.totalorder %s14, 1
    %p53 = por %p51, %p52
    %p54 = scmp.ne.s32.totalorder %s45, %s46
    %p55 = scmp.eq.s32.totalorder %s14, 0
    %p56 = por %p54, %p55
    %p57 = scmp.ne.s32.totalorder %s45, %s46
    %p58 = scmp.eq.s32.totalorder %s15, 1
    %p59 = por %p57, %p58
    %p61 = scmp.ne.s32.totalorder %s46, %s60
    %p62 = scmp.eq.s32.totalorder %s15, 0
    %p63 = por %p61, %p62
    %s65 = sadd.s32 %s64, 1
    %p68 = scmp.eq.s32.totalorder %s9, 1
    %p69 = scmp.ne.s32.totalorder %s64, %s66
    %p70 = scmp.eq.s32.totalorder %s9, 0
    %p71 = por %p69, %p70
    %p72 = scmp.ne.s32.totalorder %s64, %s66
    %p73 = scmp.eq.s32.totalorder %s14, 1
    %p74 = por %p72, %p73
    %p75 = scmp.ne.s32.totalorder %s66, %s67
    %p76 = scmp.eq.s32.totalorder %s14, 0
    %p77 = por %p75, %p76
    %p78 = scmp.ne.s32.totalorder %s66, %s67
    %p79 = scmp.eq.s32.totalorder %s15, 1
    %p80 = por %p78, %p79
    %p82 = scmp.ne.s32.totalorder %s67, %s81
    %p83 = scmp.eq.s32.totalorder %s15, 0
    %p84 = por %p82, %p83
    %s85 = ssub.s32 %s9, %s16
    %p86 = scmp.eq.s32.totalorder %s85, 0
    %s88 = sadd.s32 %s87, 1
    %s89 = scalar_select %p86, %s87, %s88
    %p92 = pneg %p86
    %p93 = scmp.eq.s32.totalorder %s9, 1
    %p94 = por %p92, %p93
    %p95 = scmp.ne.s32.totalorder %s87, %s90
    %p96 = scmp.eq.s32.totalorder %s9, 0
    %p97 = por %p95, %p96
    %p98 = scmp.ne.s32.totalorder %s87, %s90
    %p99 = scmp.eq.s32.totalorder %s14, 1
    %p100 = por %p98, %p99
    %p101 = scmp.ne.s32.totalorder %s90, %s91
    %p102 = scmp.eq.s32.totalorder %s14, 0
    %p103 = por %p101, %p102
    %p104 = scmp.ne.s32.totalorder %s90, %s91
    %p105 = scmp.eq.s32.totalorder %s15, 1
    %p106 = por %p104, %p105
    %p108 = scmp.ne.s32.totalorder %s91, %s107
    %p109 = scmp.eq.s32.totalorder %s15, 0
    %p110 = por %p108, %p109
    %p111 = scmp.le.s32.totalorder 1, %s9
    %p112 = scmp.lt.s32.totalorder %s9, 3
    %p113 = pnand %p111, %p112
    %p114 = pneg %p113
    // Predicated region
    $region9: #{rec_res_block_nchw.4} parent=5 // pred_check
      _
    $region10: #{rec_res_block_nchw.4} parent=5 // pred_check_branch
      %116 = sbr.rel (%p113) target = $region12
    $region11: #{rec_res_block_nchw.4} parent=5 // pred_region
      %s117 = ssub.s32 %s9, 1
      // Predicated region
      $region13: #{rec_res_block_nchw.4} parent=11 // pred_check
        %p118 = pneg %p56
      $region14: #{rec_res_block_nchw.4} parent=11 // pred_check_branch
        %120 = sbr.rel (%p118) target = $region16
      $region15: #{rec_res_block_nchw.4} parent=11 // pred_region
        _
      $region16: #{rec_res_block_nchw.4} parent=11 // pred_fallthru
        _
      // Predicated region
      $region17: #{rec_res_block_nchw.4} parent=11 // pred_check
        %p121 = pneg %p77
      $region18: #{rec_res_block_nchw.4} parent=11 // pred_check_branch
        %123 = sbr.rel (%p121) target = $region20
      $region19: #{rec_res_block_nchw.4} parent=11 // pred_region
        _
      $region20: #{rec_res_block_nchw.4} parent=11 // pred_fallthru
        _
    $region12: #{rec_res_block_nchw.4} parent=5 // pred_fallthru
      _
    %p124 = scmp.lt.s32.totalorder %s9, 2
    // Predicated region
    $region21: #{rec_res_block_nchw.4} parent=5 // pred_check
      %p125 = pneg %p124
    $region22: #{rec_res_block_nchw.4} parent=5 // pred_check_branch
      %127 = sbr.rel (%p125) target = $region24
    $region23: #{rec_res_block_nchw.4} parent=5 // pred_region
      // Predicated region
      $region25: #{rec_res_block_nchw.4} parent=23 // pred_check
        %p128 = pneg %p29
      $region26: #{rec_res_block_nchw.4} parent=23 // pred_check_branch
        %130 = sbr.rel (%p128) target = $region28
      $region27: #{rec_res_block_nchw.4} parent=23 // pred_region
        %p131 = scmp.lt.s32.totalorder %s9, 1
        %s132 = scalar_select %p131, %s9, 1
        %s133 = smul.addr %s132, 54
        %s134 = smul.addr %s133, 8
        %s135 = scalar_lea.vmem %s0, %s134
      $region28: #{rec_res_block_nchw.4} parent=23 // pred_fallthru
        _
    $region24: #{rec_res_block_nchw.4} parent=5 // pred_fallthru
      _
    %p136 = scmp.le.s32.totalorder 1, %s9
    %p137 = scmp.lt.s32.totalorder %s9, 3
    %p138 = pnand %p136, %p137
    %p139 = pneg %p138
    // Predicated region
    $region29: #{rec_res_block_nchw.4} parent=5 // pred_check
      _
    $region30: #{rec_res_block_nchw.4} parent=5 // pred_check_branch
      %141 = sbr.rel (%p138) target = $region32
    $region31: #{rec_res_block_nchw.4} parent=5 // pred_region
      %s142 = ssub.s32 %s9, 1
      %p143 = scmp.lt.s32.totalorder %s14, 1
      %s144 = scalar_select %p143, %s14, 1
      %s145 = smul.addr %s144, 54
      %s146 = smul.addr %s145, 8
      %s147 = scalar_lea.vmem %s0, %s146
      %p148 = pneg %p35
      %p149 = pneg %p32
      %p150 = pneg %p56
      %p151 = pneg %p53
      %p152 = pneg %p77
      %p153 = pneg %p74
      %p154 = pneg %p103
      %p155 = pneg %p100
      %p156 = scmp.lt.s32.totalorder %s14, 1
      %s157 = scalar_select %p156, %s14, 1
      %s158 = smul.addr %s157, 32
      %s159 = smul.addr %s158, 8
      %s160 = scalar_lea.vmem %s3, %s159
      %p161 = scmp.lt.s32.totalorder %s14, 1
      %s162 = scalar_select %p161, %s14, 1
      %s163 = smul.addr %s162, 54
      %s164 = smul.addr %s163, 8
      %s165 = scalar_lea.vmem %s0, %s164
      %p166 = scmp.lt.s32.totalorder %s14, 1
      %s167 = scalar_select %p166, %s14, 1
      %s168 = smul.addr %s167, 32
      %s169 = smul.addr %s168, 8
      %s170 = scalar_lea.vmem %s3, %s169
      %v171 = vld [vmem:[%s165] sm:$0xff]
      %v172 = vld [vmem:[%s165 + $0x8] sm:$0xff]
      %v173 = vld [vmem:[%s165 + $0x18] sm:$0xff]
      %v174 = vld [vmem:[%s165 + $0x20] sm:$0xff]
      %v175 = vld [vmem:[%s165 + $0x30] sm:$0xff]
      %v176 = vld [vmem:[%s165 + $0x38] sm:$0xff]
      %v177 = vld [vmem:[%s165 + $0x48] sm:$0xff]
      %v178 = vld [vmem:[%s165 + $0x50] sm:$0xff]
      %v179 = vld [vmem:[%s165 + $0x60] sm:$0xff]
      %v180 = vld [vmem:[%s165 + $0x68] sm:$0xff]
      %v181 = vld [vmem:[%s165 + $0x78] sm:$0xff]
      %v182 = vld [vmem:[%s165 + $0x80] sm:$0xff]
      %v183 = vld [vmem:[%s165 + $0x90] sm:$0xff]
      %v184 = vld [vmem:[%s165 + $0x98] sm:$0xff]
      %v185 = vld [vmem:[%s165 + $0xa8] sm:$0xff]
      %v186 = vld [vmem:[%s165 + $0xb0] sm:$0xff]
      %v187 = vld [vmem:[%s165 + $0xc0] sm:$0xff]
      %v188 = vld [vmem:[%s165 + $0xc8] sm:$0xff]
      %v189 = vld [vmem:[%s165 + $0xd8] sm:$0xff]
      %v190 = vld [vmem:[%s165 + $0xe0] sm:$0xff]
      %v191 = vld [vmem:[%s165 + $0xf0] sm:$0xff]
      %v192 = vld [vmem:[%s165 + $0xf8] sm:$0xff]
      %v193 = vld [vmem:[%s165 + $0x108] sm:$0xff]
      %v194 = vld [vmem:[%s165 + $0x110] sm:$0xff]
      %v195 = vld [vmem:[%s165 + $0x120] sm:$0xff]
      %v196 = vld [vmem:[%s165 + $0x128] sm:$0xff]
      %v197 = vld [vmem:[%s165 + $0x138] sm:$0xff]
      %v198 = vld [vmem:[%s165 + $0x140] sm:$0xff]
      %v199 = vld [vmem:[%s165 + $0x150] sm:$0xff]
      %v200 = vld [vmem:[%s165 + $0x158] sm:$0xff]
      %v201 = vld [vmem:[%s165 + $0x168] sm:$0xff]
      %v202 = vld [vmem:[%s165 + $0x170] sm:$0xff]
      %v203 = vld [vmem:[%s1] sm:$0xff]
      %v204 = vld [vmem:[%s165 + $0x1] sm:$0xff]
      %v205 = vld [vmem:[%s165 + $0x9] sm:$0xff]
      %v206 = vld [vmem:[%s165 + $0x19] sm:$0xff]
      %v207 = vld [vmem:[%s165 + $0x21] sm:$0xff]
      %v208 = vld [vmem:[%s165 + $0x31] sm:$0xff]
      %v209 = vld [vmem:[%s165 + $0x39] sm:$0xff]
      %v210 = vld [vmem:[%s165 + $0x49] sm:$0xff]
      %v211 = vld [vmem:[%s165 + $0x51] sm:$0xff]
      %v212 = vld [vmem:[%s165 + $0x61] sm:$0xff]
      %v213 = vld [vmem:[%s165 + $0x69] sm:$0xff]
      %v214 = vld [vmem:[%s165 + $0x79] sm:$0xff]
      %v215 = vld [vmem:[%s165 + $0x81] sm:$0xff]
      %v216 = vld [vmem:[%s165 + $0x91] sm:$0xff]
      %v217 = vld [vmem:[%s165 + $0x99] sm:$0xff]
      %v218 = vld [vmem:[%s165 + $0xa9] sm:$0xff]
      %v219 = vld [vmem:[%s165 + $0xb1] sm:$0xff]
      %v220 = vld [vmem:[%s165 + $0xc1] sm:$0xff]
      %v221 = vld [vmem:[%s165 + $0xc9] sm:$0xff]
      %v222 = vld [vmem:[%s165 + $0xd9] sm:$0xff]
      %v223 = vld [vmem:[%s165 + $0xe1] sm:$0xff]
      %v224 = vld [vmem:[%s165 + $0xf1] sm:$0xff]
      %v225 = vld [vmem:[%s165 + $0xf9] sm:$0xff]
      %v226 = vld [vmem:[%s165 + $0x109] sm:$0xff]
      %v227 = vld [vmem:[%s165 + $0x111] sm:$0xff]
      %v228 = vld [vmem:[%s165 + $0x121] sm:$0xff]
      %v229 = vld [vmem:[%s165 + $0x129] sm:$0xff]
      %v230 = vld [vmem:[%s165 + $0x139] sm:$0xff]
      %v231 = vld [vmem:[%s165 + $0x141] sm:$0xff]
      %v232 = vld [vmem:[%s165 + $0x151] sm:$0xff]
      %v233 = vld [vmem:[%s165 + $0x159] sm:$0xff]
      %v234 = vld [vmem:[%s165 + $0x169] sm:$0xff]
      %v235 = vld [vmem:[%s165 + $0x171] sm:$0xff]
      %s236 = scalar_lea.vmem %s1, 8
      %v237 = vld [vmem:[%s236] sm:$0xff]
      %vm238 = vcmask 64512
      %v240 = vsel %vm238, %v204, 0
      %v243 = vsel %vm238, %v205, 0
      %v246 = vsel %vm238, %v206, 0
      %v249 = vsel %vm238, %v207, 0
      %v252 = vsel %vm238, %v208, 0
      %v255 = vsel %vm238, %v209, 0
      %v258 = vsel %vm238, %v210, 0
      %v261 = vsel %vm238, %v211, 0
      %v264 = vsel %vm238, %v212, 0
      %v267 = vsel %vm238, %v213, 0
      %v270 = vsel %vm238, %v214, 0
      %v273 = vsel %vm238, %v215, 0
      %v276 = vsel %vm238, %v216, 0
      %v279 = vsel %vm238, %v217, 0
      %v282 = vsel %vm238, %v218, 0
      %v285 = vsel %vm238, %v219, 0
      %v288 = vsel %vm238, %v220, 0
      %v291 = vsel %vm238, %v221, 0
      %v294 = vsel %vm238, %v222, 0
      %v297 = vsel %vm238, %v223, 0
      %v300 = vsel %vm238, %v224, 0
      %v303 = vsel %vm238, %v225, 0
      %v306 = vsel %vm238, %v226, 0
      %v309 = vsel %vm238, %v227, 0
      %v312 = vsel %vm238, %v228, 0
      %v315 = vsel %vm238, %v229, 0
      %v318 = vsel %vm238, %v230, 0
      %v321 = vsel %vm238, %v231, 0
      %v324 = vsel %vm238, %v232, 0
      %v327 = vsel %vm238, %v233, 0
      %v330 = vsel %vm238, %v234, 0
      %v333 = vsel %vm238, %v235, 0
      %335 = vmatprep.subr.mxu0 0.0
      %336 = vmatpush1.msra.mxu0 %v237
      %337 = vmatprep.subr.mxu0 0.0
      %338 = vmatpush1.msra.mxu0 0.0
      %339 = vmatprep.subr.mxu0 0.0
      %340 = vmatpush1.msra.mxu0 0.0
      %341 = vmatprep.subr.mxu0 0.0
      %342 = vmatpush1.msra.mxu0 0.0
      %343 = vmatprep.subr.mxu0 0.0
      %344 = vmatpush1.msra.mxu0 0.0
      %345 = vmatprep.subr.mxu0 0.0
      %346 = vmatpush1.msra.mxu0 0.0
      %347 = vmatprep.subr.mxu0 0.0
      %348 = vmatpush1.msra.mxu0 0.0
      %349 = vmatprep.subr.mxu0 0.0
      %350 = vmatpush1.msra.mxu0 0.0
      %351 = vmatprep.subr.mxu0 0.0
      %352 = vmatpush1.msra.mxu0 0.0
      %353 = vmatprep.subr.mxu0 0.0
      %354 = vmatpush1.msra.mxu0 0.0
      %355 = vmatprep.subr.mxu0 0.0
      %356 = vmatpush1.msra.mxu0 0.0
      %357 = vmatprep.subr.mxu0 0.0
      %358 = vmatpush1.msra.mxu0 0.0
      %359 = vmatprep.subr.mxu0 0.0
      %360 = vmatpush1.msra.mxu0 0.0
      %361 = vmatprep.subr.mxu0 0.0
      %362 = vmatpush1.msra.mxu0 0.0
      %363 = vmatprep.subr.mxu0 0.0
      %364 = vmatpush1.msra.mxu0 0.0
      %365 = vmatprep.subr.mxu0 0.0
      %366 = vmatpush1.msra.mxu0 0.0
      %367 = vmatprep.subr.mxu0 0.0
      %368 = vmatpush1.msra.mxu0 0.0
      %369 = vmatprep.subr.mxu0 0.0
      %370 = vmatpush1.msra.mxu0 0.0
      %371 = vmatprep.subr.mxu0 0.0
      %372 = vmatpush1.msra.mxu0 0.0
      %373 = vmatprep.subr.mxu0 0.0
      %374 = vmatpush1.msra.mxu0 0.0
      %375 = vmatprep.subr.mxu0 0.0
      %376 = vmatpush1.msra.mxu0 0.0
      %377 = vmatprep.subr.mxu0 0.0
      %378 = vmatpush1.msra.mxu0 0.0
      %379 = vmatprep.subr.mxu0 0.0
      %380 = vmatpush1.msra.mxu0 0.0
      %381 = vmatprep.subr.mxu0 0.0
      %382 = vmatpush1.msra.mxu0 0.0
      %383 = vmatprep.subr.mxu0 0.0
      %384 = vmatpush1.msra.mxu0 0.0
      %385 = vmatprep.subr.mxu0 0.0
      %386 = vmatpush1.msra.mxu0 0.0
      %387 = vmatprep.subr.mxu0 0.0
      %388 = vmatpush1.msra.mxu0 0.0
      %389 = vmatprep.subr.mxu0 0.0
      %390 = vmatpush1.msra.mxu0 0.0
      %391 = vmatprep.subr.mxu0 0.0
      %392 = vmatpush1.msra.mxu0 0.0
      %393 = vmatprep.subr.mxu0 0.0
      %394 = vmatpush1.msra.mxu0 0.0
      %395 = vmatprep.subr.mxu0 0.0
      %396 = vmatpush1.msra.mxu0 0.0
      %397 = vmatprep.subr.mxu0 0.0
      %398 = vmatpush1.msra.mxu0 0.0
      %399 = vmatprep.mubr.f32.mxu0 0.0
      %400 = vmatmul.mubr.f32.gmra.mrb[0].mxu0 %v240
      %v401 = vpop.f32.mrb[0].mxu0
      %v402 = vadd.f32 0.0, %v401
      %v403 = vpop.f32.mrb[0].mxu0
      %404 = vmatprep.mubr.f32.mxu0 0.0
      %405 = vmatmul.mubr.f32.gmra.mrb[0].mxu0 %v243
      %v406 = vpop.f32.mrb[0].mxu0
      %v407 = vadd.f32 0.0, %v406
      %v408 = vpop.f32.mrb[0].mxu0
      %409 = vmatprep.mubr.f32.mxu0 0.0
      %410 = vmatmul.mubr.f32.gmra.mrb[0].mxu0 %v246
      %v411 = vpop.f32.mrb[0].mxu0
      %v412 = vadd.f32 0.0, %v411
      %v413 = vpop.f32.mrb[0].mxu0
      %414 = vmatprep.mubr.f32.mxu0 0.0
      %415 = vmatmul.mubr.f32.gmra.mrb[0].mxu0 %v249
      %v416 = vpop.f32.mrb[0].mxu0
      %v417 = vadd.f32 0.0, %v416
      %v418 = vpop.f32.mrb[0].mxu0
      %419 = vmatprep.mubr.f32.mxu0 0.0
      %420 = vmatmul.mubr.f32.gmra.mrb[0].mxu0 %v252
      %v421 = vpop.f32.mrb[0].mxu0
      %v422 = vadd.f32 0.0, %v421
      %v423 = vpop.f32.mrb[0].mxu0
      %424 = vmatprep.mubr.f32.mxu0 0.0
      %425 = vmatmul.mubr.f32.gmra.mrb[0].mxu0 %v255
      %v426 = vpop.f32.mrb[0].mxu0
      %v427 = vadd.f32 0.0, %v426
      %v428 = vpop.f32.mrb[0].mxu0
      %429 = vmatprep.mubr.f32.mxu0 0.0
      %430 = vmatmul.mubr.f32.gmra.mrb[0].mxu0 %v258
      %v431 = vpop.f32.mrb[0].mxu0
      %v432 = vadd.f32 0.0, %v431
      %v433 = vpop.f32.mrb[0].mxu0
      %434 = vmatprep.mubr.f32.mxu0 0.0
      %435 = vmatmul.mubr.f32.gmra.mrb[0].mxu0 %v261
      %v436 = vpop.f32.mrb[0].mxu0
      %v437 = vadd.f32 0.0, %v436
      %v438 = vpop.f32.mrb[0].mxu0
      %439 = vmatprep.mubr.f32.mxu0 0.0
      %440 = vmatmul.mubr.f32.gmra.mrb[0].mxu0 %v264
      %v441 = vpop.f32.mrb[0].mxu0
      %v442 = vadd.f32 0.0, %v441
      %v443 = vpop.f32.mrb[0].mxu0
      %444 = vmatprep.mubr.f32.mxu0 0.0
      %445 = vmatmul.mubr.f32.gmra.mrb[0].mxu0 %v267
      %v446 = vpop.f32.mrb[0].mxu0
      %v447 = vadd.f32 0.0, %v446
      %v448 = vpop.f32.mrb[0].mxu0
      %449 = vmatprep.mubr.f32.mxu0 0.0
      %450 = vmatmul.mubr.f32.gmra.mrb[0].mxu0 %v270
      %v451 = vpop.f32.mrb[0].mxu0
      %v452 = vadd.f32 0.0, %v451
      %v453 = vpop.f32.mrb[0].mxu0
      %454 = vmatprep.mubr.f32.mxu0 0.0
      %455 = vmatmul.mubr.f32.gmra.mrb[0].mxu0 %v273
      %v456 = vpop.f32.mrb[0].mxu0
      %v457 = vadd.f32 0.0, %v456
      %v458 = vpop.f32.mrb[0].mxu0
      %459 = vmatprep.mubr.f32.mxu0 0.0
      %460 = vmatmul.mubr.f32.gmra.mrb[0].mxu0 %v276
      %v461 = vpop.f32.mrb[0].mxu0
      %v462 = vadd.f32 0.0, %v461
      %v463 = vpop.f32.mrb[0].mxu0
      %464 = vmatprep.mubr.f32.mxu0 0.0
      %465 = vmatmul.mubr.f32.gmra.mrb[0].mxu0 %v279
      %v466 = vpop.f32.mrb[0].mxu0
      %v467 = vadd.f32 0.0, %v466
      %v468 = vpop.f32.mrb[0].mxu0
      %469 = vmatprep.mubr.f32.mxu0 0.0
      %470 = vmatmul.mubr.f32.gmra.mrb[0].mxu0 %v282
      %v471 = vpop.f32.mrb[0].mxu0
      %v472 = vadd.f32 0.0, %v471
      %v473 = vpop.f32.mrb[0].mxu0
      %474 = vmatprep.mubr.f32.mxu0 0.0
      %475 = vmatmul.mubr.f32.gmra.mrb[0].mxu0 %v285
      %v476 = vpop.f32.mrb[0].mxu0
      %v477 = vadd.f32 0.0, %v476
      %v478 = vpop.f32.mrb[0].mxu0
      %479 = vmatprep.mubr.f32.mxu0 0.0
      %480 = vmatmul.mubr.f32.gmra.mrb[0].mxu0 %v288
      %v481 = vpop.f32.mrb[0].mxu0
      %v482 = vadd.f32 0.0, %v481
      %v483 = vpop.f32.mrb[0].mxu0
      %484 = vmatprep.mubr.f32.mxu0 0.0
      %485 = vmatmul.mubr.f32.gmra.mrb[0].mxu0 %v291
      %v486 = vpop.f32.mrb[0].mxu0
      %v487 = vadd.f32 0.0, %v486
      %v488 = vpop.f32.mrb[0].mxu0
      %489 = vmatprep.mubr.f32.mxu0 0.0
      %490 = vmatmul.mubr.f32.gmra.mrb[0].mxu0 %v294
      %v491 = vpop.f32.mrb[0].mxu0
      %v492 = vadd.f32 0.0, %v491
      %v493 = vpop.f32.mrb[0].mxu0
      %494 = vmatprep.mubr.f32.mxu0 0.0
      %495 = vmatmul.mubr.f32.gmra.mrb[0].mxu0 %v297
      %v496 = vpop.f32.mrb[0].mxu0
      %v497 = vadd.f32 0.0, %v496
      %v498 = vpop.f32.mrb[0].mxu0
      %499 = vmatprep.mubr.f32.mxu0 0.0
      %500 = vmatmul.mubr.f32.gmra.mrb[0].mxu0 %v300
      %v501 = vpop.f32.mrb[0].mxu0
      %v502 = vadd.f32 0.0, %v501
      %v503 = vpop.f32.mrb[0].mxu0
      %504 = vmatprep.mubr.f32.mxu0 0.0
      %505 = vmatmul.mubr.f32.gmra.mrb[0].mxu0 %v303
      %v506 = vpop.f32.mrb[0].mxu0
      %v507 = vadd.f32 0.0, %v506
      %v508 = vpop.f32.mrb[0].mxu0
      %509 = vmatprep.mubr.f32.mxu0 0.0
      %510 = vmatmul.mubr.f32.gmra.mrb[0].mxu0 %v306
      %v511 = vpop.f32.mrb[0].mxu0
      %v512 = vadd.f32 0.0, %v511
      %v513 = vpop.f32.mrb[0].mxu0
      %514 = vmatprep.mubr.f32.mxu0 0.0
      %515 = vmatmul.mubr.f32.gmra.mrb[0].mxu0 %v309
      %v516 = vpop.f32.mrb[0].mxu0
      %v517 = vadd.f32 0.0, %v516
      %v518 = vpop.f32.mrb[0].mxu0
      %519 = vmatprep.mubr.f32.mxu0 0.0
      %520 = vmatmul.mubr.f32.gmra.mrb[0].mxu0 %v312
      %v521 = vpop.f32.mrb[0].mxu0
      %v522 = vadd.f32 0.0, %v521
      %v523 = vpop.f32.mrb[0].mxu0
      %524 = vmatprep.mubr.f32.mxu0 0.0
      %525 = vmatmul.mubr.f32.gmra.mrb[0].mxu0 %v315
      %v526 = vpop.f32.mrb[0].mxu0
      %v527 = vadd.f32 0.0, %v526
      %v528 = vpop.f32.mrb[0].mxu0
      %529 = vmatprep.mubr.f32.mxu0 0.0
      %530 = vmatmul.mubr.f32.gmra.mrb[0].mxu0 %v318
      %v531 = vpop.f32.mrb[0].mxu0
      %v532 = vadd.f32 0.0, %v531
      %v533 = vpop.f32.mrb[0].mxu0
      %534 = vmatprep.mubr.f32.mxu0 0.0
      %535 = vmatmul.mubr.f32.gmra.mrb[0].mxu0 %v321
      %v536 = vpop.f32.mrb[0].mxu0
      %v537 = vadd.f32 0.0, %v536
      %v538 = vpop.f32.mrb[0].mxu0
      %539 = vmatprep.mubr.f32.mxu0 0.0
      %540 = vmatmul.mubr.f32.gmra.mrb[0].mxu0 %v324
      %v541 = vpop.f32.mrb[0].mxu0
      %v542 = vadd.f32 0.0, %v541
      %v543 = vpop.f32.mrb[0].mxu0
      %544 = vmatprep.mubr.f32.mxu0 0.0
      %545 = vmatmul.mubr.f32.gmra.mrb[0].mxu0 %v327
      %v546 = vpop.f32.mrb[0].mxu0
      %v547 = vadd.f32 0.0, %v546
      %v548 = vpop.f32.mrb[0].mxu0
      %549 = vmatprep.mubr.f32.mxu0 0.0
      %550 = vmatmul.mubr.f32.gmra.mrb[0].mxu0 %v330
      %v551 = vpop.f32.mrb[0].mxu0
      %v552 = vadd.f32 0.0, %v551
      %v553 = vpop.f32.mrb[0].mxu0
      %554 = vmatprep.mubr.f32.mxu0 0.0
      %555 = vmatmul.mubr.f32.gmra.mrb[0].mxu0 %v333
      %v556 = vpop.f32.mrb[0].mxu0
      %v557 = vadd.f32 0.0, %v556
      %v558 = vpop.f32.mrb[0].mxu0
      %559 = vdwg.mxu0
      %v561 = vsel %vm238, %v171, 0
      %v564 = vsel %vm238, %v172, 0
      %v567 = vsel %vm238, %v173, 0
      %v570 = vsel %vm238, %v174, 0
      %v573 = vsel %vm238, %v175, 0
      %v576 = vsel %vm238, %v176, 0
      %v579 = vsel %vm238, %v177, 0
      %v582 = vsel %vm238, %v178, 0
      %v585 = vsel %vm238, %v179, 0
      %v588 = vsel %vm238, %v180, 0
      %v591 = vsel %vm238, %v181, 0
      %v594 = vsel %vm238, %v182, 0
      %v597 = vsel %vm238, %v183, 0
      %v600 = vsel %vm238, %v184, 0
      %v603 = vsel %vm238, %v185, 0
      %v606 = vsel %vm238, %v186, 0
      %v609 = vsel %vm238, %v187, 0
      %v612 = vsel %vm238, %v188, 0
      %v615 = vsel %vm238, %v189, 0
      %v618 = vsel %vm238, %v190, 0
      %v621 = vsel %vm238, %v191, 0
      %v624 = vsel %vm238, %v192, 0
      %v627 = vsel %vm238, %v193, 0
      %v630 = vsel %vm238, %v194, 0
      %v633 = vsel %vm238, %v195, 0
      %v636 = vsel %vm238, %v196, 0
      %v639 = vsel %vm238, %v197, 0
      %v642 = vsel %vm238, %v198, 0
      %v645 = vsel %vm238, %v199, 0
      %v648 = vsel %vm238, %v200, 0
      %v651 = vsel %vm238, %v201, 0
      %v654 = vsel %vm238, %v202, 0
      %656 = vmatprep.subr.mxu0 0.0
      %657 = vmatpush1.msra.mxu0 %v203
      %658 = vmatprep.subr.mxu0 0.0
      %659 = vmatpush1.msra.mxu0 0.0
      %660 = vmatprep.subr.mxu0 0.0
      %661 = vmatpush1.msra.mxu0 0.0
      %662 = vmatprep.subr.mxu0 0.0
      %663 = vmatpush1.msra.mxu0 0.0
      %664 = vmatprep.subr.mxu0 0.0
      %665 = vmatpush1.msra.mxu0 0.0
      %666 = vmatprep.subr.mxu0 0.0
      %667 = vmatpush1.msra.mxu0 0.0
      %668 = vmatprep.subr.mxu0 0.0
      %669 = vmatpush1.msra.mxu0 0.0
      %670 = vmatprep.subr.mxu0 0.0
      %671 = vmatpush1.msra.mxu0 0.0
      %672 = vmatprep.subr.mxu0 0.0
      %673 = vmatpush1.msra.mxu0 0.0
      %674 = vmatprep.subr.mxu0 0.0
      %675 = vmatpush1.msra.mxu0 0.0
      %676 = vmatprep.subr.mxu0 0.0
      %677 = vmatpush1.msra.mxu0 0.0
      %678 = vmatprep.subr.mxu0 0.0
      %679 = vmatpush1.msra.mxu0 0.0
      %680 = vmatprep.subr.mxu0 0.0
      %681 = vmatpush1.msra.mxu0 0.0
      %682 = vmatprep.subr.mxu0 0.0
      %683 = vmatpush1.msra.mxu0 0.0
      %684 = vmatprep.subr.mxu0 0.0
      %685 = vmatpush1.msra.mxu0 0.0
      %686 = vmatprep.subr.mxu0 0.0
      %687 = vmatpush1.msra.mxu0 0.0
      %688 = vmatprep.subr.mxu0 0.0
      %689 = vmatpush1.msra.mxu0 0.0
      %690 = vmatprep.subr.mxu0 0.0
      %691 = vmatpush1.msra.mxu0 0.0
      %692 = vmatprep.subr.mxu0 0.0
      %693 = vmatpush1.msra.mxu0 0.0
      %694 = vmatprep.subr.mxu0 0.0
      %695 = vmatpush1.msra.mxu0 0.0
      %696 = vmatprep.subr.mxu0 0.0
      %697 = vmatpush1.msra.mxu0 0.0
      %698 = vmatprep.subr.mxu0 0.0
      %699 = vmatpush1.msra.mxu0 0.0
      %700 = vmatprep.subr.mxu0 0.0
      %701 = vmatpush1.msra.mxu0 0.0
      %702 = vmatprep.subr.mxu0 0.0
      %703 = vmatpush1.msra.mxu0 0.0
      %704 = vmatprep.subr.mxu0 0.0
      %705 = vmatpush1.msra.mxu0 0.0
      %706 = vmatprep.subr.mxu0 0.0
      %707 = vmatpush1.msra.mxu0 0.0
      %708 = vmatprep.subr.mxu0 0.0
      %709 = vmatpush1.msra.mxu0 0.0
      %710 = vmatprep.subr.mxu0 0.0
      %711 = vmatpush1.msra.mxu0 0.0
      %712 = vmatprep.subr.mxu0 0.0
      %713 = vmatpush1.msra.mxu0 0.0
      %714 = vmatprep.subr.mxu0 0.0
      %715 = vmatpush1.msra.mxu0 0.0
      %716 = vmatprep.subr.mxu0 0.0
      %717 = vmatpush1.msra.mxu0 0.0
      %718 = vmatprep.subr.mxu0 0.0
      %719 = vmatpush1.msra.mxu0 0.0
      %720 = vmatprep.mubr.f32.mxu0 0.0
      %721 = vmatmul.mubr.f32.gmra.mrb[0].mxu0 %v561
      %v722 = vpop.f32.mrb[0].mxu0
      %v723 = vadd.f32 %v402, %v722
      %v724 = vpop.f32.mrb[0].mxu0
      %725 = vmatprep.mubr.f32.mxu0 0.0
      %726 = vmatmul.mubr.f32.gmra.mrb[0].mxu0 %v564
      %v727 = vpop.f32.mrb[0].mxu0
      %v728 = vadd.f32 %v407, %v727
      %v729 = vpop.f32.mrb[0].mxu0
      %730 = vmatprep.mubr.f32.mxu0 0.0
      %731 = vmatmul.mubr.f32.gmra.mrb[0].mxu0 %v567
      %v732 = vpop.f32.mrb[0].mxu0
      %v733 = vadd.f32 %v412, %v732
      %v734 = vpop.f32.mrb[0].mxu0
      %735 = vmatprep.mubr.f32.mxu0 0.0
      %736 = vmatmul.mubr.f32.gmra.mrb[0].mxu0 %v570
      %v737 = vpop.f32.mrb[0].mxu0
      %v738 = vadd.f32 %v417, %v737
      %v739 = vpop.f32.mrb[0].mxu0
      %740 = vmatprep.mubr.f32.mxu0 0.0
      %741 = vmatmul.mubr.f32.gmra.mrb[0].mxu0 %v573
      %v742 = vpop.f32.mrb[0].mxu0
      %v743 = vadd.f32 %v422, %v742
      %v744 = vpop.f32.mrb[0].mxu0
      %745 = vmatprep.mubr.f32.mxu0 0.0
      %746 = vmatmul.mubr.f32.gmra.mrb[0].mxu0 %v576
      %v747 = vpop.f32.mrb[0].mxu0
      %v748 = vadd.f32 %v427, %v747
      %v749 = vpop.f32.mrb[0].mxu0
      %750 = vmatprep.mubr.f32.mxu0 0.0
      %751 = vmatmul.mubr.f32.gmra.mrb[0].mxu0 %v579
      %v752 = vpop.f32.mrb[0].mxu0
      %v753 = vadd.f32 %v432, %v752
      %v754 = vpop.f32.mrb[0].mxu0
      %755 = vmatprep.mubr.f32.mxu0 0.0
      %756 = vmatmul.mubr.f32.gmra.mrb[0].mxu0 %v582
      %v757 = vpop.f32.mrb[0].mxu0
      %v758 = vadd.f32 %v437, %v757
      %v759 = vpop.f32.mrb[0].mxu0
      %760 = vmatprep.mubr.f32.mxu0 0.0
      %761 = vmatmul.mubr.f32.gmra.mrb[0].mxu0 %v585
      %v762 = vpop.f32.mrb[0].mxu0
      %v763 = vadd.f32 %v442, %v762
      %v764 = vpop.f32.mrb[0].mxu0
      %765 = vmatprep.mubr.f32.mxu0 0.0
      %766 = vmatmul.mubr.f32.gmra.mrb[0].mxu0 %v588
      %v767 = vpop.f32.mrb[0].mxu0
      %v768 = vadd.f32 %v447, %v767
      %v769 = vpop.f32.mrb[0].mxu0
      %770 = vmatprep.mubr.f32.mxu0 0.0
      %771 = vmatmul.mubr.f32.gmra.mrb[0].mxu0 %v591
      %v772 = vpop.f32.mrb[0].mxu0
      %v773 = vadd.f32 %v452, %v772
      %v774 = vpop.f32.mrb[0].mxu0
      %775 = vmatprep.mubr.f32.mxu0 0.0
      %776 = vmatmul.mubr.f32.gmra.mrb[0].mxu0 %v594
      %v777 = vpop.f32.mrb[0].mxu0
      %v778 = vadd.f32 %v457, %v777
      %v779 = vpop.f32.mrb[0].mxu0
      %780 = vmatprep.mubr.f32.mxu0 0.0
      %781 = vmatmul.mubr.f32.gmra.mrb[0].mxu0 %v597
      %v782 = vpop.f32.mrb[0].mxu0
      %v783 = vadd.f32 %v462, %v782
      %v784 = vpop.f32.mrb[0].mxu0
      %785 = vmatprep.mubr.f32.mxu0 0.0
      %786 = vmatmul.mubr.f32.gmra.mrb[0].mxu0 %v600
      %v787 = vpop.f32.mrb[0].mxu0
      %v788 = vadd.f32 %v467, %v787
      %v789 = vpop.f32.mrb[0].mxu0
      %790 = vmatprep.mubr.f32.mxu0 0.0
      %791 = vmatmul.mubr.f32.gmra.mrb[0].mxu0 %v603
      %v792 = vpop.f32.mrb[0].mxu0
      %v793 = vadd.f32 %v472, %v792
      %v794 = vpop.f32.mrb[0].mxu0
      %795 = vmatprep.mubr.f32.mxu0 0.0
      %796 = vmatmul.mubr.f32.gmra.mrb[0].mxu0 %v606
      %v797 = vpop.f32.mrb[0].mxu0
      %v798 = vadd.f32 %v477, %v797
      %v799 = vpop.f32.mrb[0].mxu0
      %800 = vmatprep.mubr.f32.mxu0 0.0
      %801 = vmatmul.mubr.f32.gmra.mrb[0].mxu0 %v609
      %v802 = vpop.f32.mrb[0].mxu0
      %v803 = vadd.f32 %v482, %v802
      %v804 = vpop.f32.mrb[0].mxu0
      %805 = vmatprep.mubr.f32.mxu0 0.0
      %806 = vmatmul.mubr.f32.gmra.mrb[0].mxu0 %v612
      %v807 = vpop.f32.mrb[0].mxu0
      %v808 = vadd.f32 %v487, %v807
      %v809 = vpop.f32.mrb[0].mxu0
      %810 = vmatprep.mubr.f32.mxu0 0.0
      %811 = vmatmul.mubr.f32.gmra.mrb[0].mxu0 %v615
      %v812 = vpop.f32.mrb[0].mxu0
      %v813 = vadd.f32 %v492, %v812
      %v814 = vpop.f32.mrb[0].mxu0
      %815 = vmatprep.mubr.f32.mxu0 0.0
      %816 = vmatmul.mubr.f32.gmra.mrb[0].mxu0 %v618
      %v817 = vpop.f32.mrb[0].mxu0
      %v818 = vadd.f32 %v497, %v817
      %v819 = vpop.f32.mrb[0].mxu0
      %820 = vmatprep.mubr.f32.mxu0 0.0
      %821 = vmatmul.mubr.f32.gmra.mrb[0].mxu0 %v621
      %v822 = vpop.f32.mrb[0].mxu0
      %v823 = vadd.f32 %v502, %v822
      %v824 = vpop.f32.mrb[0].mxu0
      %825 = vmatprep.mubr.f32.mxu0 0.0
      %826 = vmatmul.mubr.f32.gmra.mrb[0].mxu0 %v624
      %v827 = vpop.f32.mrb[0].mxu0
      %v828 = vadd.f32 %v507, %v827
      %v829 = vpop.f32.mrb[0].mxu0
      %830 = vmatprep.mubr.f32.mxu0 0.0
      %831 = vmatmul.mubr.f32.gmra.mrb[0].mxu0 %v627
      %v832 = vpop.f32.mrb[0].mxu0
      %v833 = vadd.f32 %v512, %v832
      %v834 = vpop.f32.mrb[0].mxu0
      %835 = vmatprep.mubr.f32.mxu0 0.0
      %836 = vmatmul.mubr.f32.gmra.mrb[0].mxu0 %v630
      %v837 = vpop.f32.mrb[0].mxu0
      %v838 = vadd.f32 %v517, %v837
      %v839 = vpop.f32.mrb[0].mxu0
      %840 = vmatprep.mubr.f32.mxu0 0.0
      %841 = vmatmul.mubr.f32.gmra.mrb[0].mxu0 %v633
      %v842 = vpop.f32.mrb[0].mxu0
      %v843 = vadd.f32 %v522, %v842
      %v844 = vpop.f32.mrb[0].mxu0
      %845 = vmatprep.mubr.f32.mxu0 0.0
      %846 = vmatmul.mubr.f32.gmra.mrb[0].mxu0 %v636
      %v847 = vpop.f32.mrb[0].mxu0
      %v848 = vadd.f32 %v527, %v847
      %v849 = vpop.f32.mrb[0].mxu0
      %850 = vmatprep.mubr.f32.mxu0 0.0
      %851 = vmatmul.mubr.f32.gmra.mrb[0].mxu0 %v639
      %v852 = vpop.f32.mrb[0].mxu0
      %v853 = vadd.f32 %v532, %v852
      %v854 = vpop.f32.mrb[0].mxu0
      %855 = vmatprep.mubr.f32.mxu0 0.0
      %856 = vmatmul.mubr.f32.gmra.mrb[0].mxu0 %v642
      %v857 = vpop.f32.mrb[0].mxu0
      %v858 = vadd.f32 %v537, %v857
      %v859 = vpop.f32.mrb[0].mxu0
      %860 = vmatprep.mubr.f32.mxu0 0.0
      %861 = vmatmul.mubr.f32.gmra.mrb[0].mxu0 %v645
      %v862 = vpop.f32.mrb[0].mxu0
      %v863 = vadd.f32 %v542, %v862
      %v864 = vpop.f32.mrb[0].mxu0
      %865 = vmatprep.mubr.f32.mxu0 0.0
      %866 = vmatmul.mubr.f32.gmra.mrb[0].mxu0 %v648
      %v867 = vpop.f32.mrb[0].mxu0
      %v868 = vadd.f32 %v547, %v867
      %v869 = vpop.f32.mrb[0].mxu0
      %870 = vmatprep.mubr.f32.mxu0 0.0
      %871 = vmatmul.mubr.f32.gmra.mrb[0].mxu0 %v651
      %v872 = vpop.f32.mrb[0].mxu0
      %v873 = vadd.f32 %v552, %v872
      %v874 = vpop.f32.mrb[0].mxu0
      %875 = vmatprep.mubr.f32.mxu0 0.0
      %876 = vmatmul.mubr.f32.gmra.mrb[0].mxu0 %v654
      %v877 = vpop.f32.mrb[0].mxu0
      %v878 = vadd.f32 %v557, %v877
      %v879 = vpop.f32.mrb[0].mxu0
      %880 = vdwg.mxu0
      %v881 = vld [vmem:[%s165 + $0x2] sm:$0xff]
      %v882 = vld [vmem:[%s165 + $0xa] sm:$0xff]
      %v883 = vld [vmem:[%s165 + $0x1a] sm:$0xff]
      %v884 = vld [vmem:[%s165 + $0x22] sm:$0xff]
      %v885 = vld [vmem:[%s165 + $0x32] sm:$0xff]
      %v886 = vld [vmem:[%s165 + $0x3a] sm:$0xff]
      %v887 = vld [vmem:[%s165 + $0x4a] sm:$0xff]
      %v888 = vld [vmem:[%s165 + $0x52] sm:$0xff]
      %v889 = vld [vmem:[%s165 + $0x62] sm:$0xff]
      %v890 = vld [vmem:[%s165 + $0x6a] sm:$0xff]
      %v891 = vld [vmem:[%s165 + $0x7a] sm:$0xff]
      %v892 = vld [vmem:[%s165 + $0x82] sm:$0xff]
      %v893 = vld [vmem:[%s165 + $0x92] sm:$0xff]
      %v894 = vld [vmem:[%s165 + $0x9a] sm:$0xff]
      %v895 = vld [vmem:[%s165 + $0xaa] sm:$0xff]
      %v896 = vld [vmem:[%s165 + $0xb2] sm:$0xff]
      %v897 = vld [vmem:[%s165 + $0xc2] sm:$0xff]
      %v898 = vld [vmem:[%s165 + $0xca] sm:$0xff]
      %v899 = vld [vmem:[%s165 + $0xda] sm:$0xff]
      %v900 = vld [vmem:[%s165 + $0xe2] sm:$0xff]
      %v901 = vld [vmem:[%s165 + $0xf2] sm:$0xff]
      %v902 = vld [vmem:[%s165 + $0xfa] sm:$0xff]
      %v903 = vld [vmem:[%s165 + $0x10a] sm:$0xff]
      %v904 = vld [vmem:[%s165 + $0x112] sm:$0xff]
      %v905 = vld [vmem:[%s165 + $0x122] sm:$0xff]
      %v906 = vld [vmem:[%s165 + $0x12a] sm:$0xff]
      %v907 = vld [vmem:[%s165 + $0x13a] sm:$0xff]
      %v908 = vld [vmem:[%s165 + $0x142] sm:$0xff]
      %v909 = vld [vmem:[%s165 + $0x152] sm:$0xff]
      %v910 = vld [vmem:[%s165 + $0x15a] sm:$0xff]
      %v911 = vld [vmem:[%s165 + $0x16a] sm:$0xff]
      %v912 = vld [vmem:[%s165 + $0x172] sm:$0xff]
      %s913 = scalar_lea.vmem %s1, 16
      %v914 = vld [vmem:[%s913] sm:$0xff]
      %v916 = vsel %vm238, %v881, 0
      %v919 = vsel %vm238, %v882, 0
      %v922 = vsel %vm238, %v883, 0
      %v925 = vsel %vm238, %v884, 0
      %v928 = vsel %vm238, %v885, 0
      %v931 = vsel %vm238, %v886, 0
      %v934 = vsel %vm238, %v887, 0
      %v937 = vsel %vm238, %v888, 0
      %v940 = vsel %vm238, %v889, 0
      %v943 = vsel %vm238, %v890, 0
      %v946 = vsel %vm238, %v891, 0
      %v949 = vsel %vm238, %v892, 0
      %v952 = vsel %vm238, %v893, 0
      %v955 = vsel %vm238, %v894, 0
      %v958 = vsel %vm238, %v895, 0
      %v961 = vsel %vm238, %v896, 0
      %v964 = vsel %vm238, %v897, 0
      %v967 = vsel %vm238, %v898, 0
      %v970 = vsel %vm238, %v899, 0
      %v973 = vsel %vm238, %v900, 0
      %v976 = vsel %vm238, %v901, 0
      %v979 = vsel %vm238, %v902, 0
      %v982 = vsel %vm238, %v903, 0
      %v985 = vsel %vm238, %v904, 0
      %v988 = vsel %vm238, %v905, 0
      %v991 = vsel %vm238, %v906, 0
      %v994 = vsel %vm238, %v907, 0
      %v997 = vsel %vm238, %v908, 0
      %v1000 = vsel %vm238, %v909, 0
      %v1003 = vsel %vm238, %v910, 0
      %v1006 = vsel %vm238, %v911, 0
      %v1009 = vsel %vm238, %v912, 0
      %1011 = vmatprep.subr.mxu0 0.0
      %1012 = vmatpush1.msra.mxu0 %v914
      %1013 = vmatprep.subr.mxu0 0.0
      %1014 = vmatpush1.msra.mxu0 0.0
      %1015 = vmatprep.subr.mxu0 0.0
      %1016 = vmatpush1.msra.mxu0 0.0
      %1017 = vmatprep.subr.mxu0 0.0
      %1018 = vmatpush1.msra.mxu0 0.0
      %1019 = vmatprep.subr.mxu0 0.0
      %1020 = vmatpush1.msra.mxu0 0.0
      %1021 = vmatprep.subr.mxu0 0.0
      %1022 = vmatpush1.msra.mxu0 0.0
      %1023 = vmatprep.subr.mxu0 0.0
      %1024 = vmatpush1.msra.mxu0 0.0
      %1025 = vmatprep.subr.mxu0 0.0
      %1026 = vmatpush1.msra.mxu0 0.0
      %1027 = vmatprep.subr.mxu0 0.0
      %1028 = vmatpush1.msra.mxu0 0.0
      %1029 = vmatprep.subr.mxu0 0.0
      %1030 = vmatpush1.msra.mxu0 0.0
      %1031 = vmatprep.subr.mxu0 0.0
      %1032 = vmatpush1.msra.mxu0 0.0
      %1033 = vmatprep.subr.mxu0 0.0
      %1034 = vmatpush1.msra.mxu0 0.0
      %1035 = vmatprep.subr.mxu0 0.0
      %1036 = vmatpush1.msra.mxu0 0.0
      %1037 = vmatprep.subr.mxu0 0.0
      %1038 = vmatpush1.msra.mxu0 0.0
      %1039 = vmatprep.subr.mxu0 0.0
      %1040 = vmatpush1.msra.mxu0 0.0
      %1041 = vmatprep.subr.mxu0 0.0
      %1042 = vmatpush1.msra.mxu0 0.0
      %1043 = vmatprep.subr.mxu0 0.0
      %1044 = vmatpush1.msra.mxu0 0.0
      %1045 = vmatprep.subr.mxu0 0.0
      %1046 = vmatpush1.msra.mxu0 0.0
      %1047 = vmatprep.subr.mxu0 0.0
      %1048 = vmatpush1.msra.mxu0 0.0
      %1049 = vmatprep.subr.mxu0 0.0
      %1050 = vmatpush1.msra.mxu0 0.0
      %1051 = vmatprep.subr.mxu0 0.0
      %1052 = vmatpush1.msra.mxu0 0.0
      %1053 = vmatprep.subr.mxu0 0.0
      %1054 = vmatpush1.msra.mxu0 0.0
      %1055 = vmatprep.subr.mxu0 0.0
      %1056 = vmatpush1.msra.mxu0 0.0
      %1057 = vmatprep.subr.mxu0 0.0
      %1058 = vmatpush1.msra.mxu0 0.0
      %1059 = vmatprep.subr.mxu0 0.0
      %1060 = vmatpush1.msra.mxu0 0.0
      %1061 = vmatprep.subr.mxu0 0.0
      %1062 = vmatpush1.msra.mxu0 0.0
      %1063 = vmatprep.subr.mxu0 0.0
      %1064 = vmatpush1.msra.mxu0 0.0
      %1065 = vmatprep.subr.mxu0 0.0
      %1066 = vmatpush1.msra.mxu0 0.0
      %1067 = vmatprep.subr.mxu0 0.0
      %1068 = vmatpush1.msra.mxu0 0.0
      %1069 = vmatprep.subr.mxu0 0.0
      %1070 = vmatpush1.msra.mxu0 0.0
      %1071 = vmatprep.subr.mxu0 0.0
      %1072 = vmatpush1.msra.mxu0 0.0
      %1073 = vmatprep.subr.mxu0 0.0
      %1074 = vmatpush1.msra.mxu0 0.0
      %1075 = vmatprep.mubr.f32.mxu0 0.0
      %1076 = vmatmul.mubr.f32.gmra.mrb[0].mxu0 %v916
      %v1077 = vpop.f32.mrb[0].mxu0
      %v1078 = vadd.f32 0.0, %v1077
      %v1079 = vpop.f32.mrb[0].mxu0
      %1080 = vmatprep.mubr.f32.mxu0 0.0
      %1081 = vmatmul.mubr.f32.gmra.mrb[0].mxu0 %v919
      %v1082 = vpop.f32.mrb[0].mxu0
      %v1083 = vadd.f32 0.0, %v1082
      %v1084 = vpop.f32.mrb[0].mxu0
      %1085 = vmatprep.mubr.f32.mxu0 0.0
      %1086 = vmatmul.mubr.f32.gmra.mrb[0].mxu0 %v922
      %v1087 = vpop.f32.mrb[0].mxu0
      %v1088 = vadd.f32 0.0, %v1087
      %v1089 = vpop.f32.mrb[0].mxu0
      %1090 = vmatprep.mubr.f32.mxu0 0.0
      %1091 = vmatmul.mubr.f32.gmra.mrb[0].mxu0 %v925
      %v1092 = vpop.f32.mrb[0].mxu0
      %v1093 = vadd.f32 0.0, %v1092
      %v1094 = vpop.f32.mrb[0].mxu0
      %1095 = vmatprep.mubr.f32.mxu0 0.0
      %1096 = vmatmul.mubr.f32.gmra.mrb[0].mxu0 %v928
      %v1097 = vpop.f32.mrb[0].mxu0
      %v1098 = vadd.f32 0.0, %v1097
      %v1099 = vpop.f32.mrb[0].mxu0
      %1100 = vmatprep.mubr.f32.mxu0 0.0
      %1101 = vmatmul.mubr.f32.gmra.mrb[0].mxu0 %v931
      %v1102 = vpop.f32.mrb[0].mxu0
      %v1103 = vadd.f32 0.0, %v1102
      %v1104 = vpop.f32.mrb[0].mxu0
      %1105 = vmatprep.mubr.f32.mxu0 0.0
      %1106 = vmatmul.mubr.f32.gmra.mrb[0].mxu0 %v934
      %v1107 = vpop.f32.mrb[0].mxu0
      %v1108 = vadd.f32 0.0, %v1107
      %v1109 = vpop.f32.mrb[0].mxu0
      %1110 = vmatprep.mubr.f32.mxu0 0.0
      %1111 = vmatmul.mubr.f32.gmra.mrb[0].mxu0 %v937
      %v1112 = vpop.f32.mrb[0].mxu0
      %v1113 = vadd.f32 0.0, %v1112
      %v1114 = vpop.f32.mrb[0].mxu0
      %1115 = vmatprep.mubr.f32.mxu0 0.0
      %1116 = vmatmul.mubr.f32.gmra.mrb[0].mxu0 %v940
      %v1117 = vpop.f32.mrb[0].mxu0
      %v1118 = vadd.f32 0.0, %v1117
      %v1119 = vpop.f32.mrb[0].mxu0
      %1120 = vmatprep.mubr.f32.mxu0 0.0
      %1121 = vmatmul.mubr.f32.gmra.mrb[0].mxu0 %v943
      %v1122 = vpop.f32.mrb[0].mxu0
      %v1123 = vadd.f32 0.0, %v1122
      %v1124 = vpop.f32.mrb[0].mxu0
      %1125 = vmatprep.mubr.f32.mxu0 0.0
      %1126 = vmatmul.mubr.f32.gmra.mrb[0].mxu0 %v946
      %v1127 = vpop.f32.mrb[0].mxu0
      %v1128 = vadd.f32 0.0, %v1127
      %v1129 = vpop.f32.mrb[0].mxu0
      %1130 = vmatprep.mubr.f32.mxu0 0.0
      %1131 = vmatmul.mubr.f32.gmra.mrb[0].mxu0 %v949
      %v1132 = vpop.f32.mrb[0].mxu0
      %v1133 = vadd.f32 0.0, %v1132
      %v1134 = vpop.f32.mrb[0].mxu0
      %1135 = vmatprep.mubr.f32.mxu0 0.0
      %1136 = vmatmul.mubr.f32.gmra.mrb[0].mxu0 %v952
      %v1137 = vpop.f32.mrb[0].mxu0
      %v1138 = vadd.f32 0.0, %v1137
      %v1139 = vpop.f32.mrb[0].mxu0
      %1140 = vmatprep.mubr.f32.mxu0 0.0
      %1141 = vmatmul.mubr.f32.gmra.mrb[0].mxu0 %v955
      %v1142 = vpop.f32.mrb[0].mxu0
      %v1143 = vadd.f32 0.0, %v1142
      %v1144 = vpop.f32.mrb[0].mxu0
      %1145 = vmatprep.mubr.f32.mxu0 0.0
      %1146 = vmatmul.mubr.f32.gmra.mrb[0].mxu0 %v958
      %v1147 = vpop.f32.mrb[0].mxu0
      %v1148 = vadd.f32 0.0, %v1147
      %v1149 = vpop.f32.mrb[0].mxu0
      %1150 = vmatprep.mubr.f32.mxu0 0.0
      %1151 = vmatmul.mubr.f32.gmra.mrb[0].mxu0 %v961
      %v1152 = vpop.f32.mrb[0].mxu0
      %v1153 = vadd.f32 0.0, %v1152
      %v1154 = vpop.f32.mrb[0].mxu0
      %1155 = vmatprep.mubr.f32.mxu0 0.0
      %1156 = vmatmul.mubr.f32.gmra.mrb[0].mxu0 %v964
      %v1157 = vpop.f32.mrb[0].mxu0
      %v1158 = vadd.f32 0.0, %v1157
      %v1159 = vpop.f32.mrb[0].mxu0
      %1160 = vmatprep.mubr.f32.mxu0 0.0
      %1161 = vmatmul.mubr.f32.gmra.mrb[0].mxu0 %v967
      %v1162 = vpop.f32.mrb[0].mxu0
      %v1163 = vadd.f32 0.0, %v1162
      %v1164 = vpop.f32.mrb[0].mxu0
      %1165 = vmatprep.mubr.f32.mxu0 0.0
      %1166 = vmatmul.mubr.f32.gmra.mrb[0].mxu0 %v970
      %v1167 = vpop.f32.mrb[0].mxu0
      %v1168 = vadd.f32 0.0, %v1167
      %v1169 = vpop.f32.mrb[0].mxu0
      %1170 = vmatprep.mubr.f32.mxu0 0.0
      %1171 = vmatmul.mubr.f32.gmra.mrb[0].mxu0 %v973
      %v1172 = vpop.f32.mrb[0].mxu0
      %v1173 = vadd.f32 0.0, %v1172
      %v1174 = vpop.f32.mrb[0].mxu0
      %1175 = vmatprep.mubr.f32.mxu0 0.0
      %1176 = vmatmul.mubr.f32.gmra.mrb[0].mxu0 %v976
      %v1177 = vpop.f32.mrb[0].mxu0
      %v1178 = vadd.f32 0.0, %v1177
      %v1179 = vpop.f32.mrb[0].mxu0
      %1180 = vmatprep.mubr.f32.mxu0 0.0
      %1181 = vmatmul.mubr.f32.gmra.mrb[0].mxu0 %v979
      %v1182 = vpop.f32.mrb[0].mxu0
      %v1183 = vadd.f32 0.0, %v1182
      %v1184 = vpop.f32.mrb[0].mxu0
      %1185 = vmatprep.mubr.f32.mxu0 0.0
      %1186 = vmatmul.mubr.f32.gmra.mrb[0].mxu0 %v982
      %v1187 = vpop.f32.mrb[0].mxu0
      %v1188 = vadd.f32 0.0, %v1187
      %v1189 = vpop.f32.mrb[0].mxu0
      %1190 = vmatprep.mubr.f32.mxu0 0.0
      %1191 = vmatmul.mubr.f32.gmra.mrb[0].mxu0 %v985
      %v1192 = vpop.f32.mrb[0].mxu0
      %v1193 = vadd.f32 0.0, %v1192
      %v1194 = vpop.f32.mrb[0].mxu0
      %1195 = vmatprep.mubr.f32.mxu0 0.0
      %1196 = vmatmul.mubr.f32.gmra.mrb[0].mxu0 %v988
      %v1197 = vpop.f32.mrb[0].mxu0
      %v1198 = vadd.f32 0.0, %v1197
      %v1199 = vpop.f32.mrb[0].mxu0
      %1200 = vmatprep.mubr.f32.mxu0 0.0
      %1201 = vmatmul.mubr.f32.gmra.mrb[0].mxu0 %v991
      %v1202 = vpop.f32.mrb[0].mxu0
      %v1203 = vadd.f32 0.0, %v1202
      %v1204 = vpop.f32.mrb[0].mxu0
      %1205 = vmatprep.mubr.f32.mxu0 0.0
      %1206 = vmatmul.mubr.f32.gmra.mrb[0].mxu0 %v994
      %v1207 = vpop.f32.mrb[0].mxu0
      %v1208 = vadd.f32 0.0, %v1207
      %v1209 = vpop.f32.mrb[0].mxu0
      %1210 = vmatprep.mubr.f32.mxu0 0.0
      %1211 = vmatmul.mubr.f32.gmra.mrb[0].mxu0 %v997
      %v1212 = vpop.f32.mrb[0].mxu0
      %v1213 = vadd.f32 0.0, %v1212
      %v1214 = vpop.f32.mrb[0].mxu0
      %1215 = vmatprep.mubr.f32.mxu0 0.0
      %1216 = vmatmul.mubr.f32.gmra.mrb[0].mxu0 %v1000
      %v1217 = vpop.f32.mrb[0].mxu0
      %v1218 = vadd.f32 0.0, %v1217
      %v1219 = vpop.f32.mrb[0].mxu0
      %1220 = vmatprep.mubr.f32.mxu0 0.0
      %1221 = vmatmul.mubr.f32.gmra.mrb[0].mxu0 %v1003
      %v1222 = vpop.f32.mrb[0].mxu0
      %v1223 = vadd.f32 0.0, %v1222
      %v1224 = vpop.f32.mrb[0].mxu0
      %1225 = vmatprep.mubr.f32.mxu0 0.0
      %1226 = vmatmul.mubr.f32.gmra.mrb[0].mxu0 %v1006
      %v1227 = vpop.f32.mrb[0].mxu0
      %v1228 = vadd.f32 0.0, %v1227
      %v1229 = vpop.f32.mrb[0].mxu0
      %1230 = vmatprep.mubr.f32.mxu0 0.0
      %1231 = vmatmul.mubr.f32.gmra.mrb[0].mxu0 %v1009
      %v1232 = vpop.f32.mrb[0].mxu0
      %v1233 = vadd.f32 0.0, %v1232
      %v1234 = vpop.f32.mrb[0].mxu0
      %1235 = vdwg.mxu0
      %v1236 = vadd.f32 %v723, %v1078
      %v1237 = vadd.f32 %v728, %v1083
      %v1238 = vadd.f32 %v733, %v1088
      %v1239 = vadd.f32 %v738, %v1093
      %v1240 = vadd.f32 %v743, %v1098
      %v1241 = vadd.f32 %v748, %v1103
      %v1242 = vadd.f32 %v753, %v1108
      %v1243 = vadd.f32 %v758, %v1113
      %v1244 = vadd.f32 %v763, %v1118
      %v1245 = vadd.f32 %v768, %v1123
      %v1246 = vadd.f32 %v773, %v1128
      %v1247 = vadd.f32 %v778, %v1133
      %v1248 = vadd.f32 %v783, %v1138
      %v1249 = vadd.f32 %v788, %v1143
      %v1250 = vadd.f32 %v793, %v1148
      %v1251 = vadd.f32 %v798, %v1153
      %v1252 = vadd.f32 %v803, %v1158
      %v1253 = vadd.f32 %v808, %v1163
      %v1254 = vadd.f32 %v813, %v1168
      %v1255 = vadd.f32 %v818, %v1173
      %v1256 = vadd.f32 %v823, %v1178
      %v1257 = vadd.f32 %v828, %v1183
      %v1258 = vadd.f32 %v833, %v1188
      %v1259 = vadd.f32 %v838, %v1193
      %v1260 = vadd.f32 %v843, %v1198
      %v1261 = vadd.f32 %v848, %v1203
      %v1262 = vadd.f32 %v853, %v1208
      %v1263 = vadd.f32 %v858, %v1213
      %v1264 = vadd.f32 %v863, %v1218
      %v1265 = vadd.f32 %v868, %v1223
      %v1266 = vadd.f32 %v873, %v1228
      %v1267 = vadd.f32 %v878, %v1233
      %s1268 = scalar_lea.vmem %s165, 24
      %v1269 = vld [vmem:[%s1268] sm:$0xff]
      %v1270 = vld [vmem:[%s1268 + $0x8] sm:$0xff]
      %v1271 = vld [vmem:[%s1268 + $0x18] sm:$0xff]
      %v1272 = vld [vmem:[%s1268 + $0x20] sm:$0xff]
      %v1273 = vld [vmem:[%s1268 + $0x30] sm:$0xff]
      %v1274 = vld [vmem:[%s1268 + $0x38] sm:$0xff]
      %v1275 = vld [vmem:[%s1268 + $0x48] sm:$0xff]
      %v1276 = vld [vmem:[%s1268 + $0x50] sm:$0xff]
      %v1277 = vld [vmem:[%s1268 + $0x60] sm:$0xff]
      %v1278 = vld [vmem:[%s1268 + $0x68] sm:$0xff]
      %v1279 = vld [vmem:[%s1268 + $0x78] sm:$0xff]
      %v1280 = vld [vmem:[%s1268 + $0x80] sm:$0xff]
      %v1281 = vld [vmem:[%s1268 + $0x90] sm:$0xff]
      %v1282 = vld [vmem:[%s1268 + $0x98] sm:$0xff]
      %v1283 = vld [vmem:[%s1268 + $0xa8] sm:$0xff]
      %v1284 = vld [vmem:[%s1268 + $0xb0] sm:$0xff]
      %v1285 = vld [vmem:[%s1268 + $0xc0] sm:$0xff]
      %v1286 = vld [vmem:[%s1268 + $0xc8] sm:$0xff]
      %v1287 = vld [vmem:[%s1268 + $0xd8] sm:$0xff]
      %v1288 = vld [vmem:[%s1268 + $0xe0] sm:$0xff]
      %v1289 = vld [vmem:[%s1268 + $0xf0] sm:$0xff]
      %v1290 = vld [vmem:[%s1268 + $0xf8] sm:$0xff]
      %v1291 = vld [vmem:[%s1268 + $0x108] sm:$0xff]
      %v1292 = vld [vmem:[%s1268 + $0x110] sm:$0xff]
      %v1293 = vld [vmem:[%s1268 + $0x120] sm:$0xff]
      %v1294 = vld [vmem:[%s1268 + $0x128] sm:$0xff]
      %v1295 = vld [vmem:[%s1268 + $0x138] sm:$0xff]
      %v1296 = vld [vmem:[%s1268 + $0x140] sm:$0xff]
      %v1297 = vld [vmem:[%s1268 + $0x150] sm:$0xff]
      %v1298 = vld [vmem:[%s1268 + $0x158] sm:$0xff]
      %v1299 = vld [vmem:[%s1268 + $0x168] sm:$0xff]
      %v1300 = vld [vmem:[%s1268 + $0x170] sm:$0xff]
      %s1301 = scalar_lea.vmem %s1, 24
      %v1302 = vld [vmem:[%s1301] sm:$0xff]
      %v1304 = vsel %vm238, %v1269, 0
      %v1307 = vsel %vm238, %v1270, 0
      %v1310 = vsel %vm238, %v1271, 0
      %v1313 = vsel %vm238, %v1272, 0
      %v1316 = vsel %vm238, %v1273, 0
      %v1319 = vsel %vm238, %v1274, 0
      %v1322 = vsel %vm238, %v1275, 0
      %v1325 = vsel %vm238, %v1276, 0
      %v1328 = vsel %vm238, %v1277, 0
      %v1331 = vsel %vm238, %v1278, 0
      %v1334 = vsel %vm238, %v1279, 0
      %v1337 = vsel %vm238, %v1280, 0
      %v1340 = vsel %vm238, %v1281, 0
      %v1343 = vsel %vm238, %v1282, 0
      %v1346 = vsel %vm238, %v1283, 0
      %v1349 = vsel %vm238, %v1284, 0
      %v1352 = vsel %vm238, %v1285, 0
      %v1355 = vsel %vm238, %v1286, 0
      %v1358 = vsel %vm238, %v1287, 0
      %v1361 = vsel %vm238, %v1288, 0
      %v1364 = vsel %vm238, %v1289, 0
      %v1367 = vsel %vm238, %v1290, 0
      %v1370 = vsel %vm238, %v1291, 0
      %v1373 = vsel %vm238, %v1292, 0
      %v1376 = vsel %vm238, %v1293, 0
      %v1379 = vsel %vm238, %v1294, 0
      %v1382 = vsel %vm238, %v1295, 0
      %v1385 = vsel %vm238, %v1296, 0
      %v1388 = vsel %vm238, %v1297, 0
      %v1391 = vsel %vm238, %v1298, 0
      %v1394 = vsel %vm238, %v1299, 0
      %v1397 = vsel %vm238, %v1300, 0
      %1399 = vmatprep.subr.mxu0 0.0
      %1400 = vmatpush1.msra.mxu0 %v1302
      %1401 = vmatprep.subr.mxu0 0.0
      %1402 = vmatpush1.msra.mxu0 0.0
      %1403 = vmatprep.subr.mxu0 0.0
      %1404 = vmatpush1.msra.mxu0 0.0
      %1405 = vmatprep.subr.mxu0 0.0
      %1406 = vmatpush1.msra.mxu0 0.0
      %1407 = vmatprep.subr.mxu0 0.0
      %1408 = vmatpush1.msra.mxu0 0.0
      %1409 = vmatprep.subr.mxu0 0.0
      %1410 = vmatpush1.msra.mxu0 0.0
      %1411 = vmatprep.subr.mxu0 0.0
      %1412 = vmatpush1.msra.mxu0 0.0
      %1413 = vmatprep.subr.mxu0 0.0
      %1414 = vmatpush1.msra.mxu0 0.0
      %1415 = vmatprep.subr.mxu0 0.0
      %1416 = vmatpush1.msra.mxu0 0.0
      %1417 = vmatprep.subr.mxu0 0.0
      %1418 = vmatpush1.msra.mxu0 0.0
      %1419 = vmatprep.subr.mxu0 0.0
      %1420 = vmatpush1.msra.mxu0 0.0
      %1421 = vmatprep.subr.mxu0 0.0
      %1422 = vmatpush1.msra.mxu0 0.0
      %1423 = vmatprep.subr.mxu0 0.0
      %1424 = vmatpush1.msra.mxu0 0.0
      %1425 = vmatprep.subr.mxu0 0.0
      %1426 = vmatpush1.msra.mxu0 0.0
      %1427 = vmatprep.subr.mxu0 0.0
      %1428 = vmatpush1.msra.mxu0 0.0
      %1429 = vmatprep.subr.mxu0 0.0
      %1430 = vmatpush1.msra.mxu0 0.0
      %1431 = vmatprep.subr.mxu0 0.0
      %1432 = vmatpush1.msra.mxu0 0.0
      %1433 = vmatprep.subr.mxu0 0.0
      %1434 = vmatpush1.msra.mxu0 0.0
      %1435 = vmatprep.subr.mxu0 0.0
      %1436 = vmatpush1.msra.mxu0 0.0
      %1437 = vmatprep.subr.mxu0 0.0
      %1438 = vmatpush1.msra.mxu0 0.0
      %1439 = vmatprep.subr.mxu0 0.0
      %1440 = vmatpush1.msra.mxu0 0.0
      %1441 = vmatprep.subr.mxu0 0.0
      %1442 = vmatpush1.msra.mxu0 0.0
      %1443 = vmatprep.subr.mxu0 0.0
      %1444 = vmatpush1.msra.mxu0 0.0
      %1445 = vmatprep.subr.mxu0 0.0
      %1446 = vmatpush1.msra.mxu0 0.0
      %1447 = vmatprep.subr.mxu0 0.0
      %1448 = vmatpush1.msra.mxu0 0.0
      %1449 = vmatprep.subr.mxu0 0.0
      %1450 = vmatpush1.msra.mxu0 0.0
      %1451 = vmatprep.subr.mxu0 0.0
      %1452 = vmatpush1.msra.mxu0 0.0
      %1453 = vmatprep.subr.mxu0 0.0
      %1454 = vmatpush1.msra.mxu0 0.0
      %1455 = vmatprep.subr.mxu0 0.0
      %1456 = vmatpush1.msra.mxu0 0.0
      %1457 = vmatprep.subr.mxu0 0.0
      %1458 = vmatpush1.msra.mxu0 0.0
      %1459 = vmatprep.subr.mxu0 0.0
      %1460 = vmatpush1.msra.mxu0 0.0
      %1461 = vmatprep.subr.mxu0 0.0
      %1462 = vmatpush1.msra.mxu0 0.0
      %1463 = vmatprep.mubr.f32.mxu0 0.0
      %1464 = vmatmul.mubr.f32.gmra.mrb[0].mxu0 %v1304
      %v1465 = vpop.f32.mrb[0].mxu0
      %v1466 = vadd.f32 0.0, %v1465
      %v1467 = vpop.f32.mrb[0].mxu0
      %1468 = vmatprep.mubr.f32.mxu0 0.0
      %1469 = vmatmul.mubr.f32.gmra.mrb[0].mxu0 %v1307
      %v1470 = vpop.f32.mrb[0].mxu0
      %v1471 = vadd.f32 0.0, %v1470
      %v1472 = vpop.f32.mrb[0].mxu0
      %1473 = vmatprep.mubr.f32.mxu0 0.0
      %1474 = vmatmul.mubr.f32.gmra.mrb[0].mxu0 %v1310
      %v1475 = vpop.f32.mrb[0].mxu0
      %v1476 = vadd.f32 0.0, %v1475
      %v1477 = vpop.f32.mrb[0].mxu0
      %1478 = vmatprep.mubr.f32.mxu0 0.0
      %1479 = vmatmul.mubr.f32.gmra.mrb[0].mxu0 %v1313
      %v1480 = vpop.f32.mrb[0].mxu0
      %v1481 = vadd.f32 0.0, %v1480
      %v1482 = vpop.f32.mrb[0].mxu0
      %1483 = vmatprep.mubr.f32.mxu0 0.0
      %1484 = vmatmul.mubr.f32.gmra.mrb[0].mxu0 %v1316
      %v1485 = vpop.f32.mrb[0].mxu0
      %v1486 = vadd.f32 0.0, %v1485
      %v1487 = vpop.f32.mrb[0].mxu0
      %1488 = vmatprep.mubr.f32.mxu0 0.0
      %1489 = vmatmul.mubr.f32.gmra.mrb[0].mxu0 %v1319
      %v1490 = vpop.f32.mrb[0].mxu0
      %v1491 = vadd.f32 0.0, %v1490
      %v1492 = vpop.f32.mrb[0].mxu0
      %1493 = vmatprep.mubr.f32.mxu0 0.0
      %1494 = vmatmul.mubr.f32.gmra.mrb[0].mxu0 %v1322
      %v1495 = vpop.f32.mrb[0].mxu0
      %v1496 = vadd.f32 0.0, %v1495
      %v1497 = vpop.f32.mrb[0].mxu0
      %1498 = vmatprep.mubr.f32.mxu0 0.0
      %1499 = vmatmul.mubr.f32.gmra.mrb[0].mxu0 %v1325
      %v1500 = vpop.f32.mrb[0].mxu0
      %v1501 = vadd.f32 0.0, %v1500
      %v1502 = vpop.f32.mrb[0].mxu0
      %1503 = vmatprep.mubr.f32.mxu0 0.0
      %1504 = vmatmul.mubr.f32.gmra.mrb[0].mxu0 %v1328
      %v1505 = vpop.f32.mrb[0].mxu0
      %v1506 = vadd.f32 0.0, %v1505
      %v1507 = vpop.f32.mrb[0].mxu0
      %1508 = vmatprep.mubr.f32.mxu0 0.0
      %1509 = vmatmul.mubr.f32.gmra.mrb[0].mxu0 %v1331
      %v1510 = vpop.f32.mrb[0].mxu0
      %v1511 = vadd.f32 0.0, %v1510
      %v1512 = vpop.f32.mrb[0].mxu0
      %1513 = vmatprep.mubr.f32.mxu0 0.0
      %1514 = vmatmul.mubr.f32.gmra.mrb[0].mxu0 %v1334
      %v1515 = vpop.f32.mrb[0].mxu0
      %v1516 = vadd.f32 0.0, %v1515
      %v1517 = vpop.f32.mrb[0].mxu0
      %1518 = vmatprep.mubr.f32.mxu0 0.0
      %1519 = vmatmul.mubr.f32.gmra.mrb[0].mxu0 %v1337
      %v1520 = vpop.f32.mrb[0].mxu0
      %v1521 = vadd.f32 0.0, %v1520
      %v1522 = vpop.f32.mrb[0].mxu0
      %1523 = vmatprep.mubr.f32.mxu0 0.0
      %1524 = vmatmul.mubr.f32.gmra.mrb[0].mxu0 %v1340
      %v1525 = vpop.f32.mrb[0].mxu0
      %v1526 = vadd.f32 0.0, %v1525
      %v1527 = vpop.f32.mrb[0].mxu0
      %1528 = vmatprep.mubr.f32.mxu0 0.0
      %1529 = vmatmul.mubr.f32.gmra.mrb[0].mxu0 %v1343
      %v1530 = vpop.f32.mrb[0].mxu0
      %v1531 = vadd.f32 0.0, %v1530
      %v1532 = vpop.f32.mrb[0].mxu0
      %1533 = vmatprep.mubr.f32.mxu0 0.0
      %1534 = vmatmul.mubr.f32.gmra.mrb[0].mxu0 %v1346
      %v1535 = vpop.f32.mrb[0].mxu0
      %v1536 = vadd.f32 0.0, %v1535
      %v1537 = vpop.f32.mrb[0].mxu0
      %1538 = vmatprep.mubr.f32.mxu0 0.0
      %1539 = vmatmul.mubr.f32.gmra.mrb[0].mxu0 %v1349
      %v1540 = vpop.f32.mrb[0].mxu0
      %v1541 = vadd.f32 0.0, %v1540
      %v1542 = vpop.f32.mrb[0].mxu0
      %1543 = vmatprep.mubr.f32.mxu0 0.0
      %1544 = vmatmul.mubr.f32.gmra.mrb[0].mxu0 %v1352
      %v1545 = vpop.f32.mrb[0].mxu0
      %v1546 = vadd.f32 0.0, %v1545
      %v1547 = vpop.f32.mrb[0].mxu0
      %1548 = vmatprep.mubr.f32.mxu0 0.0
      %1549 = vmatmul.mubr.f32.gmra.mrb[0].mxu0 %v1355
      %v1550 = vpop.f32.mrb[0].mxu0
      %v1551 = vadd.f32 0.0, %v1550
      %v1552 = vpop.f32.mrb[0].mxu0
      %1553 = vmatprep.mubr.f32.mxu0 0.0
      %1554 = vmatmul.mubr.f32.gmra.mrb[0].mxu0 %v1358
      %v1555 = vpop.f32.mrb[0].mxu0
      %v1556 = vadd.f32 0.0, %v1555
      %v1557 = vpop.f32.mrb[0].mxu0
      %1558 = vmatprep.mubr.f32.mxu0 0.0
      %1559 = vmatmul.mubr.f32.gmra.mrb[0].mxu0 %v1361
      %v1560 = vpop.f32.mrb[0].mxu0
      %v1561 = vadd.f32 0.0, %v1560
      %v1562 = vpop.f32.mrb[0].mxu0
      %1563 = vmatprep.mubr.f32.mxu0 0.0
      %1564 = vmatmul.mubr.f32.gmra.mrb[0].mxu0 %v1364
      %v1565 = vpop.f32.mrb[0].mxu0
      %v1566 = vadd.f32 0.0, %v1565
      %v1567 = vpop.f32.mrb[0].mxu0
      %1568 = vmatprep.mubr.f32.mxu0 0.0
      %1569 = vmatmul.mubr.f32.gmra.mrb[0].mxu0 %v1367
      %v1570 = vpop.f32.mrb[0].mxu0
      %v1571 = vadd.f32 0.0, %v1570
      %v1572 = vpop.f32.mrb[0].mxu0
      %1573 = vmatprep.mubr.f32.mxu0 0.0
      %1574 = vmatmul.mubr.f32.gmra.mrb[0].mxu0 %v1370
      %v1575 = vpop.f32.mrb[0].mxu0
      %v1576 = vadd.f32 0.0, %v1575
      %v1577 = vpop.f32.mrb[0].mxu0
      %1578 = vmatprep.mubr.f32.mxu0 0.0
      %1579 = vmatmul.mubr.f32.gmra.mrb[0].mxu0 %v1373
      %v1580 = vpop.f32.mrb[0].mxu0
      %v1581 = vadd.f32 0.0, %v1580
      %v1582 = vpop.f32.mrb[0].mxu0
      %1583 = vmatprep.mubr.f32.mxu0 0.0
      %1584 = vmatmul.mubr.f32.gmra.mrb[0].mxu0 %v1376
      %v1585 = vpop.f32.mrb[0].mxu0
      %v1586 = vadd.f32 0.0, %v1585
      %v1587 = vpop.f32.mrb[0].mxu0
      %1588 = vmatprep.mubr.f32.mxu0 0.0
      %1589 = vmatmul.mubr.f32.gmra.mrb[0].mxu0 %v1379
      %v1590 = vpop.f32.mrb[0].mxu0
      %v1591 = vadd.f32 0.0, %v1590
      %v1592 = vpop.f32.mrb[0].mxu0
      %1593 = vmatprep.mubr.f32.mxu0 0.0
      %1594 = vmatmul.mubr.f32.gmra.mrb[0].mxu0 %v1382
      %v1595 = vpop.f32.mrb[0].mxu0
      %v1596 = vadd.f32 0.0, %v1595
      %v1597 = vpop.f32.mrb[0].mxu0
      %1598 = vmatprep.mubr.f32.mxu0 0.0
      %1599 = vmatmul.mubr.f32.gmra.mrb[0].mxu0 %v1385
      %v1600 = vpop.f32.mrb[0].mxu0
      %v1601 = vadd.f32 0.0, %v1600
      %v1602 = vpop.f32.mrb[0].mxu0
      %1603 = vmatprep.mubr.f32.mxu0 0.0
      %1604 = vmatmul.mubr.f32.gmra.mrb[0].mxu0 %v1388
      %v1605 = vpop.f32.mrb[0].mxu0
      %v1606 = vadd.f32 0.0, %v1605
      %v1607 = vpop.f32.mrb[0].mxu0
      %1608 = vmatprep.mubr.f32.mxu0 0.0
      %1609 = vmatmul.mubr.f32.gmra.mrb[0].mxu0 %v1391
      %v1610 = vpop.f32.mrb[0].mxu0
      %v1611 = vadd.f32 0.0, %v1610
      %v1612 = vpop.f32.mrb[0].mxu0
      %1613 = vmatprep.mubr.f32.mxu0 0.0
      %1614 = vmatmul.mubr.f32.gmra.mrb[0].mxu0 %v1394
      %v1615 = vpop.f32.mrb[0].mxu0
      %v1616 = vadd.f32 0.0, %v1615
      %v1617 = vpop.f32.mrb[0].mxu0
      %1618 = vmatprep.mubr.f32.mxu0 0.0
      %1619 = vmatmul.mubr.f32.gmra.mrb[0].mxu0 %v1397
      %v1620 = vpop.f32.mrb[0].mxu0
      %v1621 = vadd.f32 0.0, %v1620
      %v1622 = vpop.f32.mrb[0].mxu0
      %1623 = vdwg.mxu0
      %v1624 = vadd.f32 %v1236, %v1466
      %v1625 = vadd.f32 %v1237, %v1471
      %v1626 = vadd.f32 %v1238, %v1476
      %v1627 = vadd.f32 %v1239, %v1481
      %v1628 = vadd.f32 %v1240, %v1486
      %v1629 = vadd.f32 %v1241, %v1491
      %v1630 = vadd.f32 %v1242, %v1496
      %v1631 = vadd.f32 %v1243, %v1501
      %v1632 = vadd.f32 %v1244, %v1506
      %v1633 = vadd.f32 %v1245, %v1511
      %v1634 = vadd.f32 %v1246, %v1516
      %v1635 = vadd.f32 %v1247, %v1521
      %v1636 = vadd.f32 %v1248, %v1526
      %v1637 = vadd.f32 %v1249, %v1531
      %v1638 = vadd.f32 %v1250, %v1536
      %v1639 = vadd.f32 %v1251, %v1541
      %v1640 = vadd.f32 %v1252, %v1546
      %v1641 = vadd.f32 %v1253, %v1551
      %v1642 = vadd.f32 %v1254, %v1556
      %v1643 = vadd.f32 %v1255, %v1561
      %v1644 = vadd.f32 %v1256, %v1566
      %v1645 = vadd.f32 %v1257, %v1571
      %v1646 = vadd.f32 %v1258, %v1576
      %v1647 = vadd.f32 %v1259, %v1581
      %v1648 = vadd.f32 %v1260, %v1586
      %v1649 = vadd.f32 %v1261, %v1591
      %v1650 = vadd.f32 %v1262, %v1596
      %v1651 = vadd.f32 %v1263, %v1601
      %v1652 = vadd.f32 %v1264, %v1606
      %v1653 = vadd.f32 %v1265, %v1611
      %v1654 = vadd.f32 %v1266, %v1616
      %v1655 = vadd.f32 %v1267, %v1621
      %v1656 = vld [vmem:[%s1268 + $0x1] sm:$0xff]
      %v1657 = vld [vmem:[%s1268 + $0x9] sm:$0xff]
      %v1658 = vld [vmem:[%s1268 + $0x19] sm:$0xff]
      %v1659 = vld [vmem:[%s1268 + $0x21] sm:$0xff]
      %v1660 = vld [vmem:[%s1268 + $0x31] sm:$0xff]
      %v1661 = vld [vmem:[%s1268 + $0x39] sm:$0xff]
      %v1662 = vld [vmem:[%s1268 + $0x49] sm:$0xff]
      %v1663 = vld [vmem:[%s1268 + $0x51] sm:$0xff]
      %v1664 = vld [vmem:[%s1268 + $0x61] sm:$0xff]
      %v1665 = vld [vmem:[%s1268 + $0x69] sm:$0xff]
      %v1666 = vld [vmem:[%s1268 + $0x79] sm:$0xff]
      %v1667 = vld [vmem:[%s1268 + $0x81] sm:$0xff]
      %v1668 = vld [vmem:[%s1268 + $0x91] sm:$0xff]
      %v1669 = vld [vmem:[%s1268 + $0x99] sm:$0xff]
      %v1670 = vld [vmem:[%s1268 + $0xa9] sm:$0xff]
      %v1671 = vld [vmem:[%s1268 + $0xb1] sm:$0xff]
      %v1672 = vld [vmem:[%s1268 + $0xc1] sm:$0xff]
      %v1673 = vld [vmem:[%s1268 + $0xc9] sm:$0xff]
      %v1674 = vld [vmem:[%s1268 + $0xd9] sm:$0xff]
      %v1675 = vld [vmem:[%s1268 + $0xe1] sm:$0xff]
      %v1676 = vld [vmem:[%s1268 + $0xf1] sm:$0xff]
      %v1677 = vld [vmem:[%s1268 + $0xf9] sm:$0xff]
      %v1678 = vld [vmem:[%s1268 + $0x109] sm:$0xff]
      %v1679 = vld [vmem:[%s1268 + $0x111] sm:$0xff]
      %v1680 = vld [vmem:[%s1268 + $0x121] sm:$0xff]
      %v1681 = vld [vmem:[%s1268 + $0x129] sm:$0xff]
      %v1682 = vld [vmem:[%s1268 + $0x139] sm:$0xff]
      %v1683 = vld [vmem:[%s1268 + $0x141] sm:$0xff]
      %v1684 = vld [vmem:[%s1268 + $0x151] sm:$0xff]
      %v1685 = vld [vmem:[%s1268 + $0x159] sm:$0xff]
      %v1686 = vld [vmem:[%s1268 + $0x169] sm:$0xff]
      %v1687 = vld [vmem:[%s1268 + $0x171] sm:$0xff]
      %s1688 = scalar_lea.vmem %s1, 32
      %v1689 = vld [vmem:[%s1688] sm:$0xff]
      %v1691 = vsel %vm238, %v1656, 0
      %v1694 = vsel %vm238, %v1657, 0
      %v1697 = vsel %vm238, %v1658, 0
      %v1700 = vsel %vm238, %v1659, 0
      %v1703 = vsel %vm238, %v1660, 0
      %v1706 = vsel %vm238, %v1661, 0
      %v1709 = vsel %vm238, %v1662, 0
      %v1712 = vsel %vm238, %v1663, 0
      %v1715 = vsel %vm238, %v1664, 0
      %v1718 = vsel %vm238, %v1665, 0
      %v1721 = vsel %vm238, %v1666, 0
      %v1724 = vsel %vm238, %v1667, 0
      %v1727 = vsel %vm238, %v1668, 0
      %v1730 = vsel %vm238, %v1669, 0
      %v1733 = vsel %vm238, %v1670, 0
      %v1736 = vsel %vm238, %v1671, 0
      %v1739 = vsel %vm238, %v1672, 0
      %v1742 = vsel %vm238, %v1673, 0
      %v1745 = vsel %vm238, %v1674, 0
      %v1748 = vsel %vm238, %v1675, 0
      %v1751 = vsel %vm238, %v1676, 0
      %v1754 = vsel %vm238, %v1677, 0
      %v1757 = vsel %vm238, %v1678, 0
      %v1760 = vsel %vm238, %v1679, 0
      %v1763 = vsel %vm238, %v1680, 0
      %v1766 = vsel %vm238, %v1681, 0
      %v1769 = vsel %vm238, %v1682, 0
      %v1772 = vsel %vm238, %v1683, 0
      %v1775 = vsel %vm238, %v1684, 0
      %v1778 = vsel %vm238, %v1685, 0
      %v1781 = vsel %vm238, %v1686, 0
      %v1784 = vsel %vm238, %v1687, 0
      %1786 = vmatprep.subr.mxu0 0.0
      %1787 = vmatpush1.msra.mxu0 %v1689
      %1788 = vmatprep.subr.mxu0 0.0
      %1789 = vmatpush1.msra.mxu0 0.0
      %1790 = vmatprep.subr.mxu0 0.0
      %1791 = vmatpush1.msra.mxu0 0.0
      %1792 = vmatprep.subr.mxu0 0.0
      %1793 = vmatpush1.msra.mxu0 0.0
      %1794 = vmatprep.subr.mxu0 0.0
      %1795 = vmatpush1.msra.mxu0 0.0
      %1796 = vmatprep.subr.mxu0 0.0
      %1797 = vmatpush1.msra.mxu0 0.0
      %1798 = vmatprep.subr.mxu0 0.0
      %1799 = vmatpush1.msra.mxu0 0.0
      %1800 = vmatprep.subr.mxu0 0.0
      %1801 = vmatpush1.msra.mxu0 0.0
      %1802 = vmatprep.subr.mxu0 0.0
      %1803 = vmatpush1.msra.mxu0 0.0
      %1804 = vmatprep.subr.mxu0 0.0
      %1805 = vmatpush1.msra.mxu0 0.0
      %1806 = vmatprep.subr.mxu0 0.0
      %1807 = vmatpush1.msra.mxu0 0.0
      %1808 = vmatprep.subr.mxu0 0.0
      %1809 = vmatpush1.msra.mxu0 0.0
      %1810 = vmatprep.subr.mxu0 0.0
      %1811 = vmatpush1.msra.mxu0 0.0
      %1812 = vmatprep.subr.mxu0 0.0
      %1813 = vmatpush1.msra.mxu0 0.0
      %1814 = vmatprep.subr.mxu0 0.0
      %1815 = vmatpush1.msra.mxu0 0.0
      %1816 = vmatprep.subr.mxu0 0.0
      %1817 = vmatpush1.msra.mxu0 0.0
      %1818 = vmatprep.subr.mxu0 0.0
      %1819 = vmatpush1.msra.mxu0 0.0
      %1820 = vmatprep.subr.mxu0 0.0
      %1821 = vmatpush1.msra.mxu0 0.0
      %1822 = vmatprep.subr.mxu0 0.0
      %1823 = vmatpush1.msra.mxu0 0.0
      %1824 = vmatprep.subr.mxu0 0.0
      %1825 = vmatpush1.msra.mxu0 0.0
      %1826 = vmatprep.subr.mxu0 0.0
      %1827 = vmatpush1.msra.mxu0 0.0
      %1828 = vmatprep.subr.mxu0 0.0
      %1829 = vmatpush1.msra.mxu0 0.0
      %1830 = vmatprep.subr.mxu0 0.0
      %1831 = vmatpush1.msra.mxu0 0.0
      %1832 = vmatprep.subr.mxu0 0.0
      %1833 = vmatpush1.msra.mxu0 0.0
      %1834 = vmatprep.subr.mxu0 0.0
      %1835 = vmatpush1.msra.mxu0 0.0
      %1836 = vmatprep.subr.mxu0 0.0
      %1837 = vmatpush1.msra.mxu0 0.0
      %1838 = vmatprep.subr.mxu0 0.0
      %1839 = vmatpush1.msra.mxu0 0.0
      %1840 = vmatprep.subr.mxu0 0.0
      %1841 = vmatpush1.msra.mxu0 0.0
      %1842 = vmatprep.subr.mxu0 0.0
      %1843 = vmatpush1.msra.mxu0 0.0
      %1844 = vmatprep.subr.mxu0 0.0
      %1845 = vmatpush1.msra.mxu0 0.0
      %1846 = vmatprep.subr.mxu0 0.0
      %1847 = vmatpush1.msra.mxu0 0.0
      %1848 = vmatprep.subr.mxu0 0.0
      %1849 = vmatpush1.msra.mxu0 0.0
      %1850 = vmatprep.mubr.f32.mxu0 0.0
      %1851 = vmatmul.mubr.f32.gmra.mrb[0].mxu0 %v1691
      %v1852 = vpop.f32.mrb[0].mxu0
      %v1853 = vadd.f32 0.0, %v1852
      %v1854 = vpop.f32.mrb[0].mxu0
      %1855 = vmatprep.mubr.f32.mxu0 0.0
      %1856 = vmatmul.mubr.f32.gmra.mrb[0].mxu0 %v1694
      %v1857 = vpop.f32.mrb[0].mxu0
      %v1858 = vadd.f32 0.0, %v1857
      %v1859 = vpop.f32.mrb[0].mxu0
      %1860 = vmatprep.mubr.f32.mxu0 0.0
      %1861 = vmatmul.mubr.f32.gmra.mrb[0].mxu0 %v1697
      %v1862 = vpop.f32.mrb[0].mxu0
      %v1863 = vadd.f32 0.0, %v1862
      %v1864 = vpop.f32.mrb[0].mxu0
      %1865 = vmatprep.mubr.f32.mxu0 0.0
      %1866 = vmatmul.mubr.f32.gmra.mrb[0].mxu0 %v1700
      %v1867 = vpop.f32.mrb[0].mxu0
      %v1868 = vadd.f32 0.0, %v1867
      %v1869 = vpop.f32.mrb[0].mxu0
      %1870 = vmatprep.mubr.f32.mxu0 0.0
      %1871 = vmatmul.mubr.f32.gmra.mrb[0].mxu0 %v1703
      %v1872 = vpop.f32.mrb[0].mxu0
      %v1873 = vadd.f32 0.0, %v1872
      %v1874 = vpop.f32.mrb[0].mxu0
      %1875 = vmatprep.mubr.f32.mxu0 0.0
      %1876 = vmatmul.mubr.f32.gmra.mrb[0].mxu0 %v1706
      %v1877 = vpop.f32.mrb[0].mxu0
      %v1878 = vadd.f32 0.0, %v1877
      %v1879 = vpop.f32.mrb[0].mxu0
      %1880 = vmatprep.mubr.f32.mxu0 0.0
      %1881 = vmatmul.mubr.f32.gmra.mrb[0].mxu0 %v1709
      %v1882 = vpop.f32.mrb[0].mxu0
      %v1883 = vadd.f32 0.0, %v1882
      %v1884 = vpop.f32.mrb[0].mxu0
      %1885 = vmatprep.mubr.f32.mxu0 0.0
      %1886 = vmatmul.mubr.f32.gmra.mrb[0].mxu0 %v1712
      %v1887 = vpop.f32.mrb[0].mxu0
      %v1888 = vadd.f32 0.0, %v1887
      %v1889 = vpop.f32.mrb[0].mxu0
      %1890 = vmatprep.mubr.f32.mxu0 0.0
      %1891 = vmatmul.mubr.f32.gmra.mrb[0].mxu0 %v1715
      %v1892 = vpop.f32.mrb[0].mxu0
      %v1893 = vadd.f32 0.0, %v1892
      %v1894 = vpop.f32.mrb[0].mxu0
      %1895 = vmatprep.mubr.f32.mxu0 0.0
      %1896 = vmatmul.mubr.f32.gmra.mrb[0].mxu0 %v1718
      %v1897 = vpop.f32.mrb[0].mxu0
      %v1898 = vadd.f32 0.0, %v1897
      %v1899 = vpop.f32.mrb[0].mxu0
      %1900 = vmatprep.mubr.f32.mxu0 0.0
      %1901 = vmatmul.mubr.f32.gmra.mrb[0].mxu0 %v1721
      %v1902 = vpop.f32.mrb[0].mxu0
      %v1903 = vadd.f32 0.0, %v1902
      %v1904 = vpop.f32.mrb[0].mxu0
      %1905 = vmatprep.mubr.f32.mxu0 0.0
      %1906 = vmatmul.mubr.f32.gmra.mrb[0].mxu0 %v1724
      %v1907 = vpop.f32.mrb[0].mxu0
      %v1908 = vadd.f32 0.0, %v1907
      %v1909 = vpop.f32.mrb[0].mxu0
      %1910 = vmatprep.mubr.f32.mxu0 0.0
      %1911 = vmatmul.mubr.f32.gmra.mrb[0].mxu0 %v1727
      %v1912 = vpop.f32.mrb[0].mxu0
      %v1913 = vadd.f32 0.0, %v1912
      %v1914 = vpop.f32.mrb[0].mxu0
      %1915 = vmatprep.mubr.f32.mxu0 0.0
      %1916 = vmatmul.mubr.f32.gmra.mrb[0].mxu0 %v1730
      %v1917 = vpop.f32.mrb[0].mxu0
      %v1918 = vadd.f32 0.0, %v1917
      %v1919 = vpop.f32.mrb[0].mxu0
      %1920 = vmatprep.mubr.f32.mxu0 0.0
      %1921 = vmatmul.mubr.f32.gmra.mrb[0].mxu0 %v1733
      %v1922 = vpop.f32.mrb[0].mxu0
      %v1923 = vadd.f32 0.0, %v1922
      %v1924 = vpop.f32.mrb[0].mxu0
      %1925 = vmatprep.mubr.f32.mxu0 0.0
      %1926 = vmatmul.mubr.f32.gmra.mrb[0].mxu0 %v1736
      %v1927 = vpop.f32.mrb[0].mxu0
      %v1928 = vadd.f32 0.0, %v1927
      %v1929 = vpop.f32.mrb[0].mxu0
      %1930 = vmatprep.mubr.f32.mxu0 0.0
      %1931 = vmatmul.mubr.f32.gmra.mrb[0].mxu0 %v1739
      %v1932 = vpop.f32.mrb[0].mxu0
      %v1933 = vadd.f32 0.0, %v1932
      %v1934 = vpop.f32.mrb[0].mxu0
      %1935 = vmatprep.mubr.f32.mxu0 0.0
      %1936 = vmatmul.mubr.f32.gmra.mrb[0].mxu0 %v1742
      %v1937 = vpop.f32.mrb[0].mxu0
      %v1938 = vadd.f32 0.0, %v1937
      %v1939 = vpop.f32.mrb[0].mxu0
      %1940 = vmatprep.mubr.f32.mxu0 0.0
      %1941 = vmatmul.mubr.f32.gmra.mrb[0].mxu0 %v1745
      %v1942 = vpop.f32.mrb[0].mxu0
      %v1943 = vadd.f32 0.0, %v1942
      %v1944 = vpop.f32.mrb[0].mxu0
      %1945 = vmatprep.mubr.f32.mxu0 0.0
      %1946 = vmatmul.mubr.f32.gmra.mrb[0].mxu0 %v1748
      %v1947 = vpop.f32.mrb[0].mxu0
      %v1948 = vadd.f32 0.0, %v1947
      %v1949 = vpop.f32.mrb[0].mxu0
      %1950 = vmatprep.mubr.f32.mxu0 0.0
      %1951 = vmatmul.mubr.f32.gmra.mrb[0].mxu0 %v1751
      %v1952 = vpop.f32.mrb[0].mxu0
      %v1953 = vadd.f32 0.0, %v1952
      %v1954 = vpop.f32.mrb[0].mxu0
      %1955 = vmatprep.mubr.f32.mxu0 0.0
      %1956 = vmatmul.mubr.f32.gmra.mrb[0].mxu0 %v1754
      %v1957 = vpop.f32.mrb[0].mxu0
      %v1958 = vadd.f32 0.0, %v1957
      %v1959 = vpop.f32.mrb[0].mxu0
      %1960 = vmatprep.mubr.f32.mxu0 0.0
      %1961 = vmatmul.mubr.f32.gmra.mrb[0].mxu0 %v1757
      %v1962 = vpop.f32.mrb[0].mxu0
      %v1963 = vadd.f32 0.0, %v1962
      %v1964 = vpop.f32.mrb[0].mxu0
      %1965 = vmatprep.mubr.f32.mxu0 0.0
      %1966 = vmatmul.mubr.f32.gmra.mrb[0].mxu0 %v1760
      %v1967 = vpop.f32.mrb[0].mxu0
      %v1968 = vadd.f32 0.0, %v1967
      %v1969 = vpop.f32.mrb[0].mxu0
      %1970 = vmatprep.mubr.f32.mxu0 0.0
      %1971 = vmatmul.mubr.f32.gmra.mrb[0].mxu0 %v1763
      %v1972 = vpop.f32.mrb[0].mxu0
      %v1973 = vadd.f32 0.0, %v1972
      %v1974 = vpop.f32.mrb[0].mxu0
      %1975 = vmatprep.mubr.f32.mxu0 0.0
      %1976 = vmatmul.mubr.f32.gmra.mrb[0].mxu0 %v1766
      %v1977 = vpop.f32.mrb[0].mxu0
      %v1978 = vadd.f32 0.0, %v1977
      %v1979 = vpop.f32.mrb[0].mxu0
      %1980 = vmatprep.mubr.f32.mxu0 0.0
      %1981 = vmatmul.mubr.f32.gmra.mrb[0].mxu0 %v1769
      %v1982 = vpop.f32.mrb[0].mxu0
      %v1983 = vadd.f32 0.0, %v1982
      %v1984 = vpop.f32.mrb[0].mxu0
      %1985 = vmatprep.mubr.f32.mxu0 0.0
      %1986 = vmatmul.mubr.f32.gmra.mrb[0].mxu0 %v1772
      %v1987 = vpop.f32.mrb[0].mxu0
      %v1988 = vadd.f32 0.0, %v1987
      %v1989 = vpop.f32.mrb[0].mxu0
      %1990 = vmatprep.mubr.f32.mxu0 0.0
      %1991 = vmatmul.mubr.f32.gmra.mrb[0].mxu0 %v1775
      %v1992 = vpop.f32.mrb[0].mxu0
      %v1993 = vadd.f32 0.0, %v1992
      %v1994 = vpop.f32.mrb[0].mxu0
      %1995 = vmatprep.mubr.f32.mxu0 0.0
      %1996 = vmatmul.mubr.f32.gmra.mrb[0].mxu0 %v1778
      %v1997 = vpop.f32.mrb[0].mxu0
      %v1998 = vadd.f32 0.0, %v1997
      %v1999 = vpop.f32.mrb[0].mxu0
      %2000 = vmatprep.mubr.f32.mxu0 0.0
      %2001 = vmatmul.mubr.f32.gmra.mrb[0].mxu0 %v1781
      %v2002 = vpop.f32.mrb[0].mxu0
      %v2003 = vadd.f32 0.0, %v2002
      %v2004 = vpop.f32.mrb[0].mxu0
      %2005 = vmatprep.mubr.f32.mxu0 0.0
      %2006 = vmatmul.mubr.f32.gmra.mrb[0].mxu0 %v1784
      %v2007 = vpop.f32.mrb[0].mxu0
      %v2008 = vadd.f32 0.0, %v2007
      %v2009 = vpop.f32.mrb[0].mxu0
      %2010 = vdwg.mxu0
      %v2011 = vadd.f32 %v1624, %v1853
      %v2012 = vadd.f32 %v1625, %v1858
      %v2013 = vadd.f32 %v1626, %v1863
      %v2014 = vadd.f32 %v1627, %v1868
      %v2015 = vadd.f32 %v1628, %v1873
      %v2016 = vadd.f32 %v1629, %v1878
      %v2017 = vadd.f32 %v1630, %v1883
      %v2018 = vadd.f32 %v1631, %v1888
      %v2019 = vadd.f32 %v1632, %v1893
      %v2020 = vadd.f32 %v1633, %v1898
      %v2021 = vadd.f32 %v1634, %v1903
      %v2022 = vadd.f32 %v1635, %v1908
      %v2023 = vadd.f32 %v1636, %v1913
      %v2024 = vadd.f32 %v1637, %v1918
      %v2025 = vadd.f32 %v1638, %v1923
      %v2026 = vadd.f32 %v1639, %v1928
      %v2027 = vadd.f32 %v1640, %v1933
      %v2028 = vadd.f32 %v1641, %v1938
      %v2029 = vadd.f32 %v1642, %v1943
      %v2030 = vadd.f32 %v1643, %v1948
      %v2031 = vadd.f32 %v1644, %v1953
      %v2032 = vadd.f32 %v1645, %v1958
      %v2033 = vadd.f32 %v1646, %v1963
      %v2034 = vadd.f32 %v1647, %v1968
      %v2035 = vadd.f32 %v1648, %v1973
      %v2036 = vadd.f32 %v1649, %v1978
      %v2037 = vadd.f32 %v1650, %v1983
      %v2038 = vadd.f32 %v1651, %v1988
      %v2039 = vadd.f32 %v1652, %v1993
      %v2040 = vadd.f32 %v1653, %v1998
      %v2041 = vadd.f32 %v1654, %v2003
      %v2042 = vadd.f32 %v1655, %v2008
      %v2043 = vld [vmem:[%s1268 + $0x2] sm:$0xff]
      %v2044 = vld [vmem:[%s1268 + $0xa] sm:$0xff]
      %v2045 = vld [vmem:[%s1268 + $0x1a] sm:$0xff]
      %v2046 = vld [vmem:[%s1268 + $0x22] sm:$0xff]
      %v2047 = vld [vmem:[%s1268 + $0x32] sm:$0xff]
      %v2048 = vld [vmem:[%s1268 + $0x3a] sm:$0xff]
      %v2049 = vld [vmem:[%s1268 + $0x4a] sm:$0xff]
      %v2050 = vld [vmem:[%s1268 + $0x52] sm:$0xff]
      %v2051 = vld [vmem:[%s1268 + $0x62] sm:$0xff]
      %v2052 = vld [vmem:[%s1268 + $0x6a] sm:$0xff]
      %v2053 = vld [vmem:[%s1268 + $0x7a] sm:$0xff]
      %v2054 = vld [vmem:[%s1268 + $0x82] sm:$0xff]
      %v2055 = vld [vmem:[%s1268 + $0x92] sm:$0xff]
      %v2056 = vld [vmem:[%s1268 + $0x9a] sm:$0xff]
      %v2057 = vld [vmem:[%s1268 + $0xaa] sm:$0xff]
      %v2058 = vld [vmem:[%s1268 + $0xb2] sm:$0xff]
      %v2059 = vld [vmem:[%s1268 + $0xc2] sm:$0xff]
      %v2060 = vld [vmem:[%s1268 + $0xca] sm:$0xff]
      %v2061 = vld [vmem:[%s1268 + $0xda] sm:$0xff]
      %v2062 = vld [vmem:[%s1268 + $0xe2] sm:$0xff]
      %v2063 = vld [vmem:[%s1268 + $0xf2] sm:$0xff]
      %v2064 = vld [vmem:[%s1268 + $0xfa] sm:$0xff]
      %v2065 = vld [vmem:[%s1268 + $0x10a] sm:$0xff]
      %v2066 = vld [vmem:[%s1268 + $0x112] sm:$0xff]
      %v2067 = vld [vmem:[%s1268 + $0x122] sm:$0xff]
      %v2068 = vld [vmem:[%s1268 + $0x12a] sm:$0xff]
      %v2069 = vld [vmem:[%s1268 + $0x13a] sm:$0xff]
      %v2070 = vld [vmem:[%s1268 + $0x142] sm:$0xff]
      %v2071 = vld [vmem:[%s1268 + $0x152] sm:$0xff]
      %v2072 = vld [vmem:[%s1268 + $0x15a] sm:$0xff]
      %v2073 = vld [vmem:[%s1268 + $0x16a] sm:$0xff]
      %v2074 = vld [vmem:[%s1268 + $0x172] sm:$0xff]
      %s2075 = scalar_lea.vmem %s1, 40
      %v2076 = vld [vmem:[%s2075] sm:$0xff]
      %v2078 = vsel %vm238, %v2043, 0
      %v2081 = vsel %vm238, %v2044, 0
      %v2084 = vsel %vm238, %v2045, 0
      %v2087 = vsel %vm238, %v2046, 0
      %v2090 = vsel %vm238, %v2047, 0
      %v2093 = vsel %vm238, %v2048, 0
      %v2096 = vsel %vm238, %v2049, 0
      %v2099 = vsel %vm238, %v2050, 0
      %v2102 = vsel %vm238, %v2051, 0
      %v2105 = vsel %vm238, %v2052, 0
      %v2108 = vsel %vm238, %v2053, 0
      %v2111 = vsel %vm238, %v2054, 0
      %v2114 = vsel %vm238, %v2055, 0
      %v2117 = vsel %vm238, %v2056, 0
      %v2120 = vsel %vm238, %v2057, 0
      %v2123 = vsel %vm238, %v2058, 0
      %v2126 = vsel %vm238, %v2059, 0
      %v2129 = vsel %vm238, %v2060, 0
      %v2132 = vsel %vm238, %v2061, 0
      %v2135 = vsel %vm238, %v2062, 0
      %v2138 = vsel %vm238, %v2063, 0
      %v2141 = vsel %vm238, %v2064, 0
      %v2144 = vsel %vm238, %v2065, 0
      %v2147 = vsel %vm238, %v2066, 0
      %v2150 = vsel %vm238, %v2067, 0
      %v2153 = vsel %vm238, %v2068, 0
      %v2156 = vsel %vm238, %v2069, 0
      %v2159 = vsel %vm238, %v2070, 0
      %v2162 = vsel %vm238, %v2071, 0
      %v2165 = vsel %vm238, %v2072, 0
      %v2168 = vsel %vm238, %v2073, 0
      %v2171 = vsel %vm238, %v2074, 0
      %2173 = vmatprep.subr.mxu0 0.0
      %2174 = vmatpush1.msra.mxu0 %v2076
      %2175 = vmatprep.subr.mxu0 0.0
      %2176 = vmatpush1.msra.mxu0 0.0
      %2177 = vmatprep.subr.mxu0 0.0
      %2178 = vmatpush1.msra.mxu0 0.0
      %2179 = vmatprep.subr.mxu0 0.0
      %2180 = vmatpush1.msra.mxu0 0.0
      %2181 = vmatprep.subr.mxu0 0.0
      %2182 = vmatpush1.msra.mxu0 0.0
      %2183 = vmatprep.subr.mxu0 0.0
      %2184 = vmatpush1.msra.mxu0 0.0
      %2185 = vmatprep.subr.mxu0 0.0
      %2186 = vmatpush1.msra.mxu0 0.0
      %2187 = vmatprep.subr.mxu0 0.0
      %2188 = vmatpush1.msra.mxu0 0.0
      %2189 = vmatprep.subr.mxu0 0.0
      %2190 = vmatpush1.msra.mxu0 0.0
      %2191 = vmatprep.subr.mxu0 0.0
      %2192 = vmatpush1.msra.mxu0 0.0
      %2193 = vmatprep.subr.mxu0 0.0
      %2194 = vmatpush1.msra.mxu0 0.0
      %2195 = vmatprep.subr.mxu0 0.0
      %2196 = vmatpush1.msra.mxu0 0.0
      %2197 = vmatprep.subr.mxu0 0.0
      %2198 = vmatpush1.msra.mxu0 0.0
      %2199 = vmatprep.subr.mxu0 0.0
      %2200 = vmatpush1.msra.mxu0 0.0
      %2201 = vmatprep.subr.mxu0 0.0
      %2202 = vmatpush1.msra.mxu0 0.0
      %2203 = vmatprep.subr.mxu0 0.0
      %2204 = vmatpush1.msra.mxu0 0.0
      %2205 = vmatprep.subr.mxu0 0.0
      %2206 = vmatpush1.msra.mxu0 0.0
      %2207 = vmatprep.subr.mxu0 0.0
      %2208 = vmatpush1.msra.mxu0 0.0
      %2209 = vmatprep.subr.mxu0 0.0
      %2210 = vmatpush1.msra.mxu0 0.0
      %2211 = vmatprep.subr.mxu0 0.0
      %2212 = vmatpush1.msra.mxu0 0.0
      %2213 = vmatprep.subr.mxu0 0.0
      %2214 = vmatpush1.msra.mxu0 0.0
      %2215 = vmatprep.subr.mxu0 0.0
      %2216 = vmatpush1.msra.mxu0 0.0
      %2217 = vmatprep.subr.mxu0 0.0
      %2218 = vmatpush1.msra.mxu0 0.0
      %2219 = vmatprep.subr.mxu0 0.0
      %2220 = vmatpush1.msra.mxu0 0.0
      %2221 = vmatprep.subr.mxu0 0.0
      %2222 = vmatpush1.msra.mxu0 0.0
      %2223 = vmatprep.subr.mxu0 0.0
      %2224 = vmatpush1.msra.mxu0 0.0
      %2225 = vmatprep.subr.mxu0 0.0
      %2226 = vmatpush1.msra.mxu0 0.0
      %2227 = vmatprep.subr.mxu0 0.0
      %2228 = vmatpush1.msra.mxu0 0.0
      %2229 = vmatprep.subr.mxu0 0.0
      %2230 = vmatpush1.msra.mxu0 0.0
      %2231 = vmatprep.subr.mxu0 0.0
      %2232 = vmatpush1.msra.mxu0 0.0
      %2233 = vmatprep.subr.mxu0 0.0
      %2234 = vmatpush1.msra.mxu0 0.0
      %2235 = vmatprep.subr.mxu0 0.0
      %2236 = vmatpush1.msra.mxu0 0.0
      %2237 = vmatprep.mubr.f32.mxu0 0.0
      %2238 = vmatmul.mubr.f32.gmra.mrb[0].mxu0 %v2078
      %v2239 = vpop.f32.mrb[0].mxu0
      %v2240 = vadd.f32 0.0, %v2239
      %v2241 = vpop.f32.mrb[0].mxu0
      %2242 = vmatprep.mubr.f32.mxu0 0.0
      %2243 = vmatmul.mubr.f32.gmra.mrb[0].mxu0 %v2081
      %v2244 = vpop.f32.mrb[0].mxu0
      %v2245 = vadd.f32 0.0, %v2244
      %v2246 = vpop.f32.mrb[0].mxu0
      %2247 = vmatprep.mubr.f32.mxu0 0.0
      %2248 = vmatmul.mubr.f32.gmra.mrb[0].mxu0 %v2084
      %v2249 = vpop.f32.mrb[0].mxu0
      %v2250 = vadd.f32 0.0, %v2249
      %v2251 = vpop.f32.mrb[0].mxu0
      %2252 = vmatprep.mubr.f32.mxu0 0.0
      %2253 = vmatmul.mubr.f32.gmra.mrb[0].mxu0 %v2087
      %v2254 = vpop.f32.mrb[0].mxu0
      %v2255 = vadd.f32 0.0, %v2254
      %v2256 = vpop.f32.mrb[0].mxu0
      %2257 = vmatprep.mubr.f32.mxu0 0.0
      %2258 = vmatmul.mubr.f32.gmra.mrb[0].mxu0 %v2090
      %v2259 = vpop.f32.mrb[0].mxu0
      %v2260 = vadd.f32 0.0, %v2259
      %v2261 = vpop.f32.mrb[0].mxu0
      %2262 = vmatprep.mubr.f32.mxu0 0.0
      %2263 = vmatmul.mubr.f32.gmra.mrb[0].mxu0 %v2093
      %v2264 = vpop.f32.mrb[0].mxu0
      %v2265 = vadd.f32 0.0, %v2264
      %v2266 = vpop.f32.mrb[0].mxu0
      %2267 = vmatprep.mubr.f32.mxu0 0.0
      %2268 = vmatmul.mubr.f32.gmra.mrb[0].mxu0 %v2096
      %v2269 = vpop.f32.mrb[0].mxu0
      %v2270 = vadd.f32 0.0, %v2269
      %v2271 = vpop.f32.mrb[0].mxu0
      %2272 = vmatprep.mubr.f32.mxu0 0.0
      %2273 = vmatmul.mubr.f32.gmra.mrb[0].mxu0 %v2099
      %v2274 = vpop.f32.mrb[0].mxu0
      %v2275 = vadd.f32 0.0, %v2274
      %v2276 = vpop.f32.mrb[0].mxu0
      %2277 = vmatprep.mubr.f32.mxu0 0.0
      %2278 = vmatmul.mubr.f32.gmra.mrb[0].mxu0 %v2102
      %v2279 = vpop.f32.mrb[0].mxu0
      %v2280 = vadd.f32 0.0, %v2279
      %v2281 = vpop.f32.mrb[0].mxu0
      %2282 = vmatprep.mubr.f32.mxu0 0.0
      %2283 = vmatmul.mubr.f32.gmra.mrb[0].mxu0 %v2105
      %v2284 = vpop.f32.mrb[0].mxu0
      %v2285 = vadd.f32 0.0, %v2284
      %v2286 = vpop.f32.mrb[0].mxu0
      %2287 = vmatprep.mubr.f32.mxu0 0.0
      %2288 = vmatmul.mubr.f32.gmra.mrb[0].mxu0 %v2108
      %v2289 = vpop.f32.mrb[0].mxu0
      %v2290 = vadd.f32 0.0, %v2289
      %v2291 = vpop.f32.mrb[0].mxu0
      %2292 = vmatprep.mubr.f32.mxu0 0.0
      %2293 = vmatmul.mubr.f32.gmra.mrb[0].mxu0 %v2111
      %v2294 = vpop.f32.mrb[0].mxu0
      %v2295 = vadd.f32 0.0, %v2294
      %v2296 = vpop.f32.mrb[0].mxu0
      %2297 = vmatprep.mubr.f32.mxu0 0.0
      %2298 = vmatmul.mubr.f32.gmra.mrb[0].mxu0 %v2114
      %v2299 = vpop.f32.mrb[0].mxu0
      %v2300 = vadd.f32 0.0, %v2299
      %v2301 = vpop.f32.mrb[0].mxu0
      %2302 = vmatprep.mubr.f32.mxu0 0.0
      %2303 = vmatmul.mubr.f32.gmra.mrb[0].mxu0 %v2117
      %v2304 = vpop.f32.mrb[0].mxu0
      %v2305 = vadd.f32 0.0, %v2304
      %v2306 = vpop.f32.mrb[0].mxu0
      %2307 = vmatprep.mubr.f32.mxu0 0.0
      %2308 = vmatmul.mubr.f32.gmra.mrb[0].mxu0 %v2120
      %v2309 = vpop.f32.mrb[0].mxu0
      %v2310 = vadd.f32 0.0, %v2309
      %v2311 = vpop.f32.mrb[0].mxu0
      %2312 = vmatprep.mubr.f32.mxu0 0.0
      %2313 = vmatmul.mubr.f32.gmra.mrb[0].mxu0 %v2123
      %v2314 = vpop.f32.mrb[0].mxu0
      %v2315 = vadd.f32 0.0, %v2314
      %v2316 = vpop.f32.mrb[0].mxu0
      %2317 = vmatprep.mubr.f32.mxu0 0.0
      %2318 = vmatmul.mubr.f32.gmra.mrb[0].mxu0 %v2126
      %v2319 = vpop.f32.mrb[0].mxu0
      %v2320 = vadd.f32 0.0, %v2319
      %v2321 = vpop.f32.mrb[0].mxu0
      %2322 = vmatprep.mubr.f32.mxu0 0.0
      %2323 = vmatmul.mubr.f32.gmra.mrb[0].mxu0 %v2129
      %v2324 = vpop.f32.mrb[0].mxu0
      %v2325 = vadd.f32 0.0, %v2324
      %v2326 = vpop.f32.mrb[0].mxu0
      %2327 = vmatprep.mubr.f32.mxu0 0.0
      %2328 = vmatmul.mubr.f32.gmra.mrb[0].mxu0 %v2132
      %v2329 = vpop.f32.mrb[0].mxu0
      %v2330 = vadd.f32 0.0, %v2329
      %v2331 = vpop.f32.mrb[0].mxu0
      %2332 = vmatprep.mubr.f32.mxu0 0.0
      %2333 = vmatmul.mubr.f32.gmra.mrb[0].mxu0 %v2135
      %v2334 = vpop.f32.mrb[0].mxu0
      %v2335 = vadd.f32 0.0, %v2334
      %v2336 = vpop.f32.mrb[0].mxu0
      %2337 = vmatprep.mubr.f32.mxu0 0.0
      %2338 = vmatmul.mubr.f32.gmra.mrb[0].mxu0 %v2138
      %v2339 = vpop.f32.mrb[0].mxu0
      %v2340 = vadd.f32 0.0, %v2339
      %v2341 = vpop.f32.mrb[0].mxu0
      %2342 = vmatprep.mubr.f32.mxu0 0.0
      %2343 = vmatmul.mubr.f32.gmra.mrb[0].mxu0 %v2141
      %v2344 = vpop.f32.mrb[0].mxu0
      %v2345 = vadd.f32 0.0, %v2344
      %v2346 = vpop.f32.mrb[0].mxu0
      %2347 = vmatprep.mubr.f32.mxu0 0.0
      %2348 = vmatmul.mubr.f32.gmra.mrb[0].mxu0 %v2144
      %v2349 = vpop.f32.mrb[0].mxu0
      %v2350 = vadd.f32 0.0, %v2349
      %v2351 = vpop.f32.mrb[0].mxu0
      %2352 = vmatprep.mubr.f32.mxu0 0.0
      %2353 = vmatmul.mubr.f32.gmra.mrb[0].mxu0 %v2147
      %v2354 = vpop.f32.mrb[0].mxu0
      %v2355 = vadd.f32 0.0, %v2354
      %v2356 = vpop.f32.mrb[0].mxu0
      %2357 = vmatprep.mubr.f32.mxu0 0.0
      %2358 = vmatmul.mubr.f32.gmra.mrb[0].mxu0 %v2150
      %v2359 = vpop.f32.mrb[0].mxu0
      %v2360 = vadd.f32 0.0, %v2359
      %v2361 = vpop.f32.mrb[0].mxu0
      %2362 = vmatprep.mubr.f32.mxu0 0.0
      %2363 = vmatmul.mubr.f32.gmra.mrb[0].mxu0 %v2153
      %v2364 = vpop.f32.mrb[0].mxu0
      %v2365 = vadd.f32 0.0, %v2364
      %v2366 = vpop.f32.mrb[0].mxu0
      %2367 = vmatprep.mubr.f32.mxu0 0.0
      %2368 = vmatmul.mubr.f32.gmra.mrb[0].mxu0 %v2156
      %v2369 = vpop.f32.mrb[0].mxu0
      %v2370 = vadd.f32 0.0, %v2369
      %v2371 = vpop.f32.mrb[0].mxu0
      %2372 = vmatprep.mubr.f32.mxu0 0.0
      %2373 = vmatmul.mubr.f32.gmra.mrb[0].mxu0 %v2159
      %v2374 = vpop.f32.mrb[0].mxu0
      %v2375 = vadd.f32 0.0, %v2374
      %v2376 = vpop.f32.mrb[0].mxu0
      %2377 = vmatprep.mubr.f32.mxu0 0.0
      %2378 = vmatmul.mubr.f32.gmra.mrb[0].mxu0 %v2162
      %v2379 = vpop.f32.mrb[0].mxu0
      %v2380 = vadd.f32 0.0, %v2379
      %v2381 = vpop.f32.mrb[0].mxu0
      %2382 = vmatprep.mubr.f32.mxu0 0.0
      %2383 = vmatmul.mubr.f32.gmra.mrb[0].mxu0 %v2165
      %v2384 = vpop.f32.mrb[0].mxu0
      %v2385 = vadd.f32 0.0, %v2384
      %v2386 = vpop.f32.mrb[0].mxu0
      %2387 = vmatprep.mubr.f32.mxu0 0.0
      %2388 = vmatmul.mubr.f32.gmra.mrb[0].mxu0 %v2168
      %v2389 = vpop.f32.mrb[0].mxu0
      %v2390 = vadd.f32 0.0, %v2389
      %v2391 = vpop.f32.mrb[0].mxu0
      %2392 = vmatprep.mubr.f32.mxu0 0.0
      %2393 = vmatmul.mubr.f32.gmra.mrb[0].mxu0 %v2171
      %v2394 = vpop.f32.mrb[0].mxu0
      %v2395 = vadd.f32 0.0, %v2394
      %v2396 = vpop.f32.mrb[0].mxu0
      %2397 = vdwg.mxu0
      %v2398 = vadd.f32 %v2011, %v2240
      %v2399 = vadd.f32 %v2012, %v2245
      %v2400 = vadd.f32 %v2013, %v2250
      %v2401 = vadd.f32 %v2014, %v2255
      %v2402 = vadd.f32 %v2015, %v2260
      %v2403 = vadd.f32 %v2016, %v2265
      %v2404 = vadd.f32 %v2017, %v2270
      %v2405 = vadd.f32 %v2018, %v2275
      %v2406 = vadd.f32 %v2019, %v2280
      %v2407 = vadd.f32 %v2020, %v2285
      %v2408 = vadd.f32 %v2021, %v2290
      %v2409 = vadd.f32 %v2022, %v2295
      %v2410 = vadd.f32 %v2023, %v2300
      %v2411 = vadd.f32 %v2024, %v2305
      %v2412 = vadd.f32 %v2025, %v2310
      %v2413 = vadd.f32 %v2026, %v2315
      %v2414 = vadd.f32 %v2027, %v2320
      %v2415 = vadd.f32 %v2028, %v2325
      %v2416 = vadd.f32 %v2029, %v2330
      %v2417 = vadd.f32 %v2030, %v2335
      %v2418 = vadd.f32 %v2031, %v2340
      %v2419 = vadd.f32 %v2032, %v2345
      %v2420 = vadd.f32 %v2033, %v2350
      %v2421 = vadd.f32 %v2034, %v2355
      %v2422 = vadd.f32 %v2035, %v2360
      %v2423 = vadd.f32 %v2036, %v2365
      %v2424 = vadd.f32 %v2037, %v2370
      %v2425 = vadd.f32 %v2038, %v2375
      %v2426 = vadd.f32 %v2039, %v2380
      %v2427 = vadd.f32 %v2040, %v2385
      %v2428 = vadd.f32 %v2041, %v2390
      %v2429 = vadd.f32 %v2042, %v2395
      %s2430 = scalar_lea.vmem %s165, 48
      %v2431 = vld [vmem:[%s2430] sm:$0xff]
      %v2432 = vld [vmem:[%s2430 + $0x8] sm:$0xff]
      %v2433 = vld [vmem:[%s2430 + $0x18] sm:$0xff]
      %v2434 = vld [vmem:[%s2430 + $0x20] sm:$0xff]
      %v2435 = vld [vmem:[%s2430 + $0x30] sm:$0xff]
      %v2436 = vld [vmem:[%s2430 + $0x38] sm:$0xff]
      %v2437 = vld [vmem:[%s2430 + $0x48] sm:$0xff]
      %v2438 = vld [vmem:[%s2430 + $0x50] sm:$0xff]
      %v2439 = vld [vmem:[%s2430 + $0x60] sm:$0xff]
      %v2440 = vld [vmem:[%s2430 + $0x68] sm:$0xff]
      %v2441 = vld [vmem:[%s2430 + $0x78] sm:$0xff]
      %v2442 = vld [vmem:[%s2430 + $0x80] sm:$0xff]
      %v2443 = vld [vmem:[%s2430 + $0x90] sm:$0xff]
      %v2444 = vld [vmem:[%s2430 + $0x98] sm:$0xff]
      %v2445 = vld [vmem:[%s2430 + $0xa8] sm:$0xff]
      %v2446 = vld [vmem:[%s2430 + $0xb0] sm:$0xff]
      %v2447 = vld [vmem:[%s2430 + $0xc0] sm:$0xff]
      %v2448 = vld [vmem:[%s2430 + $0xc8] sm:$0xff]
      %v2449 = vld [vmem:[%s2430 + $0xd8] sm:$0xff]
      %v2450 = vld [vmem:[%s2430 + $0xe0] sm:$0xff]
      %v2451 = vld [vmem:[%s2430 + $0xf0] sm:$0xff]
      %v2452 = vld [vmem:[%s2430 + $0xf8] sm:$0xff]
      %v2453 = vld [vmem:[%s2430 + $0x108] sm:$0xff]
      %v2454 = vld [vmem:[%s2430 + $0x110] sm:$0xff]
      %v2455 = vld [vmem:[%s2430 + $0x120] sm:$0xff]
      %v2456 = vld [vmem:[%s2430 + $0x128] sm:$0xff]
      %v2457 = vld [vmem:[%s2430 + $0x138] sm:$0xff]
      %v2458 = vld [vmem:[%s2430 + $0x140] sm:$0xff]
      %v2459 = vld [vmem:[%s2430 + $0x150] sm:$0xff]
      %v2460 = vld [vmem:[%s2430 + $0x158] sm:$0xff]
      %v2461 = vld [vmem:[%s2430 + $0x168] sm:$0xff]
      %v2462 = vld [vmem:[%s2430 + $0x170] sm:$0xff]
      %s2463 = scalar_lea.vmem %s1, 48
      %v2464 = vld [vmem:[%s2463] sm:$0xff]
      %v2466 = vsel %vm238, %v2431, 0
      %v2469 = vsel %vm238, %v2432, 0
      %v2472 = vsel %vm238, %v2433, 0
      %v2475 = vsel %vm238, %v2434, 0
      %v2478 = vsel %vm238, %v2435, 0
      %v2481 = vsel %vm238, %v2436, 0
      %v2484 = vsel %vm238, %v2437, 0
      %v2487 = vsel %vm238, %v2438, 0
      %v2490 = vsel %vm238, %v2439, 0
      %v2493 = vsel %vm238, %v2440, 0
      %v2496 = vsel %vm238, %v2441, 0
      %v2499 = vsel %vm238, %v2442, 0
      %v2502 = vsel %vm238, %v2443, 0
      %v2505 = vsel %vm238, %v2444, 0
      %v2508 = vsel %vm238, %v2445, 0
      %v2511 = vsel %vm238, %v2446, 0
      %v2514 = vsel %vm238, %v2447, 0
      %v2517 = vsel %vm238, %v2448, 0
      %v2520 = vsel %vm238, %v2449, 0
      %v2523 = vsel %vm238, %v2450, 0
      %v2526 = vsel %vm238, %v2451, 0
      %v2529 = vsel %vm238, %v2452, 0
      %v2532 = vsel %vm238, %v2453, 0
      %v2535 = vsel %vm238, %v2454, 0
      %v2538 = vsel %vm238, %v2455, 0
      %v2541 = vsel %vm238, %v2456, 0
      %v2544 = vsel %vm238, %v2457, 0
      %v2547 = vsel %vm238, %v2458, 0
      %v2550 = vsel %vm238, %v2459, 0
      %v2553 = vsel %vm238, %v2460, 0
      %v2556 = vsel %vm238, %v2461, 0
      %v2559 = vsel %vm238, %v2462, 0
      %2561 = vmatprep.subr.mxu0 0.0
      %2562 = vmatpush1.msra.mxu0 %v2464
      %2563 = vmatprep.subr.mxu0 0.0
      %2564 = vmatpush1.msra.mxu0 0.0
      %2565 = vmatprep.subr.mxu0 0.0
      %2566 = vmatpush1.msra.mxu0 0.0
      %2567 = vmatprep.subr.mxu0 0.0
      %2568 = vmatpush1.msra.mxu0 0.0
      %2569 = vmatprep.subr.mxu0 0.0
      %2570 = vmatpush1.msra.mxu0 0.0
      %2571 = vmatprep.subr.mxu0 0.0
      %2572 = vmatpush1.msra.mxu0 0.0
      %2573 = vmatprep.subr.mxu0 0.0
      %2574 = vmatpush1.msra.mxu0 0.0
      %2575 = vmatprep.subr.mxu0 0.0
      %2576 = vmatpush1.msra.mxu0 0.0
      %2577 = vmatprep.subr.mxu0 0.0
      %2578 = vmatpush1.msra.mxu0 0.0
      %2579 = vmatprep.subr.mxu0 0.0
      %2580 = vmatpush1.msra.mxu0 0.0
      %2581 = vmatprep.subr.mxu0 0.0
      %2582 = vmatpush1.msra.mxu0 0.0
      %2583 = vmatprep.subr.mxu0 0.0
      %2584 = vmatpush1.msra.mxu0 0.0
      %2585 = vmatprep.subr.mxu0 0.0
      %2586 = vmatpush1.msra.mxu0 0.0
      %2587 = vmatprep.subr.mxu0 0.0
      %2588 = vmatpush1.msra.mxu0 0.0
      %2589 = vmatprep.subr.mxu0 0.0
      %2590 = vmatpush1.msra.mxu0 0.0
      %2591 = vmatprep.subr.mxu0 0.0
      %2592 = vmatpush1.msra.mxu0 0.0
      %2593 = vmatprep.subr.mxu0 0.0
      %2594 = vmatpush1.msra.mxu0 0.0
      %2595 = vmatprep.subr.mxu0 0.0
      %2596 = vmatpush1.msra.mxu0 0.0
      %2597 = vmatprep.subr.mxu0 0.0
      %2598 = vmatpush1.msra.mxu0 0.0
      %2599 = vmatprep.subr.mxu0 0.0
      %2600 = vmatpush1.msra.mxu0 0.0
      %2601 = vmatprep.subr.mxu0 0.0
      %2602 = vmatpush1.msra.mxu0 0.0
      %2603 = vmatprep.subr.mxu0 0.0
      %2604 = vmatpush1.msra.mxu0 0.0
      %2605 = vmatprep.subr.mxu0 0.0
      %2606 = vmatpush1.msra.mxu0 0.0
      %2607 = vmatprep.subr.mxu0 0.0
      %2608 = vmatpush1.msra.mxu0 0.0
      %2609 = vmatprep.subr.mxu0 0.0
      %2610 = vmatpush1.msra.mxu0 0.0
      %2611 = vmatprep.subr.mxu0 0.0
      %2612 = vmatpush1.msra.mxu0 0.0
      %2613 = vmatprep.subr.mxu0 0.0
      %2614 = vmatpush1.msra.mxu0 0.0
      %2615 = vmatprep.subr.mxu0 0.0
      %2616 = vmatpush1.msra.mxu0 0.0
      %2617 = vmatprep.subr.mxu0 0.0
      %2618 = vmatpush1.msra.mxu0 0.0
      %2619 = vmatprep.subr.mxu0 0.0
      %2620 = vmatpush1.msra.mxu0 0.0
      %2621 = vmatprep.subr.mxu0 0.0
      %2622 = vmatpush1.msra.mxu0 0.0
      %2623 = vmatprep.subr.mxu0 0.0
      %2624 = vmatpush1.msra.mxu0 0.0
      %2625 = vmatprep.mubr.f32.mxu0 0.0
      %2626 = vmatmul.mubr.f32.gmra.mrb[0].mxu0 %v2466
      %v2627 = vpop.f32.mrb[0].mxu0
      %v2628 = vadd.f32 0.0, %v2627
      %v2629 = vpop.f32.mrb[0].mxu0
      %2630 = vmatprep.mubr.f32.mxu0 0.0
      %2631 = vmatmul.mubr.f32.gmra.mrb[0].mxu0 %v2469
      %v2632 = vpop.f32.mrb[0].mxu0
      %v2633 = vadd.f32 0.0, %v2632
      %v2634 = vpop.f32.mrb[0].mxu0
      %2635 = vmatprep.mubr.f32.mxu0 0.0
      %2636 = vmatmul.mubr.f32.gmra.mrb[0].mxu0 %v2472
      %v2637 = vpop.f32.mrb[0].mxu0
      %v2638 = vadd.f32 0.0, %v2637
      %v2639 = vpop.f32.mrb[0].mxu0
      %2640 = vmatprep.mubr.f32.mxu0 0.0
      %2641 = vmatmul.mubr.f32.gmra.mrb[0].mxu0 %v2475
      %v2642 = vpop.f32.mrb[0].mxu0
      %v2643 = vadd.f32 0.0, %v2642
      %v2644 = vpop.f32.mrb[0].mxu0
      %2645 = vmatprep.mubr.f32.mxu0 0.0
      %2646 = vmatmul.mubr.f32.gmra.mrb[0].mxu0 %v2478
      %v2647 = vpop.f32.mrb[0].mxu0
      %v2648 = vadd.f32 0.0, %v2647
      %v2649 = vpop.f32.mrb[0].mxu0
      %2650 = vmatprep.mubr.f32.mxu0 0.0
      %2651 = vmatmul.mubr.f32.gmra.mrb[0].mxu0 %v2481
      %v2652 = vpop.f32.mrb[0].mxu0
      %v2653 = vadd.f32 0.0, %v2652
      %v2654 = vpop.f32.mrb[0].mxu0
      %2655 = vmatprep.mubr.f32.mxu0 0.0
      %2656 = vmatmul.mubr.f32.gmra.mrb[0].mxu0 %v2484
      %v2657 = vpop.f32.mrb[0].mxu0
      %v2658 = vadd.f32 0.0, %v2657
      %v2659 = vpop.f32.mrb[0].mxu0
      %2660 = vmatprep.mubr.f32.mxu0 0.0
      %2661 = vmatmul.mubr.f32.gmra.mrb[0].mxu0 %v2487
      %v2662 = vpop.f32.mrb[0].mxu0
      %v2663 = vadd.f32 0.0, %v2662
      %v2664 = vpop.f32.mrb[0].mxu0
      %2665 = vmatprep.mubr.f32.mxu0 0.0
      %2666 = vmatmul.mubr.f32.gmra.mrb[0].mxu0 %v2490
      %v2667 = vpop.f32.mrb[0].mxu0
      %v2668 = vadd.f32 0.0, %v2667
      %v2669 = vpop.f32.mrb[0].mxu0
      %2670 = vmatprep.mubr.f32.mxu0 0.0
      %2671 = vmatmul.mubr.f32.gmra.mrb[0].mxu0 %v2493
      %v2672 = vpop.f32.mrb[0].mxu0
      %v2673 = vadd.f32 0.0, %v2672
      %v2674 = vpop.f32.mrb[0].mxu0
      %2675 = vmatprep.mubr.f32.mxu0 0.0
      %2676 = vmatmul.mubr.f32.gmra.mrb[0].mxu0 %v2496
      %v2677 = vpop.f32.mrb[0].mxu0
      %v2678 = vadd.f32 0.0, %v2677
      %v2679 = vpop.f32.mrb[0].mxu0
      %2680 = vmatprep.mubr.f32.mxu0 0.0
      %2681 = vmatmul.mubr.f32.gmra.mrb[0].mxu0 %v2499
      %v2682 = vpop.f32.mrb[0].mxu0
      %v2683 = vadd.f32 0.0, %v2682
      %v2684 = vpop.f32.mrb[0].mxu0
      %2685 = vmatprep.mubr.f32.mxu0 0.0
      %2686 = vmatmul.mubr.f32.gmra.mrb[0].mxu0 %v2502
      %v2687 = vpop.f32.mrb[0].mxu0
      %v2688 = vadd.f32 0.0, %v2687
      %v2689 = vpop.f32.mrb[0].mxu0
      %2690 = vmatprep.mubr.f32.mxu0 0.0
      %2691 = vmatmul.mubr.f32.gmra.mrb[0].mxu0 %v2505
      %v2692 = vpop.f32.mrb[0].mxu0
      %v2693 = vadd.f32 0.0, %v2692
      %v2694 = vpop.f32.mrb[0].mxu0
      %2695 = vmatprep.mubr.f32.mxu0 0.0
      %2696 = vmatmul.mubr.f32.gmra.mrb[0].mxu0 %v2508
      %v2697 = vpop.f32.mrb[0].mxu0
      %v2698 = vadd.f32 0.0, %v2697
      %v2699 = vpop.f32.mrb[0].mxu0
      %2700 = vmatprep.mubr.f32.mxu0 0.0
      %2701 = vmatmul.mubr.f32.gmra.mrb[0].mxu0 %v2511
      %v2702 = vpop.f32.mrb[0].mxu0
      %v2703 = vadd.f32 0.0, %v2702
      %v2704 = vpop.f32.mrb[0].mxu0
      %2705 = vmatprep.mubr.f32.mxu0 0.0
      %2706 = vmatmul.mubr.f32.gmra.mrb[0].mxu0 %v2514
      %v2707 = vpop.f32.mrb[0].mxu0
      %v2708 = vadd.f32 0.0, %v2707
      %v2709 = vpop.f32.mrb[0].mxu0
      %2710 = vmatprep.mubr.f32.mxu0 0.0
      %2711 = vmatmul.mubr.f32.gmra.mrb[0].mxu0 %v2517
      %v2712 = vpop.f32.mrb[0].mxu0
      %v2713 = vadd.f32 0.0, %v2712
      %v2714 = vpop.f32.mrb[0].mxu0
      %2715 = vmatprep.mubr.f32.mxu0 0.0
      %2716 = vmatmul.mubr.f32.gmra.mrb[0].mxu0 %v2520
      %v2717 = vpop.f32.mrb[0].mxu0
      %v2718 = vadd.f32 0.0, %v2717
      %v2719 = vpop.f32.mrb[0].mxu0
      %2720 = vmatprep.mubr.f32.mxu0 0.0
      %2721 = vmatmul.mubr.f32.gmra.mrb[0].mxu0 %v2523
      %v2722 = vpop.f32.mrb[0].mxu0
      %v2723 = vadd.f32 0.0, %v2722
      %v2724 = vpop.f32.mrb[0].mxu0
      %2725 = vmatprep.mubr.f32.mxu0 0.0
      %2726 = vmatmul.mubr.f32.gmra.mrb[0].mxu0 %v2526
      %v2727 = vpop.f32.mrb[0].mxu0
      %v2728 = vadd.f32 0.0, %v2727
      %v2729 = vpop.f32.mrb[0].mxu0
      %2730 = vmatprep.mubr.f32.mxu0 0.0
      %2731 = vmatmul.mubr.f32.gmra.mrb[0].mxu0 %v2529
      %v2732 = vpop.f32.mrb[0].mxu0
      %v2733 = vadd.f32 0.0, %v2732
      %v2734 = vpop.f32.mrb[0].mxu0
      %2735 = vmatprep.mubr.f32.mxu0 0.0
      %2736 = vmatmul.mubr.f32.gmra.mrb[0].mxu0 %v2532
      %v2737 = vpop.f32.mrb[0].mxu0
      %v2738 = vadd.f32 0.0, %v2737
      %v2739 = vpop.f32.mrb[0].mxu0
      %2740 = vmatprep.mubr.f32.mxu0 0.0
      %2741 = vmatmul.mubr.f32.gmra.mrb[0].mxu0 %v2535
      %v2742 = vpop.f32.mrb[0].mxu0
      %v2743 = vadd.f32 0.0, %v2742
      %v2744 = vpop.f32.mrb[0].mxu0
      %2745 = vmatprep.mubr.f32.mxu0 0.0
      %2746 = vmatmul.mubr.f32.gmra.mrb[0].mxu0 %v2538
      %v2747 = vpop.f32.mrb[0].mxu0
      %v2748 = vadd.f32 0.0, %v2747
      %v2749 = vpop.f32.mrb[0].mxu0
      %2750 = vmatprep.mubr.f32.mxu0 0.0
      %2751 = vmatmul.mubr.f32.gmra.mrb[0].mxu0 %v2541
      %v2752 = vpop.f32.mrb[0].mxu0
      %v2753 = vadd.f32 0.0, %v2752
      %v2754 = vpop.f32.mrb[0].mxu0
      %2755 = vmatprep.mubr.f32.mxu0 0.0
      %2756 = vmatmul.mubr.f32.gmra.mrb[0].mxu0 %v2544
      %v2757 = vpop.f32.mrb[0].mxu0
      %v2758 = vadd.f32 0.0, %v2757
      %v2759 = vpop.f32.mrb[0].mxu0
      %2760 = vmatprep.mubr.f32.mxu0 0.0
      %2761 = vmatmul.mubr.f32.gmra.mrb[0].mxu0 %v2547
      %v2762 = vpop.f32.mrb[0].mxu0
      %v2763 = vadd.f32 0.0, %v2762
      %v2764 = vpop.f32.mrb[0].mxu0
      %2765 = vmatprep.mubr.f32.mxu0 0.0
      %2766 = vmatmul.mubr.f32.gmra.mrb[0].mxu0 %v2550
      %v2767 = vpop.f32.mrb[0].mxu0
      %v2768 = vadd.f32 0.0, %v2767
      %v2769 = vpop.f32.mrb[0].mxu0
      %2770 = vmatprep.mubr.f32.mxu0 0.0
      %2771 = vmatmul.mubr.f32.gmra.mrb[0].mxu0 %v2553
      %v2772 = vpop.f32.mrb[0].mxu0
      %v2773 = vadd.f32 0.0, %v2772
      %v2774 = vpop.f32.mrb[0].mxu0
      %2775 = vmatprep.mubr.f32.mxu0 0.0
      %2776 = vmatmul.mubr.f32.gmra.mrb[0].mxu0 %v2556
      %v2777 = vpop.f32.mrb[0].mxu0
      %v2778 = vadd.f32 0.0, %v2777
      %v2779 = vpop.f32.mrb[0].mxu0
      %2780 = vmatprep.mubr.f32.mxu0 0.0
      %2781 = vmatmul.mubr.f32.gmra.mrb[0].mxu0 %v2559
      %v2782 = vpop.f32.mrb[0].mxu0
      %v2783 = vadd.f32 0.0, %v2782
      %v2784 = vpop.f32.mrb[0].mxu0
      %2785 = vdwg.mxu0
      %v2786 = vadd.f32 %v2398, %v2628
      %v2787 = vadd.f32 %v2399, %v2633
      %v2788 = vadd.f32 %v2400, %v2638
      %v2789 = vadd.f32 %v2401, %v2643
      %v2790 = vadd.f32 %v2402, %v2648
      %v2791 = vadd.f32 %v2403, %v2653
      %v2792 = vadd.f32 %v2404, %v2658
      %v2793 = vadd.f32 %v2405, %v2663
      %v2794 = vadd.f32 %v2406, %v2668
      %v2795 = vadd.f32 %v2407, %v2673
      %v2796 = vadd.f32 %v2408, %v2678
      %v2797 = vadd.f32 %v2409, %v2683
      %v2798 = vadd.f32 %v2410, %v2688
      %v2799 = vadd.f32 %v2411, %v2693
      %v2800 = vadd.f32 %v2412, %v2698
      %v2801 = vadd.f32 %v2413, %v2703
      %v2802 = vadd.f32 %v2414, %v2708
      %v2803 = vadd.f32 %v2415, %v2713
      %v2804 = vadd.f32 %v2416, %v2718
      %v2805 = vadd.f32 %v2417, %v2723
      %v2806 = vadd.f32 %v2418, %v2728
      %v2807 = vadd.f32 %v2419, %v2733
      %v2808 = vadd.f32 %v2420, %v2738
      %v2809 = vadd.f32 %v2421, %v2743
      %v2810 = vadd.f32 %v2422, %v2748
      %v2811 = vadd.f32 %v2423, %v2753
      %v2812 = vadd.f32 %v2424, %v2758
      %v2813 = vadd.f32 %v2425, %v2763
      %v2814 = vadd.f32 %v2426, %v2768
      %v2815 = vadd.f32 %v2427, %v2773
      %v2816 = vadd.f32 %v2428, %v2778
      %v2817 = vadd.f32 %v2429, %v2783
      %v2818 = vld [vmem:[%s2430 + $0x1] sm:$0xff]
      %v2819 = vld [vmem:[%s2430 + $0x9] sm:$0xff]
      %v2820 = vld [vmem:[%s2430 + $0x19] sm:$0xff]
      %v2821 = vld [vmem:[%s2430 + $0x21] sm:$0xff]
      %v2822 = vld [vmem:[%s2430 + $0x31] sm:$0xff]
      %v2823 = vld [vmem:[%s2430 + $0x39] sm:$0xff]
      %v2824 = vld [vmem:[%s2430 + $0x49] sm:$0xff]
      %v2825 = vld [vmem:[%s2430 + $0x51] sm:$0xff]
      %v2826 = vld [vmem:[%s2430 + $0x61] sm:$0xff]
      %v2827 = vld [vmem:[%s2430 + $0x69] sm:$0xff]
      %v2828 = vld [vmem:[%s2430 + $0x79] sm:$0xff]
      %v2829 = vld [vmem:[%s2430 + $0x81] sm:$0xff]
      %v2830 = vld [vmem:[%s2430 + $0x91] sm:$0xff]
      %v2831 = vld [vmem:[%s2430 + $0x99] sm:$0xff]
      %v2832 = vld [vmem:[%s2430 + $0xa9] sm:$0xff]
      %v2833 = vld [vmem:[%s2430 + $0xb1] sm:$0xff]
      %v2834 = vld [vmem:[%s2430 + $0xc1] sm:$0xff]
      %v2835 = vld [vmem:[%s2430 + $0xc9] sm:$0xff]
      %v2836 = vld [vmem:[%s2430 + $0xd9] sm:$0xff]
      %v2837 = vld [vmem:[%s2430 + $0xe1] sm:$0xff]
      %v2838 = vld [vmem:[%s2430 + $0xf1] sm:$0xff]
      %v2839 = vld [vmem:[%s2430 + $0xf9] sm:$0xff]
      %v2840 = vld [vmem:[%s2430 + $0x109] sm:$0xff]
      %v2841 = vld [vmem:[%s2430 + $0x111] sm:$0xff]
      %v2842 = vld [vmem:[%s2430 + $0x121] sm:$0xff]
      %v2843 = vld [vmem:[%s2430 + $0x129] sm:$0xff]
      %v2844 = vld [vmem:[%s2430 + $0x139] sm:$0xff]
      %v2845 = vld [vmem:[%s2430 + $0x141] sm:$0xff]
      %v2846 = vld [vmem:[%s2430 + $0x151] sm:$0xff]
      %v2847 = vld [vmem:[%s2430 + $0x159] sm:$0xff]
      %v2848 = vld [vmem:[%s2430 + $0x169] sm:$0xff]
      %v2849 = vld [vmem:[%s2430 + $0x171] sm:$0xff]
      %s2850 = scalar_lea.vmem %s1, 56
      %v2851 = vld [vmem:[%s2850] sm:$0xff]
      %v2853 = vsel %vm238, %v2818, 0
      %v2856 = vsel %vm238, %v2819, 0
      %v2859 = vsel %vm238, %v2820, 0
      %v2862 = vsel %vm238, %v2821, 0
      %v2865 = vsel %vm238, %v2822, 0
      %v2868 = vsel %vm238, %v2823, 0
      %v2871 = vsel %vm238, %v2824, 0
      %v2874 = vsel %vm238, %v2825, 0
      %v2877 = vsel %vm238, %v2826, 0
      %v2880 = vsel %vm238, %v2827, 0
      %v2883 = vsel %vm238, %v2828, 0
      %v2886 = vsel %vm238, %v2829, 0
      %v2889 = vsel %vm238, %v2830, 0
      %v2892 = vsel %vm238, %v2831, 0
      %v2895 = vsel %vm238, %v2832, 0
      %v2898 = vsel %vm238, %v2833, 0
      %v2901 = vsel %vm238, %v2834, 0
      %v2904 = vsel %vm238, %v2835, 0
      %v2907 = vsel %vm238, %v2836, 0
      %v2910 = vsel %vm238, %v2837, 0
      %v2913 = vsel %vm238, %v2838, 0
      %v2916 = vsel %vm238, %v2839, 0
      %v2919 = vsel %vm238, %v2840, 0
      %v2922 = vsel %vm238, %v2841, 0
      %v2925 = vsel %vm238, %v2842, 0
      %v2928 = vsel %vm238, %v2843, 0
      %v2931 = vsel %vm238, %v2844, 0
      %v2934 = vsel %vm238, %v2845, 0
      %v2937 = vsel %vm238, %v2846, 0
      %v2940 = vsel %vm238, %v2847, 0
      %v2943 = vsel %vm238, %v2848, 0
      %v2946 = vsel %vm238, %v2849, 0
      %2948 = vmatprep.subr.mxu0 0.0
      %2949 = vmatpush1.msra.mxu0 %v2851
      %2950 = vmatprep.subr.mxu0 0.0
      %2951 = vmatpush1.msra.mxu0 0.0
      %2952 = vmatprep.subr.mxu0 0.0
      %2953 = vmatpush1.msra.mxu0 0.0
      %2954 = vmatprep.subr.mxu0 0.0
      %2955 = vmatpush1.msra.mxu0 0.0
      %2956 = vmatprep.subr.mxu0 0.0
      %2957 = vmatpush1.msra.mxu0 0.0
      %2958 = vmatprep.subr.mxu0 0.0
      %2959 = vmatpush1.msra.mxu0 0.0
      %2960 = vmatprep.subr.mxu0 0.0
      %2961 = vmatpush1.msra.mxu0 0.0
      %2962 = vmatprep.subr.mxu0 0.0
      %2963 = vmatpush1.msra.mxu0 0.0
      %2964 = vmatprep.subr.mxu0 0.0
      %2965 = vmatpush1.msra.mxu0 0.0
      %2966 = vmatprep.subr.mxu0 0.0
      %2967 = vmatpush1.msra.mxu0 0.0
      %2968 = vmatprep.subr.mxu0 0.0
      %2969 = vmatpush1.msra.mxu0 0.0
      %2970 = vmatprep.subr.mxu0 0.0
      %2971 = vmatpush1.msra.mxu0 0.0
      %2972 = vmatprep.subr.mxu0 0.0
      %2973 = vmatpush1.msra.mxu0 0.0
      %2974 = vmatprep.subr.mxu0 0.0
      %2975 = vmatpush1.msra.mxu0 0.0
      %2976 = vmatprep.subr.mxu0 0.0
      %2977 = vmatpush1.msra.mxu0 0.0
      %2978 = vmatprep.subr.mxu0 0.0
      %2979 = vmatpush1.msra.mxu0 0.0
      %2980 = vmatprep.subr.mxu0 0.0
      %2981 = vmatpush1.msra.mxu0 0.0
      %2982 = vmatprep.subr.mxu0 0.0
      %2983 = vmatpush1.msra.mxu0 0.0
      %2984 = vmatprep.subr.mxu0 0.0
      %2985 = vmatpush1.msra.mxu0 0.0
      %2986 = vmatprep.subr.mxu0 0.0
      %2987 = vmatpush1.msra.mxu0 0.0
      %2988 = vmatprep.subr.mxu0 0.0
      %2989 = vmatpush1.msra.mxu0 0.0
      %2990 = vmatprep.subr.mxu0 0.0
      %2991 = vmatpush1.msra.mxu0 0.0
      %2992 = vmatprep.subr.mxu0 0.0
      %2993 = vmatpush1.msra.mxu0 0.0
      %2994 = vmatprep.subr.mxu0 0.0
      %2995 = vmatpush1.msra.mxu0 0.0
      %2996 = vmatprep.subr.mxu0 0.0
      %2997 = vmatpush1.msra.mxu0 0.0
      %2998 = vmatprep.subr.mxu0 0.0
      %2999 = vmatpush1.msra.mxu0 0.0
      %3000 = vmatprep.subr.mxu0 0.0
      %3001 = vmatpush1.msra.mxu0 0.0
      %3002 = vmatprep.subr.mxu0 0.0
      %3003 = vmatpush1.msra.mxu0 0.0
      %3004 = vmatprep.subr.mxu0 0.0
      %3005 = vmatpush1.msra.mxu0 0.0
      %3006 = vmatprep.subr.mxu0 0.0
      %3007 = vmatpush1.msra.mxu0 0.0
      %3008 = vmatprep.subr.mxu0 0.0
      %3009 = vmatpush1.msra.mxu0 0.0
      %3010 = vmatprep.subr.mxu0 0.0
      %3011 = vmatpush1.msra.mxu0 0.0
      %3012 = vmatprep.mubr.f32.mxu0 0.0
      %3013 = vmatmul.mubr.f32.gmra.mrb[0].mxu0 %v2853
      %v3014 = vpop.f32.mrb[0].mxu0
      %v3015 = vadd.f32 0.0, %v3014
      %v3016 = vpop.f32.mrb[0].mxu0
      %3017 = vmatprep.mubr.f32.mxu0 0.0
      %3018 = vmatmul.mubr.f32.gmra.mrb[0].mxu0 %v2856
      %v3019 = vpop.f32.mrb[0].mxu0
      %v3020 = vadd.f32 0.0, %v3019
      %v3021 = vpop.f32.mrb[0].mxu0
      %3022 = vmatprep.mubr.f32.mxu0 0.0
      %3023 = vmatmul.mubr.f32.gmra.mrb[0].mxu0 %v2859
      %v3024 = vpop.f32.mrb[0].mxu0
      %v3025 = vadd.f32 0.0, %v3024
      %v3026 = vpop.f32.mrb[0].mxu0
      %3027 = vmatprep.mubr.f32.mxu0 0.0
      %3028 = vmatmul.mubr.f32.gmra.mrb[0].mxu0 %v2862
      %v3029 = vpop.f32.mrb[0].mxu0
      %v3030 = vadd.f32 0.0, %v3029
      %v3031 = vpop.f32.mrb[0].mxu0
      %3032 = vmatprep.mubr.f32.mxu0 0.0
      %3033 = vmatmul.mubr.f32.gmra.mrb[0].mxu0 %v2865
      %v3034 = vpop.f32.mrb[0].mxu0
      %v3035 = vadd.f32 0.0, %v3034
      %v3036 = vpop.f32.mrb[0].mxu0
      %3037 = vmatprep.mubr.f32.mxu0 0.0
      %3038 = vmatmul.mubr.f32.gmra.mrb[0].mxu0 %v2868
      %v3039 = vpop.f32.mrb[0].mxu0
      %v3040 = vadd.f32 0.0, %v3039
      %v3041 = vpop.f32.mrb[0].mxu0
      %3042 = vmatprep.mubr.f32.mxu0 0.0
      %3043 = vmatmul.mubr.f32.gmra.mrb[0].mxu0 %v2871
      %v3044 = vpop.f32.mrb[0].mxu0
      %v3045 = vadd.f32 0.0, %v3044
      %v3046 = vpop.f32.mrb[0].mxu0
      %3047 = vmatprep.mubr.f32.mxu0 0.0
      %3048 = vmatmul.mubr.f32.gmra.mrb[0].mxu0 %v2874
      %v3049 = vpop.f32.mrb[0].mxu0
      %v3050 = vadd.f32 0.0, %v3049
      %v3051 = vpop.f32.mrb[0].mxu0
      %3052 = vmatprep.mubr.f32.mxu0 0.0
      %3053 = vmatmul.mubr.f32.gmra.mrb[0].mxu0 %v2877
      %v3054 = vpop.f32.mrb[0].mxu0
      %v3055 = vadd.f32 0.0, %v3054
      %v3056 = vpop.f32.mrb[0].mxu0
      %3057 = vmatprep.mubr.f32.mxu0 0.0
      %3058 = vmatmul.mubr.f32.gmra.mrb[0].mxu0 %v2880
      %v3059 = vpop.f32.mrb[0].mxu0
      %v3060 = vadd.f32 0.0, %v3059
      %v3061 = vpop.f32.mrb[0].mxu0
      %3062 = vmatprep.mubr.f32.mxu0 0.0
      %3063 = vmatmul.mubr.f32.gmra.mrb[0].mxu0 %v2883
      %v3064 = vpop.f32.mrb[0].mxu0
      %v3065 = vadd.f32 0.0, %v3064
      %v3066 = vpop.f32.mrb[0].mxu0
      %3067 = vmatprep.mubr.f32.mxu0 0.0
      %3068 = vmatmul.mubr.f32.gmra.mrb[0].mxu0 %v2886
      %v3069 = vpop.f32.mrb[0].mxu0
      %v3070 = vadd.f32 0.0, %v3069
      %v3071 = vpop.f32.mrb[0].mxu0
      %3072 = vmatprep.mubr.f32.mxu0 0.0
      %3073 = vmatmul.mubr.f32.gmra.mrb[0].mxu0 %v2889
      %v3074 = vpop.f32.mrb[0].mxu0
      %v3075 = vadd.f32 0.0, %v3074
      %v3076 = vpop.f32.mrb[0].mxu0
      %3077 = vmatprep.mubr.f32.mxu0 0.0
      %3078 = vmatmul.mubr.f32.gmra.mrb[0].mxu0 %v2892
      %v3079 = vpop.f32.mrb[0].mxu0
      %v3080 = vadd.f32 0.0, %v3079
      %v3081 = vpop.f32.mrb[0].mxu0
      %3082 = vmatprep.mubr.f32.mxu0 0.0
      %3083 = vmatmul.mubr.f32.gmra.mrb[0].mxu0 %v2895
      %v3084 = vpop.f32.mrb[0].mxu0
      %v3085 = vadd.f32 0.0, %v3084
      %v3086 = vpop.f32.mrb[0].mxu0
      %3087 = vmatprep.mubr.f32.mxu0 0.0
      %3088 = vmatmul.mubr.f32.gmra.mrb[0].mxu0 %v2898
      %v3089 = vpop.f32.mrb[0].mxu0
      %v3090 = vadd.f32 0.0, %v3089
      %v3091 = vpop.f32.mrb[0].mxu0
      %3092 = vmatprep.mubr.f32.mxu0 0.0
      %3093 = vmatmul.mubr.f32.gmra.mrb[0].mxu0 %v2901
      %v3094 = vpop.f32.mrb[0].mxu0
      %v3095 = vadd.f32 0.0, %v3094
      %v3096 = vpop.f32.mrb[0].mxu0
      %3097 = vmatprep.mubr.f32.mxu0 0.0
      %3098 = vmatmul.mubr.f32.gmra.mrb[0].mxu0 %v2904
      %v3099 = vpop.f32.mrb[0].mxu0
      %v3100 = vadd.f32 0.0, %v3099
      %v3101 = vpop.f32.mrb[0].mxu0
      %3102 = vmatprep.mubr.f32.mxu0 0.0
      %3103 = vmatmul.mubr.f32.gmra.mrb[0].mxu0 %v2907
      %v3104 = vpop.f32.mrb[0].mxu0
      %v3105 = vadd.f32 0.0, %v3104
      %v3106 = vpop.f32.mrb[0].mxu0
      %3107 = vmatprep.mubr.f32.mxu0 0.0
      %3108 = vmatmul.mubr.f32.gmra.mrb[0].mxu0 %v2910
      %v3109 = vpop.f32.mrb[0].mxu0
      %v3110 = vadd.f32 0.0, %v3109
      %v3111 = vpop.f32.mrb[0].mxu0
      %3112 = vmatprep.mubr.f32.mxu0 0.0
      %3113 = vmatmul.mubr.f32.gmra.mrb[0].mxu0 %v2913
      %v3114 = vpop.f32.mrb[0].mxu0
      %v3115 = vadd.f32 0.0, %v3114
      %v3116 = vpop.f32.mrb[0].mxu0
      %3117 = vmatprep.mubr.f32.mxu0 0.0
      %3118 = vmatmul.mubr.f32.gmra.mrb[0].mxu0 %v2916
      %v3119 = vpop.f32.mrb[0].mxu0
      %v3120 = vadd.f32 0.0, %v3119
      %v3121 = vpop.f32.mrb[0].mxu0
      %3122 = vmatprep.mubr.f32.mxu0 0.0
      %3123 = vmatmul.mubr.f32.gmra.mrb[0].mxu0 %v2919
      %v3124 = vpop.f32.mrb[0].mxu0
      %v3125 = vadd.f32 0.0, %v3124
      %v3126 = vpop.f32.mrb[0].mxu0
      %3127 = vmatprep.mubr.f32.mxu0 0.0
      %3128 = vmatmul.mubr.f32.gmra.mrb[0].mxu0 %v2922
      %v3129 = vpop.f32.mrb[0].mxu0
      %v3130 = vadd.f32 0.0, %v3129
      %v3131 = vpop.f32.mrb[0].mxu0
      %3132 = vmatprep.mubr.f32.mxu0 0.0
      %3133 = vmatmul.mubr.f32.gmra.mrb[0].mxu0 %v2925
      %v3134 = vpop.f32.mrb[0].mxu0
      %v3135 = vadd.f32 0.0, %v3134
      %v3136 = vpop.f32.mrb[0].mxu0
      %3137 = vmatprep.mubr.f32.mxu0 0.0
      %3138 = vmatmul.mubr.f32.gmra.mrb[0].mxu0 %v2928
      %v3139 = vpop.f32.mrb[0].mxu0
      %v3140 = vadd.f32 0.0, %v3139
      %v3141 = vpop.f32.mrb[0].mxu0
      %3142 = vmatprep.mubr.f32.mxu0 0.0
      %3143 = vmatmul.mubr.f32.gmra.mrb[0].mxu0 %v2931
      %v3144 = vpop.f32.mrb[0].mxu0
      %v3145 = vadd.f32 0.0, %v3144
      %v3146 = vpop.f32.mrb[0].mxu0
      %3147 = vmatprep.mubr.f32.mxu0 0.0
      %3148 = vmatmul.mubr.f32.gmra.mrb[0].mxu0 %v2934
      %v3149 = vpop.f32.mrb[0].mxu0
      %v3150 = vadd.f32 0.0, %v3149
      %v3151 = vpop.f32.mrb[0].mxu0
      %3152 = vmatprep.mubr.f32.mxu0 0.0
      %3153 = vmatmul.mubr.f32.gmra.mrb[0].mxu0 %v2937
      %v3154 = vpop.f32.mrb[0].mxu0
      %v3155 = vadd.f32 0.0, %v3154
      %v3156 = vpop.f32.mrb[0].mxu0
      %3157 = vmatprep.mubr.f32.mxu0 0.0
      %3158 = vmatmul.mubr.f32.gmra.mrb[0].mxu0 %v2940
      %v3159 = vpop.f32.mrb[0].mxu0
      %v3160 = vadd.f32 0.0, %v3159
      %v3161 = vpop.f32.mrb[0].mxu0
      %3162 = vmatprep.mubr.f32.mxu0 0.0
      %3163 = vmatmul.mubr.f32.gmra.mrb[0].mxu0 %v2943
      %v3164 = vpop.f32.mrb[0].mxu0
      %v3165 = vadd.f32 0.0, %v3164
      %v3166 = vpop.f32.mrb[0].mxu0
      %3167 = vmatprep.mubr.f32.mxu0 0.0
      %3168 = vmatmul.mubr.f32.gmra.mrb[0].mxu0 %v2946
      %v3169 = vpop.f32.mrb[0].mxu0
      %v3170 = vadd.f32 0.0, %v3169
      %v3171 = vpop.f32.mrb[0].mxu0
      %3172 = vdwg.mxu0
      %v3173 = vadd.f32 %v2786, %v3015
      %v3174 = vadd.f32 %v2787, %v3020
      %v3175 = vadd.f32 %v2788, %v3025
      %v3176 = vadd.f32 %v2789, %v3030
      %v3177 = vadd.f32 %v2790, %v3035
      %v3178 = vadd.f32 %v2791, %v3040
      %v3179 = vadd.f32 %v2792, %v3045
      %v3180 = vadd.f32 %v2793, %v3050
      %v3181 = vadd.f32 %v2794, %v3055
      %v3182 = vadd.f32 %v2795, %v3060
      %v3183 = vadd.f32 %v2796, %v3065
      %v3184 = vadd.f32 %v2797, %v3070
      %v3185 = vadd.f32 %v2798, %v3075
      %v3186 = vadd.f32 %v2799, %v3080
      %v3187 = vadd.f32 %v2800, %v3085
      %v3188 = vadd.f32 %v2801, %v3090
      %v3189 = vadd.f32 %v2802, %v3095
      %v3190 = vadd.f32 %v2803, %v3100
      %v3191 = vadd.f32 %v2804, %v3105
      %v3192 = vadd.f32 %v2805, %v3110
      %v3193 = vadd.f32 %v2806, %v3115
      %v3194 = vadd.f32 %v2807, %v3120
      %v3195 = vadd.f32 %v2808, %v3125
      %v3196 = vadd.f32 %v2809, %v3130
      %v3197 = vadd.f32 %v2810, %v3135
      %v3198 = vadd.f32 %v2811, %v3140
      %v3199 = vadd.f32 %v2812, %v3145
      %v3200 = vadd.f32 %v2813, %v3150
      %v3201 = vadd.f32 %v2814, %v3155
      %v3202 = vadd.f32 %v2815, %v3160
      %v3203 = vadd.f32 %v2816, %v3165
      %v3204 = vadd.f32 %v2817, %v3170
      %v3205 = vld [vmem:[%s2430 + $0x2] sm:$0xff]
      %v3206 = vld [vmem:[%s2430 + $0xa] sm:$0xff]
      %v3207 = vld [vmem:[%s2430 + $0x1a] sm:$0xff]
      %v3208 = vld [vmem:[%s2430 + $0x22] sm:$0xff]
      %v3209 = vld [vmem:[%s2430 + $0x32] sm:$0xff]
      %v3210 = vld [vmem:[%s2430 + $0x3a] sm:$0xff]
      %v3211 = vld [vmem:[%s2430 + $0x4a] sm:$0xff]
      %v3212 = vld [vmem:[%s2430 + $0x52] sm:$0xff]
      %v3213 = vld [vmem:[%s2430 + $0x62] sm:$0xff]
      %v3214 = vld [vmem:[%s2430 + $0x6a] sm:$0xff]
      %v3215 = vld [vmem:[%s2430 + $0x7a] sm:$0xff]
      %v3216 = vld [vmem:[%s2430 + $0x82] sm:$0xff]
      %v3217 = vld [vmem:[%s2430 + $0x92] sm:$0xff]
      %v3218 = vld [vmem:[%s2430 + $0x9a] sm:$0xff]
      %v3219 = vld [vmem:[%s2430 + $0xaa] sm:$0xff]
      %v3220 = vld [vmem:[%s2430 + $0xb2] sm:$0xff]
      %v3221 = vld [vmem:[%s2430 + $0xc2] sm:$0xff]
      %v3222 = vld [vmem:[%s2430 + $0xca] sm:$0xff]
      %v3223 = vld [vmem:[%s2430 + $0xda] sm:$0xff]
      %v3224 = vld [vmem:[%s2430 + $0xe2] sm:$0xff]
      %v3225 = vld [vmem:[%s2430 + $0xf2] sm:$0xff]
      %v3226 = vld [vmem:[%s2430 + $0xfa] sm:$0xff]
      %v3227 = vld [vmem:[%s2430 + $0x10a] sm:$0xff]
      %v3228 = vld [vmem:[%s2430 + $0x112] sm:$0xff]
      %v3229 = vld [vmem:[%s2430 + $0x122] sm:$0xff]
      %v3230 = vld [vmem:[%s2430 + $0x12a] sm:$0xff]
      %v3231 = vld [vmem:[%s2430 + $0x13a] sm:$0xff]
      %v3232 = vld [vmem:[%s2430 + $0x142] sm:$0xff]
      %v3233 = vld [vmem:[%s2430 + $0x152] sm:$0xff]
      %v3234 = vld [vmem:[%s2430 + $0x15a] sm:$0xff]
      %v3235 = vld [vmem:[%s2430 + $0x16a] sm:$0xff]
      %v3236 = vld [vmem:[%s2430 + $0x172] sm:$0xff]
      %s3237 = scalar_lea.vmem %s1, 64
      %v3238 = vld [vmem:[%s3237] sm:$0xff]
      %v3240 = vsel %vm238, %v3205, 0
      %v3243 = vsel %vm238, %v3206, 0
      %v3246 = vsel %vm238, %v3207, 0
      %v3249 = vsel %vm238, %v3208, 0
      %v3252 = vsel %vm238, %v3209, 0
      %v3255 = vsel %vm238, %v3210, 0
      %v3258 = vsel %vm238, %v3211, 0
      %v3261 = vsel %vm238, %v3212, 0
      %v3264 = vsel %vm238, %v3213, 0
      %v3267 = vsel %vm238, %v3214, 0
      %v3270 = vsel %vm238, %v3215, 0
      %v3273 = vsel %vm238, %v3216, 0
      %v3276 = vsel %vm238, %v3217, 0
      %v3279 = vsel %vm238, %v3218, 0
      %v3282 = vsel %vm238, %v3219, 0
      %v3285 = vsel %vm238, %v3220, 0
      %v3288 = vsel %vm238, %v3221, 0
      %v3291 = vsel %vm238, %v3222, 0
      %v3294 = vsel %vm238, %v3223, 0
      %v3297 = vsel %vm238, %v3224, 0
      %v3300 = vsel %vm238, %v3225, 0
      %v3303 = vsel %vm238, %v3226, 0
      %v3306 = vsel %vm238, %v3227, 0
      %v3309 = vsel %vm238, %v3228, 0
      %v3312 = vsel %vm238, %v3229, 0
      %v3315 = vsel %vm238, %v3230, 0
      %v3318 = vsel %vm238, %v3231, 0
      %v3321 = vsel %vm238, %v3232, 0
      %v3324 = vsel %vm238, %v3233, 0
      %v3327 = vsel %vm238, %v3234, 0
      %v3330 = vsel %vm238, %v3235, 0
      %v3333 = vsel %vm238, %v3236, 0
      %3335 = vmatprep.subr.mxu0 0.0
      %3336 = vmatpush1.msra.mxu0 %v3238
      %3337 = vmatprep.subr.mxu0 0.0
      %3338 = vmatpush1.msra.mxu0 0.0
      %3339 = vmatprep.subr.mxu0 0.0
      %3340 = vmatpush1.msra.mxu0 0.0
      %3341 = vmatprep.subr.mxu0 0.0
      %3342 = vmatpush1.msra.mxu0 0.0
      %3343 = vmatprep.subr.mxu0 0.0
      %3344 = vmatpush1.msra.mxu0 0.0
      %3345 = vmatprep.subr.mxu0 0.0
      %3346 = vmatpush1.msra.mxu0 0.0
      %3347 = vmatprep.subr.mxu0 0.0
      %3348 = vmatpush1.msra.mxu0 0.0
      %3349 = vmatprep.subr.mxu0 0.0
      %3350 = vmatpush1.msra.mxu0 0.0
      %3351 = vmatprep.subr.mxu0 0.0
      %3352 = vmatpush1.msra.mxu0 0.0
      %3353 = vmatprep.subr.mxu0 0.0
      %3354 = vmatpush1.msra.mxu0 0.0
      %3355 = vmatprep.subr.mxu0 0.0
      %3356 = vmatpush1.msra.mxu0 0.0
      %3357 = vmatprep.subr.mxu0 0.0
      %3358 = vmatpush1.msra.mxu0 0.0
      %3359 = vmatprep.subr.mxu0 0.0
      %3360 = vmatpush1.msra.mxu0 0.0
      %3361 = vmatprep.subr.mxu0 0.0
      %3362 = vmatpush1.msra.mxu0 0.0
      %3363 = vmatprep.subr.mxu0 0.0
      %3364 = vmatpush1.msra.mxu0 0.0
      %3365 = vmatprep.subr.mxu0 0.0
      %3366 = vmatpush1.msra.mxu0 0.0
      %3367 = vmatprep.subr.mxu0 0.0
      %3368 = vmatpush1.msra.mxu0 0.0
      %3369 = vmatprep.subr.mxu0 0.0
      %3370 = vmatpush1.msra.mxu0 0.0
      %3371 = vmatprep.subr.mxu0 0.0
      %3372 = vmatpush1.msra.mxu0 0.0
      %3373 = vmatprep.subr.mxu0 0.0
      %3374 = vmatpush1.msra.mxu0 0.0
      %3375 = vmatprep.subr.mxu0 0.0
      %3376 = vmatpush1.msra.mxu0 0.0
      %3377 = vmatprep.subr.mxu0 0.0
      %3378 = vmatpush1.msra.mxu0 0.0
      %3379 = vmatprep.subr.mxu0 0.0
      %3380 = vmatpush1.msra.mxu0 0.0
      %3381 = vmatprep.subr.mxu0 0.0
      %3382 = vmatpush1.msra.mxu0 0.0
      %3383 = vmatprep.subr.mxu0 0.0
      %3384 = vmatpush1.msra.mxu0 0.0
      %3385 = vmatprep.subr.mxu0 0.0
      %3386 = vmatpush1.msra.mxu0 0.0
      %3387 = vmatprep.subr.mxu0 0.0
      %3388 = vmatpush1.msra.mxu0 0.0
      %3389 = vmatprep.subr.mxu0 0.0
      %3390 = vmatpush1.msra.mxu0 0.0
      %3391 = vmatprep.subr.mxu0 0.0
      %3392 = vmatpush1.msra.mxu0 0.0
      %3393 = vmatprep.subr.mxu0 0.0
      %3394 = vmatpush1.msra.mxu0 0.0
      %3395 = vmatprep.subr.mxu0 0.0
      %3396 = vmatpush1.msra.mxu0 0.0
      %3397 = vmatprep.subr.mxu0 0.0
      %3398 = vmatpush1.msra.mxu0 0.0
      %3399 = vmatprep.mubr.f32.mxu0 0.0
      %3400 = vmatmul.mubr.f32.gmra.mrb[0].mxu0 %v3240
      %v3401 = vpop.f32.mrb[0].mxu0
      %v3402 = vadd.f32 0.0, %v3401
      %v3403 = vpop.f32.mrb[0].mxu0
      %3404 = vmatprep.mubr.f32.mxu0 0.0
      %3405 = vmatmul.mubr.f32.gmra.mrb[0].mxu0 %v3243
      %v3406 = vpop.f32.mrb[0].mxu0
      %v3407 = vadd.f32 0.0, %v3406
      %v3408 = vpop.f32.mrb[0].mxu0
      %3409 = vmatprep.mubr.f32.mxu0 0.0
      %3410 = vmatmul.mubr.f32.gmra.mrb[0].mxu0 %v3246
      %v3411 = vpop.f32.mrb[0].mxu0
      %v3412 = vadd.f32 0.0, %v3411
      %v3413 = vpop.f32.mrb[0].mxu0
      %3414 = vmatprep.mubr.f32.mxu0 0.0
      %3415 = vmatmul.mubr.f32.gmra.mrb[0].mxu0 %v3249
      %v3416 = vpop.f32.mrb[0].mxu0
      %v3417 = vadd.f32 0.0, %v3416
      %v3418 = vpop.f32.mrb[0].mxu0
      %3419 = vmatprep.mubr.f32.mxu0 0.0
      %3420 = vmatmul.mubr.f32.gmra.mrb[0].mxu0 %v3252
      %v3421 = vpop.f32.mrb[0].mxu0
      %v3422 = vadd.f32 0.0, %v3421
      %v3423 = vpop.f32.mrb[0].mxu0
      %3424 = vmatprep.mubr.f32.mxu0 0.0
      %3425 = vmatmul.mubr.f32.gmra.mrb[0].mxu0 %v3255
      %v3426 = vpop.f32.mrb[0].mxu0
      %v3427 = vadd.f32 0.0, %v3426
      %v3428 = vpop.f32.mrb[0].mxu0
      %3429 = vmatprep.mubr.f32.mxu0 0.0
      %3430 = vmatmul.mubr.f32.gmra.mrb[0].mxu0 %v3258
      %v3431 = vpop.f32.mrb[0].mxu0
      %v3432 = vadd.f32 0.0, %v3431
      %v3433 = vpop.f32.mrb[0].mxu0
      %3434 = vmatprep.mubr.f32.mxu0 0.0
      %3435 = vmatmul.mubr.f32.gmra.mrb[0].mxu0 %v3261
      %v3436 = vpop.f32.mrb[0].mxu0
      %v3437 = vadd.f32 0.0, %v3436
      %v3438 = vpop.f32.mrb[0].mxu0
      %3439 = vmatprep.mubr.f32.mxu0 0.0
      %3440 = vmatmul.mubr.f32.gmra.mrb[0].mxu0 %v3264
      %v3441 = vpop.f32.mrb[0].mxu0
      %v3442 = vadd.f32 0.0, %v3441
      %v3443 = vpop.f32.mrb[0].mxu0
      %3444 = vmatprep.mubr.f32.mxu0 0.0
      %3445 = vmatmul.mubr.f32.gmra.mrb[0].mxu0 %v3267
      %v3446 = vpop.f32.mrb[0].mxu0
      %v3447 = vadd.f32 0.0, %v3446
      %v3448 = vpop.f32.mrb[0].mxu0
      %3449 = vmatprep.mubr.f32.mxu0 0.0
      %3450 = vmatmul.mubr.f32.gmra.mrb[0].mxu0 %v3270
      %v3451 = vpop.f32.mrb[0].mxu0
      %v3452 = vadd.f32 0.0, %v3451
      %v3453 = vpop.f32.mrb[0].mxu0
      %3454 = vmatprep.mubr.f32.mxu0 0.0
      %3455 = vmatmul.mubr.f32.gmra.mrb[0].mxu0 %v3273
      %v3456 = vpop.f32.mrb[0].mxu0
      %v3457 = vadd.f32 0.0, %v3456
      %v3458 = vpop.f32.mrb[0].mxu0
      %3459 = vmatprep.mubr.f32.mxu0 0.0
      %3460 = vmatmul.mubr.f32.gmra.mrb[0].mxu0 %v3276
      %v3461 = vpop.f32.mrb[0].mxu0
      %v3462 = vadd.f32 0.0, %v3461
      %v3463 = vpop.f32.mrb[0].mxu0
      %3464 = vmatprep.mubr.f32.mxu0 0.0
      %3465 = vmatmul.mubr.f32.gmra.mrb[0].mxu0 %v3279
      %v3466 = vpop.f32.mrb[0].mxu0
      %v3467 = vadd.f32 0.0, %v3466
      %v3468 = vpop.f32.mrb[0].mxu0
      %3469 = vmatprep.mubr.f32.mxu0 0.0
      %3470 = vmatmul.mubr.f32.gmra.mrb[0].mxu0 %v3282
      %v3471 = vpop.f32.mrb[0].mxu0
      %v3472 = vadd.f32 0.0, %v3471
      %v3473 = vpop.f32.mrb[0].mxu0
      %3474 = vmatprep.mubr.f32.mxu0 0.0
      %3475 = vmatmul.mubr.f32.gmra.mrb[0].mxu0 %v3285
      %v3476 = vpop.f32.mrb[0].mxu0
      %v3477 = vadd.f32 0.0, %v3476
      %v3478 = vpop.f32.mrb[0].mxu0
      %3479 = vmatprep.mubr.f32.mxu0 0.0
      %3480 = vmatmul.mubr.f32.gmra.mrb[0].mxu0 %v3288
      %v3481 = vpop.f32.mrb[0].mxu0
      %v3482 = vadd.f32 0.0, %v3481
      %v3483 = vpop.f32.mrb[0].mxu0
      %3484 = vmatprep.mubr.f32.mxu0 0.0
      %3485 = vmatmul.mubr.f32.gmra.mrb[0].mxu0 %v3291
      %v3486 = vpop.f32.mrb[0].mxu0
      %v3487 = vadd.f32 0.0, %v3486
      %v3488 = vpop.f32.mrb[0].mxu0
      %3489 = vmatprep.mubr.f32.mxu0 0.0
      %3490 = vmatmul.mubr.f32.gmra.mrb[0].mxu0 %v3294
      %v3491 = vpop.f32.mrb[0].mxu0
      %v3492 = vadd.f32 0.0, %v3491
      %v3493 = vpop.f32.mrb[0].mxu0
      %3494 = vmatprep.mubr.f32.mxu0 0.0
      %3495 = vmatmul.mubr.f32.gmra.mrb[0].mxu0 %v3297
      %v3496 = vpop.f32.mrb[0].mxu0
      %v3497 = vadd.f32 0.0, %v3496
      %v3498 = vpop.f32.mrb[0].mxu0
      %3499 = vmatprep.mubr.f32.mxu0 0.0
      %3500 = vmatmul.mubr.f32.gmra.mrb[0].mxu0 %v3300
      %v3501 = vpop.f32.mrb[0].mxu0
      %v3502 = vadd.f32 0.0, %v3501
      %v3503 = vpop.f32.mrb[0].mxu0
      %3504 = vmatprep.mubr.f32.mxu0 0.0
      %3505 = vmatmul.mubr.f32.gmra.mrb[0].mxu0 %v3303
      %v3506 = vpop.f32.mrb[0].mxu0
      %v3507 = vadd.f32 0.0, %v3506
      %v3508 = vpop.f32.mrb[0].mxu0
      %3509 = vmatprep.mubr.f32.mxu0 0.0
      %3510 = vmatmul.mubr.f32.gmra.mrb[0].mxu0 %v3306
      %v3511 = vpop.f32.mrb[0].mxu0
      %v3512 = vadd.f32 0.0, %v3511
      %v3513 = vpop.f32.mrb[0].mxu0
      %3514 = vmatprep.mubr.f32.mxu0 0.0
      %3515 = vmatmul.mubr.f32.gmra.mrb[0].mxu0 %v3309
      %v3516 = vpop.f32.mrb[0].mxu0
      %v3517 = vadd.f32 0.0, %v3516
      %v3518 = vpop.f32.mrb[0].mxu0
      %3519 = vmatprep.mubr.f32.mxu0 0.0
      %3520 = vmatmul.mubr.f32.gmra.mrb[0].mxu0 %v3312
      %v3521 = vpop.f32.mrb[0].mxu0
      %v3522 = vadd.f32 0.0, %v3521
      %v3523 = vpop.f32.mrb[0].mxu0
      %3524 = vmatprep.mubr.f32.mxu0 0.0
      %3525 = vmatmul.mubr.f32.gmra.mrb[0].mxu0 %v3315
      %v3526 = vpop.f32.mrb[0].mxu0
      %v3527 = vadd.f32 0.0, %v3526
      %v3528 = vpop.f32.mrb[0].mxu0
      %3529 = vmatprep.mubr.f32.mxu0 0.0
      %3530 = vmatmul.mubr.f32.gmra.mrb[0].mxu0 %v3318
      %v3531 = vpop.f32.mrb[0].mxu0
      %v3532 = vadd.f32 0.0, %v3531
      %v3533 = vpop.f32.mrb[0].mxu0
      %3534 = vmatprep.mubr.f32.mxu0 0.0
      %3535 = vmatmul.mubr.f32.gmra.mrb[0].mxu0 %v3321
      %v3536 = vpop.f32.mrb[0].mxu0
      %v3537 = vadd.f32 0.0, %v3536
      %v3538 = vpop.f32.mrb[0].mxu0
      %3539 = vmatprep.mubr.f32.mxu0 0.0
      %3540 = vmatmul.mubr.f32.gmra.mrb[0].mxu0 %v3324
      %v3541 = vpop.f32.mrb[0].mxu0
      %v3542 = vadd.f32 0.0, %v3541
      %v3543 = vpop.f32.mrb[0].mxu0
      %3544 = vmatprep.mubr.f32.mxu0 0.0
      %3545 = vmatmul.mubr.f32.gmra.mrb[0].mxu0 %v3327
      %v3546 = vpop.f32.mrb[0].mxu0
      %v3547 = vadd.f32 0.0, %v3546
      %v3548 = vpop.f32.mrb[0].mxu0
      %3549 = vmatprep.mubr.f32.mxu0 0.0
      %3550 = vmatmul.mubr.f32.gmra.mrb[0].mxu0 %v3330
      %v3551 = vpop.f32.mrb[0].mxu0
      %v3552 = vadd.f32 0.0, %v3551
      %v3553 = vpop.f32.mrb[0].mxu0
      %3554 = vmatprep.mubr.f32.mxu0 0.0
      %3555 = vmatmul.mubr.f32.gmra.mrb[0].mxu0 %v3333
      %v3556 = vpop.f32.mrb[0].mxu0
      %v3557 = vadd.f32 0.0, %v3556
      %v3558 = vpop.f32.mrb[0].mxu0
      %3559 = vdwg.mxu0
      %v3560 = vadd.f32 %v3173, %v3402
      %v3561 = vadd.f32 %v3174, %v3407
      %v3562 = vadd.f32 %v3175, %v3412
      %v3563 = vadd.f32 %v3176, %v3417
      %v3564 = vadd.f32 %v3177, %v3422
      %v3565 = vadd.f32 %v3178, %v3427
      %v3566 = vadd.f32 %v3179, %v3432
      %v3567 = vadd.f32 %v3180, %v3437
      %v3568 = vadd.f32 %v3181, %v3442
      %v3569 = vadd.f32 %v3182, %v3447
      %v3570 = vadd.f32 %v3183, %v3452
      %v3571 = vadd.f32 %v3184, %v3457
      %v3572 = vadd.f32 %v3185, %v3462
      %v3573 = vadd.f32 %v3186, %v3467
      %v3574 = vadd.f32 %v3187, %v3472
      %v3575 = vadd.f32 %v3188, %v3477
      %v3576 = vadd.f32 %v3189, %v3482
      %v3577 = vadd.f32 %v3190, %v3487
      %v3578 = vadd.f32 %v3191, %v3492
      %v3579 = vadd.f32 %v3192, %v3497
      %v3580 = vadd.f32 %v3193, %v3502
      %v3581 = vadd.f32 %v3194, %v3507
      %v3582 = vadd.f32 %v3195, %v3512
      %v3583 = vadd.f32 %v3196, %v3517
      %v3584 = vadd.f32 %v3197, %v3522
      %v3585 = vadd.f32 %v3198, %v3527
      %v3586 = vadd.f32 %v3199, %v3532
      %v3587 = vadd.f32 %v3200, %v3537
      %v3588 = vadd.f32 %v3201, %v3542
      %v3589 = vadd.f32 %v3202, %v3547
      %v3590 = vadd.f32 %v3203, %v3552
      %v3591 = vadd.f32 %v3204, %v3557
      %v3592 = vld [vmem:[%s2] sm:$0x1]
      %v3594 = vlaneseq
      %v3595 = vshrl.u32 %v3594, 7
      %v3596 = vsub.s32 0, %v3595
      %v3597 = vrot.slane %v3592, %v3596
      %v3599 = vadd.f32 %v3560, %v3597
      %v3600 = vadd.f32 %v3561, %v3597
      %v3601 = vadd.f32 %v3562, %v3597
      %v3602 = vadd.f32 %v3563, %v3597
      %v3603 = vadd.f32 %v3564, %v3597
      %v3604 = vadd.f32 %v3565, %v3597
      %v3605 = vadd.f32 %v3566, %v3597
      %v3606 = vadd.f32 %v3567, %v3597
      %v3607 = vadd.f32 %v3568, %v3597
      %v3608 = vadd.f32 %v3569, %v3597
      %v3609 = vadd.f32 %v3570, %v3597
      %v3610 = vadd.f32 %v3571, %v3597
      %v3611 = vadd.f32 %v3572, %v3597
      %v3612 = vadd.f32 %v3573, %v3597
      %v3613 = vadd.f32 %v3574, %v3597
      %v3614 = vadd.f32 %v3575, %v3597
      %v3615 = vadd.f32 %v3576, %v3597
      %v3616 = vadd.f32 %v3577, %v3597
      %v3617 = vadd.f32 %v3578, %v3597
      %v3618 = vadd.f32 %v3579, %v3597
      %v3619 = vadd.f32 %v3580, %v3597
      %v3620 = vadd.f32 %v3581, %v3597
      %v3621 = vadd.f32 %v3582, %v3597
      %v3622 = vadd.f32 %v3583, %v3597
      %v3623 = vadd.f32 %v3584, %v3597
      %v3624 = vadd.f32 %v3585, %v3597
      %v3625 = vadd.f32 %v3586, %v3597
      %v3626 = vadd.f32 %v3587, %v3597
      %v3627 = vadd.f32 %v3588, %v3597
      %v3628 = vadd.f32 %v3589, %v3597
      %v3629 = vadd.f32 %v3590, %v3597
      %v3630 = vadd.f32 %v3591, %v3597
      %3631 = vst.msk [vmem:[%s170] sm:$0xff] %vm238, %v3599
      %3632 = vst.msk [vmem:[%s170 + $0x8] sm:$0xff] %vm238, %v3600
      %3633 = vst.msk [vmem:[%s170 + $0x10] sm:$0xff] %vm238, %v3601
      %3634 = vst.msk [vmem:[%s170 + $0x18] sm:$0xff] %vm238, %v3602
      %3635 = vst.msk [vmem:[%s170 + $0x20] sm:$0xff] %vm238, %v3603
      %3636 = vst.msk [vmem:[%s170 + $0x28] sm:$0xff] %vm238, %v3604
      %3637 = vst.msk [vmem:[%s170 + $0x30] sm:$0xff] %vm238, %v3605
      %3638 = vst.msk [vmem:[%s170 + $0x38] sm:$0xff] %vm238, %v3606
      %3639 = vst.msk [vmem:[%s170 + $0x40] sm:$0xff] %vm238, %v3607
      %3640 = vst.msk [vmem:[%s170 + $0x48] sm:$0xff] %vm238, %v3608
      %3641 = vst.msk [vmem:[%s170 + $0x50] sm:$0xff] %vm238, %v3609
      %3642 = vst.msk [vmem:[%s170 + $0x58] sm:$0xff] %vm238, %v3610
      %3643 = vst.msk [vmem:[%s170 + $0x60] sm:$0xff] %vm238, %v3611
      %3644 = vst.msk [vmem:[%s170 + $0x68] sm:$0xff] %vm238, %v3612
      %3645 = vst.msk [vmem:[%s170 + $0x70] sm:$0xff] %vm238, %v3613
      %3646 = vst.msk [vmem:[%s170 + $0x78] sm:$0xff] %vm238, %v3614
      %3647 = vst.msk [vmem:[%s170 + $0x80] sm:$0xff] %vm238, %v3615
      %3648 = vst.msk [vmem:[%s170 + $0x88] sm:$0xff] %vm238, %v3616
      %3649 = vst.msk [vmem:[%s170 + $0x90] sm:$0xff] %vm238, %v3617
      %3650 = vst.msk [vmem:[%s170 + $0x98] sm:$0xff] %vm238, %v3618
      %3651 = vst.msk [vmem:[%s170 + $0xa0] sm:$0xff] %vm238, %v3619
      %3652 = vst.msk [vmem:[%s170 + $0xa8] sm:$0xff] %vm238, %v3620
      %3653 = vst.msk [vmem:[%s170 + $0xb0] sm:$0xff] %vm238, %v3621
      %3654 = vst.msk [vmem:[%s170 + $0xb8] sm:$0xff] %vm238, %v3622
      %3655 = vst.msk [vmem:[%s170 + $0xc0] sm:$0xff] %vm238, %v3623
      %3656 = vst.msk [vmem:[%s170 + $0xc8] sm:$0xff] %vm238, %v3624
      %3657 = vst.msk [vmem:[%s170 + $0xd0] sm:$0xff] %vm238, %v3625
      %3658 = vst.msk [vmem:[%s170 + $0xd8] sm:$0xff] %vm238, %v3626
      %3659 = vst.msk [vmem:[%s170 + $0xe0] sm:$0xff] %vm238, %v3627
      %3660 = vst.msk [vmem:[%s170 + $0xe8] sm:$0xff] %vm238, %v3628
      %3661 = vst.msk [vmem:[%s170 + $0xf0] sm:$0xff] %vm238, %v3629
      %3662 = vst.msk [vmem:[%s170 + $0xf8] sm:$0xff] %vm238, %v3630
      %p3663 = scmp.lt.s32.totalorder %s14, 1
      %s3664 = scalar_select %p3663, %s14, 1
      %s3665 = smul.addr %s3664, 32
      %s3666 = smul.addr %s3665, 8
      %s3667 = scalar_lea.vmem %s3, %s3666
      // Predicated region
      $region33: #{rec_res_block_nchw.4} parent=31 // pred_check
        %p3668 = pneg %p100
      $region34: #{rec_res_block_nchw.4} parent=31 // pred_check_branch
        %3670 = sbr.rel (%p3668) target = $region36
      $region35: #{rec_res_block_nchw.4} parent=31 // pred_region
        _
      $region36: #{rec_res_block_nchw.4} parent=31 // pred_fallthru
        _
    $region32: #{rec_res_block_nchw.4} parent=5 // pred_fallthru
      _
    %p3671 = scmp.le.s32.totalorder 2, %s9
    // Predicated region
    $region37: #{rec_res_block_nchw.4} parent=5 // pred_check
      %p3672 = pneg %p3671
    $region38: #{rec_res_block_nchw.4} parent=5 // pred_check_branch
      %3674 = sbr.rel (%p3672) target = $region40
    $region39: #{rec_res_block_nchw.4} parent=5 // pred_region
      %s3675 = ssub.s32 %s9, 2
      // Predicated region
      $region41: #{rec_res_block_nchw.4} parent=39 // pred_check
        %p3676 = pneg %p106
      $region42: #{rec_res_block_nchw.4} parent=39 // pred_check_branch
        %3678 = sbr.rel (%p3676) target = $region44
      $region43: #{rec_res_block_nchw.4} parent=39 // pred_region
        %p3679 = scmp.lt.s32.totalorder %s15, 1
        %s3680 = scalar_select %p3679, %s15, 1
        %s3681 = smul.addr %s3680, 32
        %s3682 = smul.addr %s3681, 8
        %s3683 = scalar_lea.vmem %s3, %s3682
      $region44: #{rec_res_block_nchw.4} parent=39 // pred_fallthru
        _
    $region40: #{rec_res_block_nchw.4} parent=5 // pred_fallthru
      _
  $region6: #{rec_res_block_nchw.4} parent=0 // loop_footer
    %s13 = sadd.s32 1, %s9
  $region7: #{rec_res_block_nchw.4} parent=0 // loop_footer_branch
    %8 = sbr.rel target = $region3
  $region8: #{rec_res_block_nchw.4} parent=0 // loop_exit
    _

// kernel: rec_res_block_nchw.5
$region0: #{rec_res_block_nchw.5}
  #allocation0 [shape = 'u32[]', space=smem, size = 0x4, offset = 0x4, fixed_abs, tag = 'smem constant byte address 0x4 - core index']
  #allocation1 [shape = 'u32[144,128]{1,0:T(1,128)}', space=vmem, size = 0x12000, scoped, tag = 'internal scratch']
  %s0 = inlined_call_operand.vmem [shape: f32[2,18,18,8], index: 0, kind: input, shape index: {}]
  %s1 = inlined_call_operand.vmem [shape: f32[9,8,8], index: 1, kind: input, shape index: {}]
  %s2 = inlined_call_operand.vmem [shape: f32[1,8], index: 2, kind: input, shape index: {}]
  %s3 = inlined_call_operand.vmem [shape: f32[8,2], index: 3, kind: input, shape index: {}]
  %s4 = inlined_call_operand.vmem [shape: f32[1,2], index: 4, kind: input, shape index: {}]
  %s5 = inlined_call_operand.vmem [shape: f32[2,8], index: 5, kind: input, shape index: {}]
  %s6 = inlined_call_operand.vmem [shape: f32[1,8], index: 6, kind: input, shape index: {}]
  %s7 = inlined_call_operand.vmem [shape: f32[2,8], index: 7, kind: input, shape index: {}]
  %s8 = inlined_call_operand.vmem [shape: f32[1,8], index: 8, kind: input, shape index: {}]
  %s9 = inlined_call_operand.vmem [shape: f32[2,256,8], index: 9, kind: output, shape index: {}]
  %s10 = sld [smem:[#allocation0]]
  $region69: #{rec_res_block_nchw.5} parent=0
    _
  %s12 = ssub.s32 1, %s10
  %s13 = scalar_select 0, %s12, %s10
  loop: start=0, step=1, limit=4
  $region2: #{rec_res_block_nchw.5} parent=0 // loop_pre_header
    _
  $region3: #{rec_res_block_nchw.5} parent=0 // loop_header
    %s15 = sphi 0, %s19
    %p16 = scmp.ge.s32.totalorder %s15, 4
    %s25 = sphi 0, %s27
    %s28 = sphi 0, %s25
    %s29 = sphi 0, %s28
    %s45 = sphi 0, %s29
    %s49 = sphi 0, %s49
    %s51 = sphi 0, %s49
    %s52 = sphi 0, %s51
    %s66 = sphi 0, %s52
    %s70 = sphi 0, %s70
    %s72 = sphi 0, %s70
    %s73 = sphi 0, %s72
    %s87 = sphi 0, %s73
    %s91 = sphi 0, %s91
    %s93 = sphi 0, %s91
    %s94 = sphi 0, %s93
    %s108 = sphi 0, %s94
    %s112 = sphi 0, %s112
    %s114 = sphi 0, %s112
    %s115 = sphi 0, %s114
    %s129 = sphi 0, %s115
    %s133 = sphi 0, %s133
    %s135 = sphi 0, %s133
    %s136 = sphi 0, %s135
    %s150 = sphi 0, %s136
    %s154 = sphi 0, %s154
    %s156 = sphi 0, %s154
    %s157 = sphi 0, %s156
    %s171 = sphi 0, %s157
    %s175 = sphi 0, %s175
    %s177 = sphi 0, %s175
    %s178 = sphi 0, %s177
    %s192 = sphi 0, %s178
    %s196 = sphi 0, %s196
    %s198 = sphi 0, %s196
    %s199 = sphi 0, %s198
    %s213 = sphi 0, %s199
    %s219 = sphi 0, %s221
    %s222 = sphi 0, %s219
    %s223 = sphi 0, %s222
    %s239 = sphi 0, %s223
  $region4: #{rec_res_block_nchw.5} parent=0 // loop_header_branch
    %18 = sbr.rel (%p16) target = $region8
  $region5: #{rec_res_block_nchw.5} parent=0 // loop_body
    %s20 = ssub.s32 %s15, 1
    %s21 = ssub.s32 %s15, 2
    %s22 = sadd.s32 %s15, 1
    %s23 = ssub.s32 %s15, %s22
    %p24 = scmp.eq.s32.totalorder %s23, 0
    %s26 = sadd.s32 %s25, 1
    %s27 = scalar_select %p24, %s25, %s26
    %p30 = pneg %p24
    %p31 = scmp.eq.s32.totalorder %s15, 1
    %p32 = por %p30, %p31
    %p33 = scmp.ne.s32.totalorder %s25, %s28
    %p34 = scmp.eq.s32.totalorder %s15, 0
    %p35 = por %p33, %p34
    %p36 = scmp.ne.s32.totalorder %s25, %s28
    %p37 = scmp.eq.s32.totalorder %s20, 1
    %p38 = por %p36, %p37
    %p39 = scmp.ne.s32.totalorder %s28, %s29
    %p40 = scmp.eq.s32.totalorder %s20, 0
    %p41 = por %p39, %p40
    %p42 = scmp.ne.s32.totalorder %s28, %s29
    %p43 = scmp.eq.s32.totalorder %s21, 1
    %p44 = por %p42, %p43
    %p46 = scmp.ne.s32.totalorder %s29, %s45
    %p47 = scmp.eq.s32.totalorder %s21, 0
    %p48 = por %p46, %p47
    %s50 = sadd.s32 %s49, 1
    %p53 = scmp.eq.s32.totalorder %s15, 1
    %p54 = scmp.ne.s32.totalorder %s49, %s51
    %p55 = scmp.eq.s32.totalorder %s15, 0
    %p56 = por %p54, %p55
    %p57 = scmp.ne.s32.totalorder %s49, %s51
    %p58 = scmp.eq.s32.totalorder %s20, 1
    %p59 = por %p57, %p58
    %p60 = scmp.ne.s32.totalorder %s51, %s52
    %p61 = scmp.eq.s32.totalorder %s20, 0
    %p62 = por %p60, %p61
    %p63 = scmp.ne.s32.totalorder %s51, %s52
    %p64 = scmp.eq.s32.totalorder %s21, 1
    %p65 = por %p63, %p64
    %p67 = scmp.ne.s32.totalorder %s52, %s66
    %p68 = scmp.eq.s32.totalorder %s21, 0
    %p69 = por %p67, %p68
    %s71 = sadd.s32 %s70, 1
    %p74 = scmp.eq.s32.totalorder %s15, 1
    %p75 = scmp.ne.s32.totalorder %s70, %s72
    %p76 = scmp.eq.s32.totalorder %s15, 0
    %p77 = por %p75, %p76
    %p78 = scmp.ne.s32.totalorder %s70, %s72
    %p79 = scmp.eq.s32.totalorder %s20, 1
    %p80 = por %p78, %p79
    %p81 = scmp.ne.s32.totalorder %s72, %s73
    %p82 = scmp.eq.s32.totalorder %s20, 0
    %p83 = por %p81, %p82
    %p84 = scmp.ne.s32.totalorder %s72, %s73
    %p85 = scmp.eq.s32.totalorder %s21, 1
    %p86 = por %p84, %p85
    %p88 = scmp.ne.s32.totalorder %s73, %s87
    %p89 = scmp.eq.s32.totalorder %s21, 0
    %p90 = por %p88, %p89
    %s92 = sadd.s32 %s91, 1
    %p95 = scmp.eq.s32.totalorder %s15, 1
    %p96 = scmp.ne.s32.totalorder %s91, %s93
    %p97 = scmp.eq.s32.totalorder %s15, 0
    %p98 = por %p96, %p97
    %p99 = scmp.ne.s32.totalorder %s91, %s93
    %p100 = scmp.eq.s32.totalorder %s20, 1
    %p101 = por %p99, %p100
    %p102 = scmp.ne.s32.totalorder %s93, %s94
    %p103 = scmp.eq.s32.totalorder %s20, 0
    %p104 = por %p102, %p103
    %p105 = scmp.ne.s32.totalorder %s93, %s94
    %p106 = scmp.eq.s32.totalorder %s21, 1
    %p107 = por %p105, %p106
    %p109 = scmp.ne.s32.totalorder %s94, %s108
    %p110 = scmp.eq.s32.totalorder %s21, 0
    %p111 = por %p109, %p110
    %s113 = sadd.s32 %s112, 1
    %p116 = scmp.eq.s32.totalorder %s15, 1
    %p117 = scmp.ne.s32.totalorder %s112, %s114
    %p118 = scmp.eq.s32.totalorder %s15, 0
    %p119 = por %p117, %p118
    %p120 = scmp.ne.s32.totalorder %s112, %s114
    %p121 = scmp.eq.s32.totalorder %s20, 1
    %p122 = por %p120, %p121
    %p123 = scmp.ne.s32.totalorder %s114, %s115
    %p124 = scmp.eq.s32.totalorder %s20, 0
    %p125 = por %p123, %p124
    %p126 = scmp.ne.s32.totalorder %s114, %s115
    %p127 = scmp.eq.s32.totalorder %s21, 1
    %p128 = por %p126, %p127
    %p130 = scmp.ne.s32.totalorder %s115, %s129
    %p131 = scmp.eq.s32.totalorder %s21, 0
    %p132 = por %p130, %p131
    %s134 = sadd.s32 %s133, 1
    %p137 = scmp.eq.s32.totalorder %s15, 1
    %p138 = scmp.ne.s32.totalorder %s133, %s135
    %p139 = scmp.eq.s32.totalorder %s15, 0
    %p140 = por %p138, %p139
    %p141 = scmp.ne.s32.totalorder %s133, %s135
    %p142 = scmp.eq.s32.totalorder %s20, 1
    %p143 = por %p141, %p142
    %p144 = scmp.ne.s32.totalorder %s135, %s136
    %p145 = scmp.eq.s32.totalorder %s20, 0
    %p146 = por %p144, %p145
    %p147 = scmp.ne.s32.totalorder %s135, %s136
    %p148 = scmp.eq.s32.totalorder %s21, 1
    %p149 = por %p147, %p148
    %p151 = scmp.ne.s32.totalorder %s136, %s150
    %p152 = scmp.eq.s32.totalorder %s21, 0
    %p153 = por %p151, %p152
    %s155 = sadd.s32 %s154, 1
    %p158 = scmp.eq.s32.totalorder %s15, 1
    %p159 = scmp.ne.s32.totalorder %s154, %s156
    %p160 = scmp.eq.s32.totalorder %s15, 0
    %p161 = por %p159, %p160
    %p162 = scmp.ne.s32.totalorder %s154, %s156
    %p163 = scmp.eq.s32.totalorder %s20, 1
    %p164 = por %p162, %p163
    %p165 = scmp.ne.s32.totalorder %s156, %s157
    %p166 = scmp.eq.s32.totalorder %s20, 0
    %p167 = por %p165, %p166
    %p168 = scmp.ne.s32.totalorder %s156, %s157
    %p169 = scmp.eq.s32.totalorder %s21, 1
    %p170 = por %p168, %p169
    %p172 = scmp.ne.s32.totalorder %s157, %s171
    %p173 = scmp.eq.s32.totalorder %s21, 0
    %p174 = por %p172, %p173
    %s176 = sadd.s32 %s175, 1
    %p179 = scmp.eq.s32.totalorder %s15, 1
    %p180 = scmp.ne.s32.totalorder %s175, %s177
    %p181 = scmp.eq.s32.totalorder %s15, 0
    %p182 = por %p180, %p181
    %p183 = scmp.ne.s32.totalorder %s175, %s177
    %p184 = scmp.eq.s32.totalorder %s20, 1
    %p185 = por %p183, %p184
    %p186 = scmp.ne.s32.totalorder %s177, %s178
    %p187 = scmp.eq.s32.totalorder %s20, 0
    %p188 = por %p186, %p187
    %p189 = scmp.ne.s32.totalorder %s177, %s178
    %p190 = scmp.eq.s32.totalorder %s21, 1
    %p191 = por %p189, %p190
    %p193 = scmp.ne.s32.totalorder %s178, %s192
    %p194 = scmp.eq.s32.totalorder %s21, 0
    %p195 = por %p193, %p194
    %s197 = sadd.s32 %s196, 1
    %p200 = scmp.eq.s32.totalorder %s15, 1
    %p201 = scmp.ne.s32.totalorder %s196, %s198
    %p202 = scmp.eq.s32.totalorder %s15, 0
    %p203 = por %p201, %p202
    %p204 = scmp.ne.s32.totalorder %s196, %s198
    %p205 = scmp.eq.s32.totalorder %s20, 1
    %p206 = por %p204, %p205
    %p207 = scmp.ne.s32.totalorder %s198, %s199
    %p208 = scmp.eq.s32.totalorder %s20, 0
    %p209 = por %p207, %p208
    %p210 = scmp.ne.s32.totalorder %s198, %s199
    %p211 = scmp.eq.s32.totalorder %s21, 1
    %p212 = por %p210, %p211
    %p214 = scmp.ne.s32.totalorder %s199, %s213
    %p215 = scmp.eq.s32.totalorder %s21, 0
    %p216 = por %p214, %p215
    %s217 = ssub.s32 %s15, %s22
    %p218 = scmp.eq.s32.totalorder %s217, 0
    %s220 = sadd.s32 %s219, 1
    %s221 = scalar_select %p218, %s219, %s220
    %p224 = pneg %p218
    %p225 = scmp.eq.s32.totalorder %s15, 1
    %p226 = por %p224, %p225
    %p227 = scmp.ne.s32.totalorder %s219, %s222
    %p228 = scmp.eq.s32.totalorder %s15, 0
    %p229 = por %p227, %p228
    %p230 = scmp.ne.s32.totalorder %s219, %s222
    %p231 = scmp.eq.s32.totalorder %s20, 1
    %p232 = por %p230, %p231
    %p233 = scmp.ne.s32.totalorder %s222, %s223
    %p234 = scmp.eq.s32.totalorder %s20, 0
    %p235 = por %p233, %p234
    %p236 = scmp.ne.s32.totalorder %s222, %s223
    %p237 = scmp.eq.s32.totalorder %s21, 1
    %p238 = por %p236, %p237
    %p240 = scmp.ne.s32.totalorder %s223, %s239
    %p241 = scmp.eq.s32.totalorder %s21, 0
    %p242 = por %p240, %p241
    %p243 = scmp.le.s32.totalorder 1, %s15
    %p244 = scmp.lt.s32.totalorder %s15, 3
    %p245 = pnand %p243, %p244
    %p246 = pneg %p245
    // Predicated region
    $region9: #{rec_res_block_nchw.5} parent=5 // pred_check
      _
    $region10: #{rec_res_block_nchw.5} parent=5 // pred_check_branch
      %248 = sbr.rel (%p245) target = $region12
    $region11: #{rec_res_block_nchw.5} parent=5 // pred_region
      %s249 = ssub.s32 %s15, 1
      // Predicated region
      $region13: #{rec_res_block_nchw.5} parent=11 // pred_check
        %p250 = pneg %p62
      $region14: #{rec_res_block_nchw.5} parent=11 // pred_check_branch
        %252 = sbr.rel (%p250) target = $region16
      $region15: #{rec_res_block_nchw.5} parent=11 // pred_region
        _
      $region16: #{rec_res_block_nchw.5} parent=11 // pred_fallthru
        _
      // Predicated region
      $region17: #{rec_res_block_nchw.5} parent=11 // pred_check
        %p253 = pneg %p83
      $region18: #{rec_res_block_nchw.5} parent=11 // pred_check_branch
        %255 = sbr.rel (%p253) target = $region20
      $region19: #{rec_res_block_nchw.5} parent=11 // pred_region
        _
      $region20: #{rec_res_block_nchw.5} parent=11 // pred_fallthru
        _
      // Predicated region
      $region21: #{rec_res_block_nchw.5} parent=11 // pred_check
        %p256 = pneg %p104
      $region22: #{rec_res_block_nchw.5} parent=11 // pred_check_branch
        %258 = sbr.rel (%p256) target = $region24
      $region23: #{rec_res_block_nchw.5} parent=11 // pred_region
        _
      $region24: #{rec_res_block_nchw.5} parent=11 // pred_fallthru
        _
      // Predicated region
      $region25: #{rec_res_block_nchw.5} parent=11 // pred_check
        %p259 = pneg %p125
      $region26: #{rec_res_block_nchw.5} parent=11 // pred_check_branch
        %261 = sbr.rel (%p259) target = $region28
      $region27: #{rec_res_block_nchw.5} parent=11 // pred_region
        _
      $region28: #{rec_res_block_nchw.5} parent=11 // pred_fallthru
        _
      // Predicated region
      $region29: #{rec_res_block_nchw.5} parent=11 // pred_check
        %p262 = pneg %p146
      $region30: #{rec_res_block_nchw.5} parent=11 // pred_check_branch
        %264 = sbr.rel (%p262) target = $region32
      $region31: #{rec_res_block_nchw.5} parent=11 // pred_region
        _
      $region32: #{rec_res_block_nchw.5} parent=11 // pred_fallthru
        _
      // Predicated region
      $region33: #{rec_res_block_nchw.5} parent=11 // pred_check
        %p265 = pneg %p167
      $region34: #{rec_res_block_nchw.5} parent=11 // pred_check_branch
        %267 = sbr.rel (%p265) target = $region36
      $region35: #{rec_res_block_nchw.5} parent=11 // pred_region
        _
      $region36: #{rec_res_block_nchw.5} parent=11 // pred_fallthru
        _
      // Predicated region
      $region37: #{rec_res_block_nchw.5} parent=11 // pred_check
        %p268 = pneg %p188
      $region38: #{rec_res_block_nchw.5} parent=11 // pred_check_branch
        %270 = sbr.rel (%p268) target = $region40
      $region39: #{rec_res_block_nchw.5} parent=11 // pred_region
        _
      $region40: #{rec_res_block_nchw.5} parent=11 // pred_fallthru
        _
      // Predicated region
      $region41: #{rec_res_block_nchw.5} parent=11 // pred_check
        %p271 = pneg %p209
      $region42: #{rec_res_block_nchw.5} parent=11 // pred_check_branch
        %273 = sbr.rel (%p271) target = $region44
      $region43: #{rec_res_block_nchw.5} parent=11 // pred_region
        _
      $region44: #{rec_res_block_nchw.5} parent=11 // pred_fallthru
        _
    $region12: #{rec_res_block_nchw.5} parent=5 // pred_fallthru
      _
    %p274 = scmp.lt.s32.totalorder %s15, 2
    // Predicated region
    $region45: #{rec_res_block_nchw.5} parent=5 // pred_check
      %p275 = pneg %p274
    $region46: #{rec_res_block_nchw.5} parent=5 // pred_check_branch
      %277 = sbr.rel (%p275) target = $region48
    $region47: #{rec_res_block_nchw.5} parent=5 // pred_region
      // Predicated region
      $region49: #{rec_res_block_nchw.5} parent=47 // pred_check
        %p278 = pneg %p35
      $region50: #{rec_res_block_nchw.5} parent=47 // pred_check_branch
        %280 = sbr.rel (%p278) target = $region52
      $region51: #{rec_res_block_nchw.5} parent=47 // pred_region
        %p281 = scmp.lt.s32.totalorder %s15, 1
        %s282 = scalar_select %p281, %s15, 1
        %s283 = smul.addr %s282, 54
        %s284 = smul.addr %s283, 8
        %s285 = scalar_lea.vmem %s0, %s284
      $region52: #{rec_res_block_nchw.5} parent=47 // pred_fallthru
        _
    $region48: #{rec_res_block_nchw.5} parent=5 // pred_fallthru
      _
    %p286 = scmp.le.s32.totalorder 1, %s15
    %p287 = scmp.lt.s32.totalorder %s15, 3
    %p288 = pnand %p286, %p287
    %p289 = pneg %p288
    // Predicated region
    $region53: #{rec_res_block_nchw.5} parent=5 // pred_check
      _
    $region54: #{rec_res_block_nchw.5} parent=5 // pred_check_branch
      %291 = sbr.rel (%p288) target = $region56
    $region55: #{rec_res_block_nchw.5} parent=5 // pred_region
      %s292 = ssub.s32 %s15, 1
      %p293 = scmp.lt.s32.totalorder %s20, 1
      %s294 = scalar_select %p293, %s20, 1
      %s295 = smul.addr %s294, 54
      %s296 = smul.addr %s295, 8
      %s297 = scalar_lea.vmem %s0, %s296
      %p298 = pneg %p41
      %p299 = pneg %p38
      %p300 = pneg %p62
      %p301 = pneg %p59
      %p302 = pneg %p83
      %p303 = pneg %p80
      %p304 = pneg %p104
      %p305 = pneg %p101
      %p306 = pneg %p125
      %p307 = pneg %p122
      %p308 = pneg %p146
      %p309 = pneg %p143
      %p310 = pneg %p167
      %p311 = pneg %p164
      %p312 = pneg %p188
      %p313 = pneg %p185
      %p314 = pneg %p209
      %p315 = pneg %p206
      %p316 = pneg %p235
      %p317 = pneg %p232
      %p318 = scmp.lt.s32.totalorder %s20, 1
      %s319 = scalar_select %p318, %s20, 1
      %s320 = smul.addr %s319, 32
      %s321 = smul.addr %s320, 8
      %s322 = scalar_lea.vmem %s9, %s321
      %p323 = scmp.lt.s32.totalorder %s20, 1
      %s324 = scalar_select %p323, %s20, 1
      %s325 = smul.addr %s324, 54
      %s326 = smul.addr %s325, 8
      %s327 = scalar_lea.vmem %s0, %s326
      %p328 = scmp.lt.s32.totalorder %s20, 1
      %s329 = scalar_select %p328, %s20, 1
      %s330 = smul.addr %s329, 32
      %s331 = smul.addr %s330, 8
      %s332 = scalar_lea.vmem %s9, %s331
      %v333 = vld [vmem:[%s327] sm:$0xff]
      %v334 = vld [vmem:[%s327 + $0x8] sm:$0xff]
      %v335 = vld [vmem:[%s327 + $0x18] sm:$0xff]
      %v336 = vld [vmem:[%s327 + $0x20] sm:$0xff]
      %v337 = vld [vmem:[%s327 + $0x30] sm:$0xff]
      %v338 = vld [vmem:[%s327 + $0x38] sm:$0xff]
      %v339 = vld [vmem:[%s327 + $0x48] sm:$0xff]
      %v340 = vld [vmem:[%s327 + $0x50] sm:$0xff]
      %v341 = vld [vmem:[%s327 + $0x60] sm:$0xff]
      %v342 = vld [vmem:[%s327 + $0x68] sm:$0xff]
      %v343 = vld [vmem:[%s327 + $0x78] sm:$0xff]
      %v344 = vld [vmem:[%s327 + $0x80] sm:$0xff]
      %v345 = vld [vmem:[%s327 + $0x90] sm:$0xff]
      %v346 = vld [vmem:[%s327 + $0x98] sm:$0xff]
      %v347 = vld [vmem:[%s327 + $0xa8] sm:$0xff]
      %v348 = vld [vmem:[%s327 + $0xb0] sm:$0xff]
      %v349 = vld [vmem:[%s327 + $0xc0] sm:$0xff]
      %v350 = vld [vmem:[%s327 + $0xc8] sm:$0xff]
      %v351 = vld [vmem:[%s327 + $0xd8] sm:$0xff]
      %v352 = vld [vmem:[%s327 + $0xe0] sm:$0xff]
      %v353 = vld [vmem:[%s327 + $0xf0] sm:$0xff]
      %v354 = vld [vmem:[%s327 + $0xf8] sm:$0xff]
      %v355 = vld [vmem:[%s327 + $0x108] sm:$0xff]
      %v356 = vld [vmem:[%s327 + $0x110] sm:$0xff]
      %v357 = vld [vmem:[%s327 + $0x120] sm:$0xff]
      %v358 = vld [vmem:[%s327 + $0x128] sm:$0xff]
      %v359 = vld [vmem:[%s327 + $0x138] sm:$0xff]
      %v360 = vld [vmem:[%s327 + $0x140] sm:$0xff]
      %v361 = vld [vmem:[%s327 + $0x150] sm:$0xff]
      %v362 = vld [vmem:[%s327 + $0x158] sm:$0xff]
      %v363 = vld [vmem:[%s327 + $0x168] sm:$0xff]
      %v364 = vld [vmem:[%s327 + $0x170] sm:$0xff]
      %v365 = vld [vmem:[%s1] sm:$0xff]
      %v366 = vld [vmem:[%s327 + $0x1] sm:$0xff]
      %v367 = vld [vmem:[%s327 + $0x9] sm:$0xff]
      %v368 = vld [vmem:[%s327 + $0x19] sm:$0xff]
      %v369 = vld [vmem:[%s327 + $0x21] sm:$0xff]
      %v370 = vld [vmem:[%s327 + $0x31] sm:$0xff]
      %v371 = vld [vmem:[%s327 + $0x39] sm:$0xff]
      %v372 = vld [vmem:[%s327 + $0x49] sm:$0xff]
      %v373 = vld [vmem:[%s327 + $0x51] sm:$0xff]
      %v374 = vld [vmem:[%s327 + $0x61] sm:$0xff]
      %v375 = vld [vmem:[%s327 + $0x69] sm:$0xff]
      %v376 = vld [vmem:[%s327 + $0x79] sm:$0xff]
      %v377 = vld [vmem:[%s327 + $0x81] sm:$0xff]
      %v378 = vld [vmem:[%s327 + $0x91] sm:$0xff]
      %v379 = vld [vmem:[%s327 + $0x99] sm:$0xff]
      %v380 = vld [vmem:[%s327 + $0xa9] sm:$0xff]
      %v381 = vld [vmem:[%s327 + $0xb1] sm:$0xff]
      %v382 = vld [vmem:[%s327 + $0xc1] sm:$0xff]
      %v383 = vld [vmem:[%s327 + $0xc9] sm:$0xff]
      %v384 = vld [vmem:[%s327 + $0xd9] sm:$0xff]
      %v385 = vld [vmem:[%s327 + $0xe1] sm:$0xff]
      %v386 = vld [vmem:[%s327 + $0xf1] sm:$0xff]
      %v387 = vld [vmem:[%s327 + $0xf9] sm:$0xff]
      %v388 = vld [vmem:[%s327 + $0x109] sm:$0xff]
      %v389 = vld [vmem:[%s327 + $0x111] sm:$0xff]
      %v390 = vld [vmem:[%s327 + $0x121] sm:$0xff]
      %v391 = vld [vmem:[%s327 + $0x129] sm:$0xff]
      %v392 = vld [vmem:[%s327 + $0x139] sm:$0xff]
      %v393 = vld [vmem:[%s327 + $0x141] sm:$0xff]
      %v394 = vld [vmem:[%s327 + $0x151] sm:$0xff]
      %v395 = vld [vmem:[%s327 + $0x159] sm:$0xff]
      %v396 = vld [vmem:[%s327 + $0x169] sm:$0xff]
      %v397 = vld [vmem:[%s327 + $0x171] sm:$0xff]
      %s398 = scalar_lea.vmem %s1, 8
      %v399 = vld [vmem:[%s398] sm:$0xff]
      %vm400 = vcmask 64512
      %v402 = vsel %vm400, %v366, 0
      %v405 = vsel %vm400, %v367, 0
      %v408 = vsel %vm400, %v368, 0
      %v411 = vsel %vm400, %v369, 0
      %v414 = vsel %vm400, %v370, 0
      %v417 = vsel %vm400, %v371, 0
      %v420 = vsel %vm400, %v372, 0
      %v423 = vsel %vm400, %v373, 0
      %v426 = vsel %vm400, %v374, 0
      %v429 = vsel %vm400, %v375, 0
      %v432 = vsel %vm400, %v376, 0
      %v435 = vsel %vm400, %v377, 0
      %v438 = vsel %vm400, %v378, 0
      %v441 = vsel %vm400, %v379, 0
      %v444 = vsel %vm400, %v380, 0
      %v447 = vsel %vm400, %v381, 0
      %v450 = vsel %vm400, %v382, 0
      %v453 = vsel %vm400, %v383, 0
      %v456 = vsel %vm400, %v384, 0
      %v459 = vsel %vm400, %v385, 0
      %v462 = vsel %vm400, %v386, 0
      %v465 = vsel %vm400, %v387, 0
      %v468 = vsel %vm400, %v388, 0
      %v471 = vsel %vm400, %v389, 0
      %v474 = vsel %vm400, %v390, 0
      %v477 = vsel %vm400, %v391, 0
      %v480 = vsel %vm400, %v392, 0
      %v483 = vsel %vm400, %v393, 0
      %v486 = vsel %vm400, %v394, 0
      %v489 = vsel %vm400, %v395, 0
      %v492 = vsel %vm400, %v396, 0
      %v495 = vsel %vm400, %v397, 0
      %497 = vmatprep.subr.mxu0 0.0
      %498 = vmatpush1.msra.mxu0 %v399
      %499 = vmatprep.subr.mxu0 0.0
      %500 = vmatpush1.msra.mxu0 0.0
      %501 = vmatprep.subr.mxu0 0.0
      %502 = vmatpush1.msra.mxu0 0.0
      %503 = vmatprep.subr.mxu0 0.0
      %504 = vmatpush1.msra.mxu0 0.0
      %505 = vmatprep.subr.mxu0 0.0
      %506 = vmatpush1.msra.mxu0 0.0
      %507 = vmatprep.subr.mxu0 0.0
      %508 = vmatpush1.msra.mxu0 0.0
      %509 = vmatprep.subr.mxu0 0.0
      %510 = vmatpush1.msra.mxu0 0.0
      %511 = vmatprep.subr.mxu0 0.0
      %512 = vmatpush1.msra.mxu0 0.0
      %513 = vmatprep.subr.mxu0 0.0
      %514 = vmatpush1.msra.mxu0 0.0
      %515 = vmatprep.subr.mxu0 0.0
      %516 = vmatpush1.msra.mxu0 0.0
      %517 = vmatprep.subr.mxu0 0.0
      %518 = vmatpush1.msra.mxu0 0.0
      %519 = vmatprep.subr.mxu0 0.0
      %520 = vmatpush1.msra.mxu0 0.0
      %521 = vmatprep.subr.mxu0 0.0
      %522 = vmatpush1.msra.mxu0 0.0
      %523 = vmatprep.subr.mxu0 0.0
      %524 = vmatpush1.msra.mxu0 0.0
      %525 = vmatprep.subr.mxu0 0.0
      %526 = vmatpush1.msra.mxu0 0.0
      %527 = vmatprep.subr.mxu0 0.0
      %528 = vmatpush1.msra.mxu0 0.0
      %529 = vmatprep.subr.mxu0 0.0
      %530 = vmatpush1.msra.mxu0 0.0
      %531 = vmatprep.subr.mxu0 0.0
      %532 = vmatpush1.msra.mxu0 0.0
      %533 = vmatprep.subr.mxu0 0.0
      %534 = vmatpush1.msra.mxu0 0.0
      %535 = vmatprep.subr.mxu0 0.0
      %536 = vmatpush1.msra.mxu0 0.0
      %537 = vmatprep.subr.mxu0 0.0
      %538 = vmatpush1.msra.mxu0 0.0
      %539 = vmatprep.subr.mxu0 0.0
      %540 = vmatpush1.msra.mxu0 0.0
      %541 = vmatprep.subr.mxu0 0.0
      %542 = vmatpush1.msra.mxu0 0.0
      %543 = vmatprep.subr.mxu0 0.0
      %544 = vmatpush1.msra.mxu0 0.0
      %545 = vmatprep.subr.mxu0 0.0
      %546 = vmatpush1.msra.mxu0 0.0
      %547 = vmatprep.subr.mxu0 0.0
      %548 = vmatpush1.msra.mxu0 0.0
      %549 = vmatprep.subr.mxu0 0.0
      %550 = vmatpush1.msra.mxu0 0.0
      %551 = vmatprep.subr.mxu0 0.0
      %552 = vmatpush1.msra.mxu0 0.0
      %553 = vmatprep.subr.mxu0 0.0
      %554 = vmatpush1.msra.mxu0 0.0
      %555 = vmatprep.subr.mxu0 0.0
      %556 = vmatpush1.msra.mxu0 0.0
      %557 = vmatprep.subr.mxu0 0.0
      %558 = vmatpush1.msra.mxu0 0.0
      %559 = vmatprep.subr.mxu0 0.0
      %560 = vmatpush1.msra.mxu0 0.0
      %561 = vmatprep.mubr.f32.mxu0 0.0
      %562 = vmatmul.mubr.f32.gmra.mrb[0].mxu0 %v402
      %v563 = vpop.f32.mrb[0].mxu0
      %v564 = vadd.f32 0.0, %v563
      %v565 = vpop.f32.mrb[0].mxu0
      %566 = vmatprep.mubr.f32.mxu0 0.0
      %567 = vmatmul.mubr.f32.gmra.mrb[0].mxu0 %v405
      %v568 = vpop.f32.mrb[0].mxu0
      %v569 = vadd.f32 0.0, %v568
      %v570 = vpop.f32.mrb[0].mxu0
      %571 = vmatprep.mubr.f32.mxu0 0.0
      %572 = vmatmul.mubr.f32.gmra.mrb[0].mxu0 %v408
      %v573 = vpop.f32.mrb[0].mxu0
      %v574 = vadd.f32 0.0, %v573
      %v575 = vpop.f32.mrb[0].mxu0
      %576 = vmatprep.mubr.f32.mxu0 0.0
      %577 = vmatmul.mubr.f32.gmra.mrb[0].mxu0 %v411
      %v578 = vpop.f32.mrb[0].mxu0
      %v579 = vadd.f32 0.0, %v578
      %v580 = vpop.f32.mrb[0].mxu0
      %581 = vmatprep.mubr.f32.mxu0 0.0
      %582 = vmatmul.mubr.f32.gmra.mrb[0].mxu0 %v414
      %v583 = vpop.f32.mrb[0].mxu0
      %v584 = vadd.f32 0.0, %v583
      %v585 = vpop.f32.mrb[0].mxu0
      %586 = vmatprep.mubr.f32.mxu0 0.0
      %587 = vmatmul.mubr.f32.gmra.mrb[0].mxu0 %v417
      %v588 = vpop.f32.mrb[0].mxu0
      %v589 = vadd.f32 0.0, %v588
      %v590 = vpop.f32.mrb[0].mxu0
      %591 = vmatprep.mubr.f32.mxu0 0.0
      %592 = vmatmul.mubr.f32.gmra.mrb[0].mxu0 %v420
      %v593 = vpop.f32.mrb[0].mxu0
      %v594 = vadd.f32 0.0, %v593
      %v595 = vpop.f32.mrb[0].mxu0
      %596 = vmatprep.mubr.f32.mxu0 0.0
      %597 = vmatmul.mubr.f32.gmra.mrb[0].mxu0 %v423
      %v598 = vpop.f32.mrb[0].mxu0
      %v599 = vadd.f32 0.0, %v598
      %v600 = vpop.f32.mrb[0].mxu0
      %601 = vmatprep.mubr.f32.mxu0 0.0
      %602 = vmatmul.mubr.f32.gmra.mrb[0].mxu0 %v426
      %v603 = vpop.f32.mrb[0].mxu0
      %v604 = vadd.f32 0.0, %v603
      %v605 = vpop.f32.mrb[0].mxu0
      %606 = vmatprep.mubr.f32.mxu0 0.0
      %607 = vmatmul.mubr.f32.gmra.mrb[0].mxu0 %v429
      %v608 = vpop.f32.mrb[0].mxu0
      %v609 = vadd.f32 0.0, %v608
      %v610 = vpop.f32.mrb[0].mxu0
      %611 = vmatprep.mubr.f32.mxu0 0.0
      %612 = vmatmul.mubr.f32.gmra.mrb[0].mxu0 %v432
      %v613 = vpop.f32.mrb[0].mxu0
      %v614 = vadd.f32 0.0, %v613
      %v615 = vpop.f32.mrb[0].mxu0
      %616 = vmatprep.mubr.f32.mxu0 0.0
      %617 = vmatmul.mubr.f32.gmra.mrb[0].mxu0 %v435
      %v618 = vpop.f32.mrb[0].mxu0
      %v619 = vadd.f32 0.0, %v618
      %v620 = vpop.f32.mrb[0].mxu0
      %621 = vmatprep.mubr.f32.mxu0 0.0
      %622 = vmatmul.mubr.f32.gmra.mrb[0].mxu0 %v438
      %v623 = vpop.f32.mrb[0].mxu0
      %v624 = vadd.f32 0.0, %v623
      %v625 = vpop.f32.mrb[0].mxu0
      %626 = vmatprep.mubr.f32.mxu0 0.0
      %627 = vmatmul.mubr.f32.gmra.mrb[0].mxu0 %v441
      %v628 = vpop.f32.mrb[0].mxu0
      %v629 = vadd.f32 0.0, %v628
      %v630 = vpop.f32.mrb[0].mxu0
      %631 = vmatprep.mubr.f32.mxu0 0.0
      %632 = vmatmul.mubr.f32.gmra.mrb[0].mxu0 %v444
      %v633 = vpop.f32.mrb[0].mxu0
      %v634 = vadd.f32 0.0, %v633
      %v635 = vpop.f32.mrb[0].mxu0
      %636 = vmatprep.mubr.f32.mxu0 0.0
      %637 = vmatmul.mubr.f32.gmra.mrb[0].mxu0 %v447
      %v638 = vpop.f32.mrb[0].mxu0
      %v639 = vadd.f32 0.0, %v638
      %v640 = vpop.f32.mrb[0].mxu0
      %641 = vmatprep.mubr.f32.mxu0 0.0
      %642 = vmatmul.mubr.f32.gmra.mrb[0].mxu0 %v450
      %v643 = vpop.f32.mrb[0].mxu0
      %v644 = vadd.f32 0.0, %v643
      %v645 = vpop.f32.mrb[0].mxu0
      %646 = vmatprep.mubr.f32.mxu0 0.0
      %647 = vmatmul.mubr.f32.gmra.mrb[0].mxu0 %v453
      %v648 = vpop.f32.mrb[0].mxu0
      %v649 = vadd.f32 0.0, %v648
      %v650 = vpop.f32.mrb[0].mxu0
      %651 = vmatprep.mubr.f32.mxu0 0.0
      %652 = vmatmul.mubr.f32.gmra.mrb[0].mxu0 %v456
      %v653 = vpop.f32.mrb[0].mxu0
      %v654 = vadd.f32 0.0, %v653
      %v655 = vpop.f32.mrb[0].mxu0
      %656 = vmatprep.mubr.f32.mxu0 0.0
      %657 = vmatmul.mubr.f32.gmra.mrb[0].mxu0 %v459
      %v658 = vpop.f32.mrb[0].mxu0
      %v659 = vadd.f32 0.0, %v658
      %v660 = vpop.f32.mrb[0].mxu0
      %661 = vmatprep.mubr.f32.mxu0 0.0
      %662 = vmatmul.mubr.f32.gmra.mrb[0].mxu0 %v462
      %v663 = vpop.f32.mrb[0].mxu0
      %v664 = vadd.f32 0.0, %v663
      %v665 = vpop.f32.mrb[0].mxu0
      %666 = vmatprep.mubr.f32.mxu0 0.0
      %667 = vmatmul.mubr.f32.gmra.mrb[0].mxu0 %v465
      %v668 = vpop.f32.mrb[0].mxu0
      %v669 = vadd.f32 0.0, %v668
      %v670 = vpop.f32.mrb[0].mxu0
      %671 = vmatprep.mubr.f32.mxu0 0.0
      %672 = vmatmul.mubr.f32.gmra.mrb[0].mxu0 %v468
      %v673 = vpop.f32.mrb[0].mxu0
      %v674 = vadd.f32 0.0, %v673
      %v675 = vpop.f32.mrb[0].mxu0
      %676 = vmatprep.mubr.f32.mxu0 0.0
      %677 = vmatmul.mubr.f32.gmra.mrb[0].mxu0 %v471
      %v678 = vpop.f32.mrb[0].mxu0
      %v679 = vadd.f32 0.0, %v678
      %v680 = vpop.f32.mrb[0].mxu0
      %681 = vmatprep.mubr.f32.mxu0 0.0
      %682 = vmatmul.mubr.f32.gmra.mrb[0].mxu0 %v474
      %v683 = vpop.f32.mrb[0].mxu0
      %v684 = vadd.f32 0.0, %v683
      %v685 = vpop.f32.mrb[0].mxu0
      %686 = vmatprep.mubr.f32.mxu0 0.0
      %687 = vmatmul.mubr.f32.gmra.mrb[0].mxu0 %v477
      %v688 = vpop.f32.mrb[0].mxu0
      %v689 = vadd.f32 0.0, %v688
      %v690 = vpop.f32.mrb[0].mxu0
      %691 = vmatprep.mubr.f32.mxu0 0.0
      %692 = vmatmul.mubr.f32.gmra.mrb[0].mxu0 %v480
      %v693 = vpop.f32.mrb[0].mxu0
      %v694 = vadd.f32 0.0, %v693
      %v695 = vpop.f32.mrb[0].mxu0
      %696 = vmatprep.mubr.f32.mxu0 0.0
      %697 = vmatmul.mubr.f32.gmra.mrb[0].mxu0 %v483
      %v698 = vpop.f32.mrb[0].mxu0
      %v699 = vadd.f32 0.0, %v698
      %v700 = vpop.f32.mrb[0].mxu0
      %701 = vmatprep.mubr.f32.mxu0 0.0
      %702 = vmatmul.mubr.f32.gmra.mrb[0].mxu0 %v486
      %v703 = vpop.f32.mrb[0].mxu0
      %v704 = vadd.f32 0.0, %v703
      %v705 = vpop.f32.mrb[0].mxu0
      %706 = vmatprep.mubr.f32.mxu0 0.0
      %707 = vmatmul.mubr.f32.gmra.mrb[0].mxu0 %v489
      %v708 = vpop.f32.mrb[0].mxu0
      %v709 = vadd.f32 0.0, %v708
      %v710 = vpop.f32.mrb[0].mxu0
      %711 = vmatprep.mubr.f32.mxu0 0.0
      %712 = vmatmul.mubr.f32.gmra.mrb[0].mxu0 %v492
      %v713 = vpop.f32.mrb[0].mxu0
      %v714 = vadd.f32 0.0, %v713
      %v715 = vpop.f32.mrb[0].mxu0
      %716 = vmatprep.mubr.f32.mxu0 0.0
      %717 = vmatmul.mubr.f32.gmra.mrb[0].mxu0 %v495
      %v718 = vpop.f32.mrb[0].mxu0
      %v719 = vadd.f32 0.0, %v718
      %v720 = vpop.f32.mrb[0].mxu0
      %721 = vdwg.mxu0
      %v723 = vsel %vm400, %v333, 0
      %v726 = vsel %vm400, %v334, 0
      %v729 = vsel %vm400, %v335, 0
      %v732 = vsel %vm400, %v336, 0
      %v735 = vsel %vm400, %v337, 0
      %v738 = vsel %vm400, %v338, 0
      %v741 = vsel %vm400, %v339, 0
      %v744 = vsel %vm400, %v340, 0
      %v747 = vsel %vm400, %v341, 0
      %v750 = vsel %vm400, %v342, 0
      %v753 = vsel %vm400, %v343, 0
      %v756 = vsel %vm400, %v344, 0
      %v759 = vsel %vm400, %v345, 0
      %v762 = vsel %vm400, %v346, 0
      %v765 = vsel %vm400, %v347, 0
      %v768 = vsel %vm400, %v348, 0
      %v771 = vsel %vm400, %v349, 0
      %v774 = vsel %vm400, %v350, 0
      %v777 = vsel %vm400, %v351, 0
      %v780 = vsel %vm400, %v352, 0
      %v783 = vsel %vm400, %v353, 0
      %v786 = vsel %vm400, %v354, 0
      %v789 = vsel %vm400, %v355, 0
      %v792 = vsel %vm400, %v356, 0
      %v795 = vsel %vm400, %v357, 0
      %v798 = vsel %vm400, %v358, 0
      %v801 = vsel %vm400, %v359, 0
      %v804 = vsel %vm400, %v360, 0
      %v807 = vsel %vm400, %v361, 0
      %v810 = vsel %vm400, %v362, 0
      %v813 = vsel %vm400, %v363, 0
      %v816 = vsel %vm400, %v364, 0
      %818 = vmatprep.subr.mxu0 0.0
      %819 = vmatpush1.msra.mxu0 %v365
      %820 = vmatprep.subr.mxu0 0.0
      %821 = vmatpush1.msra.mxu0 0.0
      %822 = vmatprep.subr.mxu0 0.0
      %823 = vmatpush1.msra.mxu0 0.0
      %824 = vmatprep.subr.mxu0 0.0
      %825 = vmatpush1.msra.mxu0 0.0
      %826 = vmatprep.subr.mxu0 0.0
      %827 = vmatpush1.msra.mxu0 0.0
      %828 = vmatprep.subr.mxu0 0.0
      %829 = vmatpush1.msra.mxu0 0.0
      %830 = vmatprep.subr.mxu0 0.0
      %831 = vmatpush1.msra.mxu0 0.0
      %832 = vmatprep.subr.mxu0 0.0
      %833 = vmatpush1.msra.mxu0 0.0
      %834 = vmatprep.subr.mxu0 0.0
      %835 = vmatpush1.msra.mxu0 0.0
      %836 = vmatprep.subr.mxu0 0.0
      %837 = vmatpush1.msra.mxu0 0.0
      %838 = vmatprep.subr.mxu0 0.0
      %839 = vmatpush1.msra.mxu0 0.0
      %840 = vmatprep.subr.mxu0 0.0
      %841 = vmatpush1.msra.mxu0 0.0
      %842 = vmatprep.subr.mxu0 0.0
      %843 = vmatpush1.msra.mxu0 0.0
      %844 = vmatprep.subr.mxu0 0.0
      %845 = vmatpush1.msra.mxu0 0.0
      %846 = vmatprep.subr.mxu0 0.0
      %847 = vmatpush1.msra.mxu0 0.0
      %848 = vmatprep.subr.mxu0 0.0
      %849 = vmatpush1.msra.mxu0 0.0
      %850 = vmatprep.subr.mxu0 0.0
      %851 = vmatpush1.msra.mxu0 0.0
      %852 = vmatprep.subr.mxu0 0.0
      %853 = vmatpush1.msra.mxu0 0.0
      %854 = vmatprep.subr.mxu0 0.0
      %855 = vmatpush1.msra.mxu0 0.0
      %856 = vmatprep.subr.mxu0 0.0
      %857 = vmatpush1.msra.mxu0 0.0
      %858 = vmatprep.subr.mxu0 0.0
      %859 = vmatpush1.msra.mxu0 0.0
      %860 = vmatprep.subr.mxu0 0.0
      %861 = vmatpush1.msra.mxu0 0.0
      %862 = vmatprep.subr.mxu0 0.0
      %863 = vmatpush1.msra.mxu0 0.0
      %864 = vmatprep.subr.mxu0 0.0
      %865 = vmatpush1.msra.mxu0 0.0
      %866 = vmatprep.subr.mxu0 0.0
      %867 = vmatpush1.msra.mxu0 0.0
      %868 = vmatprep.subr.mxu0 0.0
      %869 = vmatpush1.msra.mxu0 0.0
      %870 = vmatprep.subr.mxu0 0.0
      %871 = vmatpush1.msra.mxu0 0.0
      %872 = vmatprep.subr.mxu0 0.0
      %873 = vmatpush1.msra.mxu0 0.0
      %874 = vmatprep.subr.mxu0 0.0
      %875 = vmatpush1.msra.mxu0 0.0
      %876 = vmatprep.subr.mxu0 0.0
      %877 = vmatpush1.msra.mxu0 0.0
      %878 = vmatprep.subr.mxu0 0.0
      %879 = vmatpush1.msra.mxu0 0.0
      %880 = vmatprep.subr.mxu0 0.0
      %881 = vmatpush1.msra.mxu0 0.0
      %882 = vmatprep.mubr.f32.mxu0 0.0
      %883 = vmatmul.mubr.f32.gmra.mrb[0].mxu0 %v723
      %v884 = vpop.f32.mrb[0].mxu0
      %v885 = vadd.f32 %v564, %v884
      %v886 = vpop.f32.mrb[0].mxu0
      %887 = vmatprep.mubr.f32.mxu0 0.0
      %888 = vmatmul.mubr.f32.gmra.mrb[0].mxu0 %v726
      %v889 = vpop.f32.mrb[0].mxu0
      %v890 = vadd.f32 %v569, %v889
      %v891 = vpop.f32.mrb[0].mxu0
      %892 = vmatprep.mubr.f32.mxu0 0.0
      %893 = vmatmul.mubr.f32.gmra.mrb[0].mxu0 %v729
      %v894 = vpop.f32.mrb[0].mxu0
      %v895 = vadd.f32 %v574, %v894
      %v896 = vpop.f32.mrb[0].mxu0
      %897 = vmatprep.mubr.f32.mxu0 0.0
      %898 = vmatmul.mubr.f32.gmra.mrb[0].mxu0 %v732
      %v899 = vpop.f32.mrb[0].mxu0
      %v900 = vadd.f32 %v579, %v899
      %v901 = vpop.f32.mrb[0].mxu0
      %902 = vmatprep.mubr.f32.mxu0 0.0
      %903 = vmatmul.mubr.f32.gmra.mrb[0].mxu0 %v735
      %v904 = vpop.f32.mrb[0].mxu0
      %v905 = vadd.f32 %v584, %v904
      %v906 = vpop.f32.mrb[0].mxu0
      %907 = vmatprep.mubr.f32.mxu0 0.0
      %908 = vmatmul.mubr.f32.gmra.mrb[0].mxu0 %v738
      %v909 = vpop.f32.mrb[0].mxu0
      %v910 = vadd.f32 %v589, %v909
      %v911 = vpop.f32.mrb[0].mxu0
      %912 = vmatprep.mubr.f32.mxu0 0.0
      %913 = vmatmul.mubr.f32.gmra.mrb[0].mxu0 %v741
      %v914 = vpop.f32.mrb[0].mxu0
      %v915 = vadd.f32 %v594, %v914
      %v916 = vpop.f32.mrb[0].mxu0
      %917 = vmatprep.mubr.f32.mxu0 0.0
      %918 = vmatmul.mubr.f32.gmra.mrb[0].mxu0 %v744
      %v919 = vpop.f32.mrb[0].mxu0
      %v920 = vadd.f32 %v599, %v919
      %v921 = vpop.f32.mrb[0].mxu0
      %922 = vmatprep.mubr.f32.mxu0 0.0
      %923 = vmatmul.mubr.f32.gmra.mrb[0].mxu0 %v747
      %v924 = vpop.f32.mrb[0].mxu0
      %v925 = vadd.f32 %v604, %v924
      %v926 = vpop.f32.mrb[0].mxu0
      %927 = vmatprep.mubr.f32.mxu0 0.0
      %928 = vmatmul.mubr.f32.gmra.mrb[0].mxu0 %v750
      %v929 = vpop.f32.mrb[0].mxu0
      %v930 = vadd.f32 %v609, %v929
      %v931 = vpop.f32.mrb[0].mxu0
      %932 = vmatprep.mubr.f32.mxu0 0.0
      %933 = vmatmul.mubr.f32.gmra.mrb[0].mxu0 %v753
      %v934 = vpop.f32.mrb[0].mxu0
      %v935 = vadd.f32 %v614, %v934
      %v936 = vpop.f32.mrb[0].mxu0
      %937 = vmatprep.mubr.f32.mxu0 0.0
      %938 = vmatmul.mubr.f32.gmra.mrb[0].mxu0 %v756
      %v939 = vpop.f32.mrb[0].mxu0
      %v940 = vadd.f32 %v619, %v939
      %v941 = vpop.f32.mrb[0].mxu0
      %942 = vmatprep.mubr.f32.mxu0 0.0
      %943 = vmatmul.mubr.f32.gmra.mrb[0].mxu0 %v759
      %v944 = vpop.f32.mrb[0].mxu0
      %v945 = vadd.f32 %v624, %v944
      %v946 = vpop.f32.mrb[0].mxu0
      %947 = vmatprep.mubr.f32.mxu0 0.0
      %948 = vmatmul.mubr.f32.gmra.mrb[0].mxu0 %v762
      %v949 = vpop.f32.mrb[0].mxu0
      %v950 = vadd.f32 %v629, %v949
      %v951 = vpop.f32.mrb[0].mxu0
      %952 = vmatprep.mubr.f32.mxu0 0.0
      %953 = vmatmul.mubr.f32.gmra.mrb[0].mxu0 %v765
      %v954 = vpop.f32.mrb[0].mxu0
      %v955 = vadd.f32 %v634, %v954
      %v956 = vpop.f32.mrb[0].mxu0
      %957 = vmatprep.mubr.f32.mxu0 0.0
      %958 = vmatmul.mubr.f32.gmra.mrb[0].mxu0 %v768
      %v959 = vpop.f32.mrb[0].mxu0
      %v960 = vadd.f32 %v639, %v959
      %v961 = vpop.f32.mrb[0].mxu0
      %962 = vmatprep.mubr.f32.mxu0 0.0
      %963 = vmatmul.mubr.f32.gmra.mrb[0].mxu0 %v771
      %v964 = vpop.f32.mrb[0].mxu0
      %v965 = vadd.f32 %v644, %v964
      %v966 = vpop.f32.mrb[0].mxu0
      %967 = vmatprep.mubr.f32.mxu0 0.0
      %968 = vmatmul.mubr.f32.gmra.mrb[0].mxu0 %v774
      %v969 = vpop.f32.mrb[0].mxu0
      %v970 = vadd.f32 %v649, %v969
      %v971 = vpop.f32.mrb[0].mxu0
      %972 = vmatprep.mubr.f32.mxu0 0.0
      %973 = vmatmul.mubr.f32.gmra.mrb[0].mxu0 %v777
      %v974 = vpop.f32.mrb[0].mxu0
      %v975 = vadd.f32 %v654, %v974
      %v976 = vpop.f32.mrb[0].mxu0
      %977 = vmatprep.mubr.f32.mxu0 0.0
      %978 = vmatmul.mubr.f32.gmra.mrb[0].mxu0 %v780
      %v979 = vpop.f32.mrb[0].mxu0
      %v980 = vadd.f32 %v659, %v979
      %v981 = vpop.f32.mrb[0].mxu0
      %982 = vmatprep.mubr.f32.mxu0 0.0
      %983 = vmatmul.mubr.f32.gmra.mrb[0].mxu0 %v783
      %v984 = vpop.f32.mrb[0].mxu0
      %v985 = vadd.f32 %v664, %v984
      %v986 = vpop.f32.mrb[0].mxu0
      %987 = vmatprep.mubr.f32.mxu0 0.0
      %988 = vmatmul.mubr.f32.gmra.mrb[0].mxu0 %v786
      %v989 = vpop.f32.mrb[0].mxu0
      %v990 = vadd.f32 %v669, %v989
      %v991 = vpop.f32.mrb[0].mxu0
      %992 = vmatprep.mubr.f32.mxu0 0.0
      %993 = vmatmul.mubr.f32.gmra.mrb[0].mxu0 %v789
      %v994 = vpop.f32.mrb[0].mxu0
      %v995 = vadd.f32 %v674, %v994
      %v996 = vpop.f32.mrb[0].mxu0
      %997 = vmatprep.mubr.f32.mxu0 0.0
      %998 = vmatmul.mubr.f32.gmra.mrb[0].mxu0 %v792
      %v999 = vpop.f32.mrb[0].mxu0
      %v1000 = vadd.f32 %v679, %v999
      %v1001 = vpop.f32.mrb[0].mxu0
      %1002 = vmatprep.mubr.f32.mxu0 0.0
      %1003 = vmatmul.mubr.f32.gmra.mrb[0].mxu0 %v795
      %v1004 = vpop.f32.mrb[0].mxu0
      %v1005 = vadd.f32 %v684, %v1004
      %v1006 = vpop.f32.mrb[0].mxu0
      %1007 = vmatprep.mubr.f32.mxu0 0.0
      %1008 = vmatmul.mubr.f32.gmra.mrb[0].mxu0 %v798
      %v1009 = vpop.f32.mrb[0].mxu0
      %v1010 = vadd.f32 %v689, %v1009
      %v1011 = vpop.f32.mrb[0].mxu0
      %1012 = vmatprep.mubr.f32.mxu0 0.0
      %1013 = vmatmul.mubr.f32.gmra.mrb[0].mxu0 %v801
      %v1014 = vpop.f32.mrb[0].mxu0
      %v1015 = vadd.f32 %v694, %v1014
      %v1016 = vpop.f32.mrb[0].mxu0
      %1017 = vmatprep.mubr.f32.mxu0 0.0
      %1018 = vmatmul.mubr.f32.gmra.mrb[0].mxu0 %v804
      %v1019 = vpop.f32.mrb[0].mxu0
      %v1020 = vadd.f32 %v699, %v1019
      %v1021 = vpop.f32.mrb[0].mxu0
      %1022 = vmatprep.mubr.f32.mxu0 0.0
      %1023 = vmatmul.mubr.f32.gmra.mrb[0].mxu0 %v807
      %v1024 = vpop.f32.mrb[0].mxu0
      %v1025 = vadd.f32 %v704, %v1024
      %v1026 = vpop.f32.mrb[0].mxu0
      %1027 = vmatprep.mubr.f32.mxu0 0.0
      %1028 = vmatmul.mubr.f32.gmra.mrb[0].mxu0 %v810
      %v1029 = vpop.f32.mrb[0].mxu0
      %v1030 = vadd.f32 %v709, %v1029
      %v1031 = vpop.f32.mrb[0].mxu0
      %1032 = vmatprep.mubr.f32.mxu0 0.0
      %1033 = vmatmul.mubr.f32.gmra.mrb[0].mxu0 %v813
      %v1034 = vpop.f32.mrb[0].mxu0
      %v1035 = vadd.f32 %v714, %v1034
      %v1036 = vpop.f32.mrb[0].mxu0
      %1037 = vmatprep.mubr.f32.mxu0 0.0
      %1038 = vmatmul.mubr.f32.gmra.mrb[0].mxu0 %v816
      %v1039 = vpop.f32.mrb[0].mxu0
      %v1040 = vadd.f32 %v719, %v1039
      %v1041 = vpop.f32.mrb[0].mxu0
      %1042 = vdwg.mxu0
      %v1043 = vld [vmem:[%s327 + $0x2] sm:$0xff]
      %v1044 = vld [vmem:[%s327 + $0xa] sm:$0xff]
      %v1045 = vld [vmem:[%s327 + $0x1a] sm:$0xff]
      %v1046 = vld [vmem:[%s327 + $0x22] sm:$0xff]
      %v1047 = vld [vmem:[%s327 + $0x32] sm:$0xff]
      %v1048 = vld [vmem:[%s327 + $0x3a] sm:$0xff]
      %v1049 = vld [vmem:[%s327 + $0x4a] sm:$0xff]
      %v1050 = vld [vmem:[%s327 + $0x52] sm:$0xff]
      %v1051 = vld [vmem:[%s327 + $0x62] sm:$0xff]
      %v1052 = vld [vmem:[%s327 + $0x6a] sm:$0xff]
      %v1053 = vld [vmem:[%s327 + $0x7a] sm:$0xff]
      %v1054 = vld [vmem:[%s327 + $0x82] sm:$0xff]
      %v1055 = vld [vmem:[%s327 + $0x92] sm:$0xff]
      %v1056 = vld [vmem:[%s327 + $0x9a] sm:$0xff]
      %v1057 = vld [vmem:[%s327 + $0xaa] sm:$0xff]
      %v1058 = vld [vmem:[%s327 + $0xb2] sm:$0xff]
      %v1059 = vld [vmem:[%s327 + $0xc2] sm:$0xff]
      %v1060 = vld [vmem:[%s327 + $0xca] sm:$0xff]
      %v1061 = vld [vmem:[%s327 + $0xda] sm:$0xff]
      %v1062 = vld [vmem:[%s327 + $0xe2] sm:$0xff]
      %v1063 = vld [vmem:[%s327 + $0xf2] sm:$0xff]
      %v1064 = vld [vmem:[%s327 + $0xfa] sm:$0xff]
      %v1065 = vld [vmem:[%s327 + $0x10a] sm:$0xff]
      %v1066 = vld [vmem:[%s327 + $0x112] sm:$0xff]
      %v1067 = vld [vmem:[%s327 + $0x122] sm:$0xff]
      %v1068 = vld [vmem:[%s327 + $0x12a] sm:$0xff]
      %v1069 = vld [vmem:[%s327 + $0x13a] sm:$0xff]
      %v1070 = vld [vmem:[%s327 + $0x142] sm:$0xff]
      %v1071 = vld [vmem:[%s327 + $0x152] sm:$0xff]
      %v1072 = vld [vmem:[%s327 + $0x15a] sm:$0xff]
      %v1073 = vld [vmem:[%s327 + $0x16a] sm:$0xff]
      %v1074 = vld [vmem:[%s327 + $0x172] sm:$0xff]
      %s1075 = scalar_lea.vmem %s1, 16
      %v1076 = vld [vmem:[%s1075] sm:$0xff]
      %v1078 = vsel %vm400, %v1043, 0
      %v1081 = vsel %vm400, %v1044, 0
      %v1084 = vsel %vm400, %v1045, 0
      %v1087 = vsel %vm400, %v1046, 0
      %v1090 = vsel %vm400, %v1047, 0
      %v1093 = vsel %vm400, %v1048, 0
      %v1096 = vsel %vm400, %v1049, 0
      %v1099 = vsel %vm400, %v1050, 0
      %v1102 = vsel %vm400, %v1051, 0
      %v1105 = vsel %vm400, %v1052, 0
      %v1108 = vsel %vm400, %v1053, 0
      %v1111 = vsel %vm400, %v1054, 0
      %v1114 = vsel %vm400, %v1055, 0
      %v1117 = vsel %vm400, %v1056, 0
      %v1120 = vsel %vm400, %v1057, 0
      %v1123 = vsel %vm400, %v1058, 0
      %v1126 = vsel %vm400, %v1059, 0
      %v1129 = vsel %vm400, %v1060, 0
      %v1132 = vsel %vm400, %v1061, 0
      %v1135 = vsel %vm400, %v1062, 0
      %v1138 = vsel %vm400, %v1063, 0
      %v1141 = vsel %vm400, %v1064, 0
      %v1144 = vsel %vm400, %v1065, 0
      %v1147 = vsel %vm400, %v1066, 0
      %v1150 = vsel %vm400, %v1067, 0
      %v1153 = vsel %vm400, %v1068, 0
      %v1156 = vsel %vm400, %v1069, 0
      %v1159 = vsel %vm400, %v1070, 0
      %v1162 = vsel %vm400, %v1071, 0
      %v1165 = vsel %vm400, %v1072, 0
      %v1168 = vsel %vm400, %v1073, 0
      %v1171 = vsel %vm400, %v1074, 0
      %1173 = vmatprep.subr.mxu0 0.0
      %1174 = vmatpush1.msra.mxu0 %v1076
      %1175 = vmatprep.subr.mxu0 0.0
      %1176 = vmatpush1.msra.mxu0 0.0
      %1177 = vmatprep.subr.mxu0 0.0
      %1178 = vmatpush1.msra.mxu0 0.0
      %1179 = vmatprep.subr.mxu0 0.0
      %1180 = vmatpush1.msra.mxu0 0.0
      %1181 = vmatprep.subr.mxu0 0.0
      %1182 = vmatpush1.msra.mxu0 0.0
      %1183 = vmatprep.subr.mxu0 0.0
      %1184 = vmatpush1.msra.mxu0 0.0
      %1185 = vmatprep.subr.mxu0 0.0
      %1186 = vmatpush1.msra.mxu0 0.0
      %1187 = vmatprep.subr.mxu0 0.0
      %1188 = vmatpush1.msra.mxu0 0.0
      %1189 = vmatprep.subr.mxu0 0.0
      %1190 = vmatpush1.msra.mxu0 0.0
      %1191 = vmatprep.subr.mxu0 0.0
      %1192 = vmatpush1.msra.mxu0 0.0
      %1193 = vmatprep.subr.mxu0 0.0
      %1194 = vmatpush1.msra.mxu0 0.0
      %1195 = vmatprep.subr.mxu0 0.0
      %1196 = vmatpush1.msra.mxu0 0.0
      %1197 = vmatprep.subr.mxu0 0.0
      %1198 = vmatpush1.msra.mxu0 0.0
      %1199 = vmatprep.subr.mxu0 0.0
      %1200 = vmatpush1.msra.mxu0 0.0
      %1201 = vmatprep.subr.mxu0 0.0
      %1202 = vmatpush1.msra.mxu0 0.0
      %1203 = vmatprep.subr.mxu0 0.0
      %1204 = vmatpush1.msra.mxu0 0.0
      %1205 = vmatprep.subr.mxu0 0.0
      %1206 = vmatpush1.msra.mxu0 0.0
      %1207 = vmatprep.subr.mxu0 0.0
      %1208 = vmatpush1.msra.mxu0 0.0
      %1209 = vmatprep.subr.mxu0 0.0
      %1210 = vmatpush1.msra.mxu0 0.0
      %1211 = vmatprep.subr.mxu0 0.0
      %1212 = vmatpush1.msra.mxu0 0.0
      %1213 = vmatprep.subr.mxu0 0.0
      %1214 = vmatpush1.msra.mxu0 0.0
      %1215 = vmatprep.subr.mxu0 0.0
      %1216 = vmatpush1.msra.mxu0 0.0
      %1217 = vmatprep.subr.mxu0 0.0
      %1218 = vmatpush1.msra.mxu0 0.0
      %1219 = vmatprep.subr.mxu0 0.0
      %1220 = vmatpush1.msra.mxu0 0.0
      %1221 = vmatprep.subr.mxu0 0.0
      %1222 = vmatpush1.msra.mxu0 0.0
      %1223 = vmatprep.subr.mxu0 0.0
      %1224 = vmatpush1.msra.mxu0 0.0
      %1225 = vmatprep.subr.mxu0 0.0
      %1226 = vmatpush1.msra.mxu0 0.0
      %1227 = vmatprep.subr.mxu0 0.0
      %1228 = vmatpush1.msra.mxu0 0.0
      %1229 = vmatprep.subr.mxu0 0.0
      %1230 = vmatpush1.msra.mxu0 0.0
      %1231 = vmatprep.subr.mxu0 0.0
      %1232 = vmatpush1.msra.mxu0 0.0
      %1233 = vmatprep.subr.mxu0 0.0
      %1234 = vmatpush1.msra.mxu0 0.0
      %1235 = vmatprep.subr.mxu0 0.0
      %1236 = vmatpush1.msra.mxu0 0.0
      %1237 = vmatprep.mubr.f32.mxu0 0.0
      %1238 = vmatmul.mubr.f32.gmra.mrb[0].mxu0 %v1078
      %v1239 = vpop.f32.mrb[0].mxu0
      %v1240 = vadd.f32 0.0, %v1239
      %v1241 = vpop.f32.mrb[0].mxu0
      %1242 = vmatprep.mubr.f32.mxu0 0.0
      %1243 = vmatmul.mubr.f32.gmra.mrb[0].mxu0 %v1081
      %v1244 = vpop.f32.mrb[0].mxu0
      %v1245 = vadd.f32 0.0, %v1244
      %v1246 = vpop.f32.mrb[0].mxu0
      %1247 = vmatprep.mubr.f32.mxu0 0.0
      %1248 = vmatmul.mubr.f32.gmra.mrb[0].mxu0 %v1084
      %v1249 = vpop.f32.mrb[0].mxu0
      %v1250 = vadd.f32 0.0, %v1249
      %v1251 = vpop.f32.mrb[0].mxu0
      %1252 = vmatprep.mubr.f32.mxu0 0.0
      %1253 = vmatmul.mubr.f32.gmra.mrb[0].mxu0 %v1087
      %v1254 = vpop.f32.mrb[0].mxu0
      %v1255 = vadd.f32 0.0, %v1254
      %v1256 = vpop.f32.mrb[0].mxu0
      %1257 = vmatprep.mubr.f32.mxu0 0.0
      %1258 = vmatmul.mubr.f32.gmra.mrb[0].mxu0 %v1090
      %v1259 = vpop.f32.mrb[0].mxu0
      %v1260 = vadd.f32 0.0, %v1259
      %v1261 = vpop.f32.mrb[0].mxu0
      %1262 = vmatprep.mubr.f32.mxu0 0.0
      %1263 = vmatmul.mubr.f32.gmra.mrb[0].mxu0 %v1093
      %v1264 = vpop.f32.mrb[0].mxu0
      %v1265 = vadd.f32 0.0, %v1264
      %v1266 = vpop.f32.mrb[0].mxu0
      %1267 = vmatprep.mubr.f32.mxu0 0.0
      %1268 = vmatmul.mubr.f32.gmra.mrb[0].mxu0 %v1096
      %v1269 = vpop.f32.mrb[0].mxu0
      %v1270 = vadd.f32 0.0, %v1269
      %v1271 = vpop.f32.mrb[0].mxu0
      %1272 = vmatprep.mubr.f32.mxu0 0.0
      %1273 = vmatmul.mubr.f32.gmra.mrb[0].mxu0 %v1099
      %v1274 = vpop.f32.mrb[0].mxu0
      %v1275 = vadd.f32 0.0, %v1274
      %v1276 = vpop.f32.mrb[0].mxu0
      %1277 = vmatprep.mubr.f32.mxu0 0.0
      %1278 = vmatmul.mubr.f32.gmra.mrb[0].mxu0 %v1102
      %v1279 = vpop.f32.mrb[0].mxu0
      %v1280 = vadd.f32 0.0, %v1279
      %v1281 = vpop.f32.mrb[0].mxu0
      %1282 = vmatprep.mubr.f32.mxu0 0.0
      %1283 = vmatmul.mubr.f32.gmra.mrb[0].mxu0 %v1105
      %v1284 = vpop.f32.mrb[0].mxu0
      %v1285 = vadd.f32 0.0, %v1284
      %v1286 = vpop.f32.mrb[0].mxu0
      %1287 = vmatprep.mubr.f32.mxu0 0.0
      %1288 = vmatmul.mubr.f32.gmra.mrb[0].mxu0 %v1108
      %v1289 = vpop.f32.mrb[0].mxu0
      %v1290 = vadd.f32 0.0, %v1289
      %v1291 = vpop.f32.mrb[0].mxu0
      %1292 = vmatprep.mubr.f32.mxu0 0.0
      %1293 = vmatmul.mubr.f32.gmra.mrb[0].mxu0 %v1111
      %v1294 = vpop.f32.mrb[0].mxu0
      %v1295 = vadd.f32 0.0, %v1294
      %v1296 = vpop.f32.mrb[0].mxu0
      %1297 = vmatprep.mubr.f32.mxu0 0.0
      %1298 = vmatmul.mubr.f32.gmra.mrb[0].mxu0 %v1114
      %v1299 = vpop.f32.mrb[0].mxu0
      %v1300 = vadd.f32 0.0, %v1299
      %v1301 = vpop.f32.mrb[0].mxu0
      %1302 = vmatprep.mubr.f32.mxu0 0.0
      %1303 = vmatmul.mubr.f32.gmra.mrb[0].mxu0 %v1117
      %v1304 = vpop.f32.mrb[0].mxu0
      %v1305 = vadd.f32 0.0, %v1304
      %v1306 = vpop.f32.mrb[0].mxu0
      %1307 = vmatprep.mubr.f32.mxu0 0.0
      %1308 = vmatmul.mubr.f32.gmra.mrb[0].mxu0 %v1120
      %v1309 = vpop.f32.mrb[0].mxu0
      %v1310 = vadd.f32 0.0, %v1309
      %v1311 = vpop.f32.mrb[0].mxu0
      %1312 = vmatprep.mubr.f32.mxu0 0.0
      %1313 = vmatmul.mubr.f32.gmra.mrb[0].mxu0 %v1123
      %v1314 = vpop.f32.mrb[0].mxu0
      %v1315 = vadd.f32 0.0, %v1314
      %v1316 = vpop.f32.mrb[0].mxu0
      %1317 = vmatprep.mubr.f32.mxu0 0.0
      %1318 = vmatmul.mubr.f32.gmra.mrb[0].mxu0 %v1126
      %v1319 = vpop.f32.mrb[0].mxu0
      %v1320 = vadd.f32 0.0, %v1319
      %v1321 = vpop.f32.mrb[0].mxu0
      %1322 = vmatprep.mubr.f32.mxu0 0.0
      %1323 = vmatmul.mubr.f32.gmra.mrb[0].mxu0 %v1129
      %v1324 = vpop.f32.mrb[0].mxu0
      %v1325 = vadd.f32 0.0, %v1324
      %v1326 = vpop.f32.mrb[0].mxu0
      %1327 = vmatprep.mubr.f32.mxu0 0.0
      %1328 = vmatmul.mubr.f32.gmra.mrb[0].mxu0 %v1132
      %v1329 = vpop.f32.mrb[0].mxu0
      %v1330 = vadd.f32 0.0, %v1329
      %v1331 = vpop.f32.mrb[0].mxu0
      %1332 = vmatprep.mubr.f32.mxu0 0.0
      %1333 = vmatmul.mubr.f32.gmra.mrb[0].mxu0 %v1135
      %v1334 = vpop.f32.mrb[0].mxu0
      %v1335 = vadd.f32 0.0, %v1334
      %v1336 = vpop.f32.mrb[0].mxu0
      %1337 = vmatprep.mubr.f32.mxu0 0.0
      %1338 = vmatmul.mubr.f32.gmra.mrb[0].mxu0 %v1138
      %v1339 = vpop.f32.mrb[0].mxu0
      %v1340 = vadd.f32 0.0, %v1339
      %v1341 = vpop.f32.mrb[0].mxu0
      %1342 = vmatprep.mubr.f32.mxu0 0.0
      %1343 = vmatmul.mubr.f32.gmra.mrb[0].mxu0 %v1141
      %v1344 = vpop.f32.mrb[0].mxu0
      %v1345 = vadd.f32 0.0, %v1344
      %v1346 = vpop.f32.mrb[0].mxu0
      %1347 = vmatprep.mubr.f32.mxu0 0.0
      %1348 = vmatmul.mubr.f32.gmra.mrb[0].mxu0 %v1144
      %v1349 = vpop.f32.mrb[0].mxu0
      %v1350 = vadd.f32 0.0, %v1349
      %v1351 = vpop.f32.mrb[0].mxu0
      %1352 = vmatprep.mubr.f32.mxu0 0.0
      %1353 = vmatmul.mubr.f32.gmra.mrb[0].mxu0 %v1147
      %v1354 = vpop.f32.mrb[0].mxu0
      %v1355 = vadd.f32 0.0, %v1354
      %v1356 = vpop.f32.mrb[0].mxu0
      %1357 = vmatprep.mubr.f32.mxu0 0.0
      %1358 = vmatmul.mubr.f32.gmra.mrb[0].mxu0 %v1150
      %v1359 = vpop.f32.mrb[0].mxu0
      %v1360 = vadd.f32 0.0, %v1359
      %v1361 = vpop.f32.mrb[0].mxu0
      %1362 = vmatprep.mubr.f32.mxu0 0.0
      %1363 = vmatmul.mubr.f32.gmra.mrb[0].mxu0 %v1153
      %v1364 = vpop.f32.mrb[0].mxu0
      %v1365 = vadd.f32 0.0, %v1364
      %v1366 = vpop.f32.mrb[0].mxu0
      %1367 = vmatprep.mubr.f32.mxu0 0.0
      %1368 = vmatmul.mubr.f32.gmra.mrb[0].mxu0 %v1156
      %v1369 = vpop.f32.mrb[0].mxu0
      %v1370 = vadd.f32 0.0, %v1369
      %v1371 = vpop.f32.mrb[0].mxu0
      %1372 = vmatprep.mubr.f32.mxu0 0.0
      %1373 = vmatmul.mubr.f32.gmra.mrb[0].mxu0 %v1159
      %v1374 = vpop.f32.mrb[0].mxu0
      %v1375 = vadd.f32 0.0, %v1374
      %v1376 = vpop.f32.mrb[0].mxu0
      %1377 = vmatprep.mubr.f32.mxu0 0.0
      %1378 = vmatmul.mubr.f32.gmra.mrb[0].mxu0 %v1162
      %v1379 = vpop.f32.mrb[0].mxu0
      %v1380 = vadd.f32 0.0, %v1379
      %v1381 = vpop.f32.mrb[0].mxu0
      %1382 = vmatprep.mubr.f32.mxu0 0.0
      %1383 = vmatmul.mubr.f32.gmra.mrb[0].mxu0 %v1165
      %v1384 = vpop.f32.mrb[0].mxu0
      %v1385 = vadd.f32 0.0, %v1384
      %v1386 = vpop.f32.mrb[0].mxu0
      %1387 = vmatprep.mubr.f32.mxu0 0.0
      %1388 = vmatmul.mubr.f32.gmra.mrb[0].mxu0 %v1168
      %v1389 = vpop.f32.mrb[0].mxu0
      %v1390 = vadd.f32 0.0, %v1389
      %v1391 = vpop.f32.mrb[0].mxu0
      %1392 = vmatprep.mubr.f32.mxu0 0.0
      %1393 = vmatmul.mubr.f32.gmra.mrb[0].mxu0 %v1171
      %v1394 = vpop.f32.mrb[0].mxu0
      %v1395 = vadd.f32 0.0, %v1394
      %v1396 = vpop.f32.mrb[0].mxu0
      %1397 = vdwg.mxu0
      %v1398 = vadd.f32 %v885, %v1240
      %v1399 = vadd.f32 %v890, %v1245
      %v1400 = vadd.f32 %v895, %v1250
      %v1401 = vadd.f32 %v900, %v1255
      %v1402 = vadd.f32 %v905, %v1260
      %v1403 = vadd.f32 %v910, %v1265
      %v1404 = vadd.f32 %v915, %v1270
      %v1405 = vadd.f32 %v920, %v1275
      %v1406 = vadd.f32 %v925, %v1280
      %v1407 = vadd.f32 %v930, %v1285
      %v1408 = vadd.f32 %v935, %v1290
      %v1409 = vadd.f32 %v940, %v1295
      %v1410 = vadd.f32 %v945, %v1300
      %v1411 = vadd.f32 %v950, %v1305
      %v1412 = vadd.f32 %v955, %v1310
      %v1413 = vadd.f32 %v960, %v1315
      %v1414 = vadd.f32 %v965, %v1320
      %v1415 = vadd.f32 %v970, %v1325
      %v1416 = vadd.f32 %v975, %v1330
      %v1417 = vadd.f32 %v980, %v1335
      %v1418 = vadd.f32 %v985, %v1340
      %v1419 = vadd.f32 %v990, %v1345
      %v1420 = vadd.f32 %v995, %v1350
      %v1421 = vadd.f32 %v1000, %v1355
      %v1422 = vadd.f32 %v1005, %v1360
      %v1423 = vadd.f32 %v1010, %v1365
      %v1424 = vadd.f32 %v1015, %v1370
      %v1425 = vadd.f32 %v1020, %v1375
      %v1426 = vadd.f32 %v1025, %v1380
      %v1427 = vadd.f32 %v1030, %v1385
      %v1428 = vadd.f32 %v1035, %v1390
      %v1429 = vadd.f32 %v1040, %v1395
      %s1430 = scalar_lea.vmem %s327, 24
      %v1431 = vld [vmem:[%s1430] sm:$0xff]
      %v1432 = vld [vmem:[%s1430 + $0x8] sm:$0xff]
      %v1433 = vld [vmem:[%s1430 + $0x18] sm:$0xff]
      %v1434 = vld [vmem:[%s1430 + $0x20] sm:$0xff]
      %v1435 = vld [vmem:[%s1430 + $0x30] sm:$0xff]
      %v1436 = vld [vmem:[%s1430 + $0x38] sm:$0xff]
      %v1437 = vld [vmem:[%s1430 + $0x48] sm:$0xff]
      %v1438 = vld [vmem:[%s1430 + $0x50] sm:$0xff]
      %v1439 = vld [vmem:[%s1430 + $0x60] sm:$0xff]
      %v1440 = vld [vmem:[%s1430 + $0x68] sm:$0xff]
      %v1441 = vld [vmem:[%s1430 + $0x78] sm:$0xff]
      %v1442 = vld [vmem:[%s1430 + $0x80] sm:$0xff]
      %v1443 = vld [vmem:[%s1430 + $0x90] sm:$0xff]
      %v1444 = vld [vmem:[%s1430 + $0x98] sm:$0xff]
      %v1445 = vld [vmem:[%s1430 + $0xa8] sm:$0xff]
      %v1446 = vld [vmem:[%s1430 + $0xb0] sm:$0xff]
      %v1447 = vld [vmem:[%s1430 + $0xc0] sm:$0xff]
      %v1448 = vld [vmem:[%s1430 + $0xc8] sm:$0xff]
      %v1449 = vld [vmem:[%s1430 + $0xd8] sm:$0xff]
      %v1450 = vld [vmem:[%s1430 + $0xe0] sm:$0xff]
      %v1451 = vld [vmem:[%s1430 + $0xf0] sm:$0xff]
      %v1452 = vld [vmem:[%s1430 + $0xf8] sm:$0xff]
      %v1453 = vld [vmem:[%s1430 + $0x108] sm:$0xff]
      %v1454 = vld [vmem:[%s1430 + $0x110] sm:$0xff]
      %v1455 = vld [vmem:[%s1430 + $0x120] sm:$0xff]
      %v1456 = vld [vmem:[%s1430 + $0x128] sm:$0xff]
      %v1457 = vld [vmem:[%s1430 + $0x138] sm:$0xff]
      %v1458 = vld [vmem:[%s1430 + $0x140] sm:$0xff]
      %v1459 = vld [vmem:[%s1430 + $0x150] sm:$0xff]
      %v1460 = vld [vmem:[%s1430 + $0x158] sm:$0xff]
      %v1461 = vld [vmem:[%s1430 + $0x168] sm:$0xff]
      %v1462 = vld [vmem:[%s1430 + $0x170] sm:$0xff]
      %s1463 = scalar_lea.vmem %s1, 24
      %v1464 = vld [vmem:[%s1463] sm:$0xff]
      %v1466 = vsel %vm400, %v1431, 0
      %v1469 = vsel %vm400, %v1432, 0
      %v1472 = vsel %vm400, %v1433, 0
      %v1475 = vsel %vm400, %v1434, 0
      %v1478 = vsel %vm400, %v1435, 0
      %v1481 = vsel %vm400, %v1436, 0
      %v1484 = vsel %vm400, %v1437, 0
      %v1487 = vsel %vm400, %v1438, 0
      %v1490 = vsel %vm400, %v1439, 0
      %v1493 = vsel %vm400, %v1440, 0
      %v1496 = vsel %vm400, %v1441, 0
      %v1499 = vsel %vm400, %v1442, 0
      %v1502 = vsel %vm400, %v1443, 0
      %v1505 = vsel %vm400, %v1444, 0
      %v1508 = vsel %vm400, %v1445, 0
      %v1511 = vsel %vm400, %v1446, 0
      %v1514 = vsel %vm400, %v1447, 0
      %v1517 = vsel %vm400, %v1448, 0
      %v1520 = vsel %vm400, %v1449, 0
      %v1523 = vsel %vm400, %v1450, 0
      %v1526 = vsel %vm400, %v1451, 0
      %v1529 = vsel %vm400, %v1452, 0
      %v1532 = vsel %vm400, %v1453, 0
      %v1535 = vsel %vm400, %v1454, 0
      %v1538 = vsel %vm400, %v1455, 0
      %v1541 = vsel %vm400, %v1456, 0
      %v1544 = vsel %vm400, %v1457, 0
      %v1547 = vsel %vm400, %v1458, 0
      %v1550 = vsel %vm400, %v1459, 0
      %v1553 = vsel %vm400, %v1460, 0
      %v1556 = vsel %vm400, %v1461, 0
      %v1559 = vsel %vm400, %v1462, 0
      %1561 = vmatprep.subr.mxu0 0.0
      %1562 = vmatpush1.msra.mxu0 %v1464
      %1563 = vmatprep.subr.mxu0 0.0
      %1564 = vmatpush1.msra.mxu0 0.0
      %1565 = vmatprep.subr.mxu0 0.0
      %1566 = vmatpush1.msra.mxu0 0.0
      %1567 = vmatprep.subr.mxu0 0.0
      %1568 = vmatpush1.msra.mxu0 0.0
      %1569 = vmatprep.subr.mxu0 0.0
      %1570 = vmatpush1.msra.mxu0 0.0
      %1571 = vmatprep.subr.mxu0 0.0
      %1572 = vmatpush1.msra.mxu0 0.0
      %1573 = vmatprep.subr.mxu0 0.0
      %1574 = vmatpush1.msra.mxu0 0.0
      %1575 = vmatprep.subr.mxu0 0.0
      %1576 = vmatpush1.msra.mxu0 0.0
      %1577 = vmatprep.subr.mxu0 0.0
      %1578 = vmatpush1.msra.mxu0 0.0
      %1579 = vmatprep.subr.mxu0 0.0
      %1580 = vmatpush1.msra.mxu0 0.0
      %1581 = vmatprep.subr.mxu0 0.0
      %1582 = vmatpush1.msra.mxu0 0.0
      %1583 = vmatprep.subr.mxu0 0.0
      %1584 = vmatpush1.msra.mxu0 0.0
      %1585 = vmatprep.subr.mxu0 0.0
      %1586 = vmatpush1.msra.mxu0 0.0
      %1587 = vmatprep.subr.mxu0 0.0
      %1588 = vmatpush1.msra.mxu0 0.0
      %1589 = vmatprep.subr.mxu0 0.0
      %1590 = vmatpush1.msra.mxu0 0.0
      %1591 = vmatprep.subr.mxu0 0.0
      %1592 = vmatpush1.msra.mxu0 0.0
      %1593 = vmatprep.subr.mxu0 0.0
      %1594 = vmatpush1.msra.mxu0 0.0
      %1595 = vmatprep.subr.mxu0 0.0
      %1596 = vmatpush1.msra.mxu0 0.0
      %1597 = vmatprep.subr.mxu0 0.0
      %1598 = vmatpush1.msra.mxu0 0.0
      %1599 = vmatprep.subr.mxu0 0.0
      %1600 = vmatpush1.msra.mxu0 0.0
      %1601 = vmatprep.subr.mxu0 0.0
      %1602 = vmatpush1.msra.mxu0 0.0
      %1603 = vmatprep.subr.mxu0 0.0
      %1604 = vmatpush1.msra.mxu0 0.0
      %1605 = vmatprep.subr.mxu0 0.0
      %1606 = vmatpush1.msra.mxu0 0.0
      %1607 = vmatprep.subr.mxu0 0.0
      %1608 = vmatpush1.msra.mxu0 0.0
      %1609 = vmatprep.subr.mxu0 0.0
      %1610 = vmatpush1.msra.mxu0 0.0
      %1611 = vmatprep.subr.mxu0 0.0
      %1612 = vmatpush1.msra.mxu0 0.0
      %1613 = vmatprep.subr.mxu0 0.0
      %1614 = vmatpush1.msra.mxu0 0.0
      %1615 = vmatprep.subr.mxu0 0.0
      %1616 = vmatpush1.msra.mxu0 0.0
      %1617 = vmatprep.subr.mxu0 0.0
      %1618 = vmatpush1.msra.mxu0 0.0
      %1619 = vmatprep.subr.mxu0 0.0
      %1620 = vmatpush1.msra.mxu0 0.0
      %1621 = vmatprep.subr.mxu0 0.0
      %1622 = vmatpush1.msra.mxu0 0.0
      %1623 = vmatprep.subr.mxu0 0.0
      %1624 = vmatpush1.msra.mxu0 0.0
      %1625 = vmatprep.mubr.f32.mxu0 0.0
      %1626 = vmatmul.mubr.f32.gmra.mrb[0].mxu0 %v1466
      %v1627 = vpop.f32.mrb[0].mxu0
      %v1628 = vadd.f32 0.0, %v1627
      %v1629 = vpop.f32.mrb[0].mxu0
      %1630 = vmatprep.mubr.f32.mxu0 0.0
      %1631 = vmatmul.mubr.f32.gmra.mrb[0].mxu0 %v1469
      %v1632 = vpop.f32.mrb[0].mxu0
      %v1633 = vadd.f32 0.0, %v1632
      %v1634 = vpop.f32.mrb[0].mxu0
      %1635 = vmatprep.mubr.f32.mxu0 0.0
      %1636 = vmatmul.mubr.f32.gmra.mrb[0].mxu0 %v1472
      %v1637 = vpop.f32.mrb[0].mxu0
      %v1638 = vadd.f32 0.0, %v1637
      %v1639 = vpop.f32.mrb[0].mxu0
      %1640 = vmatprep.mubr.f32.mxu0 0.0
      %1641 = vmatmul.mubr.f32.gmra.mrb[0].mxu0 %v1475
      %v1642 = vpop.f32.mrb[0].mxu0
      %v1643 = vadd.f32 0.0, %v1642
      %v1644 = vpop.f32.mrb[0].mxu0
      %1645 = vmatprep.mubr.f32.mxu0 0.0
      %1646 = vmatmul.mubr.f32.gmra.mrb[0].mxu0 %v1478
      %v1647 = vpop.f32.mrb[0].mxu0
      %v1648 = vadd.f32 0.0, %v1647
      %v1649 = vpop.f32.mrb[0].mxu0
      %1650 = vmatprep.mubr.f32.mxu0 0.0
      %1651 = vmatmul.mubr.f32.gmra.mrb[0].mxu0 %v1481
      %v1652 = vpop.f32.mrb[0].mxu0
      %v1653 = vadd.f32 0.0, %v1652
      %v1654 = vpop.f32.mrb[0].mxu0
      %1655 = vmatprep.mubr.f32.mxu0 0.0
      %1656 = vmatmul.mubr.f32.gmra.mrb[0].mxu0 %v1484
      %v1657 = vpop.f32.mrb[0].mxu0
      %v1658 = vadd.f32 0.0, %v1657
      %v1659 = vpop.f32.mrb[0].mxu0
      %1660 = vmatprep.mubr.f32.mxu0 0.0
      %1661 = vmatmul.mubr.f32.gmra.mrb[0].mxu0 %v1487
      %v1662 = vpop.f32.mrb[0].mxu0
      %v1663 = vadd.f32 0.0, %v1662
      %v1664 = vpop.f32.mrb[0].mxu0
      %1665 = vmatprep.mubr.f32.mxu0 0.0
      %1666 = vmatmul.mubr.f32.gmra.mrb[0].mxu0 %v1490
      %v1667 = vpop.f32.mrb[0].mxu0
      %v1668 = vadd.f32 0.0, %v1667
      %v1669 = vpop.f32.mrb[0].mxu0
      %1670 = vmatprep.mubr.f32.mxu0 0.0
      %1671 = vmatmul.mubr.f32.gmra.mrb[0].mxu0 %v1493
      %v1672 = vpop.f32.mrb[0].mxu0
      %v1673 = vadd.f32 0.0, %v1672
      %v1674 = vpop.f32.mrb[0].mxu0
      %1675 = vmatprep.mubr.f32.mxu0 0.0
      %1676 = vmatmul.mubr.f32.gmra.mrb[0].mxu0 %v1496
      %v1677 = vpop.f32.mrb[0].mxu0
      %v1678 = vadd.f32 0.0, %v1677
      %v1679 = vpop.f32.mrb[0].mxu0
      %1680 = vmatprep.mubr.f32.mxu0 0.0
      %1681 = vmatmul.mubr.f32.gmra.mrb[0].mxu0 %v1499
      %v1682 = vpop.f32.mrb[0].mxu0
      %v1683 = vadd.f32 0.0, %v1682
      %v1684 = vpop.f32.mrb[0].mxu0
      %1685 = vmatprep.mubr.f32.mxu0 0.0
      %1686 = vmatmul.mubr.f32.gmra.mrb[0].mxu0 %v1502
      %v1687 = vpop.f32.mrb[0].mxu0
      %v1688 = vadd.f32 0.0, %v1687
      %v1689 = vpop.f32.mrb[0].mxu0
      %1690 = vmatprep.mubr.f32.mxu0 0.0
      %1691 = vmatmul.mubr.f32.gmra.mrb[0].mxu0 %v1505
      %v1692 = vpop.f32.mrb[0].mxu0
      %v1693 = vadd.f32 0.0, %v1692
      %v1694 = vpop.f32.mrb[0].mxu0
      %1695 = vmatprep.mubr.f32.mxu0 0.0
      %1696 = vmatmul.mubr.f32.gmra.mrb[0].mxu0 %v1508
      %v1697 = vpop.f32.mrb[0].mxu0
      %v1698 = vadd.f32 0.0, %v1697
      %v1699 = vpop.f32.mrb[0].mxu0
      %1700 = vmatprep.mubr.f32.mxu0 0.0
      %1701 = vmatmul.mubr.f32.gmra.mrb[0].mxu0 %v1511
      %v1702 = vpop.f32.mrb[0].mxu0
      %v1703 = vadd.f32 0.0, %v1702
      %v1704 = vpop.f32.mrb[0].mxu0
      %1705 = vmatprep.mubr.f32.mxu0 0.0
      %1706 = vmatmul.mubr.f32.gmra.mrb[0].mxu0 %v1514
      %v1707 = vpop.f32.mrb[0].mxu0
      %v1708 = vadd.f32 0.0, %v1707
      %v1709 = vpop.f32.mrb[0].mxu0
      %1710 = vmatprep.mubr.f32.mxu0 0.0
      %1711 = vmatmul.mubr.f32.gmra.mrb[0].mxu0 %v1517
      %v1712 = vpop.f32.mrb[0].mxu0
      %v1713 = vadd.f32 0.0, %v1712
      %v1714 = vpop.f32.mrb[0].mxu0
      %1715 = vmatprep.mubr.f32.mxu0 0.0
      %1716 = vmatmul.mubr.f32.gmra.mrb[0].mxu0 %v1520
      %v1717 = vpop.f32.mrb[0].mxu0
      %v1718 = vadd.f32 0.0, %v1717
      %v1719 = vpop.f32.mrb[0].mxu0
      %1720 = vmatprep.mubr.f32.mxu0 0.0
      %1721 = vmatmul.mubr.f32.gmra.mrb[0].mxu0 %v1523
      %v1722 = vpop.f32.mrb[0].mxu0
      %v1723 = vadd.f32 0.0, %v1722
      %v1724 = vpop.f32.mrb[0].mxu0
      %1725 = vmatprep.mubr.f32.mxu0 0.0
      %1726 = vmatmul.mubr.f32.gmra.mrb[0].mxu0 %v1526
      %v1727 = vpop.f32.mrb[0].mxu0
      %v1728 = vadd.f32 0.0, %v1727
      %v1729 = vpop.f32.mrb[0].mxu0
      %1730 = vmatprep.mubr.f32.mxu0 0.0
      %1731 = vmatmul.mubr.f32.gmra.mrb[0].mxu0 %v1529
      %v1732 = vpop.f32.mrb[0].mxu0
      %v1733 = vadd.f32 0.0, %v1732
      %v1734 = vpop.f32.mrb[0].mxu0
      %1735 = vmatprep.mubr.f32.mxu0 0.0
      %1736 = vmatmul.mubr.f32.gmra.mrb[0].mxu0 %v1532
      %v1737 = vpop.f32.mrb[0].mxu0
      %v1738 = vadd.f32 0.0, %v1737
      %v1739 = vpop.f32.mrb[0].mxu0
      %1740 = vmatprep.mubr.f32.mxu0 0.0
      %1741 = vmatmul.mubr.f32.gmra.mrb[0].mxu0 %v1535
      %v1742 = vpop.f32.mrb[0].mxu0
      %v1743 = vadd.f32 0.0, %v1742
      %v1744 = vpop.f32.mrb[0].mxu0
      %1745 = vmatprep.mubr.f32.mxu0 0.0
      %1746 = vmatmul.mubr.f32.gmra.mrb[0].mxu0 %v1538
      %v1747 = vpop.f32.mrb[0].mxu0
      %v1748 = vadd.f32 0.0, %v1747
      %v1749 = vpop.f32.mrb[0].mxu0
      %1750 = vmatprep.mubr.f32.mxu0 0.0
      %1751 = vmatmul.mubr.f32.gmra.mrb[0].mxu0 %v1541
      %v1752 = vpop.f32.mrb[0].mxu0
      %v1753 = vadd.f32 0.0, %v1752
      %v1754 = vpop.f32.mrb[0].mxu0
      %1755 = vmatprep.mubr.f32.mxu0 0.0
      %1756 = vmatmul.mubr.f32.gmra.mrb[0].mxu0 %v1544
      %v1757 = vpop.f32.mrb[0].mxu0
      %v1758 = vadd.f32 0.0, %v1757
      %v1759 = vpop.f32.mrb[0].mxu0
      %1760 = vmatprep.mubr.f32.mxu0 0.0
      %1761 = vmatmul.mubr.f32.gmra.mrb[0].mxu0 %v1547
      %v1762 = vpop.f32.mrb[0].mxu0
      %v1763 = vadd.f32 0.0, %v1762
      %v1764 = vpop.f32.mrb[0].mxu0
      %1765 = vmatprep.mubr.f32.mxu0 0.0
      %1766 = vmatmul.mubr.f32.gmra.mrb[0].mxu0 %v1550
      %v1767 = vpop.f32.mrb[0].mxu0
      %v1768 = vadd.f32 0.0, %v1767
      %v1769 = vpop.f32.mrb[0].mxu0
      %1770 = vmatprep.mubr.f32.mxu0 0.0
      %1771 = vmatmul.mubr.f32.gmra.mrb[0].mxu0 %v1553
      %v1772 = vpop.f32.mrb[0].mxu0
      %v1773 = vadd.f32 0.0, %v1772
      %v1774 = vpop.f32.mrb[0].mxu0
      %1775 = vmatprep.mubr.f32.mxu0 0.0
      %1776 = vmatmul.mubr.f32.gmra.mrb[0].mxu0 %v1556
      %v1777 = vpop.f32.mrb[0].mxu0
      %v1778 = vadd.f32 0.0, %v1777
      %v1779 = vpop.f32.mrb[0].mxu0
      %1780 = vmatprep.mubr.f32.mxu0 0.0
      %1781 = vmatmul.mubr.f32.gmra.mrb[0].mxu0 %v1559
      %v1782 = vpop.f32.mrb[0].mxu0
      %v1783 = vadd.f32 0.0, %v1782
      %v1784 = vpop.f32.mrb[0].mxu0
      %1785 = vdwg.mxu0
      %v1786 = vadd.f32 %v1398, %v1628
      %v1787 = vadd.f32 %v1399, %v1633
      %v1788 = vadd.f32 %v1400, %v1638
      %v1789 = vadd.f32 %v1401, %v1643
      %v1790 = vadd.f32 %v1402, %v1648
      %v1791 = vadd.f32 %v1403, %v1653
      %v1792 = vadd.f32 %v1404, %v1658
      %v1793 = vadd.f32 %v1405, %v1663
      %v1794 = vadd.f32 %v1406, %v1668
      %v1795 = vadd.f32 %v1407, %v1673
      %v1796 = vadd.f32 %v1408, %v1678
      %v1797 = vadd.f32 %v1409, %v1683
      %v1798 = vadd.f32 %v1410, %v1688
      %v1799 = vadd.f32 %v1411, %v1693
      %v1800 = vadd.f32 %v1412, %v1698
      %v1801 = vadd.f32 %v1413, %v1703
      %v1802 = vadd.f32 %v1414, %v1708
      %v1803 = vadd.f32 %v1415, %v1713
      %v1804 = vadd.f32 %v1416, %v1718
      %v1805 = vadd.f32 %v1417, %v1723
      %v1806 = vadd.f32 %v1418, %v1728
      %v1807 = vadd.f32 %v1419, %v1733
      %v1808 = vadd.f32 %v1420, %v1738
      %v1809 = vadd.f32 %v1421, %v1743
      %v1810 = vadd.f32 %v1422, %v1748
      %v1811 = vadd.f32 %v1423, %v1753
      %v1812 = vadd.f32 %v1424, %v1758
      %v1813 = vadd.f32 %v1425, %v1763
      %v1814 = vadd.f32 %v1426, %v1768
      %v1815 = vadd.f32 %v1427, %v1773
      %v1816 = vadd.f32 %v1428, %v1778
      %v1817 = vadd.f32 %v1429, %v1783
      %v1818 = vld [vmem:[%s1430 + $0x1] sm:$0xff]
      %v1819 = vld [vmem:[%s1430 + $0x9] sm:$0xff]
      %v1820 = vld [vmem:[%s1430 + $0x19] sm:$0xff]
      %v1821 = vld [vmem:[%s1430 + $0x21] sm:$0xff]
      %v1822 = vld [vmem:[%s1430 + $0x31] sm:$0xff]
      %v1823 = vld [vmem:[%s1430 + $0x39] sm:$0xff]
      %v1824 = vld [vmem:[%s1430 + $0x49] sm:$0xff]
      %v1825 = vld [vmem:[%s1430 + $0x51] sm:$0xff]
      %v1826 = vld [vmem:[%s1430 + $0x61] sm:$0xff]
      %v1827 = vld [vmem:[%s1430 + $0x69] sm:$0xff]
      %v1828 = vld [vmem:[%s1430 + $0x79] sm:$0xff]
      %v1829 = vld [vmem:[%s1430 + $0x81] sm:$0xff]
      %v1830 = vld [vmem:[%s1430 + $0x91] sm:$0xff]
      %v1831 = vld [vmem:[%s1430 + $0x99] sm:$0xff]
      %v1832 = vld [vmem:[%s1430 + $0xa9] sm:$0xff]
      %v1833 = vld [vmem:[%s1430 + $0xb1] sm:$0xff]
      %v1834 = vld [vmem:[%s1430 + $0xc1] sm:$0xff]
      %v1835 = vld [vmem:[%s1430 + $0xc9] sm:$0xff]
      %v1836 = vld [vmem:[%s1430 + $0xd9] sm:$0xff]
      %v1837 = vld [vmem:[%s1430 + $0xe1] sm:$0xff]
      %v1838 = vld [vmem:[%s1430 + $0xf1] sm:$0xff]
      %v1839 = vld [vmem:[%s1430 + $0xf9] sm:$0xff]
      %v1840 = vld [vmem:[%s1430 + $0x109] sm:$0xff]
      %v1841 = vld [vmem:[%s1430 + $0x111] sm:$0xff]
      %v1842 = vld [vmem:[%s1430 + $0x121] sm:$0xff]
      %v1843 = vld [vmem:[%s1430 + $0x129] sm:$0xff]
      %v1844 = vld [vmem:[%s1430 + $0x139] sm:$0xff]
      %v1845 = vld [vmem:[%s1430 + $0x141] sm:$0xff]
      %v1846 = vld [vmem:[%s1430 + $0x151] sm:$0xff]
      %v1847 = vld [vmem:[%s1430 + $0x159] sm:$0xff]
      %v1848 = vld [vmem:[%s1430 + $0x169] sm:$0xff]
      %v1849 = vld [vmem:[%s1430 + $0x171] sm:$0xff]
      %s1850 = scalar_lea.vmem %s1, 32
      %v1851 = vld [vmem:[%s1850] sm:$0xff]
      %v1853 = vsel %vm400, %v1818, 0
      %v1856 = vsel %vm400, %v1819, 0
      %v1859 = vsel %vm400, %v1820, 0
      %v1862 = vsel %vm400, %v1821, 0
      %v1865 = vsel %vm400, %v1822, 0
      %v1868 = vsel %vm400, %v1823, 0
      %v1871 = vsel %vm400, %v1824, 0
      %v1874 = vsel %vm400, %v1825, 0
      %v1877 = vsel %vm400, %v1826, 0
      %v1880 = vsel %vm400, %v1827, 0
      %v1883 = vsel %vm400, %v1828, 0
      %v1886 = vsel %vm400, %v1829, 0
      %v1889 = vsel %vm400, %v1830, 0
      %v1892 = vsel %vm400, %v1831, 0
      %v1895 = vsel %vm400, %v1832, 0
      %v1898 = vsel %vm400, %v1833, 0
      %v1901 = vsel %vm400, %v1834, 0
      %v1904 = vsel %vm400, %v1835, 0
      %v1907 = vsel %vm400, %v1836, 0
      %v1910 = vsel %vm400, %v1837, 0
      %v1913 = vsel %vm400, %v1838, 0
      %v1916 = vsel %vm400, %v1839, 0
      %v1919 = vsel %vm400, %v1840, 0
      %v1922 = vsel %vm400, %v1841, 0
      %v1925 = vsel %vm400, %v1842, 0
      %v1928 = vsel %vm400, %v1843, 0
      %v1931 = vsel %vm400, %v1844, 0
      %v1934 = vsel %vm400, %v1845, 0
      %v1937 = vsel %vm400, %v1846, 0
      %v1940 = vsel %vm400, %v1847, 0
      %v1943 = vsel %vm400, %v1848, 0
      %v1946 = vsel %vm400, %v1849, 0
      %1948 = vmatprep.subr.mxu0 0.0
      %1949 = vmatpush1.msra.mxu0 %v1851
      %1950 = vmatprep.subr.mxu0 0.0
      %1951 = vmatpush1.msra.mxu0 0.0
      %1952 = vmatprep.subr.mxu0 0.0
      %1953 = vmatpush1.msra.mxu0 0.0
      %1954 = vmatprep.subr.mxu0 0.0
      %1955 = vmatpush1.msra.mxu0 0.0
      %1956 = vmatprep.subr.mxu0 0.0
      %1957 = vmatpush1.msra.mxu0 0.0
      %1958 = vmatprep.subr.mxu0 0.0
      %1959 = vmatpush1.msra.mxu0 0.0
      %1960 = vmatprep.subr.mxu0 0.0
      %1961 = vmatpush1.msra.mxu0 0.0
      %1962 = vmatprep.subr.mxu0 0.0
      %1963 = vmatpush1.msra.mxu0 0.0
      %1964 = vmatprep.subr.mxu0 0.0
      %1965 = vmatpush1.msra.mxu0 0.0
      %1966 = vmatprep.subr.mxu0 0.0
      %1967 = vmatpush1.msra.mxu0 0.0
      %1968 = vmatprep.subr.mxu0 0.0
      %1969 = vmatpush1.msra.mxu0 0.0
      %1970 = vmatprep.subr.mxu0 0.0
      %1971 = vmatpush1.msra.mxu0 0.0
      %1972 = vmatprep.subr.mxu0 0.0
      %1973 = vmatpush1.msra.mxu0 0.0
      %1974 = vmatprep.subr.mxu0 0.0
      %1975 = vmatpush1.msra.mxu0 0.0
      %1976 = vmatprep.subr.mxu0 0.0
      %1977 = vmatpush1.msra.mxu0 0.0
      %1978 = vmatprep.subr.mxu0 0.0
      %1979 = vmatpush1.msra.mxu0 0.0
      %1980 = vmatprep.subr.mxu0 0.0
      %1981 = vmatpush1.msra.mxu0 0.0
      %1982 = vmatprep.subr.mxu0 0.0
      %1983 = vmatpush1.msra.mxu0 0.0
      %1984 = vmatprep.subr.mxu0 0.0
      %1985 = vmatpush1.msra.mxu0 0.0
      %1986 = vmatprep.subr.mxu0 0.0
      %1987 = vmatpush1.msra.mxu0 0.0
      %1988 = vmatprep.subr.mxu0 0.0
      %1989 = vmatpush1.msra.mxu0 0.0
      %1990 = vmatprep.subr.mxu0 0.0
      %1991 = vmatpush1.msra.mxu0 0.0
      %1992 = vmatprep.subr.mxu0 0.0
      %1993 = vmatpush1.msra.mxu0 0.0
      %1994 = vmatprep.subr.mxu0 0.0
      %1995 = vmatpush1.msra.mxu0 0.0
      %1996 = vmatprep.subr.mxu0 0.0
      %1997 = vmatpush1.msra.mxu0 0.0
      %1998 = vmatprep.subr.mxu0 0.0
      %1999 = vmatpush1.msra.mxu0 0.0
      %2000 = vmatprep.subr.mxu0 0.0
      %2001 = vmatpush1.msra.mxu0 0.0
      %2002 = vmatprep.subr.mxu0 0.0
      %2003 = vmatpush1.msra.mxu0 0.0
      %2004 = vmatprep.subr.mxu0 0.0
      %2005 = vmatpush1.msra.mxu0 0.0
      %2006 = vmatprep.subr.mxu0 0.0
      %2007 = vmatpush1.msra.mxu0 0.0
      %2008 = vmatprep.subr.mxu0 0.0
      %2009 = vmatpush1.msra.mxu0 0.0
      %2010 = vmatprep.subr.mxu0 0.0
      %2011 = vmatpush1.msra.mxu0 0.0
      %2012 = vmatprep.mubr.f32.mxu0 0.0
      %2013 = vmatmul.mubr.f32.gmra.mrb[0].mxu0 %v1853
      %v2014 = vpop.f32.mrb[0].mxu0
      %v2015 = vadd.f32 0.0, %v2014
      %v2016 = vpop.f32.mrb[0].mxu0
      %2017 = vmatprep.mubr.f32.mxu0 0.0
      %2018 = vmatmul.mubr.f32.gmra.mrb[0].mxu0 %v1856
      %v2019 = vpop.f32.mrb[0].mxu0
      %v2020 = vadd.f32 0.0, %v2019
      %v2021 = vpop.f32.mrb[0].mxu0
      %2022 = vmatprep.mubr.f32.mxu0 0.0
      %2023 = vmatmul.mubr.f32.gmra.mrb[0].mxu0 %v1859
      %v2024 = vpop.f32.mrb[0].mxu0
      %v2025 = vadd.f32 0.0, %v2024
      %v2026 = vpop.f32.mrb[0].mxu0
      %2027 = vmatprep.mubr.f32.mxu0 0.0
      %2028 = vmatmul.mubr.f32.gmra.mrb[0].mxu0 %v1862
      %v2029 = vpop.f32.mrb[0].mxu0
      %v2030 = vadd.f32 0.0, %v2029
      %v2031 = vpop.f32.mrb[0].mxu0
      %2032 = vmatprep.mubr.f32.mxu0 0.0
      %2033 = vmatmul.mubr.f32.gmra.mrb[0].mxu0 %v1865
      %v2034 = vpop.f32.mrb[0].mxu0
      %v2035 = vadd.f32 0.0, %v2034
      %v2036 = vpop.f32.mrb[0].mxu0
      %2037 = vmatprep.mubr.f32.mxu0 0.0
      %2038 = vmatmul.mubr.f32.gmra.mrb[0].mxu0 %v1868
      %v2039 = vpop.f32.mrb[0].mxu0
      %v2040 = vadd.f32 0.0, %v2039
      %v2041 = vpop.f32.mrb[0].mxu0
      %2042 = vmatprep.mubr.f32.mxu0 0.0
      %2043 = vmatmul.mubr.f32.gmra.mrb[0].mxu0 %v1871
      %v2044 = vpop.f32.mrb[0].mxu0
      %v2045 = vadd.f32 0.0, %v2044
      %v2046 = vpop.f32.mrb[0].mxu0
      %2047 = vmatprep.mubr.f32.mxu0 0.0
      %2048 = vmatmul.mubr.f32.gmra.mrb[0].mxu0 %v1874
      %v2049 = vpop.f32.mrb[0].mxu0
      %v2050 = vadd.f32 0.0, %v2049
      %v2051 = vpop.f32.mrb[0].mxu0
      %2052 = vmatprep.mubr.f32.mxu0 0.0
      %2053 = vmatmul.mubr.f32.gmra.mrb[0].mxu0 %v1877
      %v2054 = vpop.f32.mrb[0].mxu0
      %v2055 = vadd.f32 0.0, %v2054
      %v2056 = vpop.f32.mrb[0].mxu0
      %2057 = vmatprep.mubr.f32.mxu0 0.0
      %2058 = vmatmul.mubr.f32.gmra.mrb[0].mxu0 %v1880
      %v2059 = vpop.f32.mrb[0].mxu0
      %v2060 = vadd.f32 0.0, %v2059
      %v2061 = vpop.f32.mrb[0].mxu0
      %2062 = vmatprep.mubr.f32.mxu0 0.0
      %2063 = vmatmul.mubr.f32.gmra.mrb[0].mxu0 %v1883
      %v2064 = vpop.f32.mrb[0].mxu0
      %v2065 = vadd.f32 0.0, %v2064
      %v2066 = vpop.f32.mrb[0].mxu0
      %2067 = vmatprep.mubr.f32.mxu0 0.0
      %2068 = vmatmul.mubr.f32.gmra.mrb[0].mxu0 %v1886
      %v2069 = vpop.f32.mrb[0].mxu0
      %v2070 = vadd.f32 0.0, %v2069
      %v2071 = vpop.f32.mrb[0].mxu0
      %2072 = vmatprep.mubr.f32.mxu0 0.0
      %2073 = vmatmul.mubr.f32.gmra.mrb[0].mxu0 %v1889
      %v2074 = vpop.f32.mrb[0].mxu0
      %v2075 = vadd.f32 0.0, %v2074
      %v2076 = vpop.f32.mrb[0].mxu0
      %2077 = vmatprep.mubr.f32.mxu0 0.0
      %2078 = vmatmul.mubr.f32.gmra.mrb[0].mxu0 %v1892
      %v2079 = vpop.f32.mrb[0].mxu0
      %v2080 = vadd.f32 0.0, %v2079
      %v2081 = vpop.f32.mrb[0].mxu0
      %2082 = vmatprep.mubr.f32.mxu0 0.0
      %2083 = vmatmul.mubr.f32.gmra.mrb[0].mxu0 %v1895
      %v2084 = vpop.f32.mrb[0].mxu0
      %v2085 = vadd.f32 0.0, %v2084
      %v2086 = vpop.f32.mrb[0].mxu0
      %2087 = vmatprep.mubr.f32.mxu0 0.0
      %2088 = vmatmul.mubr.f32.gmra.mrb[0].mxu0 %v1898
      %v2089 = vpop.f32.mrb[0].mxu0
      %v2090 = vadd.f32 0.0, %v2089
      %v2091 = vpop.f32.mrb[0].mxu0
      %2092 = vmatprep.mubr.f32.mxu0 0.0
      %2093 = vmatmul.mubr.f32.gmra.mrb[0].mxu0 %v1901
      %v2094 = vpop.f32.mrb[0].mxu0
      %v2095 = vadd.f32 0.0, %v2094
      %v2096 = vpop.f32.mrb[0].mxu0
      %2097 = vmatprep.mubr.f32.mxu0 0.0
      %2098 = vmatmul.mubr.f32.gmra.mrb[0].mxu0 %v1904
      %v2099 = vpop.f32.mrb[0].mxu0
      %v2100 = vadd.f32 0.0, %v2099
      %v2101 = vpop.f32.mrb[0].mxu0
      %2102 = vmatprep.mubr.f32.mxu0 0.0
      %2103 = vmatmul.mubr.f32.gmra.mrb[0].mxu0 %v1907
      %v2104 = vpop.f32.mrb[0].mxu0
      %v2105 = vadd.f32 0.0, %v2104
      %v2106 = vpop.f32.mrb[0].mxu0
      %2107 = vmatprep.mubr.f32.mxu0 0.0
      %2108 = vmatmul.mubr.f32.gmra.mrb[0].mxu0 %v1910
      %v2109 = vpop.f32.mrb[0].mxu0
      %v2110 = vadd.f32 0.0, %v2109
      %v2111 = vpop.f32.mrb[0].mxu0
      %2112 = vmatprep.mubr.f32.mxu0 0.0
      %2113 = vmatmul.mubr.f32.gmra.mrb[0].mxu0 %v1913
      %v2114 = vpop.f32.mrb[0].mxu0
      %v2115 = vadd.f32 0.0, %v2114
      %v2116 = vpop.f32.mrb[0].mxu0
      %2117 = vmatprep.mubr.f32.mxu0 0.0
      %2118 = vmatmul.mubr.f32.gmra.mrb[0].mxu0 %v1916
      %v2119 = vpop.f32.mrb[0].mxu0
      %v2120 = vadd.f32 0.0, %v2119
      %v2121 = vpop.f32.mrb[0].mxu0
      %2122 = vmatprep.mubr.f32.mxu0 0.0
      %2123 = vmatmul.mubr.f32.gmra.mrb[0].mxu0 %v1919
      %v2124 = vpop.f32.mrb[0].mxu0
      %v2125 = vadd.f32 0.0, %v2124
      %v2126 = vpop.f32.mrb[0].mxu0
      %2127 = vmatprep.mubr.f32.mxu0 0.0
      %2128 = vmatmul.mubr.f32.gmra.mrb[0].mxu0 %v1922
      %v2129 = vpop.f32.mrb[0].mxu0
      %v2130 = vadd.f32 0.0, %v2129
      %v2131 = vpop.f32.mrb[0].mxu0
      %2132 = vmatprep.mubr.f32.mxu0 0.0
      %2133 = vmatmul.mubr.f32.gmra.mrb[0].mxu0 %v1925
      %v2134 = vpop.f32.mrb[0].mxu0
      %v2135 = vadd.f32 0.0, %v2134
      %v2136 = vpop.f32.mrb[0].mxu0
      %2137 = vmatprep.mubr.f32.mxu0 0.0
      %2138 = vmatmul.mubr.f32.gmra.mrb[0].mxu0 %v1928
      %v2139 = vpop.f32.mrb[0].mxu0
      %v2140 = vadd.f32 0.0, %v2139
      %v2141 = vpop.f32.mrb[0].mxu0
      %2142 = vmatprep.mubr.f32.mxu0 0.0
      %2143 = vmatmul.mubr.f32.gmra.mrb[0].mxu0 %v1931
      %v2144 = vpop.f32.mrb[0].mxu0
      %v2145 = vadd.f32 0.0, %v2144
      %v2146 = vpop.f32.mrb[0].mxu0
      %2147 = vmatprep.mubr.f32.mxu0 0.0
      %2148 = vmatmul.mubr.f32.gmra.mrb[0].mxu0 %v1934
      %v2149 = vpop.f32.mrb[0].mxu0
      %v2150 = vadd.f32 0.0, %v2149
      %v2151 = vpop.f32.mrb[0].mxu0
      %2152 = vmatprep.mubr.f32.mxu0 0.0
      %2153 = vmatmul.mubr.f32.gmra.mrb[0].mxu0 %v1937
      %v2154 = vpop.f32.mrb[0].mxu0
      %v2155 = vadd.f32 0.0, %v2154
      %v2156 = vpop.f32.mrb[0].mxu0
      %2157 = vmatprep.mubr.f32.mxu0 0.0
      %2158 = vmatmul.mubr.f32.gmra.mrb[0].mxu0 %v1940
      %v2159 = vpop.f32.mrb[0].mxu0
      %v2160 = vadd.f32 0.0, %v2159
      %v2161 = vpop.f32.mrb[0].mxu0
      %2162 = vmatprep.mubr.f32.mxu0 0.0
      %2163 = vmatmul.mubr.f32.gmra.mrb[0].mxu0 %v1943
      %v2164 = vpop.f32.mrb[0].mxu0
      %v2165 = vadd.f32 0.0, %v2164
      %v2166 = vpop.f32.mrb[0].mxu0
      %2167 = vmatprep.mubr.f32.mxu0 0.0
      %2168 = vmatmul.mubr.f32.gmra.mrb[0].mxu0 %v1946
      %v2169 = vpop.f32.mrb[0].mxu0
      %v2170 = vadd.f32 0.0, %v2169
      %v2171 = vpop.f32.mrb[0].mxu0
      %2172 = vdwg.mxu0
      %v2173 = vadd.f32 %v1786, %v2015
      %v2174 = vadd.f32 %v1787, %v2020
      %v2175 = vadd.f32 %v1788, %v2025
      %v2176 = vadd.f32 %v1789, %v2030
      %v2177 = vadd.f32 %v1790, %v2035
      %v2178 = vadd.f32 %v1791, %v2040
      %v2179 = vadd.f32 %v1792, %v2045
      %v2180 = vadd.f32 %v1793, %v2050
      %v2181 = vadd.f32 %v1794, %v2055
      %v2182 = vadd.f32 %v1795, %v2060
      %v2183 = vadd.f32 %v1796, %v2065
      %v2184 = vadd.f32 %v1797, %v2070
      %v2185 = vadd.f32 %v1798, %v2075
      %v2186 = vadd.f32 %v1799, %v2080
      %v2187 = vadd.f32 %v1800, %v2085
      %v2188 = vadd.f32 %v1801, %v2090
      %v2189 = vadd.f32 %v1802, %v2095
      %v2190 = vadd.f32 %v1803, %v2100
      %v2191 = vadd.f32 %v1804, %v2105
      %v2192 = vadd.f32 %v1805, %v2110
      %v2193 = vadd.f32 %v1806, %v2115
      %v2194 = vadd.f32 %v1807, %v2120
      %v2195 = vadd.f32 %v1808, %v2125
      %v2196 = vadd.f32 %v1809, %v2130
      %v2197 = vadd.f32 %v1810, %v2135
      %v2198 = vadd.f32 %v1811, %v2140
      %v2199 = vadd.f32 %v1812, %v2145
      %v2200 = vadd.f32 %v1813, %v2150
      %v2201 = vadd.f32 %v1814, %v2155
      %v2202 = vadd.f32 %v1815, %v2160
      %v2203 = vadd.f32 %v1816, %v2165
      %v2204 = vadd.f32 %v1817, %v2170
      %v2205 = vld [vmem:[%s1430 + $0x2] sm:$0xff]
      %v2206 = vld [vmem:[%s1430 + $0xa] sm:$0xff]
      %v2207 = vld [vmem:[%s1430 + $0x1a] sm:$0xff]
      %v2208 = vld [vmem:[%s1430 + $0x22] sm:$0xff]
      %v2209 = vld [vmem:[%s1430 + $0x32] sm:$0xff]
      %v2210 = vld [vmem:[%s1430 + $0x3a] sm:$0xff]
      %v2211 = vld [vmem:[%s1430 + $0x4a] sm:$0xff]
      %v2212 = vld [vmem:[%s1430 + $0x52] sm:$0xff]
      %v2213 = vld [vmem:[%s1430 + $0x62] sm:$0xff]
      %v2214 = vld [vmem:[%s1430 + $0x6a] sm:$0xff]
      %v2215 = vld [vmem:[%s1430 + $0x7a] sm:$0xff]
      %v2216 = vld [vmem:[%s1430 + $0x82] sm:$0xff]
      %v2217 = vld [vmem:[%s1430 + $0x92] sm:$0xff]
      %v2218 = vld [vmem:[%s1430 + $0x9a] sm:$0xff]
      %v2219 = vld [vmem:[%s1430 + $0xaa] sm:$0xff]
      %v2220 = vld [vmem:[%s1430 + $0xb2] sm:$0xff]
      %v2221 = vld [vmem:[%s1430 + $0xc2] sm:$0xff]
      %v2222 = vld [vmem:[%s1430 + $0xca] sm:$0xff]
      %v2223 = vld [vmem:[%s1430 + $0xda] sm:$0xff]
      %v2224 = vld [vmem:[%s1430 + $0xe2] sm:$0xff]
      %v2225 = vld [vmem:[%s1430 + $0xf2] sm:$0xff]
      %v2226 = vld [vmem:[%s1430 + $0xfa] sm:$0xff]
      %v2227 = vld [vmem:[%s1430 + $0x10a] sm:$0xff]
      %v2228 = vld [vmem:[%s1430 + $0x112] sm:$0xff]
      %v2229 = vld [vmem:[%s1430 + $0x122] sm:$0xff]
      %v2230 = vld [vmem:[%s1430 + $0x12a] sm:$0xff]
      %v2231 = vld [vmem:[%s1430 + $0x13a] sm:$0xff]
      %v2232 = vld [vmem:[%s1430 + $0x142] sm:$0xff]
      %v2233 = vld [vmem:[%s1430 + $0x152] sm:$0xff]
      %v2234 = vld [vmem:[%s1430 + $0x15a] sm:$0xff]
      %v2235 = vld [vmem:[%s1430 + $0x16a] sm:$0xff]
      %v2236 = vld [vmem:[%s1430 + $0x172] sm:$0xff]
      %s2237 = scalar_lea.vmem %s1, 40
      %v2238 = vld [vmem:[%s2237] sm:$0xff]
      %v2240 = vsel %vm400, %v2205, 0
      %v2243 = vsel %vm400, %v2206, 0
      %v2246 = vsel %vm400, %v2207, 0
      %v2249 = vsel %vm400, %v2208, 0
      %v2252 = vsel %vm400, %v2209, 0
      %v2255 = vsel %vm400, %v2210, 0
      %v2258 = vsel %vm400, %v2211, 0
      %v2261 = vsel %vm400, %v2212, 0
      %v2264 = vsel %vm400, %v2213, 0
      %v2267 = vsel %vm400, %v2214, 0
      %v2270 = vsel %vm400, %v2215, 0
      %v2273 = vsel %vm400, %v2216, 0
      %v2276 = vsel %vm400, %v2217, 0
      %v2279 = vsel %vm400, %v2218, 0
      %v2282 = vsel %vm400, %v2219, 0
      %v2285 = vsel %vm400, %v2220, 0
      %v2288 = vsel %vm400, %v2221, 0
      %v2291 = vsel %vm400, %v2222, 0
      %v2294 = vsel %vm400, %v2223, 0
      %v2297 = vsel %vm400, %v2224, 0
      %v2300 = vsel %vm400, %v2225, 0
      %v2303 = vsel %vm400, %v2226, 0
      %v2306 = vsel %vm400, %v2227, 0
      %v2309 = vsel %vm400, %v2228, 0
      %v2312 = vsel %vm400, %v2229, 0
      %v2315 = vsel %vm400, %v2230, 0
      %v2318 = vsel %vm400, %v2231, 0
      %v2321 = vsel %vm400, %v2232, 0
      %v2324 = vsel %vm400, %v2233, 0
      %v2327 = vsel %vm400, %v2234, 0
      %v2330 = vsel %vm400, %v2235, 0
      %v2333 = vsel %vm400, %v2236, 0
      %2335 = vmatprep.subr.mxu0 0.0
      %2336 = vmatpush1.msra.mxu0 %v2238
      %2337 = vmatprep.subr.mxu0 0.0
      %2338 = vmatpush1.msra.mxu0 0.0
      %2339 = vmatprep.subr.mxu0 0.0
      %2340 = vmatpush1.msra.mxu0 0.0
      %2341 = vmatprep.subr.mxu0 0.0
      %2342 = vmatpush1.msra.mxu0 0.0
      %2343 = vmatprep.subr.mxu0 0.0
      %2344 = vmatpush1.msra.mxu0 0.0
      %2345 = vmatprep.subr.mxu0 0.0
      %2346 = vmatpush1.msra.mxu0 0.0
      %2347 = vmatprep.subr.mxu0 0.0
      %2348 = vmatpush1.msra.mxu0 0.0
      %2349 = vmatprep.subr.mxu0 0.0
      %2350 = vmatpush1.msra.mxu0 0.0
      %2351 = vmatprep.subr.mxu0 0.0
      %2352 = vmatpush1.msra.mxu0 0.0
      %2353 = vmatprep.subr.mxu0 0.0
      %2354 = vmatpush1.msra.mxu0 0.0
      %2355 = vmatprep.subr.mxu0 0.0
      %2356 = vmatpush1.msra.mxu0 0.0
      %2357 = vmatprep.subr.mxu0 0.0
      %2358 = vmatpush1.msra.mxu0 0.0
      %2359 = vmatprep.subr.mxu0 0.0
      %2360 = vmatpush1.msra.mxu0 0.0
      %2361 = vmatprep.subr.mxu0 0.0
      %2362 = vmatpush1.msra.mxu0 0.0
      %2363 = vmatprep.subr.mxu0 0.0
      %2364 = vmatpush1.msra.mxu0 0.0
      %2365 = vmatprep.subr.mxu0 0.0
      %2366 = vmatpush1.msra.mxu0 0.0
      %2367 = vmatprep.subr.mxu0 0.0
      %2368 = vmatpush1.msra.mxu0 0.0
      %2369 = vmatprep.subr.mxu0 0.0
      %2370 = vmatpush1.msra.mxu0 0.0
      %2371 = vmatprep.subr.mxu0 0.0
      %2372 = vmatpush1.msra.mxu0 0.0
      %2373 = vmatprep.subr.mxu0 0.0
      %2374 = vmatpush1.msra.mxu0 0.0
      %2375 = vmatprep.subr.mxu0 0.0
      %2376 = vmatpush1.msra.mxu0 0.0
      %2377 = vmatprep.subr.mxu0 0.0
      %2378 = vmatpush1.msra.mxu0 0.0
      %2379 = vmatprep.subr.mxu0 0.0
      %2380 = vmatpush1.msra.mxu0 0.0
      %2381 = vmatprep.subr.mxu0 0.0
      %2382 = vmatpush1.msra.mxu0 0.0
      %2383 = vmatprep.subr.mxu0 0.0
      %2384 = vmatpush1.msra.mxu0 0.0
      %2385 = vmatprep.subr.mxu0 0.0
      %2386 = vmatpush1.msra.mxu0 0.0
      %2387 = vmatprep.subr.mxu0 0.0
      %2388 = vmatpush1.msra.mxu0 0.0
      %2389 = vmatprep.subr.mxu0 0.0
      %2390 = vmatpush1.msra.mxu0 0.0
      %2391 = vmatprep.subr.mxu0 0.0
      %2392 = vmatpush1.msra.mxu0 0.0
      %2393 = vmatprep.subr.mxu0 0.0
      %2394 = vmatpush1.msra.mxu0 0.0
      %2395 = vmatprep.subr.mxu0 0.0
      %2396 = vmatpush1.msra.mxu0 0.0
      %2397 = vmatprep.subr.mxu0 0.0
      %2398 = vmatpush1.msra.mxu0 0.0
      %2399 = vmatprep.mubr.f32.mxu0 0.0
      %2400 = vmatmul.mubr.f32.gmra.mrb[0].mxu0 %v2240
      %v2401 = vpop.f32.mrb[0].mxu0
      %v2402 = vadd.f32 0.0, %v2401
      %v2403 = vpop.f32.mrb[0].mxu0
      %2404 = vmatprep.mubr.f32.mxu0 0.0
      %2405 = vmatmul.mubr.f32.gmra.mrb[0].mxu0 %v2243
      %v2406 = vpop.f32.mrb[0].mxu0
      %v2407 = vadd.f32 0.0, %v2406
      %v2408 = vpop.f32.mrb[0].mxu0
      %2409 = vmatprep.mubr.f32.mxu0 0.0
      %2410 = vmatmul.mubr.f32.gmra.mrb[0].mxu0 %v2246
      %v2411 = vpop.f32.mrb[0].mxu0
      %v2412 = vadd.f32 0.0, %v2411
      %v2413 = vpop.f32.mrb[0].mxu0
      %2414 = vmatprep.mubr.f32.mxu0 0.0
      %2415 = vmatmul.mubr.f32.gmra.mrb[0].mxu0 %v2249
      %v2416 = vpop.f32.mrb[0].mxu0
      %v2417 = vadd.f32 0.0, %v2416
      %v2418 = vpop.f32.mrb[0].mxu0
      %2419 = vmatprep.mubr.f32.mxu0 0.0
      %2420 = vmatmul.mubr.f32.gmra.mrb[0].mxu0 %v2252
      %v2421 = vpop.f32.mrb[0].mxu0
      %v2422 = vadd.f32 0.0, %v2421
      %v2423 = vpop.f32.mrb[0].mxu0
      %2424 = vmatprep.mubr.f32.mxu0 0.0
      %2425 = vmatmul.mubr.f32.gmra.mrb[0].mxu0 %v2255
      %v2426 = vpop.f32.mrb[0].mxu0
      %v2427 = vadd.f32 0.0, %v2426
      %v2428 = vpop.f32.mrb[0].mxu0
      %2429 = vmatprep.mubr.f32.mxu0 0.0
      %2430 = vmatmul.mubr.f32.gmra.mrb[0].mxu0 %v2258
      %v2431 = vpop.f32.mrb[0].mxu0
      %v2432 = vadd.f32 0.0, %v2431
      %v2433 = vpop.f32.mrb[0].mxu0
      %2434 = vmatprep.mubr.f32.mxu0 0.0
      %2435 = vmatmul.mubr.f32.gmra.mrb[0].mxu0 %v2261
      %v2436 = vpop.f32.mrb[0].mxu0
      %v2437 = vadd.f32 0.0, %v2436
      %v2438 = vpop.f32.mrb[0].mxu0
      %2439 = vmatprep.mubr.f32.mxu0 0.0
      %2440 = vmatmul.mubr.f32.gmra.mrb[0].mxu0 %v2264
      %v2441 = vpop.f32.mrb[0].mxu0
      %v2442 = vadd.f32 0.0, %v2441
      %v2443 = vpop.f32.mrb[0].mxu0
      %2444 = vmatprep.mubr.f32.mxu0 0.0
      %2445 = vmatmul.mubr.f32.gmra.mrb[0].mxu0 %v2267
      %v2446 = vpop.f32.mrb[0].mxu0
      %v2447 = vadd.f32 0.0, %v2446
      %v2448 = vpop.f32.mrb[0].mxu0
      %2449 = vmatprep.mubr.f32.mxu0 0.0
      %2450 = vmatmul.mubr.f32.gmra.mrb[0].mxu0 %v2270
      %v2451 = vpop.f32.mrb[0].mxu0
      %v2452 = vadd.f32 0.0, %v2451
      %v2453 = vpop.f32.mrb[0].mxu0
      %2454 = vmatprep.mubr.f32.mxu0 0.0
      %2455 = vmatmul.mubr.f32.gmra.mrb[0].mxu0 %v2273
      %v2456 = vpop.f32.mrb[0].mxu0
      %v2457 = vadd.f32 0.0, %v2456
      %v2458 = vpop.f32.mrb[0].mxu0
      %2459 = vmatprep.mubr.f32.mxu0 0.0
      %2460 = vmatmul.mubr.f32.gmra.mrb[0].mxu0 %v2276
      %v2461 = vpop.f32.mrb[0].mxu0
      %v2462 = vadd.f32 0.0, %v2461
      %v2463 = vpop.f32.mrb[0].mxu0
      %2464 = vmatprep.mubr.f32.mxu0 0.0
      %2465 = vmatmul.mubr.f32.gmra.mrb[0].mxu0 %v2279
      %v2466 = vpop.f32.mrb[0].mxu0
      %v2467 = vadd.f32 0.0, %v2466
      %v2468 = vpop.f32.mrb[0].mxu0
      %2469 = vmatprep.mubr.f32.mxu0 0.0
      %2470 = vmatmul.mubr.f32.gmra.mrb[0].mxu0 %v2282
      %v2471 = vpop.f32.mrb[0].mxu0
      %v2472 = vadd.f32 0.0, %v2471
      %v2473 = vpop.f32.mrb[0].mxu0
      %2474 = vmatprep.mubr.f32.mxu0 0.0
      %2475 = vmatmul.mubr.f32.gmra.mrb[0].mxu0 %v2285
      %v2476 = vpop.f32.mrb[0].mxu0
      %v2477 = vadd.f32 0.0, %v2476
      %v2478 = vpop.f32.mrb[0].mxu0
      %2479 = vmatprep.mubr.f32.mxu0 0.0
      %2480 = vmatmul.mubr.f32.gmra.mrb[0].mxu0 %v2288
      %v2481 = vpop.f32.mrb[0].mxu0
      %v2482 = vadd.f32 0.0, %v2481
      %v2483 = vpop.f32.mrb[0].mxu0
      %2484 = vmatprep.mubr.f32.mxu0 0.0
      %2485 = vmatmul.mubr.f32.gmra.mrb[0].mxu0 %v2291
      %v2486 = vpop.f32.mrb[0].mxu0
      %v2487 = vadd.f32 0.0, %v2486
      %v2488 = vpop.f32.mrb[0].mxu0
      %2489 = vmatprep.mubr.f32.mxu0 0.0
      %2490 = vmatmul.mubr.f32.gmra.mrb[0].mxu0 %v2294
      %v2491 = vpop.f32.mrb[0].mxu0
      %v2492 = vadd.f32 0.0, %v2491
      %v2493 = vpop.f32.mrb[0].mxu0
      %2494 = vmatprep.mubr.f32.mxu0 0.0
      %2495 = vmatmul.mubr.f32.gmra.mrb[0].mxu0 %v2297
      %v2496 = vpop.f32.mrb[0].mxu0
      %v2497 = vadd.f32 0.0, %v2496
      %v2498 = vpop.f32.mrb[0].mxu0
      %2499 = vmatprep.mubr.f32.mxu0 0.0
      %2500 = vmatmul.mubr.f32.gmra.mrb[0].mxu0 %v2300
      %v2501 = vpop.f32.mrb[0].mxu0
      %v2502 = vadd.f32 0.0, %v2501
      %v2503 = vpop.f32.mrb[0].mxu0
      %2504 = vmatprep.mubr.f32.mxu0 0.0
      %2505 = vmatmul.mubr.f32.gmra.mrb[0].mxu0 %v2303
      %v2506 = vpop.f32.mrb[0].mxu0
      %v2507 = vadd.f32 0.0, %v2506
      %v2508 = vpop.f32.mrb[0].mxu0
      %2509 = vmatprep.mubr.f32.mxu0 0.0
      %2510 = vmatmul.mubr.f32.gmra.mrb[0].mxu0 %v2306
      %v2511 = vpop.f32.mrb[0].mxu0
      %v2512 = vadd.f32 0.0, %v2511
      %v2513 = vpop.f32.mrb[0].mxu0
      %2514 = vmatprep.mubr.f32.mxu0 0.0
      %2515 = vmatmul.mubr.f32.gmra.mrb[0].mxu0 %v2309
      %v2516 = vpop.f32.mrb[0].mxu0
      %v2517 = vadd.f32 0.0, %v2516
      %v2518 = vpop.f32.mrb[0].mxu0
      %2519 = vmatprep.mubr.f32.mxu0 0.0
      %2520 = vmatmul.mubr.f32.gmra.mrb[0].mxu0 %v2312
      %v2521 = vpop.f32.mrb[0].mxu0
      %v2522 = vadd.f32 0.0, %v2521
      %v2523 = vpop.f32.mrb[0].mxu0
      %2524 = vmatprep.mubr.f32.mxu0 0.0
      %2525 = vmatmul.mubr.f32.gmra.mrb[0].mxu0 %v2315
      %v2526 = vpop.f32.mrb[0].mxu0
      %v2527 = vadd.f32 0.0, %v2526
      %v2528 = vpop.f32.mrb[0].mxu0
      %2529 = vmatprep.mubr.f32.mxu0 0.0
      %2530 = vmatmul.mubr.f32.gmra.mrb[0].mxu0 %v2318
      %v2531 = vpop.f32.mrb[0].mxu0
      %v2532 = vadd.f32 0.0, %v2531
      %v2533 = vpop.f32.mrb[0].mxu0
      %2534 = vmatprep.mubr.f32.mxu0 0.0
      %2535 = vmatmul.mubr.f32.gmra.mrb[0].mxu0 %v2321
      %v2536 = vpop.f32.mrb[0].mxu0
      %v2537 = vadd.f32 0.0, %v2536
      %v2538 = vpop.f32.mrb[0].mxu0
      %2539 = vmatprep.mubr.f32.mxu0 0.0
      %2540 = vmatmul.mubr.f32.gmra.mrb[0].mxu0 %v2324
      %v2541 = vpop.f32.mrb[0].mxu0
      %v2542 = vadd.f32 0.0, %v2541
      %v2543 = vpop.f32.mrb[0].mxu0
      %2544 = vmatprep.mubr.f32.mxu0 0.0
      %2545 = vmatmul.mubr.f32.gmra.mrb[0].mxu0 %v2327
      %v2546 = vpop.f32.mrb[0].mxu0
      %v2547 = vadd.f32 0.0, %v2546
      %v2548 = vpop.f32.mrb[0].mxu0
      %2549 = vmatprep.mubr.f32.mxu0 0.0
      %2550 = vmatmul.mubr.f32.gmra.mrb[0].mxu0 %v2330
      %v2551 = vpop.f32.mrb[0].mxu0
      %v2552 = vadd.f32 0.0, %v2551
      %v2553 = vpop.f32.mrb[0].mxu0
      %2554 = vmatprep.mubr.f32.mxu0 0.0
      %2555 = vmatmul.mubr.f32.gmra.mrb[0].mxu0 %v2333
      %v2556 = vpop.f32.mrb[0].mxu0
      %v2557 = vadd.f32 0.0, %v2556
      %v2558 = vpop.f32.mrb[0].mxu0
      %2559 = vdwg.mxu0
      %v2560 = vadd.f32 %v2173, %v2402
      %v2561 = vadd.f32 %v2174, %v2407
      %v2562 = vadd.f32 %v2175, %v2412
      %v2563 = vadd.f32 %v2176, %v2417
      %v2564 = vadd.f32 %v2177, %v2422
      %v2565 = vadd.f32 %v2178, %v2427
      %v2566 = vadd.f32 %v2179, %v2432
      %v2567 = vadd.f32 %v2180, %v2437
      %v2568 = vadd.f32 %v2181, %v2442
      %v2569 = vadd.f32 %v2182, %v2447
      %v2570 = vadd.f32 %v2183, %v2452
      %v2571 = vadd.f32 %v2184, %v2457
      %v2572 = vadd.f32 %v2185, %v2462
      %v2573 = vadd.f32 %v2186, %v2467
      %v2574 = vadd.f32 %v2187, %v2472
      %v2575 = vadd.f32 %v2188, %v2477
      %v2576 = vadd.f32 %v2189, %v2482
      %v2577 = vadd.f32 %v2190, %v2487
      %v2578 = vadd.f32 %v2191, %v2492
      %v2579 = vadd.f32 %v2192, %v2497
      %v2580 = vadd.f32 %v2193, %v2502
      %v2581 = vadd.f32 %v2194, %v2507
      %v2582 = vadd.f32 %v2195, %v2512
      %v2583 = vadd.f32 %v2196, %v2517
      %v2584 = vadd.f32 %v2197, %v2522
      %v2585 = vadd.f32 %v2198, %v2527
      %v2586 = vadd.f32 %v2199, %v2532
      %v2587 = vadd.f32 %v2200, %v2537
      %v2588 = vadd.f32 %v2201, %v2542
      %v2589 = vadd.f32 %v2202, %v2547
      %v2590 = vadd.f32 %v2203, %v2552
      %v2591 = vadd.f32 %v2204, %v2557
      %s2592 = scalar_lea.vmem %s327, 48
      %v2593 = vld [vmem:[%s2592] sm:$0xff]
      %v2594 = vld [vmem:[%s2592 + $0x8] sm:$0xff]
      %v2595 = vld [vmem:[%s2592 + $0x18] sm:$0xff]
      %v2596 = vld [vmem:[%s2592 + $0x20] sm:$0xff]
      %v2597 = vld [vmem:[%s2592 + $0x30] sm:$0xff]
      %v2598 = vld [vmem:[%s2592 + $0x38] sm:$0xff]
      %v2599 = vld [vmem:[%s2592 + $0x48] sm:$0xff]
      %v2600 = vld [vmem:[%s2592 + $0x50] sm:$0xff]
      %v2601 = vld [vmem:[%s2592 + $0x60] sm:$0xff]
      %v2602 = vld [vmem:[%s2592 + $0x68] sm:$0xff]
      %v2603 = vld [vmem:[%s2592 + $0x78] sm:$0xff]
      %v2604 = vld [vmem:[%s2592 + $0x80] sm:$0xff]
      %v2605 = vld [vmem:[%s2592 + $0x90] sm:$0xff]
      %v2606 = vld [vmem:[%s2592 + $0x98] sm:$0xff]
      %v2607 = vld [vmem:[%s2592 + $0xa8] sm:$0xff]
      %v2608 = vld [vmem:[%s2592 + $0xb0] sm:$0xff]
      %v2609 = vld [vmem:[%s2592 + $0xc0] sm:$0xff]
      %v2610 = vld [vmem:[%s2592 + $0xc8] sm:$0xff]
      %v2611 = vld [vmem:[%s2592 + $0xd8] sm:$0xff]
      %v2612 = vld [vmem:[%s2592 + $0xe0] sm:$0xff]
      %v2613 = vld [vmem:[%s2592 + $0xf0] sm:$0xff]
      %v2614 = vld [vmem:[%s2592 + $0xf8] sm:$0xff]
      %v2615 = vld [vmem:[%s2592 + $0x108] sm:$0xff]
      %v2616 = vld [vmem:[%s2592 + $0x110] sm:$0xff]
      %v2617 = vld [vmem:[%s2592 + $0x120] sm:$0xff]
      %v2618 = vld [vmem:[%s2592 + $0x128] sm:$0xff]
      %v2619 = vld [vmem:[%s2592 + $0x138] sm:$0xff]
      %v2620 = vld [vmem:[%s2592 + $0x140] sm:$0xff]
      %v2621 = vld [vmem:[%s2592 + $0x150] sm:$0xff]
      %v2622 = vld [vmem:[%s2592 + $0x158] sm:$0xff]
      %v2623 = vld [vmem:[%s2592 + $0x168] sm:$0xff]
      %v2624 = vld [vmem:[%s2592 + $0x170] sm:$0xff]
      %s2625 = scalar_lea.vmem %s1, 48
      %v2626 = vld [vmem:[%s2625] sm:$0xff]
      %v2628 = vsel %vm400, %v2593, 0
      %v2631 = vsel %vm400, %v2594, 0
      %v2634 = vsel %vm400, %v2595, 0
      %v2637 = vsel %vm400, %v2596, 0
      %v2640 = vsel %vm400, %v2597, 0
      %v2643 = vsel %vm400, %v2598, 0
      %v2646 = vsel %vm400, %v2599, 0
      %v2649 = vsel %vm400, %v2600, 0
      %v2652 = vsel %vm400, %v2601, 0
      %v2655 = vsel %vm400, %v2602, 0
      %v2658 = vsel %vm400, %v2603, 0
      %v2661 = vsel %vm400, %v2604, 0
      %v2664 = vsel %vm400, %v2605, 0
      %v2667 = vsel %vm400, %v2606, 0
      %v2670 = vsel %vm400, %v2607, 0
      %v2673 = vsel %vm400, %v2608, 0
      %v2676 = vsel %vm400, %v2609, 0
      %v2679 = vsel %vm400, %v2610, 0
      %v2682 = vsel %vm400, %v2611, 0
      %v2685 = vsel %vm400, %v2612, 0
      %v2688 = vsel %vm400, %v2613, 0
      %v2691 = vsel %vm400, %v2614, 0
      %v2694 = vsel %vm400, %v2615, 0
      %v2697 = vsel %vm400, %v2616, 0
      %v2700 = vsel %vm400, %v2617, 0
      %v2703 = vsel %vm400, %v2618, 0
      %v2706 = vsel %vm400, %v2619, 0
      %v2709 = vsel %vm400, %v2620, 0
      %v2712 = vsel %vm400, %v2621, 0
      %v2715 = vsel %vm400, %v2622, 0
      %v2718 = vsel %vm400, %v2623, 0
      %v2721 = vsel %vm400, %v2624, 0
      %2723 = vmatprep.subr.mxu0 0.0
      %2724 = vmatpush1.msra.mxu0 %v2626
      %2725 = vmatprep.subr.mxu0 0.0
      %2726 = vmatpush1.msra.mxu0 0.0
      %2727 = vmatprep.subr.mxu0 0.0
      %2728 = vmatpush1.msra.mxu0 0.0
      %2729 = vmatprep.subr.mxu0 0.0
      %2730 = vmatpush1.msra.mxu0 0.0
      %2731 = vmatprep.subr.mxu0 0.0
      %2732 = vmatpush1.msra.mxu0 0.0
      %2733 = vmatprep.subr.mxu0 0.0
      %2734 = vmatpush1.msra.mxu0 0.0
      %2735 = vmatprep.subr.mxu0 0.0
      %2736 = vmatpush1.msra.mxu0 0.0
      %2737 = vmatprep.subr.mxu0 0.0
      %2738 = vmatpush1.msra.mxu0 0.0
      %2739 = vmatprep.subr.mxu0 0.0
      %2740 = vmatpush1.msra.mxu0 0.0
      %2741 = vmatprep.subr.mxu0 0.0
      %2742 = vmatpush1.msra.mxu0 0.0
      %2743 = vmatprep.subr.mxu0 0.0
      %2744 = vmatpush1.msra.mxu0 0.0
      %2745 = vmatprep.subr.mxu0 0.0
      %2746 = vmatpush1.msra.mxu0 0.0
      %2747 = vmatprep.subr.mxu0 0.0
      %2748 = vmatpush1.msra.mxu0 0.0
      %2749 = vmatprep.subr.mxu0 0.0
      %2750 = vmatpush1.msra.mxu0 0.0
      %2751 = vmatprep.subr.mxu0 0.0
      %2752 = vmatpush1.msra.mxu0 0.0
      %2753 = vmatprep.subr.mxu0 0.0
      %2754 = vmatpush1.msra.mxu0 0.0
      %2755 = vmatprep.subr.mxu0 0.0
      %2756 = vmatpush1.msra.mxu0 0.0
      %2757 = vmatprep.subr.mxu0 0.0
      %2758 = vmatpush1.msra.mxu0 0.0
      %2759 = vmatprep.subr.mxu0 0.0
      %2760 = vmatpush1.msra.mxu0 0.0
      %2761 = vmatprep.subr.mxu0 0.0
      %2762 = vmatpush1.msra.mxu0 0.0
      %2763 = vmatprep.subr.mxu0 0.0
      %2764 = vmatpush1.msra.mxu0 0.0
      %2765 = vmatprep.subr.mxu0 0.0
      %2766 = vmatpush1.msra.mxu0 0.0
      %2767 = vmatprep.subr.mxu0 0.0
      %2768 = vmatpush1.msra.mxu0 0.0
      %2769 = vmatprep.subr.mxu0 0.0
      %2770 = vmatpush1.msra.mxu0 0.0
      %2771 = vmatprep.subr.mxu0 0.0
      %2772 = vmatpush1.msra.mxu0 0.0
      %2773 = vmatprep.subr.mxu0 0.0
      %2774 = vmatpush1.msra.mxu0 0.0
      %2775 = vmatprep.subr.mxu0 0.0
      %2776 = vmatpush1.msra.mxu0 0.0
      %2777 = vmatprep.subr.mxu0 0.0
      %2778 = vmatpush1.msra.mxu0 0.0
      %2779 = vmatprep.subr.mxu0 0.0
      %2780 = vmatpush1.msra.mxu0 0.0
      %2781 = vmatprep.subr.mxu0 0.0
      %2782 = vmatpush1.msra.mxu0 0.0
      %2783 = vmatprep.subr.mxu0 0.0
      %2784 = vmatpush1.msra.mxu0 0.0
      %2785 = vmatprep.subr.mxu0 0.0
      %2786 = vmatpush1.msra.mxu0 0.0
      %2787 = vmatprep.mubr.f32.mxu0 0.0
      %2788 = vmatmul.mubr.f32.gmra.mrb[0].mxu0 %v2628
      %v2789 = vpop.f32.mrb[0].mxu0
      %v2790 = vadd.f32 0.0, %v2789
      %v2791 = vpop.f32.mrb[0].mxu0
      %2792 = vmatprep.mubr.f32.mxu0 0.0
      %2793 = vmatmul.mubr.f32.gmra.mrb[0].mxu0 %v2631
      %v2794 = vpop.f32.mrb[0].mxu0
      %v2795 = vadd.f32 0.0, %v2794
      %v2796 = vpop.f32.mrb[0].mxu0
      %2797 = vmatprep.mubr.f32.mxu0 0.0
      %2798 = vmatmul.mubr.f32.gmra.mrb[0].mxu0 %v2634
      %v2799 = vpop.f32.mrb[0].mxu0
      %v2800 = vadd.f32 0.0, %v2799
      %v2801 = vpop.f32.mrb[0].mxu0
      %2802 = vmatprep.mubr.f32.mxu0 0.0
      %2803 = vmatmul.mubr.f32.gmra.mrb[0].mxu0 %v2637
      %v2804 = vpop.f32.mrb[0].mxu0
      %v2805 = vadd.f32 0.0, %v2804
      %v2806 = vpop.f32.mrb[0].mxu0
      %2807 = vmatprep.mubr.f32.mxu0 0.0
      %2808 = vmatmul.mubr.f32.gmra.mrb[0].mxu0 %v2640
      %v2809 = vpop.f32.mrb[0].mxu0
      %v2810 = vadd.f32 0.0, %v2809
      %v2811 = vpop.f32.mrb[0].mxu0
      %2812 = vmatprep.mubr.f32.mxu0 0.0
      %2813 = vmatmul.mubr.f32.gmra.mrb[0].mxu0 %v2643
      %v2814 = vpop.f32.mrb[0].mxu0
      %v2815 = vadd.f32 0.0, %v2814
      %v2816 = vpop.f32.mrb[0].mxu0
      %2817 = vmatprep.mubr.f32.mxu0 0.0
      %2818 = vmatmul.mubr.f32.gmra.mrb[0].mxu0 %v2646
      %v2819 = vpop.f32.mrb[0].mxu0
      %v2820 = vadd.f32 0.0, %v2819
      %v2821 = vpop.f32.mrb[0].mxu0
      %2822 = vmatprep.mubr.f32.mxu0 0.0
      %2823 = vmatmul.mubr.f32.gmra.mrb[0].mxu0 %v2649
      %v2824 = vpop.f32.mrb[0].mxu0
      %v2825 = vadd.f32 0.0, %v2824
      %v2826 = vpop.f32.mrb[0].mxu0
      %2827 = vmatprep.mubr.f32.mxu0 0.0
      %2828 = vmatmul.mubr.f32.gmra.mrb[0].mxu0 %v2652
      %v2829 = vpop.f32.mrb[0].mxu0
      %v2830 = vadd.f32 0.0, %v2829
      %v2831 = vpop.f32.mrb[0].mxu0
      %2832 = vmatprep.mubr.f32.mxu0 0.0
      %2833 = vmatmul.mubr.f32.gmra.mrb[0].mxu0 %v2655
      %v2834 = vpop.f32.mrb[0].mxu0
      %v2835 = vadd.f32 0.0, %v2834
      %v2836 = vpop.f32.mrb[0].mxu0
      %2837 = vmatprep.mubr.f32.mxu0 0.0
      %2838 = vmatmul.mubr.f32.gmra.mrb[0].mxu0 %v2658
      %v2839 = vpop.f32.mrb[0].mxu0
      %v2840 = vadd.f32 0.0, %v2839
      %v2841 = vpop.f32.mrb[0].mxu0
      %2842 = vmatprep.mubr.f32.mxu0 0.0
      %2843 = vmatmul.mubr.f32.gmra.mrb[0].mxu0 %v2661
      %v2844 = vpop.f32.mrb[0].mxu0
      %v2845 = vadd.f32 0.0, %v2844
      %v2846 = vpop.f32.mrb[0].mxu0
      %2847 = vmatprep.mubr.f32.mxu0 0.0
      %2848 = vmatmul.mubr.f32.gmra.mrb[0].mxu0 %v2664
      %v2849 = vpop.f32.mrb[0].mxu0
      %v2850 = vadd.f32 0.0, %v2849
      %v2851 = vpop.f32.mrb[0].mxu0
      %2852 = vmatprep.mubr.f32.mxu0 0.0
      %2853 = vmatmul.mubr.f32.gmra.mrb[0].mxu0 %v2667
      %v2854 = vpop.f32.mrb[0].mxu0
      %v2855 = vadd.f32 0.0, %v2854
      %v2856 = vpop.f32.mrb[0].mxu0
      %2857 = vmatprep.mubr.f32.mxu0 0.0
      %2858 = vmatmul.mubr.f32.gmra.mrb[0].mxu0 %v2670
      %v2859 = vpop.f32.mrb[0].mxu0
      %v2860 = vadd.f32 0.0, %v2859
      %v2861 = vpop.f32.mrb[0].mxu0
      %2862 = vmatprep.mubr.f32.mxu0 0.0
      %2863 = vmatmul.mubr.f32.gmra.mrb[0].mxu0 %v2673
      %v2864 = vpop.f32.mrb[0].mxu0
      %v2865 = vadd.f32 0.0, %v2864
      %v2866 = vpop.f32.mrb[0].mxu0
      %2867 = vmatprep.mubr.f32.mxu0 0.0
      %2868 = vmatmul.mubr.f32.gmra.mrb[0].mxu0 %v2676
      %v2869 = vpop.f32.mrb[0].mxu0
      %v2870 = vadd.f32 0.0, %v2869
      %v2871 = vpop.f32.mrb[0].mxu0
      %2872 = vmatprep.mubr.f32.mxu0 0.0
      %2873 = vmatmul.mubr.f32.gmra.mrb[0].mxu0 %v2679
      %v2874 = vpop.f32.mrb[0].mxu0
      %v2875 = vadd.f32 0.0, %v2874
      %v2876 = vpop.f32.mrb[0].mxu0
      %2877 = vmatprep.mubr.f32.mxu0 0.0
      %2878 = vmatmul.mubr.f32.gmra.mrb[0].mxu0 %v2682
      %v2879 = vpop.f32.mrb[0].mxu0
      %v2880 = vadd.f32 0.0, %v2879
      %v2881 = vpop.f32.mrb[0].mxu0
      %2882 = vmatprep.mubr.f32.mxu0 0.0
      %2883 = vmatmul.mubr.f32.gmra.mrb[0].mxu0 %v2685
      %v2884 = vpop.f32.mrb[0].mxu0
      %v2885 = vadd.f32 0.0, %v2884
      %v2886 = vpop.f32.mrb[0].mxu0
      %2887 = vmatprep.mubr.f32.mxu0 0.0
      %2888 = vmatmul.mubr.f32.gmra.mrb[0].mxu0 %v2688
      %v2889 = vpop.f32.mrb[0].mxu0
      %v2890 = vadd.f32 0.0, %v2889
      %v2891 = vpop.f32.mrb[0].mxu0
      %2892 = vmatprep.mubr.f32.mxu0 0.0
      %2893 = vmatmul.mubr.f32.gmra.mrb[0].mxu0 %v2691
      %v2894 = vpop.f32.mrb[0].mxu0
      %v2895 = vadd.f32 0.0, %v2894
      %v2896 = vpop.f32.mrb[0].mxu0
      %2897 = vmatprep.mubr.f32.mxu0 0.0
      %2898 = vmatmul.mubr.f32.gmra.mrb[0].mxu0 %v2694
      %v2899 = vpop.f32.mrb[0].mxu0
      %v2900 = vadd.f32 0.0, %v2899
      %v2901 = vpop.f32.mrb[0].mxu0
      %2902 = vmatprep.mubr.f32.mxu0 0.0
      %2903 = vmatmul.mubr.f32.gmra.mrb[0].mxu0 %v2697
      %v2904 = vpop.f32.mrb[0].mxu0
      %v2905 = vadd.f32 0.0, %v2904
      %v2906 = vpop.f32.mrb[0].mxu0
      %2907 = vmatprep.mubr.f32.mxu0 0.0
      %2908 = vmatmul.mubr.f32.gmra.mrb[0].mxu0 %v2700
      %v2909 = vpop.f32.mrb[0].mxu0
      %v2910 = vadd.f32 0.0, %v2909
      %v2911 = vpop.f32.mrb[0].mxu0
      %2912 = vmatprep.mubr.f32.mxu0 0.0
      %2913 = vmatmul.mubr.f32.gmra.mrb[0].mxu0 %v2703
      %v2914 = vpop.f32.mrb[0].mxu0
      %v2915 = vadd.f32 0.0, %v2914
      %v2916 = vpop.f32.mrb[0].mxu0
      %2917 = vmatprep.mubr.f32.mxu0 0.0
      %2918 = vmatmul.mubr.f32.gmra.mrb[0].mxu0 %v2706
      %v2919 = vpop.f32.mrb[0].mxu0
      %v2920 = vadd.f32 0.0, %v2919
      %v2921 = vpop.f32.mrb[0].mxu0
      %2922 = vmatprep.mubr.f32.mxu0 0.0
      %2923 = vmatmul.mubr.f32.gmra.mrb[0].mxu0 %v2709
      %v2924 = vpop.f32.mrb[0].mxu0
      %v2925 = vadd.f32 0.0, %v2924
      %v2926 = vpop.f32.mrb[0].mxu0
      %2927 = vmatprep.mubr.f32.mxu0 0.0
      %2928 = vmatmul.mubr.f32.gmra.mrb[0].mxu0 %v2712
      %v2929 = vpop.f32.mrb[0].mxu0
      %v2930 = vadd.f32 0.0, %v2929
      %v2931 = vpop.f32.mrb[0].mxu0
      %2932 = vmatprep.mubr.f32.mxu0 0.0
      %2933 = vmatmul.mubr.f32.gmra.mrb[0].mxu0 %v2715
      %v2934 = vpop.f32.mrb[0].mxu0
      %v2935 = vadd.f32 0.0, %v2934
      %v2936 = vpop.f32.mrb[0].mxu0
      %2937 = vmatprep.mubr.f32.mxu0 0.0
      %2938 = vmatmul.mubr.f32.gmra.mrb[0].mxu0 %v2718
      %v2939 = vpop.f32.mrb[0].mxu0
      %v2940 = vadd.f32 0.0, %v2939
      %v2941 = vpop.f32.mrb[0].mxu0
      %2942 = vmatprep.mubr.f32.mxu0 0.0
      %2943 = vmatmul.mubr.f32.gmra.mrb[0].mxu0 %v2721
      %v2944 = vpop.f32.mrb[0].mxu0
      %v2945 = vadd.f32 0.0, %v2944
      %v2946 = vpop.f32.mrb[0].mxu0
      %2947 = vdwg.mxu0
      %v2948 = vadd.f32 %v2560, %v2790
      %v2949 = vadd.f32 %v2561, %v2795
      %v2950 = vadd.f32 %v2562, %v2800
      %v2951 = vadd.f32 %v2563, %v2805
      %v2952 = vadd.f32 %v2564, %v2810
      %v2953 = vadd.f32 %v2565, %v2815
      %v2954 = vadd.f32 %v2566, %v2820
      %v2955 = vadd.f32 %v2567, %v2825
      %v2956 = vadd.f32 %v2568, %v2830
      %v2957 = vadd.f32 %v2569, %v2835
      %v2958 = vadd.f32 %v2570, %v2840
      %v2959 = vadd.f32 %v2571, %v2845
      %v2960 = vadd.f32 %v2572, %v2850
      %v2961 = vadd.f32 %v2573, %v2855
      %v2962 = vadd.f32 %v2574, %v2860
      %v2963 = vadd.f32 %v2575, %v2865
      %v2964 = vadd.f32 %v2576, %v2870
      %v2965 = vadd.f32 %v2577, %v2875
      %v2966 = vadd.f32 %v2578, %v2880
      %v2967 = vadd.f32 %v2579, %v2885
      %v2968 = vadd.f32 %v2580, %v2890
      %v2969 = vadd.f32 %v2581, %v2895
      %v2970 = vadd.f32 %v2582, %v2900
      %v2971 = vadd.f32 %v2583, %v2905
      %v2972 = vadd.f32 %v2584, %v2910
      %v2973 = vadd.f32 %v2585, %v2915
      %v2974 = vadd.f32 %v2586, %v2920
      %v2975 = vadd.f32 %v2587, %v2925
      %v2976 = vadd.f32 %v2588, %v2930
      %v2977 = vadd.f32 %v2589, %v2935
      %v2978 = vadd.f32 %v2590, %v2940
      %v2979 = vadd.f32 %v2591, %v2945
      %v2980 = vld [vmem:[%s2592 + $0x1] sm:$0xff]
      %v2981 = vld [vmem:[%s2592 + $0x9] sm:$0xff]
      %v2982 = vld [vmem:[%s2592 + $0x19] sm:$0xff]
      %v2983 = vld [vmem:[%s2592 + $0x21] sm:$0xff]
      %v2984 = vld [vmem:[%s2592 + $0x31] sm:$0xff]
      %v2985 = vld [vmem:[%s2592 + $0x39] sm:$0xff]
      %v2986 = vld [vmem:[%s2592 + $0x49] sm:$0xff]
      %v2987 = vld [vmem:[%s2592 + $0x51] sm:$0xff]
      %v2988 = vld [vmem:[%s2592 + $0x61] sm:$0xff]
      %v2989 = vld [vmem:[%s2592 + $0x69] sm:$0xff]
      %v2990 = vld [vmem:[%s2592 + $0x79] sm:$0xff]
      %v2991 = vld [vmem:[%s2592 + $0x81] sm:$0xff]
      %v2992 = vld [vmem:[%s2592 + $0x91] sm:$0xff]
      %v2993 = vld [vmem:[%s2592 + $0x99] sm:$0xff]
      %v2994 = vld [vmem:[%s2592 + $0xa9] sm:$0xff]
      %v2995 = vld [vmem:[%s2592 + $0xb1] sm:$0xff]
      %v2996 = vld [vmem:[%s2592 + $0xc1] sm:$0xff]
      %v2997 = vld [vmem:[%s2592 + $0xc9] sm:$0xff]
      %v2998 = vld [vmem:[%s2592 + $0xd9] sm:$0xff]
      %v2999 = vld [vmem:[%s2592 + $0xe1] sm:$0xff]
      %v3000 = vld [vmem:[%s2592 + $0xf1] sm:$0xff]
      %v3001 = vld [vmem:[%s2592 + $0xf9] sm:$0xff]
      %v3002 = vld [vmem:[%s2592 + $0x109] sm:$0xff]
      %v3003 = vld [vmem:[%s2592 + $0x111] sm:$0xff]
      %v3004 = vld [vmem:[%s2592 + $0x121] sm:$0xff]
      %v3005 = vld [vmem:[%s2592 + $0x129] sm:$0xff]
      %v3006 = vld [vmem:[%s2592 + $0x139] sm:$0xff]
      %v3007 = vld [vmem:[%s2592 + $0x141] sm:$0xff]
      %v3008 = vld [vmem:[%s2592 + $0x151] sm:$0xff]
      %v3009 = vld [vmem:[%s2592 + $0x159] sm:$0xff]
      %v3010 = vld [vmem:[%s2592 + $0x169] sm:$0xff]
      %v3011 = vld [vmem:[%s2592 + $0x171] sm:$0xff]
      %s3012 = scalar_lea.vmem %s1, 56
      %v3013 = vld [vmem:[%s3012] sm:$0xff]
      %v3015 = vsel %vm400, %v2980, 0
      %v3018 = vsel %vm400, %v2981, 0
      %v3021 = vsel %vm400, %v2982, 0
      %v3024 = vsel %vm400, %v2983, 0
      %v3027 = vsel %vm400, %v2984, 0
      %v3030 = vsel %vm400, %v2985, 0
      %v3033 = vsel %vm400, %v2986, 0
      %v3036 = vsel %vm400, %v2987, 0
      %v3039 = vsel %vm400, %v2988, 0
      %v3042 = vsel %vm400, %v2989, 0
      %v3045 = vsel %vm400, %v2990, 0
      %v3048 = vsel %vm400, %v2991, 0
      %v3051 = vsel %vm400, %v2992, 0
      %v3054 = vsel %vm400, %v2993, 0
      %v3057 = vsel %vm400, %v2994, 0
      %v3060 = vsel %vm400, %v2995, 0
      %v3063 = vsel %vm400, %v2996, 0
      %v3066 = vsel %vm400, %v2997, 0
      %v3069 = vsel %vm400, %v2998, 0
      %v3072 = vsel %vm400, %v2999, 0
      %v3075 = vsel %vm400, %v3000, 0
      %v3078 = vsel %vm400, %v3001, 0
      %v3081 = vsel %vm400, %v3002, 0
      %v3084 = vsel %vm400, %v3003, 0
      %v3087 = vsel %vm400, %v3004, 0
      %v3090 = vsel %vm400, %v3005, 0
      %v3093 = vsel %vm400, %v3006, 0
      %v3096 = vsel %vm400, %v3007, 0
      %v3099 = vsel %vm400, %v3008, 0
      %v3102 = vsel %vm400, %v3009, 0
      %v3105 = vsel %vm400, %v3010, 0
      %v3108 = vsel %vm400, %v3011, 0
      %3110 = vmatprep.subr.mxu0 0.0
      %3111 = vmatpush1.msra.mxu0 %v3013
      %3112 = vmatprep.subr.mxu0 0.0
      %3113 = vmatpush1.msra.mxu0 0.0
      %3114 = vmatprep.subr.mxu0 0.0
      %3115 = vmatpush1.msra.mxu0 0.0
      %3116 = vmatprep.subr.mxu0 0.0
      %3117 = vmatpush1.msra.mxu0 0.0
      %3118 = vmatprep.subr.mxu0 0.0
      %3119 = vmatpush1.msra.mxu0 0.0
      %3120 = vmatprep.subr.mxu0 0.0
      %3121 = vmatpush1.msra.mxu0 0.0
      %3122 = vmatprep.subr.mxu0 0.0
      %3123 = vmatpush1.msra.mxu0 0.0
      %3124 = vmatprep.subr.mxu0 0.0
      %3125 = vmatpush1.msra.mxu0 0.0
      %3126 = vmatprep.subr.mxu0 0.0
      %3127 = vmatpush1.msra.mxu0 0.0
      %3128 = vmatprep.subr.mxu0 0.0
      %3129 = vmatpush1.msra.mxu0 0.0
      %3130 = vmatprep.subr.mxu0 0.0
      %3131 = vmatpush1.msra.mxu0 0.0
      %3132 = vmatprep.subr.mxu0 0.0
      %3133 = vmatpush1.msra.mxu0 0.0
      %3134 = vmatprep.subr.mxu0 0.0
      %3135 = vmatpush1.msra.mxu0 0.0
      %3136 = vmatprep.subr.mxu0 0.0
      %3137 = vmatpush1.msra.mxu0 0.0
      %3138 = vmatprep.subr.mxu0 0.0
      %3139 = vmatpush1.msra.mxu0 0.0
      %3140 = vmatprep.subr.mxu0 0.0
      %3141 = vmatpush1.msra.mxu0 0.0
      %3142 = vmatprep.subr.mxu0 0.0
      %3143 = vmatpush1.msra.mxu0 0.0
      %3144 = vmatprep.subr.mxu0 0.0
      %3145 = vmatpush1.msra.mxu0 0.0
      %3146 = vmatprep.subr.mxu0 0.0
      %3147 = vmatpush1.msra.mxu0 0.0
      %3148 = vmatprep.subr.mxu0 0.0
      %3149 = vmatpush1.msra.mxu0 0.0
      %3150 = vmatprep.subr.mxu0 0.0
      %3151 = vmatpush1.msra.mxu0 0.0
      %3152 = vmatprep.subr.mxu0 0.0
      %3153 = vmatpush1.msra.mxu0 0.0
      %3154 = vmatprep.subr.mxu0 0.0
      %3155 = vmatpush1.msra.mxu0 0.0
      %3156 = vmatprep.subr.mxu0 0.0
      %3157 = vmatpush1.msra.mxu0 0.0
      %3158 = vmatprep.subr.mxu0 0.0
      %3159 = vmatpush1.msra.mxu0 0.0
      %3160 = vmatprep.subr.mxu0 0.0
      %3161 = vmatpush1.msra.mxu0 0.0
      %3162 = vmatprep.subr.mxu0 0.0
      %3163 = vmatpush1.msra.mxu0 0.0
      %3164 = vmatprep.subr.mxu0 0.0
      %3165 = vmatpush1.msra.mxu0 0.0
      %3166 = vmatprep.subr.mxu0 0.0
      %3167 = vmatpush1.msra.mxu0 0.0
      %3168 = vmatprep.subr.mxu0 0.0
      %3169 = vmatpush1.msra.mxu0 0.0
      %3170 = vmatprep.subr.mxu0 0.0
      %3171 = vmatpush1.msra.mxu0 0.0
      %3172 = vmatprep.subr.mxu0 0.0
      %3173 = vmatpush1.msra.mxu0 0.0
      %3174 = vmatprep.mubr.f32.mxu0 0.0
      %3175 = vmatmul.mubr.f32.gmra.mrb[0].mxu0 %v3015
      %v3176 = vpop.f32.mrb[0].mxu0
      %v3177 = vadd.f32 0.0, %v3176
      %v3178 = vpop.f32.mrb[0].mxu0
      %3179 = vmatprep.mubr.f32.mxu0 0.0
      %3180 = vmatmul.mubr.f32.gmra.mrb[0].mxu0 %v3018
      %v3181 = vpop.f32.mrb[0].mxu0
      %v3182 = vadd.f32 0.0, %v3181
      %v3183 = vpop.f32.mrb[0].mxu0
      %3184 = vmatprep.mubr.f32.mxu0 0.0
      %3185 = vmatmul.mubr.f32.gmra.mrb[0].mxu0 %v3021
      %v3186 = vpop.f32.mrb[0].mxu0
      %v3187 = vadd.f32 0.0, %v3186
      %v3188 = vpop.f32.mrb[0].mxu0
      %3189 = vmatprep.mubr.f32.mxu0 0.0
      %3190 = vmatmul.mubr.f32.gmra.mrb[0].mxu0 %v3024
      %v3191 = vpop.f32.mrb[0].mxu0
      %v3192 = vadd.f32 0.0, %v3191
      %v3193 = vpop.f32.mrb[0].mxu0
      %3194 = vmatprep.mubr.f32.mxu0 0.0
      %3195 = vmatmul.mubr.f32.gmra.mrb[0].mxu0 %v3027
      %v3196 = vpop.f32.mrb[0].mxu0
      %v3197 = vadd.f32 0.0, %v3196
      %v3198 = vpop.f32.mrb[0].mxu0
      %3199 = vmatprep.mubr.f32.mxu0 0.0
      %3200 = vmatmul.mubr.f32.gmra.mrb[0].mxu0 %v3030
      %v3201 = vpop.f32.mrb[0].mxu0
      %v3202 = vadd.f32 0.0, %v3201
      %v3203 = vpop.f32.mrb[0].mxu0
      %3204 = vmatprep.mubr.f32.mxu0 0.0
      %3205 = vmatmul.mubr.f32.gmra.mrb[0].mxu0 %v3033
      %v3206 = vpop.f32.mrb[0].mxu0
      %v3207 = vadd.f32 0.0, %v3206
      %v3208 = vpop.f32.mrb[0].mxu0
      %3209 = vmatprep.mubr.f32.mxu0 0.0
      %3210 = vmatmul.mubr.f32.gmra.mrb[0].mxu0 %v3036
      %v3211 = vpop.f32.mrb[0].mxu0
      %v3212 = vadd.f32 0.0, %v3211
      %v3213 = vpop.f32.mrb[0].mxu0
      %3214 = vmatprep.mubr.f32.mxu0 0.0
      %3215 = vmatmul.mubr.f32.gmra.mrb[0].mxu0 %v3039
      %v3216 = vpop.f32.mrb[0].mxu0
      %v3217 = vadd.f32 0.0, %v3216
      %v3218 = vpop.f32.mrb[0].mxu0
      %3219 = vmatprep.mubr.f32.mxu0 0.0
      %3220 = vmatmul.mubr.f32.gmra.mrb[0].mxu0 %v3042
      %v3221 = vpop.f32.mrb[0].mxu0
      %v3222 = vadd.f32 0.0, %v3221
      %v3223 = vpop.f32.mrb[0].mxu0
      %3224 = vmatprep.mubr.f32.mxu0 0.0
      %3225 = vmatmul.mubr.f32.gmra.mrb[0].mxu0 %v3045
      %v3226 = vpop.f32.mrb[0].mxu0
      %v3227 = vadd.f32 0.0, %v3226
      %v3228 = vpop.f32.mrb[0].mxu0
      %3229 = vmatprep.mubr.f32.mxu0 0.0
      %3230 = vmatmul.mubr.f32.gmra.mrb[0].mxu0 %v3048
      %v3231 = vpop.f32.mrb[0].mxu0
      %v3232 = vadd.f32 0.0, %v3231
      %v3233 = vpop.f32.mrb[0].mxu0
      %3234 = vmatprep.mubr.f32.mxu0 0.0
      %3235 = vmatmul.mubr.f32.gmra.mrb[0].mxu0 %v3051
      %v3236 = vpop.f32.mrb[0].mxu0
      %v3237 = vadd.f32 0.0, %v3236
      %v3238 = vpop.f32.mrb[0].mxu0
      %3239 = vmatprep.mubr.f32.mxu0 0.0
      %3240 = vmatmul.mubr.f32.gmra.mrb[0].mxu0 %v3054
      %v3241 = vpop.f32.mrb[0].mxu0
      %v3242 = vadd.f32 0.0, %v3241
      %v3243 = vpop.f32.mrb[0].mxu0
      %3244 = vmatprep.mubr.f32.mxu0 0.0
      %3245 = vmatmul.mubr.f32.gmra.mrb[0].mxu0 %v3057
      %v3246 = vpop.f32.mrb[0].mxu0
      %v3247 = vadd.f32 0.0, %v3246
      %v3248 = vpop.f32.mrb[0].mxu0
      %3249 = vmatprep.mubr.f32.mxu0 0.0
      %3250 = vmatmul.mubr.f32.gmra.mrb[0].mxu0 %v3060
      %v3251 = vpop.f32.mrb[0].mxu0
      %v3252 = vadd.f32 0.0, %v3251
      %v3253 = vpop.f32.mrb[0].mxu0
      %3254 = vmatprep.mubr.f32.mxu0 0.0
      %3255 = vmatmul.mubr.f32.gmra.mrb[0].mxu0 %v3063
      %v3256 = vpop.f32.mrb[0].mxu0
      %v3257 = vadd.f32 0.0, %v3256
      %v3258 = vpop.f32.mrb[0].mxu0
      %3259 = vmatprep.mubr.f32.mxu0 0.0
      %3260 = vmatmul.mubr.f32.gmra.mrb[0].mxu0 %v3066
      %v3261 = vpop.f32.mrb[0].mxu0
      %v3262 = vadd.f32 0.0, %v3261
      %v3263 = vpop.f32.mrb[0].mxu0
      %3264 = vmatprep.mubr.f32.mxu0 0.0
      %3265 = vmatmul.mubr.f32.gmra.mrb[0].mxu0 %v3069
      %v3266 = vpop.f32.mrb[0].mxu0
      %v3267 = vadd.f32 0.0, %v3266
      %v3268 = vpop.f32.mrb[0].mxu0
      %3269 = vmatprep.mubr.f32.mxu0 0.0
      %3270 = vmatmul.mubr.f32.gmra.mrb[0].mxu0 %v3072
      %v3271 = vpop.f32.mrb[0].mxu0
      %v3272 = vadd.f32 0.0, %v3271
      %v3273 = vpop.f32.mrb[0].mxu0
      %3274 = vmatprep.mubr.f32.mxu0 0.0
      %3275 = vmatmul.mubr.f32.gmra.mrb[0].mxu0 %v3075
      %v3276 = vpop.f32.mrb[0].mxu0
      %v3277 = vadd.f32 0.0, %v3276
      %v3278 = vpop.f32.mrb[0].mxu0
      %3279 = vmatprep.mubr.f32.mxu0 0.0
      %3280 = vmatmul.mubr.f32.gmra.mrb[0].mxu0 %v3078
      %v3281 = vpop.f32.mrb[0].mxu0
      %v3282 = vadd.f32 0.0, %v3281
      %v3283 = vpop.f32.mrb[0].mxu0
      %3284 = vmatprep.mubr.f32.mxu0 0.0
      %3285 = vmatmul.mubr.f32.gmra.mrb[0].mxu0 %v3081
      %v3286 = vpop.f32.mrb[0].mxu0
      %v3287 = vadd.f32 0.0, %v3286
      %v3288 = vpop.f32.mrb[0].mxu0
      %3289 = vmatprep.mubr.f32.mxu0 0.0
      %3290 = vmatmul.mubr.f32.gmra.mrb[0].mxu0 %v3084
      %v3291 = vpop.f32.mrb[0].mxu0
      %v3292 = vadd.f32 0.0, %v3291
      %v3293 = vpop.f32.mrb[0].mxu0
      %3294 = vmatprep.mubr.f32.mxu0 0.0
      %3295 = vmatmul.mubr.f32.gmra.mrb[0].mxu0 %v3087
      %v3296 = vpop.f32.mrb[0].mxu0
      %v3297 = vadd.f32 0.0, %v3296
      %v3298 = vpop.f32.mrb[0].mxu0
      %3299 = vmatprep.mubr.f32.mxu0 0.0
      %3300 = vmatmul.mubr.f32.gmra.mrb[0].mxu0 %v3090
      %v3301 = vpop.f32.mrb[0].mxu0
      %v3302 = vadd.f32 0.0, %v3301
      %v3303 = vpop.f32.mrb[0].mxu0
      %3304 = vmatprep.mubr.f32.mxu0 0.0
      %3305 = vmatmul.mubr.f32.gmra.mrb[0].mxu0 %v3093
      %v3306 = vpop.f32.mrb[0].mxu0
      %v3307 = vadd.f32 0.0, %v3306
      %v3308 = vpop.f32.mrb[0].mxu0
      %3309 = vmatprep.mubr.f32.mxu0 0.0
      %3310 = vmatmul.mubr.f32.gmra.mrb[0].mxu0 %v3096
      %v3311 = vpop.f32.mrb[0].mxu0
      %v3312 = vadd.f32 0.0, %v3311
      %v3313 = vpop.f32.mrb[0].mxu0
      %3314 = vmatprep.mubr.f32.mxu0 0.0
      %3315 = vmatmul.mubr.f32.gmra.mrb[0].mxu0 %v3099
      %v3316 = vpop.f32.mrb[0].mxu0
      %v3317 = vadd.f32 0.0, %v3316
      %v3318 = vpop.f32.mrb[0].mxu0
      %3319 = vmatprep.mubr.f32.mxu0 0.0
      %3320 = vmatmul.mubr.f32.gmra.mrb[0].mxu0 %v3102
      %v3321 = vpop.f32.mrb[0].mxu0
      %v3322 = vadd.f32 0.0, %v3321
      %v3323 = vpop.f32.mrb[0].mxu0
      %3324 = vmatprep.mubr.f32.mxu0 0.0
      %3325 = vmatmul.mubr.f32.gmra.mrb[0].mxu0 %v3105
      %v3326 = vpop.f32.mrb[0].mxu0
      %v3327 = vadd.f32 0.0, %v3326
      %v3328 = vpop.f32.mrb[0].mxu0
      %3329 = vmatprep.mubr.f32.mxu0 0.0
      %3330 = vmatmul.mubr.f32.gmra.mrb[0].mxu0 %v3108
      %v3331 = vpop.f32.mrb[0].mxu0
      %v3332 = vadd.f32 0.0, %v3331
      %v3333 = vpop.f32.mrb[0].mxu0
      %3334 = vdwg.mxu0
      %v3335 = vadd.f32 %v2948, %v3177
      %v3336 = vadd.f32 %v2949, %v3182
      %v3337 = vadd.f32 %v2950, %v3187
      %v3338 = vadd.f32 %v2951, %v3192
      %v3339 = vadd.f32 %v2952, %v3197
      %v3340 = vadd.f32 %v2953, %v3202
      %v3341 = vadd.f32 %v2954, %v3207
      %v3342 = vadd.f32 %v2955, %v3212
      %v3343 = vadd.f32 %v2956, %v3217
      %v3344 = vadd.f32 %v2957, %v3222
      %v3345 = vadd.f32 %v2958, %v3227
      %v3346 = vadd.f32 %v2959, %v3232
      %v3347 = vadd.f32 %v2960, %v3237
      %v3348 = vadd.f32 %v2961, %v3242
      %v3349 = vadd.f32 %v2962, %v3247
      %v3350 = vadd.f32 %v2963, %v3252
      %v3351 = vadd.f32 %v2964, %v3257
      %v3352 = vadd.f32 %v2965, %v3262
      %v3353 = vadd.f32 %v2966, %v3267
      %v3354 = vadd.f32 %v2967, %v3272
      %v3355 = vadd.f32 %v2968, %v3277
      %v3356 = vadd.f32 %v2969, %v3282
      %v3357 = vadd.f32 %v2970, %v3287
      %v3358 = vadd.f32 %v2971, %v3292
      %v3359 = vadd.f32 %v2972, %v3297
      %v3360 = vadd.f32 %v2973, %v3302
      %v3361 = vadd.f32 %v2974, %v3307
      %v3362 = vadd.f32 %v2975, %v3312
      %v3363 = vadd.f32 %v2976, %v3317
      %v3364 = vadd.f32 %v2977, %v3322
      %v3365 = vadd.f32 %v2978, %v3327
      %v3366 = vadd.f32 %v2979, %v3332
      %v3367 = vld [vmem:[%s2592 + $0x2] sm:$0xff]
      %v3368 = vld [vmem:[%s2592 + $0xa] sm:$0xff]
      %v3369 = vld [vmem:[%s2592 + $0x1a] sm:$0xff]
      %v3370 = vld [vmem:[%s2592 + $0x22] sm:$0xff]
      %v3371 = vld [vmem:[%s2592 + $0x32] sm:$0xff]
      %v3372 = vld [vmem:[%s2592 + $0x3a] sm:$0xff]
      %v3373 = vld [vmem:[%s2592 + $0x4a] sm:$0xff]
      %v3374 = vld [vmem:[%s2592 + $0x52] sm:$0xff]
      %v3375 = vld [vmem:[%s2592 + $0x62] sm:$0xff]
      %v3376 = vld [vmem:[%s2592 + $0x6a] sm:$0xff]
      %v3377 = vld [vmem:[%s2592 + $0x7a] sm:$0xff]
      %v3378 = vld [vmem:[%s2592 + $0x82] sm:$0xff]
      %v3379 = vld [vmem:[%s2592 + $0x92] sm:$0xff]
      %v3380 = vld [vmem:[%s2592 + $0x9a] sm:$0xff]
      %v3381 = vld [vmem:[%s2592 + $0xaa] sm:$0xff]
      %v3382 = vld [vmem:[%s2592 + $0xb2] sm:$0xff]
      %v3383 = vld [vmem:[%s2592 + $0xc2] sm:$0xff]
      %v3384 = vld [vmem:[%s2592 + $0xca] sm:$0xff]
      %v3385 = vld [vmem:[%s2592 + $0xda] sm:$0xff]
      %v3386 = vld [vmem:[%s2592 + $0xe2] sm:$0xff]
      %v3387 = vld [vmem:[%s2592 + $0xf2] sm:$0xff]
      %v3388 = vld [vmem:[%s2592 + $0xfa] sm:$0xff]
      %v3389 = vld [vmem:[%s2592 + $0x10a] sm:$0xff]
      %v3390 = vld [vmem:[%s2592 + $0x112] sm:$0xff]
      %v3391 = vld [vmem:[%s2592 + $0x122] sm:$0xff]
      %v3392 = vld [vmem:[%s2592 + $0x12a] sm:$0xff]
      %v3393 = vld [vmem:[%s2592 + $0x13a] sm:$0xff]
      %v3394 = vld [vmem:[%s2592 + $0x142] sm:$0xff]
      %v3395 = vld [vmem:[%s2592 + $0x152] sm:$0xff]
      %v3396 = vld [vmem:[%s2592 + $0x15a] sm:$0xff]
      %v3397 = vld [vmem:[%s2592 + $0x16a] sm:$0xff]
      %v3398 = vld [vmem:[%s2592 + $0x172] sm:$0xff]
      %s3399 = scalar_lea.vmem %s1, 64
      %v3400 = vld [vmem:[%s3399] sm:$0xff]
      %v3402 = vsel %vm400, %v3367, 0
      %v3405 = vsel %vm400, %v3368, 0
      %v3408 = vsel %vm400, %v3369, 0
      %v3411 = vsel %vm400, %v3370, 0
      %v3414 = vsel %vm400, %v3371, 0
      %v3417 = vsel %vm400, %v3372, 0
      %v3420 = vsel %vm400, %v3373, 0
      %v3423 = vsel %vm400, %v3374, 0
      %v3426 = vsel %vm400, %v3375, 0
      %v3429 = vsel %vm400, %v3376, 0
      %v3432 = vsel %vm400, %v3377, 0
      %v3435 = vsel %vm400, %v3378, 0
      %v3438 = vsel %vm400, %v3379, 0
      %v3441 = vsel %vm400, %v3380, 0
      %v3444 = vsel %vm400, %v3381, 0
      %v3447 = vsel %vm400, %v3382, 0
      %v3450 = vsel %vm400, %v3383, 0
      %v3453 = vsel %vm400, %v3384, 0
      %v3456 = vsel %vm400, %v3385, 0
      %v3459 = vsel %vm400, %v3386, 0
      %v3462 = vsel %vm400, %v3387, 0
      %v3465 = vsel %vm400, %v3388, 0
      %v3468 = vsel %vm400, %v3389, 0
      %v3471 = vsel %vm400, %v3390, 0
      %v3474 = vsel %vm400, %v3391, 0
      %v3477 = vsel %vm400, %v3392, 0
      %v3480 = vsel %vm400, %v3393, 0
      %v3483 = vsel %vm400, %v3394, 0
      %v3486 = vsel %vm400, %v3395, 0
      %v3489 = vsel %vm400, %v3396, 0
      %v3492 = vsel %vm400, %v3397, 0
      %v3495 = vsel %vm400, %v3398, 0
      %3497 = vmatprep.subr.mxu0 0.0
      %3498 = vmatpush1.msra.mxu0 %v3400
      %3499 = vmatprep.subr.mxu0 0.0
      %3500 = vmatpush1.msra.mxu0 0.0
      %3501 = vmatprep.subr.mxu0 0.0
      %3502 = vmatpush1.msra.mxu0 0.0
      %3503 = vmatprep.subr.mxu0 0.0
      %3504 = vmatpush1.msra.mxu0 0.0
      %3505 = vmatprep.subr.mxu0 0.0
      %3506 = vmatpush1.msra.mxu0 0.0
      %3507 = vmatprep.subr.mxu0 0.0
      %3508 = vmatpush1.msra.mxu0 0.0
      %3509 = vmatprep.subr.mxu0 0.0
      %3510 = vmatpush1.msra.mxu0 0.0
      %3511 = vmatprep.subr.mxu0 0.0
      %3512 = vmatpush1.msra.mxu0 0.0
      %3513 = vmatprep.subr.mxu0 0.0
      %3514 = vmatpush1.msra.mxu0 0.0
      %3515 = vmatprep.subr.mxu0 0.0
      %3516 = vmatpush1.msra.mxu0 0.0
      %3517 = vmatprep.subr.mxu0 0.0
      %3518 = vmatpush1.msra.mxu0 0.0
      %3519 = vmatprep.subr.mxu0 0.0
      %3520 = vmatpush1.msra.mxu0 0.0
      %3521 = vmatprep.subr.mxu0 0.0
      %3522 = vmatpush1.msra.mxu0 0.0
      %3523 = vmatprep.subr.mxu0 0.0
      %3524 = vmatpush1.msra.mxu0 0.0
      %3525 = vmatprep.subr.mxu0 0.0
      %3526 = vmatpush1.msra.mxu0 0.0
      %3527 = vmatprep.subr.mxu0 0.0
      %3528 = vmatpush1.msra.mxu0 0.0
      %3529 = vmatprep.subr.mxu0 0.0
      %3530 = vmatpush1.msra.mxu0 0.0
      %3531 = vmatprep.subr.mxu0 0.0
      %3532 = vmatpush1.msra.mxu0 0.0
      %3533 = vmatprep.subr.mxu0 0.0
      %3534 = vmatpush1.msra.mxu0 0.0
      %3535 = vmatprep.subr.mxu0 0.0
      %3536 = vmatpush1.msra.mxu0 0.0
      %3537 = vmatprep.subr.mxu0 0.0
      %3538 = vmatpush1.msra.mxu0 0.0
      %3539 = vmatprep.subr.mxu0 0.0
      %3540 = vmatpush1.msra.mxu0 0.0
      %3541 = vmatprep.subr.mxu0 0.0
      %3542 = vmatpush1.msra.mxu0 0.0
      %3543 = vmatprep.subr.mxu0 0.0
      %3544 = vmatpush1.msra.mxu0 0.0
      %3545 = vmatprep.subr.mxu0 0.0
      %3546 = vmatpush1.msra.mxu0 0.0
      %3547 = vmatprep.subr.mxu0 0.0
      %3548 = vmatpush1.msra.mxu0 0.0
      %3549 = vmatprep.subr.mxu0 0.0
      %3550 = vmatpush1.msra.mxu0 0.0
      %3551 = vmatprep.subr.mxu0 0.0
      %3552 = vmatpush1.msra.mxu0 0.0
      %3553 = vmatprep.subr.mxu0 0.0
      %3554 = vmatpush1.msra.mxu0 0.0
      %3555 = vmatprep.subr.mxu0 0.0
      %3556 = vmatpush1.msra.mxu0 0.0
      %3557 = vmatprep.subr.mxu0 0.0
      %3558 = vmatpush1.msra.mxu0 0.0
      %3559 = vmatprep.subr.mxu0 0.0
      %3560 = vmatpush1.msra.mxu0 0.0
      %3561 = vmatprep.mubr.f32.mxu0 0.0
      %3562 = vmatmul.mubr.f32.gmra.mrb[0].mxu0 %v3402
      %v3563 = vpop.f32.mrb[0].mxu0
      %v3564 = vadd.f32 0.0, %v3563
      %v3565 = vpop.f32.mrb[0].mxu0
      %3566 = vmatprep.mubr.f32.mxu0 0.0
      %3567 = vmatmul.mubr.f32.gmra.mrb[0].mxu0 %v3405
      %v3568 = vpop.f32.mrb[0].mxu0
      %v3569 = vadd.f32 0.0, %v3568
      %v3570 = vpop.f32.mrb[0].mxu0
      %3571 = vmatprep.mubr.f32.mxu0 0.0
      %3572 = vmatmul.mubr.f32.gmra.mrb[0].mxu0 %v3408
      %v3573 = vpop.f32.mrb[0].mxu0
      %v3574 = vadd.f32 0.0, %v3573
      %v3575 = vpop.f32.mrb[0].mxu0
      %3576 = vmatprep.mubr.f32.mxu0 0.0
      %3577 = vmatmul.mubr.f32.gmra.mrb[0].mxu0 %v3411
      %v3578 = vpop.f32.mrb[0].mxu0
      %v3579 = vadd.f32 0.0, %v3578
      %v3580 = vpop.f32.mrb[0].mxu0
      %3581 = vmatprep.mubr.f32.mxu0 0.0
      %3582 = vmatmul.mubr.f32.gmra.mrb[0].mxu0 %v3414
      %v3583 = vpop.f32.mrb[0].mxu0
      %v3584 = vadd.f32 0.0, %v3583
      %v3585 = vpop.f32.mrb[0].mxu0
      %3586 = vmatprep.mubr.f32.mxu0 0.0
      %3587 = vmatmul.mubr.f32.gmra.mrb[0].mxu0 %v3417
      %v3588 = vpop.f32.mrb[0].mxu0
      %v3589 = vadd.f32 0.0, %v3588
      %v3590 = vpop.f32.mrb[0].mxu0
      %3591 = vmatprep.mubr.f32.mxu0 0.0
      %3592 = vmatmul.mubr.f32.gmra.mrb[0].mxu0 %v3420
      %v3593 = vpop.f32.mrb[0].mxu0
      %v3594 = vadd.f32 0.0, %v3593
      %v3595 = vpop.f32.mrb[0].mxu0
      %3596 = vmatprep.mubr.f32.mxu0 0.0
      %3597 = vmatmul.mubr.f32.gmra.mrb[0].mxu0 %v3423
      %v3598 = vpop.f32.mrb[0].mxu0
      %v3599 = vadd.f32 0.0, %v3598
      %v3600 = vpop.f32.mrb[0].mxu0
      %3601 = vmatprep.mubr.f32.mxu0 0.0
      %3602 = vmatmul.mubr.f32.gmra.mrb[0].mxu0 %v3426
      %v3603 = vpop.f32.mrb[0].mxu0
      %v3604 = vadd.f32 0.0, %v3603
      %v3605 = vpop.f32.mrb[0].mxu0
      %3606 = vmatprep.mubr.f32.mxu0 0.0
      %3607 = vmatmul.mubr.f32.gmra.mrb[0].mxu0 %v3429
      %v3608 = vpop.f32.mrb[0].mxu0
      %v3609 = vadd.f32 0.0, %v3608
      %v3610 = vpop.f32.mrb[0].mxu0
      %3611 = vmatprep.mubr.f32.mxu0 0.0
      %3612 = vmatmul.mubr.f32.gmra.mrb[0].mxu0 %v3432
      %v3613 = vpop.f32.mrb[0].mxu0
      %v3614 = vadd.f32 0.0, %v3613
      %v3615 = vpop.f32.mrb[0].mxu0
      %3616 = vmatprep.mubr.f32.mxu0 0.0
      %3617 = vmatmul.mubr.f32.gmra.mrb[0].mxu0 %v3435
      %v3618 = vpop.f32.mrb[0].mxu0
      %v3619 = vadd.f32 0.0, %v3618
      %v3620 = vpop.f32.mrb[0].mxu0
      %3621 = vmatprep.mubr.f32.mxu0 0.0
      %3622 = vmatmul.mubr.f32.gmra.mrb[0].mxu0 %v3438
      %v3623 = vpop.f32.mrb[0].mxu0
      %v3624 = vadd.f32 0.0, %v3623
      %v3625 = vpop.f32.mrb[0].mxu0
      %3626 = vmatprep.mubr.f32.mxu0 0.0
      %3627 = vmatmul.mubr.f32.gmra.mrb[0].mxu0 %v3441
      %v3628 = vpop.f32.mrb[0].mxu0
      %v3629 = vadd.f32 0.0, %v3628
      %v3630 = vpop.f32.mrb[0].mxu0
      %3631 = vmatprep.mubr.f32.mxu0 0.0
      %3632 = vmatmul.mubr.f32.gmra.mrb[0].mxu0 %v3444
      %v3633 = vpop.f32.mrb[0].mxu0
      %v3634 = vadd.f32 0.0, %v3633
      %v3635 = vpop.f32.mrb[0].mxu0
      %3636 = vmatprep.mubr.f32.mxu0 0.0
      %3637 = vmatmul.mubr.f32.gmra.mrb[0].mxu0 %v3447
      %v3638 = vpop.f32.mrb[0].mxu0
      %v3639 = vadd.f32 0.0, %v3638
      %v3640 = vpop.f32.mrb[0].mxu0
      %3641 = vmatprep.mubr.f32.mxu0 0.0
      %3642 = vmatmul.mubr.f32.gmra.mrb[0].mxu0 %v3450
      %v3643 = vpop.f32.mrb[0].mxu0
      %v3644 = vadd.f32 0.0, %v3643
      %v3645 = vpop.f32.mrb[0].mxu0
      %3646 = vmatprep.mubr.f32.mxu0 0.0
      %3647 = vmatmul.mubr.f32.gmra.mrb[0].mxu0 %v3453
      %v3648 = vpop.f32.mrb[0].mxu0
      %v3649 = vadd.f32 0.0, %v3648
      %v3650 = vpop.f32.mrb[0].mxu0
      %3651 = vmatprep.mubr.f32.mxu0 0.0
      %3652 = vmatmul.mubr.f32.gmra.mrb[0].mxu0 %v3456
      %v3653 = vpop.f32.mrb[0].mxu0
      %v3654 = vadd.f32 0.0, %v3653
      %v3655 = vpop.f32.mrb[0].mxu0
      %3656 = vmatprep.mubr.f32.mxu0 0.0
      %3657 = vmatmul.mubr.f32.gmra.mrb[0].mxu0 %v3459
      %v3658 = vpop.f32.mrb[0].mxu0
      %v3659 = vadd.f32 0.0, %v3658
      %v3660 = vpop.f32.mrb[0].mxu0
      %3661 = vmatprep.mubr.f32.mxu0 0.0
      %3662 = vmatmul.mubr.f32.gmra.mrb[0].mxu0 %v3462
      %v3663 = vpop.f32.mrb[0].mxu0
      %v3664 = vadd.f32 0.0, %v3663
      %v3665 = vpop.f32.mrb[0].mxu0
      %3666 = vmatprep.mubr.f32.mxu0 0.0
      %3667 = vmatmul.mubr.f32.gmra.mrb[0].mxu0 %v3465
      %v3668 = vpop.f32.mrb[0].mxu0
      %v3669 = vadd.f32 0.0, %v3668
      %v3670 = vpop.f32.mrb[0].mxu0
      %3671 = vmatprep.mubr.f32.mxu0 0.0
      %3672 = vmatmul.mubr.f32.gmra.mrb[0].mxu0 %v3468
      %v3673 = vpop.f32.mrb[0].mxu0
      %v3674 = vadd.f32 0.0, %v3673
      %v3675 = vpop.f32.mrb[0].mxu0
      %3676 = vmatprep.mubr.f32.mxu0 0.0
      %3677 = vmatmul.mubr.f32.gmra.mrb[0].mxu0 %v3471
      %v3678 = vpop.f32.mrb[0].mxu0
      %v3679 = vadd.f32 0.0, %v3678
      %v3680 = vpop.f32.mrb[0].mxu0
      %3681 = vmatprep.mubr.f32.mxu0 0.0
      %3682 = vmatmul.mubr.f32.gmra.mrb[0].mxu0 %v3474
      %v3683 = vpop.f32.mrb[0].mxu0
      %v3684 = vadd.f32 0.0, %v3683
      %v3685 = vpop.f32.mrb[0].mxu0
      %3686 = vmatprep.mubr.f32.mxu0 0.0
      %3687 = vmatmul.mubr.f32.gmra.mrb[0].mxu0 %v3477
      %v3688 = vpop.f32.mrb[0].mxu0
      %v3689 = vadd.f32 0.0, %v3688
      %v3690 = vpop.f32.mrb[0].mxu0
      %3691 = vmatprep.mubr.f32.mxu0 0.0
      %3692 = vmatmul.mubr.f32.gmra.mrb[0].mxu0 %v3480
      %v3693 = vpop.f32.mrb[0].mxu0
      %v3694 = vadd.f32 0.0, %v3693
      %v3695 = vpop.f32.mrb[0].mxu0
      %3696 = vmatprep.mubr.f32.mxu0 0.0
      %3697 = vmatmul.mubr.f32.gmra.mrb[0].mxu0 %v3483
      %v3698 = vpop.f32.mrb[0].mxu0
      %v3699 = vadd.f32 0.0, %v3698
      %v3700 = vpop.f32.mrb[0].mxu0
      %3701 = vmatprep.mubr.f32.mxu0 0.0
      %3702 = vmatmul.mubr.f32.gmra.mrb[0].mxu0 %v3486
      %v3703 = vpop.f32.mrb[0].mxu0
      %v3704 = vadd.f32 0.0, %v3703
      %v3705 = vpop.f32.mrb[0].mxu0
      %3706 = vmatprep.mubr.f32.mxu0 0.0
      %3707 = vmatmul.mubr.f32.gmra.mrb[0].mxu0 %v3489
      %v3708 = vpop.f32.mrb[0].mxu0
      %v3709 = vadd.f32 0.0, %v3708
      %v3710 = vpop.f32.mrb[0].mxu0
      %3711 = vmatprep.mubr.f32.mxu0 0.0
      %3712 = vmatmul.mubr.f32.gmra.mrb[0].mxu0 %v3492
      %v3713 = vpop.f32.mrb[0].mxu0
      %v3714 = vadd.f32 0.0, %v3713
      %v3715 = vpop.f32.mrb[0].mxu0
      %3716 = vmatprep.mubr.f32.mxu0 0.0
      %3717 = vmatmul.mubr.f32.gmra.mrb[0].mxu0 %v3495
      %v3718 = vpop.f32.mrb[0].mxu0
      %v3719 = vadd.f32 0.0, %v3718
      %v3720 = vpop.f32.mrb[0].mxu0
      %3721 = vdwg.mxu0
      %v3722 = vadd.f32 %v3335, %v3564
      %v3723 = vadd.f32 %v3336, %v3569
      %v3724 = vadd.f32 %v3337, %v3574
      %v3725 = vadd.f32 %v3338, %v3579
      %v3726 = vadd.f32 %v3339, %v3584
      %v3727 = vadd.f32 %v3340, %v3589
      %v3728 = vadd.f32 %v3341, %v3594
      %v3729 = vadd.f32 %v3342, %v3599
      %v3730 = vadd.f32 %v3343, %v3604
      %v3731 = vadd.f32 %v3344, %v3609
      %v3732 = vadd.f32 %v3345, %v3614
      %v3733 = vadd.f32 %v3346, %v3619
      %v3734 = vadd.f32 %v3347, %v3624
      %v3735 = vadd.f32 %v3348, %v3629
      %v3736 = vadd.f32 %v3349, %v3634
      %v3737 = vadd.f32 %v3350, %v3639
      %v3738 = vadd.f32 %v3351, %v3644
      %v3739 = vadd.f32 %v3352, %v3649
      %v3740 = vadd.f32 %v3353, %v3654
      %v3741 = vadd.f32 %v3354, %v3659
      %v3742 = vadd.f32 %v3355, %v3664
      %v3743 = vadd.f32 %v3356, %v3669
      %v3744 = vadd.f32 %v3357, %v3674
      %v3745 = vadd.f32 %v3358, %v3679
      %v3746 = vadd.f32 %v3359, %v3684
      %v3747 = vadd.f32 %v3360, %v3689
      %v3748 = vadd.f32 %v3361, %v3694
      %v3749 = vadd.f32 %v3362, %v3699
      %v3750 = vadd.f32 %v3363, %v3704
      %v3751 = vadd.f32 %v3364, %v3709
      %v3752 = vadd.f32 %v3365, %v3714
      %v3753 = vadd.f32 %v3366, %v3719
      %v3754 = vsel %vm400, %v3722, 0.0
      %v3755 = vsel %vm400, %v3723, 0.0
      %v3756 = vadd.f32 %v3754, %v3755
      %v3757 = vsel %vm400, %v3724, 0.0
      %v3758 = vadd.f32 %v3756, %v3757
      %v3759 = vsel %vm400, %v3725, 0.0
      %v3760 = vadd.f32 %v3758, %v3759
      %v3761 = vsel %vm400, %v3726, 0.0
      %v3762 = vadd.f32 %v3760, %v3761
      %v3763 = vsel %vm400, %v3727, 0.0
      %v3764 = vadd.f32 %v3762, %v3763
      %v3765 = vsel %vm400, %v3728, 0.0
      %v3766 = vadd.f32 %v3764, %v3765
      %v3767 = vsel %vm400, %v3729, 0.0
      %v3768 = vadd.f32 %v3766, %v3767
      %v3769 = vsel %vm400, %v3730, 0.0
      %v3770 = vadd.f32 %v3768, %v3769
      %v3771 = vsel %vm400, %v3731, 0.0
      %v3772 = vadd.f32 %v3770, %v3771
      %v3773 = vsel %vm400, %v3732, 0.0
      %v3774 = vadd.f32 %v3772, %v3773
      %v3775 = vsel %vm400, %v3733, 0.0
      %v3776 = vadd.f32 %v3774, %v3775
      %v3777 = vsel %vm400, %v3734, 0.0
      %v3778 = vadd.f32 %v3776, %v3777
      %v3779 = vsel %vm400, %v3735, 0.0
      %v3780 = vadd.f32 %v3778, %v3779
      %v3781 = vsel %vm400, %v3736, 0.0
      %v3782 = vadd.f32 %v3780, %v3781
      %v3783 = vsel %vm400, %v3737, 0.0
      %v3784 = vadd.f32 %v3782, %v3783
      %v3785 = vsel %vm400, %v3738, 0.0
      %v3786 = vadd.f32 %v3784, %v3785
      %v3787 = vsel %vm400, %v3739, 0.0
      %v3788 = vadd.f32 %v3786, %v3787
      %v3789 = vsel %vm400, %v3740, 0.0
      %v3790 = vadd.f32 %v3788, %v3789
      %v3791 = vsel %vm400, %v3741, 0.0
      %v3792 = vadd.f32 %v3790, %v3791
      %v3793 = vsel %vm400, %v3742, 0.0
      %v3794 = vadd.f32 %v3792, %v3793
      %v3795 = vsel %vm400, %v3743, 0.0
      %v3796 = vadd.f32 %v3794, %v3795
      %v3797 = vsel %vm400, %v3744, 0.0
      %v3798 = vadd.f32 %v3796, %v3797
      %v3799 = vsel %vm400, %v3745, 0.0
      %v3800 = vadd.f32 %v3798, %v3799
      %v3801 = vsel %vm400, %v3746, 0.0
      %v3802 = vadd.f32 %v3800, %v3801
      %v3803 = vsel %vm400, %v3747, 0.0
      %v3804 = vadd.f32 %v3802, %v3803
      %v3805 = vsel %vm400, %v3748, 0.0
      %v3806 = vadd.f32 %v3804, %v3805
      %v3807 = vsel %vm400, %v3749, 0.0
      %v3808 = vadd.f32 %v3806, %v3807
      %v3809 = vsel %vm400, %v3750, 0.0
      %v3810 = vadd.f32 %v3808, %v3809
      %v3811 = vsel %vm400, %v3751, 0.0
      %v3812 = vadd.f32 %v3810, %v3811
      %v3813 = vsel %vm400, %v3752, 0.0
      %v3814 = vadd.f32 %v3812, %v3813
      %v3815 = vsel %vm400, %v3753, 0.0
      %v3816 = vadd.f32 %v3814, %v3815
      %v3817 = vrot.slane %v3816, 4
      %v3818 = vadd.f32 %v3816, %v3817
      %v3819 = vrot.slane %v3818, 2
      %v3820 = vadd.f32 %v3818, %v3819
      %v3821 = vrot.slane %v3820, 1
      %v3822 = vadd.f32 %v3820, %v3821
      %v3823 = vmul.f32 %v3822, 0.00390625
      %v3824 = vld [vmem:[%s2] sm:$0x1]
      %v3825 = vadd.f32 %v3823, %v3824
      %v3826 = vld [vmem:[%s3] sm:$0xff]
      %v3827 = vld [vmem:[%s4] sm:$0x1]
      %v3829 = vsel %vm400, %v3825, 0
      %3831 = vmatprep.subr.mxu0 0.0
      %3832 = vmatpush1.msra.mxu0 %v3826
      %3833 = vmatprep.subr.mxu0 0.0
      %3834 = vmatpush1.msra.mxu0 0.0
      %3835 = vmatprep.subr.mxu0 0.0
      %3836 = vmatpush1.msra.mxu0 0.0
      %3837 = vmatprep.subr.mxu0 0.0
      %3838 = vmatpush1.msra.mxu0 0.0
      %3839 = vmatprep.subr.mxu0 0.0
      %3840 = vmatpush1.msra.mxu0 0.0
      %3841 = vmatprep.subr.mxu0 0.0
      %3842 = vmatpush1.msra.mxu0 0.0
      %3843 = vmatprep.subr.mxu0 0.0
      %3844 = vmatpush1.msra.mxu0 0.0
      %3845 = vmatprep.subr.mxu0 0.0
      %3846 = vmatpush1.msra.mxu0 0.0
      %3847 = vmatprep.subr.mxu0 0.0
      %3848 = vmatpush1.msra.mxu0 0.0
      %3849 = vmatprep.subr.mxu0 0.0
      %3850 = vmatpush1.msra.mxu0 0.0
      %3851 = vmatprep.subr.mxu0 0.0
      %3852 = vmatpush1.msra.mxu0 0.0
      %3853 = vmatprep.subr.mxu0 0.0
      %3854 = vmatpush1.msra.mxu0 0.0
      %3855 = vmatprep.subr.mxu0 0.0
      %3856 = vmatpush1.msra.mxu0 0.0
      %3857 = vmatprep.subr.mxu0 0.0
      %3858 = vmatpush1.msra.mxu0 0.0
      %3859 = vmatprep.subr.mxu0 0.0
      %3860 = vmatpush1.msra.mxu0 0.0
      %3861 = vmatprep.subr.mxu0 0.0
      %3862 = vmatpush1.msra.mxu0 0.0
      %3863 = vmatprep.subr.mxu0 0.0
      %3864 = vmatpush1.msra.mxu0 0.0
      %3865 = vmatprep.subr.mxu0 0.0
      %3866 = vmatpush1.msra.mxu0 0.0
      %3867 = vmatprep.subr.mxu0 0.0
      %3868 = vmatpush1.msra.mxu0 0.0
      %3869 = vmatprep.subr.mxu0 0.0
      %3870 = vmatpush1.msra.mxu0 0.0
      %3871 = vmatprep.subr.mxu0 0.0
      %3872 = vmatpush1.msra.mxu0 0.0
      %3873 = vmatprep.subr.mxu0 0.0
      %3874 = vmatpush1.msra.mxu0 0.0
      %3875 = vmatprep.subr.mxu0 0.0
      %3876 = vmatpush1.msra.mxu0 0.0
      %3877 = vmatprep.subr.mxu0 0.0
      %3878 = vmatpush1.msra.mxu0 0.0
      %3879 = vmatprep.subr.mxu0 0.0
      %3880 = vmatpush1.msra.mxu0 0.0
      %3881 = vmatprep.subr.mxu0 0.0
      %3882 = vmatpush1.msra.mxu0 0.0
      %3883 = vmatprep.subr.mxu0 0.0
      %3884 = vmatpush1.msra.mxu0 0.0
      %3885 = vmatprep.subr.mxu0 0.0
      %3886 = vmatpush1.msra.mxu0 0.0
      %3887 = vmatprep.subr.mxu0 0.0
      %3888 = vmatpush1.msra.mxu0 0.0
      %3889 = vmatprep.subr.mxu0 0.0
      %3890 = vmatpush1.msra.mxu0 0.0
      %3891 = vmatprep.subr.mxu0 0.0
      %3892 = vmatpush1.msra.mxu0 0.0
      %3893 = vmatprep.subr.mxu0 0.0
      %3894 = vmatpush1.msra.mxu0 0.0
      %3895 = vmatprep.mubr.f32.mxu0 0.0
      %3896 = vmatmul.mubr.f32.gmra.mrb[0].mxu0 %v3829
      %v3897 = vpop.f32.mrb[0].mxu0
      %v3898 = vadd.f32 %v3827, %v3897
      %v3899 = vpop.f32.mrb[0].mxu0
      %3900 = vdwg.mxu0
      %v3901 = vmax.f32 %v3898, 0.0
      %v3902 = vld [vmem:[%s5] sm:$0x3]
      %v3903 = vld [vmem:[%s6] sm:$0x1]
      %vm3904 = vcmask 15360
      %v3906 = vsel %vm3904, %v3901, 0
      %vm3908 = vcmask 1041408
      %v3910 = vsel %vm3908, %v3902, 0
      %3912 = vmatprep.subr.mxu0 0.0
      %3913 = vmatpush1.msra.mxu0 %v3910
      %3914 = vmatprep.subr.mxu0 0.0
      %3915 = vmatpush1.msra.mxu0 0.0
      %3916 = vmatprep.subr.mxu0 0.0
      %3917 = vmatpush1.msra.mxu0 0.0
      %3918 = vmatprep.subr.mxu0 0.0
      %3919 = vmatpush1.msra.mxu0 0.0
      %3920 = vmatprep.subr.mxu0 0.0
      %3921 = vmatpush1.msra.mxu0 0.0
      %3922 = vmatprep.subr.mxu0 0.0
      %3923 = vmatpush1.msra.mxu0 0.0
      %3924 = vmatprep.subr.mxu0 0.0
      %3925 = vmatpush1.msra.mxu0 0.0
      %3926 = vmatprep.subr.mxu0 0.0
      %3927 = vmatpush1.msra.mxu0 0.0
      %3928 = vmatprep.subr.mxu0 0.0
      %3929 = vmatpush1.msra.mxu0 0.0
      %3930 = vmatprep.subr.mxu0 0.0
      %3931 = vmatpush1.msra.mxu0 0.0
      %3932 = vmatprep.subr.mxu0 0.0
      %3933 = vmatpush1.msra.mxu0 0.0
      %3934 = vmatprep.subr.mxu0 0.0
      %3935 = vmatpush1.msra.mxu0 0.0
      %3936 = vmatprep.subr.mxu0 0.0
      %3937 = vmatpush1.msra.mxu0 0.0
      %3938 = vmatprep.subr.mxu0 0.0
      %3939 = vmatpush1.msra.mxu0 0.0
      %3940 = vmatprep.subr.mxu0 0.0
      %3941 = vmatpush1.msra.mxu0 0.0
      %3942 = vmatprep.subr.mxu0 0.0
      %3943 = vmatpush1.msra.mxu0 0.0
      %3944 = vmatprep.subr.mxu0 0.0
      %3945 = vmatpush1.msra.mxu0 0.0
      %3946 = vmatprep.subr.mxu0 0.0
      %3947 = vmatpush1.msra.mxu0 0.0
      %3948 = vmatprep.subr.mxu0 0.0
      %3949 = vmatpush1.msra.mxu0 0.0
      %3950 = vmatprep.subr.mxu0 0.0
      %3951 = vmatpush1.msra.mxu0 0.0
      %3952 = vmatprep.subr.mxu0 0.0
      %3953 = vmatpush1.msra.mxu0 0.0
      %3954 = vmatprep.subr.mxu0 0.0
      %3955 = vmatpush1.msra.mxu0 0.0
      %3956 = vmatprep.subr.mxu0 0.0
      %3957 = vmatpush1.msra.mxu0 0.0
      %3958 = vmatprep.subr.mxu0 0.0
      %3959 = vmatpush1.msra.mxu0 0.0
      %3960 = vmatprep.subr.mxu0 0.0
      %3961 = vmatpush1.msra.mxu0 0.0
      %3962 = vmatprep.subr.mxu0 0.0
      %3963 = vmatpush1.msra.mxu0 0.0
      %3964 = vmatprep.subr.mxu0 0.0
      %3965 = vmatpush1.msra.mxu0 0.0
      %3966 = vmatprep.subr.mxu0 0.0
      %3967 = vmatpush1.msra.mxu0 0.0
      %3968 = vmatprep.subr.mxu0 0.0
      %3969 = vmatpush1.msra.mxu0 0.0
      %3970 = vmatprep.subr.mxu0 0.0
      %3971 = vmatpush1.msra.mxu0 0.0
      %3972 = vmatprep.subr.mxu0 0.0
      %3973 = vmatpush1.msra.mxu0 0.0
      %3974 = vmatprep.subr.mxu0 0.0
      %3975 = vmatpush1.msra.mxu0 0.0
      %3976 = vmatprep.mubr.f32.mxu0 0.0
      %3977 = vmatmul.mubr.f32.gmra.mrb[0].mxu0 %v3906
      %v3978 = vpop.f32.mrb[0].mxu0
      %v3979 = vadd.f32 %v3903, %v3978
      %v3980 = vpop.f32.mrb[0].mxu0
      %3981 = vdwg.mxu0
      %v3982 = vld [vmem:[%s7] sm:$0x3]
      %v3983 = vld [vmem:[%s8] sm:$0x1]
      %v3985 = vsel %vm3908, %v3982, 0
      %3987 = vmatprep.subr.mxu0 0.0
      %3988 = vmatpush1.msra.mxu0 %v3985
      %3989 = vmatprep.subr.mxu0 0.0
      %3990 = vmatpush1.msra.mxu0 0.0
      %3991 = vmatprep.subr.mxu0 0.0
      %3992 = vmatpush1.msra.mxu0 0.0
      %3993 = vmatprep.subr.mxu0 0.0
      %3994 = vmatpush1.msra.mxu0 0.0
      %3995 = vmatprep.subr.mxu0 0.0
      %3996 = vmatpush1.msra.mxu0 0.0
      %3997 = vmatprep.subr.mxu0 0.0
      %3998 = vmatpush1.msra.mxu0 0.0
      %3999 = vmatprep.subr.mxu0 0.0
      %4000 = vmatpush1.msra.mxu0 0.0
      %4001 = vmatprep.subr.mxu0 0.0
      %4002 = vmatpush1.msra.mxu0 0.0
      %4003 = vmatprep.subr.mxu0 0.0
      %4004 = vmatpush1.msra.mxu0 0.0
      %4005 = vmatprep.subr.mxu0 0.0
      %4006 = vmatpush1.msra.mxu0 0.0
      %4007 = vmatprep.subr.mxu0 0.0
      %4008 = vmatpush1.msra.mxu0 0.0
      %4009 = vmatprep.subr.mxu0 0.0
      %4010 = vmatpush1.msra.mxu0 0.0
      %4011 = vmatprep.subr.mxu0 0.0
      %4012 = vmatpush1.msra.mxu0 0.0
      %4013 = vmatprep.subr.mxu0 0.0
      %4014 = vmatpush1.msra.mxu0 0.0
      %4015 = vmatprep.subr.mxu0 0.0
      %4016 = vmatpush1.msra.mxu0 0.0
      %4017 = vmatprep.subr.mxu0 0.0
      %4018 = vmatpush1.msra.mxu0 0.0
      %4019 = vmatprep.subr.mxu0 0.0
      %4020 = vmatpush1.msra.mxu0 0.0
      %4021 = vmatprep.subr.mxu0 0.0
      %4022 = vmatpush1.msra.mxu0 0.0
      %4023 = vmatprep.subr.mxu0 0.0
      %4024 = vmatpush1.msra.mxu0 0.0
      %4025 = vmatprep.subr.mxu0 0.0
      %4026 = vmatpush1.msra.mxu0 0.0
      %4027 = vmatprep.subr.mxu0 0.0
      %4028 = vmatpush1.msra.mxu0 0.0
      %4029 = vmatprep.subr.mxu0 0.0
      %4030 = vmatpush1.msra.mxu0 0.0
      %4031 = vmatprep.subr.mxu0 0.0
      %4032 = vmatpush1.msra.mxu0 0.0
      %4033 = vmatprep.subr.mxu0 0.0
      %4034 = vmatpush1.msra.mxu0 0.0
      %4035 = vmatprep.subr.mxu0 0.0
      %4036 = vmatpush1.msra.mxu0 0.0
      %4037 = vmatprep.subr.mxu0 0.0
      %4038 = vmatpush1.msra.mxu0 0.0
      %4039 = vmatprep.subr.mxu0 0.0
      %4040 = vmatpush1.msra.mxu0 0.0
      %4041 = vmatprep.subr.mxu0 0.0
      %4042 = vmatpush1.msra.mxu0 0.0
      %4043 = vmatprep.subr.mxu0 0.0
      %4044 = vmatpush1.msra.mxu0 0.0
      %4045 = vmatprep.subr.mxu0 0.0
      %4046 = vmatpush1.msra.mxu0 0.0
      %4047 = vmatprep.subr.mxu0 0.0
      %4048 = vmatpush1.msra.mxu0 0.0
      %4049 = vmatprep.subr.mxu0 0.0
      %4050 = vmatpush1.msra.mxu0 0.0
      %4051 = vmatprep.mubr.f32.mxu0 0.0
      %4052 = vmatmul.mubr.f32.gmra.mrb[0].mxu0 %v3906
      %v4053 = vpop.f32.mrb[0].mxu0
      %v4054 = vadd.f32 %v3983, %v4053
      %v4055 = vpop.f32.mrb[0].mxu0
      %4056 = vdwg.mxu0
      %v4057 = vxor.u32 %v3979, 2147483648
      %v4058 = vmul.f32 %v4057, 1.442695
      %v4059 = vpow.pop %v4058
      %v4060 = vadd.f32 %v4059, 1.0
      %v4061 = vrcp.pop %v4060
      %v4062 = vmul.f32 1.0, %v4061
      %v4063 = vadd.f32 %v4062, 1.0
      %v4064 = vlaneseq
      %v4065 = vshrl.u32 %v4064, 7
      %v4066 = vsub.s32 0, %v4065
      %v4067 = vrot.slane %v4063, %v4066
      %v4068 = vmul.f32 %v1818, %v4067
      %v4069 = vmul.f32 %v1819, %v4067
      %v4070 = vmul.f32 %v1820, %v4067
      %v4071 = vmul.f32 %v1821, %v4067
      %v4072 = vmul.f32 %v1822, %v4067
      %v4073 = vmul.f32 %v1823, %v4067
      %v4074 = vmul.f32 %v1824, %v4067
      %v4075 = vmul.f32 %v1825, %v4067
      %v4076 = vmul.f32 %v1826, %v4067
      %v4077 = vmul.f32 %v1827, %v4067
      %v4078 = vmul.f32 %v1828, %v4067
      %v4079 = vmul.f32 %v1829, %v4067
      %v4080 = vmul.f32 %v1830, %v4067
      %v4081 = vmul.f32 %v1831, %v4067
      %v4082 = vmul.f32 %v1832, %v4067
      %v4083 = vmul.f32 %v1833, %v4067
      %v4084 = vmul.f32 %v1834, %v4067
      %v4085 = vmul.f32 %v1835, %v4067
      %v4086 = vmul.f32 %v1836, %v4067
      %v4087 = vmul.f32 %v1837, %v4067
      %v4088 = vmul.f32 %v1838, %v4067
      %v4089 = vmul.f32 %v1839, %v4067
      %v4090 = vmul.f32 %v1840, %v4067
      %v4091 = vmul.f32 %v1841, %v4067
      %v4092 = vmul.f32 %v1842, %v4067
      %v4093 = vmul.f32 %v1843, %v4067
      %v4094 = vmul.f32 %v1844, %v4067
      %v4095 = vmul.f32 %v1845, %v4067
      %v4096 = vmul.f32 %v1846, %v4067
      %v4097 = vmul.f32 %v1847, %v4067
      %v4098 = vmul.f32 %v1848, %v4067
      %v4099 = vmul.f32 %v1849, %v4067
      %v4100 = vlaneseq
      %v4101 = vshrl.u32 %v4100, 7
      %v4102 = vsub.s32 0, %v4101
      %v4103 = vrot.slane %v4054, %v4102
      %v4104 = vadd.f32 %v4068, %v4103
      %v4105 = vadd.f32 %v4069, %v4103
      %v4106 = vadd.f32 %v4070, %v4103
      %v4107 = vadd.f32 %v4071, %v4103
      %v4108 = vadd.f32 %v4072, %v4103
      %v4109 = vadd.f32 %v4073, %v4103
      %v4110 = vadd.f32 %v4074, %v4103
      %v4111 = vadd.f32 %v4075, %v4103
      %v4112 = vadd.f32 %v4076, %v4103
      %v4113 = vadd.f32 %v4077, %v4103
      %v4114 = vadd.f32 %v4078, %v4103
      %v4115 = vadd.f32 %v4079, %v4103
      %v4116 = vadd.f32 %v4080, %v4103
      %v4117 = vadd.f32 %v4081, %v4103
      %v4118 = vadd.f32 %v4082, %v4103
      %v4119 = vadd.f32 %v4083, %v4103
      %v4120 = vadd.f32 %v4084, %v4103
      %v4121 = vadd.f32 %v4085, %v4103
      %v4122 = vadd.f32 %v4086, %v4103
      %v4123 = vadd.f32 %v4087, %v4103
      %v4124 = vadd.f32 %v4088, %v4103
      %v4125 = vadd.f32 %v4089, %v4103
      %v4126 = vadd.f32 %v4090, %v4103
      %v4127 = vadd.f32 %v4091, %v4103
      %v4128 = vadd.f32 %v4092, %v4103
      %v4129 = vadd.f32 %v4093, %v4103
      %v4130 = vadd.f32 %v4094, %v4103
      %v4131 = vadd.f32 %v4095, %v4103
      %v4132 = vadd.f32 %v4096, %v4103
      %v4133 = vadd.f32 %v4097, %v4103
      %v4134 = vadd.f32 %v4098, %v4103
      %v4135 = vadd.f32 %v4099, %v4103
      %v4136 = vmax.f32 %v4104, 0.0
      %v4137 = vmax.f32 %v4105, 0.0
      %v4138 = vmax.f32 %v4106, 0.0
      %v4139 = vmax.f32 %v4107, 0.0
      %v4140 = vmax.f32 %v4108, 0.0
      %v4141 = vmax.f32 %v4109, 0.0
      %v4142 = vmax.f32 %v4110, 0.0
      %v4143 = vmax.f32 %v4111, 0.0
      %v4144 = vmax.f32 %v4112, 0.0
      %v4145 = vmax.f32 %v4113, 0.0
      %v4146 = vmax.f32 %v4114, 0.0
      %v4147 = vmax.f32 %v4115, 0.0
      %v4148 = vmax.f32 %v4116, 0.0
      %v4149 = vmax.f32 %v4117, 0.0
      %v4150 = vmax.f32 %v4118, 0.0
      %v4151 = vmax.f32 %v4119, 0.0
      %v4152 = vmax.f32 %v4120, 0.0
      %v4153 = vmax.f32 %v4121, 0.0
      %v4154 = vmax.f32 %v4122, 0.0
      %v4155 = vmax.f32 %v4123, 0.0
      %v4156 = vmax.f32 %v4124, 0.0
      %v4157 = vmax.f32 %v4125, 0.0
      %v4158 = vmax.f32 %v4126, 0.0
      %v4159 = vmax.f32 %v4127, 0.0
      %v4160 = vmax.f32 %v4128, 0.0
      %v4161 = vmax.f32 %v4129, 0.0
      %v4162 = vmax.f32 %v4130, 0.0
      %v4163 = vmax.f32 %v4131, 0.0
      %v4164 = vmax.f32 %v4132, 0.0
      %v4165 = vmax.f32 %v4133, 0.0
      %v4166 = vmax.f32 %v4134, 0.0
      %v4167 = vmax.f32 %v4135, 0.0
      %4168 = vst.msk [vmem:[%s332] sm:$0xff] %vm400, %v4136
      %4169 = vst.msk [vmem:[%s332 + $0x8] sm:$0xff] %vm400, %v4137
      %4170 = vst.msk [vmem:[%s332 + $0x10] sm:$0xff] %vm400, %v4138
      %4171 = vst.msk [vmem:[%s332 + $0x18] sm:$0xff] %vm400, %v4139
      %4172 = vst.msk [vmem:[%s332 + $0x20] sm:$0xff] %vm400, %v4140
      %4173 = vst.msk [vmem:[%s332 + $0x28] sm:$0xff] %vm400, %v4141
      %4174 = vst.msk [vmem:[%s332 + $0x30] sm:$0xff] %vm400, %v4142
      %4175 = vst.msk [vmem:[%s332 + $0x38] sm:$0xff] %vm400, %v4143
      %4176 = vst.msk [vmem:[%s332 + $0x40] sm:$0xff] %vm400, %v4144
      %4177 = vst.msk [vmem:[%s332 + $0x48] sm:$0xff] %vm400, %v4145
      %4178 = vst.msk [vmem:[%s332 + $0x50] sm:$0xff] %vm400, %v4146
      %4179 = vst.msk [vmem:[%s332 + $0x58] sm:$0xff] %vm400, %v4147
      %4180 = vst.msk [vmem:[%s332 + $0x60] sm:$0xff] %vm400, %v4148
      %4181 = vst.msk [vmem:[%s332 + $0x68] sm:$0xff] %vm400, %v4149
      %4182 = vst.msk [vmem:[%s332 + $0x70] sm:$0xff] %vm400, %v4150
      %4183 = vst.msk [vmem:[%s332 + $0x78] sm:$0xff] %vm400, %v4151
      %4184 = vst.msk [vmem:[%s332 + $0x80] sm:$0xff] %vm400, %v4152
      %4185 = vst.msk [vmem:[%s332 + $0x88] sm:$0xff] %vm400, %v4153
      %4186 = vst.msk [vmem:[%s332 + $0x90] sm:$0xff] %vm400, %v4154
      %4187 = vst.msk [vmem:[%s332 + $0x98] sm:$0xff] %vm400, %v4155
      %4188 = vst.msk [vmem:[%s332 + $0xa0] sm:$0xff] %vm400, %v4156
      %4189 = vst.msk [vmem:[%s332 + $0xa8] sm:$0xff] %vm400, %v4157
      %4190 = vst.msk [vmem:[%s332 + $0xb0] sm:$0xff] %vm400, %v4158
      %4191 = vst.msk [vmem:[%s332 + $0xb8] sm:$0xff] %vm400, %v4159
      %4192 = vst.msk [vmem:[%s332 + $0xc0] sm:$0xff] %vm400, %v4160
      %4193 = vst.msk [vmem:[%s332 + $0xc8] sm:$0xff] %vm400, %v4161
      %4194 = vst.msk [vmem:[%s332 + $0xd0] sm:$0xff] %vm400, %v4162
      %4195 = vst.msk [vmem:[%s332 + $0xd8] sm:$0xff] %vm400, %v4163
      %4196 = vst.msk [vmem:[%s332 + $0xe0] sm:$0xff] %vm400, %v4164
      %4197 = vst.msk [vmem:[%s332 + $0xe8] sm:$0xff] %vm400, %v4165
      %4198 = vst.msk [vmem:[%s332 + $0xf0] sm:$0xff] %vm400, %v4166
      %4199 = vst.msk [vmem:[%s332 + $0xf8] sm:$0xff] %vm400, %v4167
      %p4200 = scmp.lt.s32.totalorder %s20, 1
      %s4201 = scalar_select %p4200, %s20, 1
      %s4202 = smul.addr %s4201, 32
      %s4203 = smul.addr %s4202, 8
      %s4204 = scalar_lea.vmem %s9, %s4203
      // Predicated region
      $region57: #{rec_res_block_nchw.5} parent=55 // pred_check
        %p4205 = pneg %p232
      $region58: #{rec_res_block_nchw.5} parent=55 // pred_check_branch
        %4207 = sbr.rel (%p4205) target = $region60
      $region59: #{rec_res_block_nchw.5} parent=55 // pred_region
        _
      $region60: #{rec_res_block_nchw.5} parent=55 // pred_fallthru
        _
    $region56: #{rec_res_block_nchw.5} parent=5 // pred_fallthru
      _
    %p4208 = scmp.le.s32.totalorder 2, %s15
    // Predicated region
    $region61: #{rec_res_block_nchw.5} parent=5 // pred_check
      %p4209 = pneg %p4208
    $region62: #{rec_res_block_nchw.5} parent=5 // pred_check_branch
      %4211 = sbr.rel (%p4209) target = $region64
    $region63: #{rec_res_block_nchw.5} parent=5 // pred_region
      %s4212 = ssub.s32 %s15, 2
      // Predicated region
      $region65: #{rec_res_block_nchw.5} parent=63 // pred_check
        %p4213 = pneg %p238
      $region66: #{rec_res_block_nchw.5} parent=63 // pred_check_branch
        %4215 = sbr.rel (%p4213) target = $region68
      $region67: #{rec_res_block_nchw.5} parent=63 // pred_region
        %p4216 = scmp.lt.s32.totalorder %s21, 1
        %s4217 = scalar_select %p4216, %s21, 1
        %s4218 = smul.addr %s4217, 32
        %s4219 = smul.addr %s4218, 8
        %s4220 = scalar_lea.vmem %s9, %s4219
      $region68: #{rec_res_block_nchw.5} parent=63 // pred_fallthru
        _
    $region64: #{rec_res_block_nchw.5} parent=5 // pred_fallthru
      _
  $region6: #{rec_res_block_nchw.5} parent=0 // loop_footer
    %s19 = sadd.s32 1, %s15
  $region7: #{rec_res_block_nchw.5} parent=0 // loop_footer_branch
    %14 = sbr.rel target = $region3
  $region8: #{rec_res_block_nchw.5} parent=0 // loop_exit
    _

</llo_original>
